<compile_context>
chip_gen: v7x
topology: tpu7x:2x2x1
jax: 0.10.0
libtpu: 0.0.40
codegen_flags: <defaults>
</compile_context>

<pallas_src>
import functools

import jax
import jax.numpy as jnp
from jax.experimental import pallas as pl
from jax.experimental.pallas import tpu as pltpu

IN_C = 3
STEM_C = 16          # stem channels (real)
WIDTH = 32           # bottleneck width (real)
GROUPS = 4           # cardinality (32 in the real model)
WPG = WIDTH // GROUPS
EXP_C = 64           # bottleneck expansion channels (real)
SE_MID = 16          # SE reduction channels (real)
OUT_FEATURES = 5
P = 128              # lane-padded channel width for every activation / weight

VMEM_LIMIT = 32 * 1024 * 1024  # explicit scoped-VMEM budget (fits v5e/v6e/v7x)


# ----------------------------- Pallas kernels ------------------------------

def _gemm_bn_kernel(x_ref, w_ref, s_ref, b_ref, o_ref, *, relu):
    # y = (x @ w) * scale + shift   (1x1/7x7-im2col conv with folded BN)
    # bf16 operands, f32 accumulation, f32 epilogue, bf16 store.
    acc = jnp.dot(x_ref[...], w_ref[...], preferred_element_type=jnp.float32)
    y = acc * s_ref[...] + b_ref[...]
    if relu:
        y = jnp.maximum(y, 0.0)
    o_ref[...] = y.astype(o_ref.dtype)


def _maxpool_kernel(p_ref, o_ref):
    # p: [tile, 9, C] -> max over the 3x3 window axis (zero-pad exact: post-ReLU)
    o_ref[...] = jnp.max(p_ref[...], axis=1).astype(o_ref.dtype)


def _bottleneck_head_kernel(xp_ref, idn_ref,
                            w2_ref, s2_ref, b2_ref,
                            w3_ref, s3_ref, b3_ref,
                            sw1_ref, sb1_ref, sw2_ref, sb2_ref,
                            wd_ref, sd_ref, bd_ref,
                            fw_ref, fb_ref, o_ref, *, ho, wo):
    """Fused per-image tail: grouped 3x3 conv -> BN/ReLU -> 1x1 expand -> BN ->
    SE -> downsample 1x1 + BN -> residual add + ReLU -> GAP -> fc head."""
    hw = ho * wo
    xp = xp_ref[0]                           # (ho+2, wo+2, P) bf16, zero-padded c1 out
    idn = idn_ref[0].reshape(hw, P)          # (hw, P) bf16, maxpool output (identity)

    # conv2: grouped 3x3 conv as ONE block-diagonal GEMM per tap (9 taps),
    # windows built from the VMEM-resident padded block (no im2col in HBM).
    acc = jnp.zeros((hw, P), jnp.float32)
    for t in range(9):
        di, dj = t // 3, t % 3
        win = xp[di:di + ho, dj:dj + wo, :].reshape(hw, P)
        acc = acc + jnp.dot(win, w2_ref[t], preferred_element_type=jnp.float32)
    y = jnp.maximum(acc * s2_ref[...] + b2_ref[...], 0.0)

    # conv3: 1x1 expand + BN (no ReLU before SE)
    y = jnp.dot(y.astype(jnp.bfloat16), w3_ref[...],
                preferred_element_type=jnp.float32) * s3_ref[...] + b3_ref[...]

    # squeeze-and-excitation: GAP -> fc -> ReLU -> fc -> sigmoid -> channel scale
    pooled = jnp.mean(y, axis=0, keepdims=True)                      # (1, P)
    hid = jnp.dot(pooled.astype(jnp.bfloat16), sw1_ref[...],
                  preferred_element_type=jnp.float32) + sb1_ref[...]
    hid = jnp.maximum(hid, 0.0)
    se = jax.nn.sigmoid(jnp.dot(hid.astype(jnp.bfloat16), sw2_ref[...],
                                preferred_element_type=jnp.float32) + sb2_ref[...])
    y = y * se                                                       # broadcast (1, P)

    # downsample identity (1x1 conv + BN), residual add + ReLU
    ids = jnp.dot(idn, wd_ref[...],
                  preferred_element_type=jnp.float32) * sd_ref[...] + bd_ref[...]
    y = jnp.maximum(y + ids, 0.0)

    # head: global average pool + Linear (128-lane padded; sliced in wrapper)
    g = jnp.mean(y, axis=0, keepdims=True)                           # (1, P)
    logits = jnp.dot(g.astype(jnp.bfloat16), fw_ref[...],
                     preferred_element_type=jnp.float32) + fb_ref[...]
    # lane-dense (8, 128) store; wrapper keeps row 0, first 5 lanes
    o_ref[0] = jnp.broadcast_to(logits, (o_ref.shape[1], o_ref.shape[2]))


# ---------------------------- pallas_call wrappers --------------------------

def _pick_tile(m, want=256):
    # biggest power-of-two tile (>=8 rows) that divides M; scale `want` up for
    # real resolutions (>=512 rows keeps the HBM pipe busy).
    for t in (want, 512, 256, 128, 64, 32, 16, 8):
        if t <= m and m % t == 0:
            return t
    return m


def _const_spec(shape):
    nd = len(shape)
    return pl.BlockSpec(tuple(shape), lambda b, _nd=nd: (0,) * _nd)


def _gemm_bn(x, w, scale, shift, relu):
    m, k = x.shape
    n_out = w.shape[1]
    tm = _pick_tile(m)
    kern = functools.partial(_gemm_bn_kernel, relu=relu)
    return pl.pallas_call(
        kern,
        out_shape=jax.ShapeDtypeStruct((m, n_out), jnp.bfloat16),
        grid=(m // tm,),
        in_specs=[pl.BlockSpec((tm, k), lambda i: (i, 0)),
                  pl.BlockSpec((k, n_out), lambda i: (0, 0)),
                  pl.BlockSpec((1, n_out), lambda i: (0, 0)),
                  pl.BlockSpec((1, n_out), lambda i: (0, 0))],
        out_specs=pl.BlockSpec((tm, n_out), lambda i: (i, 0)),
        compiler_params=pltpu.CompilerParams(
            dimension_semantics=("parallel",), vmem_limit_bytes=VMEM_LIMIT),
        cost_estimate=pl.CostEstimate(
            flops=2 * m * k * n_out, transcendentals=0,
            bytes_accessed=(m * k + k * n_out + m * n_out) * 2 + 2 * n_out * 4),
    )(x, w, scale, shift)


def _maxpool(patches):
    m = patches.shape[0]
    tm = _pick_tile(m)
    return pl.pallas_call(
        _maxpool_kernel,
        out_shape=jax.ShapeDtypeStruct((m, P), jnp.bfloat16),
        grid=(m // tm,),
        in_specs=[pl.BlockSpec((tm, 9, P), lambda i: (i, 0, 0))],
        out_specs=pl.BlockSpec((tm, P), lambda i: (i, 0)),
        compiler_params=pltpu.CompilerParams(
            dimension_semantics=("parallel",), vmem_limit_bytes=VMEM_LIMIT),
        cost_estimate=pl.CostEstimate(
            flops=9 * m * P, transcendentals=0,
            bytes_accessed=(m * 9 * P + m * P) * 2),
    )(patches)


def _bottleneck_head(c1_pad, identity, p, ho, wo):
    n = c1_pad.shape[0]
    hp, wp = ho + 2, wo + 2
    kern = functools.partial(_bottleneck_head_kernel, ho=ho, wo=wo)
    flops = n * 2 * ho * wo * P * P * 11          # 9 taps + conv3 + downsample
    bytes_acc = (n * (hp * wp + ho * wo) * P * 2  # activations (bf16)
                 + 14 * P * P * 2                 # weights (bf16)
                 + 10 * P * 4                     # scales / shifts / biases
                 + n * 8 * P * 4)                 # logits
    return pl.pallas_call(
        kern,
        out_shape=jax.ShapeDtypeStruct((n, 8, P), jnp.float32),
        grid=(n,),
        in_specs=[
            pl.BlockSpec((1, hp, wp, P), lambda b: (b, 0, 0, 0)),
            pl.BlockSpec((1, ho, wo, P), lambda b: (b, 0, 0, 0)),
            _const_spec(p['c2_w'].shape), _const_spec(p['c2_s'].shape),
            _const_spec(p['c2_b'].shape),
            _const_spec(p['c3_w'].shape), _const_spec(p['c3_s'].shape),
            _const_spec(p['c3_b'].shape),
            _const_spec(p['se_w1'].shape), _const_spec(p['se_b1'].shape),
            _const_spec(p['se_w2'].shape), _const_spec(p['se_b2'].shape),
            _const_spec(p['ds_w'].shape), _const_spec(p['ds_s'].shape),
            _const_spec(p['ds_b'].shape),
            _const_spec(p['fc_w'].shape), _const_spec(p['fc_b'].shape),
        ],
        out_specs=pl.BlockSpec((1, 8, P), lambda b: (b, 0, 0)),
        compiler_params=pltpu.CompilerParams(
            dimension_semantics=("parallel",), vmem_limit_bytes=VMEM_LIMIT),
        cost_estimate=pl.CostEstimate(
            flops=flops, transcendentals=n * P, bytes_accessed=bytes_acc),
    )(c1_pad, identity,
      p['c2_w'], p['c2_s'], p['c2_b'],
      p['c3_w'], p['c3_s'], p['c3_b'],
      p['se_w1'], p['se_b1'], p['se_w2'], p['se_b2'],
      p['ds_w'], p['ds_s'], p['ds_b'],
      p['fc_w'], p['fc_b'])


# ------------------------------- glue (layout) ------------------------------

def _im2col(x, kh, kw, stride, pad):
    # x: [N, H, W, C] -> patches [N, Ho, Wo, kh*kw, C]  (pure layout glue)
    n, h, w, c = x.shape
    xp = jnp.pad(x, ((0, 0), (pad, pad), (pad, pad), (0, 0)))
    ho = (h + 2 * pad - kh) // stride + 1
    wo = (w + 2 * pad - kw) // stride + 1
    cols = []
    for i in range(kh):
        for j in range(kw):
            cols.append(xp[:, i:i + ho * stride:stride, j:j + wo * stride:stride, :])
    patches = jnp.stack(cols, axis=3)
    return patches, ho, wo


def _fold_bn(gamma, beta, mean, var, eps=1e-5):
    scale = gamma / jnp.sqrt(var + eps)
    shift = beta - mean * scale
    return scale, shift


# ------------------------------ parameter init ------------------------------

def init_params(key):
    ks = iter(jax.random.split(key, 128))

    def w(shape, scale=0.05):
        return scale * jax.random.normal(next(ks), shape, jnp.float32)

    def pad_row(v):                      # (c,) -> (1, P), zero-padded lanes
        return jnp.zeros((1, P), jnp.float32).at[0, :v.shape[0]].set(v)

    def pad_mat(m, rows=P):              # (r, c) -> (rows, P), zero-padded
        out = jnp.zeros((rows, P), jnp.float32)
        return out.at[:m.shape[0], :m.shape[1]].set(m)

    def bn_padded(c):
        gamma = 1.0 + 0.05 * jax.random.normal(next(ks), (c,), jnp.float32)
        beta = 0.05 * jax.random.normal(next(ks), (c,), jnp.float32)
        mean = 0.05 * jax.random.normal(next(ks), (c,), jnp.float32)
        var = 1.0 + 0.05 * jnp.abs(jax.random.normal(next(ks), (c,), jnp.float32))
        scale, shift = _fold_bn(gamma, beta, mean, var)
        return pad_row(scale), pad_row(shift)

    p = {}
    p['stem_w'] = pad_mat(w((7 * 7 * IN_C, STEM_C)), rows=7 * 7 * IN_C)
    p['stem_s'], p['stem_b'] = bn_padded(STEM_C)
    p['c1_w'] = pad_mat(w((STEM_C, WIDTH)))
    p['c1_s'], p['c1_b'] = bn_padded(WIDTH)

    # grouped 3x3 conv as block-diagonal per-tap weight: [9, P, P]
    w2 = jnp.zeros((9, P, P), jnp.float32)
    for t in range(9):
        for g in range(GROUPS):
            blk = w((WPG, WPG))
            w2 = w2.at[t, g * WPG:(g + 1) * WPG, g * WPG:(g + 1) * WPG].set(blk)
    p['c2_w'] = w2
    p['c2_s'], p['c2_b'] = bn_padded(WIDTH)

    p['c3_w'] = pad_mat(w((WIDTH, EXP_C)))
    p['c3_s'], p['c3_b'] = bn_padded(EXP_C)
    p['se_w1'] = pad_mat(w((EXP_C, SE_MID)))
    p['se_b1'] = pad_row(w((SE_MID,)))
    p['se_w2'] = pad_mat(w((SE_MID, EXP_C)))
    p['se_b2'] = pad_row(w((EXP_C,)))
    p['ds_w'] = pad_mat(w((STEM_C, EXP_C)))
    p['ds_s'], p['ds_b'] = bn_padded(EXP_C)
    p['fc_w'] = pad_mat(w((EXP_C, OUT_FEATURES)))
    p['fc_b'] = pad_row(w((OUT_FEATURES,)))

    # GEMM operands in bf16 (f32 accumulation in-kernel); BN/bias stay f32.
    for name in ('stem_w', 'c1_w', 'c2_w', 'c3_w', 'se_w1', 'se_w2', 'ds_w', 'fc_w'):
        p[name] = p[name].astype(jnp.bfloat16)
    return p


# --------------------------------- forward ----------------------------------

def cassava_forward(params, x_nchw):
    x = jnp.transpose(x_nchw, (0, 2, 3, 1)).astype(jnp.bfloat16)   # NCHW -> NHWC
    n = x.shape[0]

    # stem: 7x7 stride-2 conv + BN + ReLU (tiled GEMM over M = n*Ho*Wo)
    patches, h1, w1 = _im2col(x, 7, 7, 2, 3)
    m1 = n * h1 * w1
    stem = _gemm_bn(patches.reshape(m1, 7 * 7 * IN_C), params['stem_w'],
                    params['stem_s'], params['stem_b'], relu=True)
    stem = stem.reshape(n, h1, w1, P)

    # maxpool 3x3 stride 2 pad 1 (zero-pad exact: post-ReLU values >= 0)
    mp_patches, h2, w2 = _im2col(stem, 3, 3, 2, 1)
    m2 = n * h2 * w2
    identity = _maxpool(mp_patches.reshape(m2, 9, P)).reshape(n, h2, w2, P)

    # bottleneck conv1: 1x1 -> width, BN, ReLU (tiled GEMM over M)
    c1 = _gemm_bn(identity.reshape(m2, P), params['c1_w'],
                  params['c1_s'], params['c1_b'], relu=True)
    c1_pad = jnp.pad(c1.reshape(n, h2, w2, P),
                     ((0, 0), (1, 1), (1, 1), (0, 0)))   # spatial pad for 3x3 conv

    # fused: grouped 3x3 + BN/ReLU + 1x1 expand + BN + SE + downsample + BN
    #        + residual add + ReLU + GAP + fc head  (one kernel, grid over batch)
    logits_pad = _bottleneck_head(c1_pad, identity, params, h2, w2)
    return logits_pad[:, 0, :OUT_FEATURES].astype(jnp.float32)


if __name__ == "__main__":
    x = jax.random.normal(jax.random.PRNGKey(0), (2, 3, 32, 32), jnp.float32)
    params = init_params(jax.random.PRNGKey(42))
    out = jax.jit(cassava_forward)(params, x)
    jax.block_until_ready(out)
    assert out.shape == (2, OUT_FEATURES) and out.dtype == jnp.float32
    print("KERNEL_OK")
</pallas_src>

<mosaic_0001>
module attributes {stable_mosaic.version = 11 : i64} {
  func.func @_gemm_bn_kernel(%arg0: i32, %arg1: memref<256x147xbf16, #tpu.memory_space<vmem>>, %arg2: memref<147x128xbf16, #tpu.memory_space<vmem>>, %arg3: memref<1x128xf32, #tpu.memory_space<vmem>>, %arg4: memref<1x128xf32, #tpu.memory_space<vmem>>, %arg5: memref<256x128xbf16, #tpu.memory_space<vmem>>) attributes {dimension_semantics = [#tpu.dimension_semantics<parallel>], iteration_bounds = array<i64: 2>, scalar_prefetch = 0 : i64, scratch_operands = 0 : i64, tpu.core_type = #tpu.core_type<tc>, window_params = [{transform_indices = @transform_0, window_bounds = array<i64: 256, 147>}, {pipeline_mode = #tpu.pipeline_mode<synchronous>, transform_indices = @transform_1, window_bounds = array<i64: 147, 128>}, {pipeline_mode = #tpu.pipeline_mode<synchronous>, transform_indices = @transform_2, window_bounds = array<i64: 1, 128>}, {pipeline_mode = #tpu.pipeline_mode<synchronous>, transform_indices = @transform_3, window_bounds = array<i64: 1, 128>}, {transform_indices = @transform_4, window_bounds = array<i64: 256, 128>}]} {
    %c0 = arith.constant 0 : index
    %c0_0 = arith.constant 0 : index
    %0 = vector.load %arg1[%c0, %c0_0] : memref<256x147xbf16, #tpu.memory_space<vmem>>, vector<256x147xbf16>
    %c0_1 = arith.constant 0 : index
    %c0_2 = arith.constant 0 : index
    %1 = vector.load %arg2[%c0_1, %c0_2] : memref<147x128xbf16, #tpu.memory_space<vmem>>, vector<147x128xbf16>
    %cst = arith.constant dense<0.000000e+00> : vector<256x128xf32>
    %2 = tpu.matmul %0, %1, %cst {dimension_numbers = #tpu.dot_dimension_numbers<[1], [0], [0], [1], [0, 0, 1, 1], [], []>} : vector<256x147xbf16>, vector<147x128xbf16>, vector<256x128xf32> -> vector<256x128xf32>
    %c0_3 = arith.constant 0 : index
    %c0_4 = arith.constant 0 : index
    %3 = vector.load %arg3[%c0_3, %c0_4] : memref<1x128xf32, #tpu.memory_space<vmem>>, vector<1x128xf32>
    %4 = vector.broadcast %3 : vector<1x128xf32> to vector<256x128xf32>
    %5 = arith.mulf %2, %4 : vector<256x128xf32>
    %c0_5 = arith.constant 0 : index
    %c0_6 = arith.constant 0 : index
    %6 = vector.load %arg4[%c0_5, %c0_6] : memref<1x128xf32, #tpu.memory_space<vmem>>, vector<1x128xf32>
    %7 = vector.broadcast %6 : vector<1x128xf32> to vector<256x128xf32>
    %8 = arith.addf %5, %7 : vector<256x128xf32>
    %cst_7 = arith.constant 0.000000e+00 : f32
    %9 = vector.broadcast %cst_7 : f32 to vector<256x128xf32>
    %10 = arith.maximumf %8, %9 : vector<256x128xf32>
    %11 = arith.truncf %10 : vector<256x128xf32> to vector<256x128xbf16>
    %c0_8 = arith.constant 0 : index
    %c0_9 = arith.constant 0 : index
    %12 = vector.load %arg5[%c0_8, %c0_9] : memref<256x128xbf16, #tpu.memory_space<vmem>>, vector<256x128xbf16>
    tpu.vector_store %arg5[%c0_8, %c0_9], %11 {strides = array<i32>} : memref<256x128xbf16, #tpu.memory_space<vmem>>, vector<256x128xbf16>,
    return
  }
  func.func @transform_0(%arg0: i32) -> (i32, i32) {
    %c0_i32 = arith.constant 0 : i32
    %c0_i32_0 = arith.constant 0 : i32
    return %arg0, %c0_i32 : i32, i32
  }
  func.func @transform_1(%arg0: i32) -> (i32, i32) {
    %c0_i32 = arith.constant 0 : i32
    %c0_i32_0 = arith.constant 0 : i32
    %c0_i32_1 = arith.constant 0 : i32
    return %c0_i32, %c0_i32_0 : i32, i32
  }
  func.func @transform_2(%arg0: i32) -> (i32, i32) {
    %c0_i32 = arith.constant 0 : i32
    %c0_i32_0 = arith.constant 0 : i32
    %c0_i32_1 = arith.constant 0 : i32
    return %c0_i32, %c0_i32_0 : i32, i32
  }
  func.func @transform_3(%arg0: i32) -> (i32, i32) {
    %c0_i32 = arith.constant 0 : i32
    %c0_i32_0 = arith.constant 0 : i32
    %c0_i32_1 = arith.constant 0 : i32
    return %c0_i32, %c0_i32_0 : i32, i32
  }
  func.func @transform_4(%arg0: i32) -> (i32, i32) {
    %c0_i32 = arith.constant 0 : i32
    %c0_i32_0 = arith.constant 0 : i32
    return %arg0, %c0_i32 : i32, i32
  }
}

module attributes {stable_mosaic.version = 11 : i64} {
  func.func @_maxpool_kernel(%arg0: i32, %arg1: memref<128x9x128xbf16, #tpu.memory_space<vmem>>, %arg2: memref<128x128xbf16, #tpu.memory_space<vmem>>) attributes {dimension_semantics = [#tpu.dimension_semantics<parallel>], iteration_bounds = array<i64: 1>, scalar_prefetch = 0 : i64, scratch_operands = 0 : i64, tpu.core_type = #tpu.core_type<tc>, window_params = [{transform_indices = @transform_0, window_bounds = array<i64: 128, 9, 128>}, {transform_indices = @transform_1, window_bounds = array<i64: 128, 128>}]} {
    %c0 = arith.constant 0 : index
    %c0_0 = arith.constant 0 : index
    %c0_1 = arith.constant 0 : index
    %0 = vector.load %arg1[%c0, %c0_0, %c0_1] : memref<128x9x128xbf16, #tpu.memory_space<vmem>>, vector<128x9x128xbf16>
    %cst = arith.constant dense<0xFF80> : vector<128x128xbf16>
    %1 = vector.multi_reduction <maximumf>, %0, %cst [1] : vector<128x9x128xbf16> to vector<128x128xbf16>
    %c0_2 = arith.constant 0 : index
    %c0_3 = arith.constant 0 : index
    %2 = vector.load %arg2[%c0_2, %c0_3] : memref<128x128xbf16, #tpu.memory_space<vmem>>, vector<128x128xbf16>
    tpu.vector_store %arg2[%c0_2, %c0_3], %1 {strides = array<i32>} : memref<128x128xbf16, #tpu.memory_space<vmem>>, vector<128x128xbf16>,
    return
  }
  func.func @transform_0(%arg0: i32) -> (i32, i32, i32) {
    %c0_i32 = arith.constant 0 : i32
    %c0_i32_0 = arith.constant 0 : i32
    %c0_i32_1 = arith.constant 0 : i32
    return %arg0, %c0_i32, %c0_i32_0 : i32, i32, i32
  }
  func.func @transform_1(%arg0: i32) -> (i32, i32) {
    %c0_i32 = arith.constant 0 : i32
    %c0_i32_0 = arith.constant 0 : i32
    return %arg0, %c0_i32 : i32, i32
  }
}

module attributes {stable_mosaic.version = 11 : i64} {
  func.func @_gemm_bn_kernel(%arg0: i32, %arg1: memref<128x128xbf16, #tpu.memory_space<vmem>>, %arg2: memref<128x128xbf16, #tpu.memory_space<vmem>>, %arg3: memref<1x128xf32, #tpu.memory_space<vmem>>, %arg4: memref<1x128xf32, #tpu.memory_space<vmem>>, %arg5: memref<128x128xbf16, #tpu.memory_space<vmem>>) attributes {dimension_semantics = [#tpu.dimension_semantics<parallel>], iteration_bounds = array<i64: 1>, scalar_prefetch = 0 : i64, scratch_operands = 0 : i64, tpu.core_type = #tpu.core_type<tc>, window_params = [{transform_indices = @transform_0, window_bounds = array<i64: 128, 128>}, {pipeline_mode = #tpu.pipeline_mode<synchronous>, transform_indices = @transform_1, window_bounds = array<i64: 128, 128>}, {pipeline_mode = #tpu.pipeline_mode<synchronous>, transform_indices = @transform_2, window_bounds = array<i64: 1, 128>}, {pipeline_mode = #tpu.pipeline_mode<synchronous>, transform_indices = @transform_3, window_bounds = array<i64: 1, 128>}, {transform_indices = @transform_4, window_bounds = array<i64: 128, 128>}]} {
    %c0 = arith.constant 0 : index
    %c0_0 = arith.constant 0 : index
    %0 = vector.load %arg1[%c0, %c0_0] : memref<128x128xbf16, #tpu.memory_space<vmem>>, vector<128x128xbf16>
    %c0_1 = arith.constant 0 : index
    %c0_2 = arith.constant 0 : index
    %1 = vector.load %arg2[%c0_1, %c0_2] : memref<128x128xbf16, #tpu.memory_space<vmem>>, vector<128x128xbf16>
    %cst = arith.constant dense<0.000000e+00> : vector<128x128xf32>
    %2 = tpu.matmul %0, %1, %cst {dimension_numbers = #tpu.dot_dimension_numbers<[1], [0], [0], [1], [0, 0, 1, 1], [], []>} : vector<128x128xbf16>, vector<128x128xbf16>, vector<128x128xf32> -> vector<128x128xf32>
    %c0_3 = arith.constant 0 : index
    %c0_4 = arith.constant 0 : index
    %3 = vector.load %arg3[%c0_3, %c0_4] : memref<1x128xf32, #tpu.memory_space<vmem>>, vector<1x128xf32>
    %4 = vector.broadcast %3 : vector<1x128xf32> to vector<128x128xf32>
    %5 = arith.mulf %2, %4 : vector<128x128xf32>
    %c0_5 = arith.constant 0 : index
    %c0_6 = arith.constant 0 : index
    %6 = vector.load %arg4[%c0_5, %c0_6] : memref<1x128xf32, #tpu.memory_space<vmem>>, vector<1x128xf32>
    %7 = vector.broadcast %6 : vector<1x128xf32> to vector<128x128xf32>
    %8 = arith.addf %5, %7 : vector<128x128xf32>
    %cst_7 = arith.constant 0.000000e+00 : f32
    %9 = vector.broadcast %cst_7 : f32 to vector<128x128xf32>
    %10 = arith.maximumf %8, %9 : vector<128x128xf32>
    %11 = arith.truncf %10 : vector<128x128xf32> to vector<128x128xbf16>
    %c0_8 = arith.constant 0 : index
    %c0_9 = arith.constant 0 : index
    %12 = vector.load %arg5[%c0_8, %c0_9] : memref<128x128xbf16, #tpu.memory_space<vmem>>, vector<128x128xbf16>
    tpu.vector_store %arg5[%c0_8, %c0_9], %11 {strides = array<i32>} : memref<128x128xbf16, #tpu.memory_space<vmem>>, vector<128x128xbf16>,
    return
  }
  func.func @transform_0(%arg0: i32) -> (i32, i32) {
    %c0_i32 = arith.constant 0 : i32
    %c0_i32_0 = arith.constant 0 : i32
    return %arg0, %c0_i32 : i32, i32
  }
  func.func @transform_1(%arg0: i32) -> (i32, i32) {
    %c0_i32 = arith.constant 0 : i32
    %c0_i32_0 = arith.constant 0 : i32
    %c0_i32_1 = arith.constant 0 : i32
    return %c0_i32, %c0_i32_0 : i32, i32
  }
  func.func @transform_2(%arg0: i32) -> (i32, i32) {
    %c0_i32 = arith.constant 0 : i32
    %c0_i32_0 = arith.constant 0 : i32
    %c0_i32_1 = arith.constant 0 : i32
    return %c0_i32, %c0_i32_0 : i32, i32
  }
  func.func @transform_3(%arg0: i32) -> (i32, i32) {
    %c0_i32 = arith.constant 0 : i32
    %c0_i32_0 = arith.constant 0 : i32
    %c0_i32_1 = arith.constant 0 : i32
    return %c0_i32, %c0_i32_0 : i32, i32
  }
  func.func @transform_4(%arg0: i32) -> (i32, i32) {
    %c0_i32 = arith.constant 0 : i32
    %c0_i32_0 = arith.constant 0 : i32
    return %arg0, %c0_i32 : i32, i32
  }
}

module attributes {stable_mosaic.version = 11 : i64} {
  func.func @_bottleneck_head_kernel(%arg0: i32, %arg1: memref<1x10x10x128xbf16, #tpu.memory_space<vmem>>, %arg2: memref<1x8x8x128xbf16, #tpu.memory_space<vmem>>, %arg3: memref<9x128x128xbf16, #tpu.memory_space<vmem>>, %arg4: memref<1x128xf32, #tpu.memory_space<vmem>>, %arg5: memref<1x128xf32, #tpu.memory_space<vmem>>, %arg6: memref<128x128xbf16, #tpu.memory_space<vmem>>, %arg7: memref<1x128xf32, #tpu.memory_space<vmem>>, %arg8: memref<1x128xf32, #tpu.memory_space<vmem>>, %arg9: memref<128x128xbf16, #tpu.memory_space<vmem>>, %arg10: memref<1x128xf32, #tpu.memory_space<vmem>>, %arg11: memref<128x128xbf16, #tpu.memory_space<vmem>>, %arg12: memref<1x128xf32, #tpu.memory_space<vmem>>, %arg13: memref<128x128xbf16, #tpu.memory_space<vmem>>, %arg14: memref<1x128xf32, #tpu.memory_space<vmem>>, %arg15: memref<1x128xf32, #tpu.memory_space<vmem>>, %arg16: memref<128x128xbf16, #tpu.memory_space<vmem>>, %arg17: memref<1x128xf32, #tpu.memory_space<vmem>>, %arg18: memref<1x8x128xf32, #tpu.memory_space<vmem>>) attributes {dimension_semantics = [#tpu.dimension_semantics<parallel>], iteration_bounds = array<i64: 2>, scalar_prefetch = 0 : i64, scratch_operands = 0 : i64, tpu.core_type = #tpu.core_type<tc>, window_params = [{transform_indices = @transform_0, window_bounds = array<i64: 1, 10, 10, 128>}, {transform_indices = @transform_1, window_bounds = array<i64: 1, 8, 8, 128>}, {pipeline_mode = #tpu.pipeline_mode<synchronous>, transform_indices = @transform_2, window_bounds = array<i64: 9, 128, 128>}, {pipeline_mode = #tpu.pipeline_mode<synchronous>, transform_indices = @transform_3, window_bounds = array<i64: 1, 128>}, {pipeline_mode = #tpu.pipeline_mode<synchronous>, transform_indices = @transform_4, window_bounds = array<i64: 1, 128>}, {pipeline_mode = #tpu.pipeline_mode<synchronous>, transform_indices = @transform_5, window_bounds = array<i64: 128, 128>}, {pipeline_mode = #tpu.pipeline_mode<synchronous>, transform_indices = @transform_6, window_bounds = array<i64: 1, 128>}, {pipeline_mode = #tpu.pipeline_mode<synchronous>, transform_indices = @transform_7, window_bounds = array<i64: 1, 128>}, {pipeline_mode = #tpu.pipeline_mode<synchronous>, transform_indices = @transform_8, window_bounds = array<i64: 128, 128>}, {pipeline_mode = #tpu.pipeline_mode<synchronous>, transform_indices = @transform_9, window_bounds = array<i64: 1, 128>}, {pipeline_mode = #tpu.pipeline_mode<synchronous>, transform_indices = @transform_10, window_bounds = array<i64: 128, 128>}, {pipeline_mode = #tpu.pipeline_mode<synchronous>, transform_indices = @transform_11, window_bounds = array<i64: 1, 128>}, {pipeline_mode = #tpu.pipeline_mode<synchronous>, transform_indices = @transform_12, window_bounds = array<i64: 128, 128>}, {pipeline_mode = #tpu.pipeline_mode<synchronous>, transform_indices = @transform_13, window_bounds = array<i64: 1, 128>}, {pipeline_mode = #tpu.pipeline_mode<synchronous>, transform_indices = @transform_14, window_bounds = array<i64: 1, 128>}, {pipeline_mode = #tpu.pipeline_mode<synchronous>, transform_indices = @transform_15, window_bounds = array<i64: 128, 128>}, {pipeline_mode = #tpu.pipeline_mode<synchronous>, transform_indices = @transform_16, window_bounds = array<i64: 1, 128>}, {transform_indices = @transform_17, window_bounds = array<i64: 1, 8, 128>}]} {
    %c0 = arith.constant 0 : index
    %c0_0 = arith.constant 0 : index
    %c0_1 = arith.constant 0 : index
    %c0_2 = arith.constant 0 : index
    %0 = vector.load %arg1[%c0, %c0_0, %c0_1, %c0_2] : memref<1x10x10x128xbf16, #tpu.memory_space<vmem>>, vector<1x10x10x128xbf16>
    %1 = vector.shape_cast %0 : vector<1x10x10x128xbf16> to vector<10x10x128xbf16>
    %c0_3 = arith.constant 0 : index
    %c0_4 = arith.constant 0 : index
    %c0_5 = arith.constant 0 : index
    %c0_6 = arith.constant 0 : index
    %2 = vector.load %arg2[%c0_3, %c0_4, %c0_5, %c0_6] : memref<1x8x8x128xbf16, #tpu.memory_space<vmem>>, vector<1x8x8x128xbf16>
    %3 = vector.shape_cast %2 : vector<1x8x8x128xbf16> to vector<8x8x128xbf16>
    %4 = vector.shape_cast %3 : vector<8x8x128xbf16> to vector<64x128xbf16>
    %cst = arith.constant 0.000000e+00 : f32
    %5 = vector.broadcast %cst : f32 to vector<64x128xf32>
    %6 = vector.extract_strided_slice %1 {offsets = [0, 0, 0], sizes = [8, 8, 128], strides = [1, 1, 1]} : vector<10x10x128xbf16> to vector<8x8x128xbf16>
    %7 = vector.shape_cast %6 : vector<8x8x128xbf16> to vector<64x128xbf16>
    %c0_7 = arith.constant 0 : index
    %c0_8 = arith.constant 0 : index
    %c0_9 = arith.constant 0 : index
    %8 = vector.load %arg3[%c0_7, %c0_8, %c0_9] : memref<9x128x128xbf16, #tpu.memory_space<vmem>>, vector<1x128x128xbf16>
    %9 = vector.shape_cast %8 : vector<1x128x128xbf16> to vector<128x128xbf16>
    %cst_10 = arith.constant dense<0.000000e+00> : vector<64x128xf32>
    %10 = tpu.matmul %7, %9, %cst_10 {dimension_numbers = #tpu.dot_dimension_numbers<[1], [0], [0], [1], [0, 0, 1, 1], [], []>} : vector<64x128xbf16>, vector<128x128xbf16>, vector<64x128xf32> -> vector<64x128xf32>
    %11 = arith.addf %5, %10 : vector<64x128xf32>
    %12 = vector.extract_strided_slice %1 {offsets = [0, 1, 0], sizes = [8, 8, 128], strides = [1, 1, 1]} : vector<10x10x128xbf16> to vector<8x8x128xbf16>
    %13 = vector.shape_cast %12 : vector<8x8x128xbf16> to vector<64x128xbf16>
    %c1 = arith.constant 1 : index
    %c0_11 = arith.constant 0 : index
    %c0_12 = arith.constant 0 : index
    %14 = vector.load %arg3[%c1, %c0_11, %c0_12] : memref<9x128x128xbf16, #tpu.memory_space<vmem>>, vector<1x128x128xbf16>
    %15 = vector.shape_cast %14 : vector<1x128x128xbf16> to vector<128x128xbf16>
    %cst_13 = arith.constant dense<0.000000e+00> : vector<64x128xf32>
    %16 = tpu.matmul %13, %15, %cst_13 {dimension_numbers = #tpu.dot_dimension_numbers<[1], [0], [0], [1], [0, 0, 1, 1], [], []>} : vector<64x128xbf16>, vector<128x128xbf16>, vector<64x128xf32> -> vector<64x128xf32>
    %17 = arith.addf %11, %16 : vector<64x128xf32>
    %18 = vector.extract_strided_slice %1 {offsets = [0, 2, 0], sizes = [8, 8, 128], strides = [1, 1, 1]} : vector<10x10x128xbf16> to vector<8x8x128xbf16>
    %19 = vector.shape_cast %18 : vector<8x8x128xbf16> to vector<64x128xbf16>
    %c2 = arith.constant 2 : index
    %c0_14 = arith.constant 0 : index
    %c0_15 = arith.constant 0 : index
    %20 = vector.load %arg3[%c2, %c0_14, %c0_15] : memref<9x128x128xbf16, #tpu.memory_space<vmem>>, vector<1x128x128xbf16>
    %21 = vector.shape_cast %20 : vector<1x128x128xbf16> to vector<128x128xbf16>
    %cst_16 = arith.constant dense<0.000000e+00> : vector<64x128xf32>
    %22 = tpu.matmul %19, %21, %cst_16 {dimension_numbers = #tpu.dot_dimension_numbers<[1], [0], [0], [1], [0, 0, 1, 1], [], []>} : vector<64x128xbf16>, vector<128x128xbf16>, vector<64x128xf32> -> vector<64x128xf32>
    %23 = arith.addf %17, %22 : vector<64x128xf32>
    %24 = vector.extract_strided_slice %1 {offsets = [1, 0, 0], sizes = [8, 8, 128], strides = [1, 1, 1]} : vector<10x10x128xbf16> to vector<8x8x128xbf16>
    %25 = vector.shape_cast %24 : vector<8x8x128xbf16> to vector<64x128xbf16>
    %c3 = arith.constant 3 : index
    %c0_17 = arith.constant 0 : index
    %c0_18 = arith.constant 0 : index
    %26 = vector.load %arg3[%c3, %c0_17, %c0_18] : memref<9x128x128xbf16, #tpu.memory_space<vmem>>, vector<1x128x128xbf16>
    %27 = vector.shape_cast %26 : vector<1x128x128xbf16> to vector<128x128xbf16>
    %cst_19 = arith.constant dense<0.000000e+00> : vector<64x128xf32>
    %28 = tpu.matmul %25, %27, %cst_19 {dimension_numbers = #tpu.dot_dimension_numbers<[1], [0], [0], [1], [0, 0, 1, 1], [], []>} : vector<64x128xbf16>, vector<128x128xbf16>, vector<64x128xf32> -> vector<64x128xf32>
    %29 = arith.addf %23, %28 : vector<64x128xf32>
    %30 = vector.extract_strided_slice %1 {offsets = [1, 1, 0], sizes = [8, 8, 128], strides = [1, 1, 1]} : vector<10x10x128xbf16> to vector<8x8x128xbf16>
    %31 = vector.shape_cast %30 : vector<8x8x128xbf16> to vector<64x128xbf16>
    %c4 = arith.constant 4 : index
    %c0_20 = arith.constant 0 : index
    %c0_21 = arith.constant 0 : index
    %32 = vector.load %arg3[%c4, %c0_20, %c0_21] : memref<9x128x128xbf16, #tpu.memory_space<vmem>>, vector<1x128x128xbf16>
    %33 = vector.shape_cast %32 : vector<1x128x128xbf16> to vector<128x128xbf16>
    %cst_22 = arith.constant dense<0.000000e+00> : vector<64x128xf32>
    %34 = tpu.matmul %31, %33, %cst_22 {dimension_numbers = #tpu.dot_dimension_numbers<[1], [0], [0], [1], [0, 0, 1, 1], [], []>} : vector<64x128xbf16>, vector<128x128xbf16>, vector<64x128xf32> -> vector<64x128xf32>
    %35 = arith.addf %29, %34 : vector<64x128xf32>
    %36 = vector.extract_strided_slice %1 {offsets = [1, 2, 0], sizes = [8, 8, 128], strides = [1, 1, 1]} : vector<10x10x128xbf16> to vector<8x8x128xbf16>
    %37 = vector.shape_cast %36 : vector<8x8x128xbf16> to vector<64x128xbf16>
    %c5 = arith.constant 5 : index
    %c0_23 = arith.constant 0 : index
    %c0_24 = arith.constant 0 : index
    %38 = vector.load %arg3[%c5, %c0_23, %c0_24] : memref<9x128x128xbf16, #tpu.memory_space<vmem>>, vector<1x128x128xbf16>
    %39 = vector.shape_cast %38 : vector<1x128x128xbf16> to vector<128x128xbf16>
    %cst_25 = arith.constant dense<0.000000e+00> : vector<64x128xf32>
    %40 = tpu.matmul %37, %39, %cst_25 {dimension_numbers = #tpu.dot_dimension_numbers<[1], [0], [0], [1], [0, 0, 1, 1], [], []>} : vector<64x128xbf16>, vector<128x128xbf16>, vector<64x128xf32> -> vector<64x128xf32>
    %41 = arith.addf %35, %40 : vector<64x128xf32>
    %42 = vector.extract_strided_slice %1 {offsets = [2, 0, 0], sizes = [8, 8, 128], strides = [1, 1, 1]} : vector<10x10x128xbf16> to vector<8x8x128xbf16>
    %43 = vector.shape_cast %42 : vector<8x8x128xbf16> to vector<64x128xbf16>
    %c6 = arith.constant 6 : index
    %c0_26 = arith.constant 0 : index
    %c0_27 = arith.constant 0 : index
    %44 = vector.load %arg3[%c6, %c0_26, %c0_27] : memref<9x128x128xbf16, #tpu.memory_space<vmem>>, vector<1x128x128xbf16>
    %45 = vector.shape_cast %44 : vector<1x128x128xbf16> to vector<128x128xbf16>
    %cst_28 = arith.constant dense<0.000000e+00> : vector<64x128xf32>
    %46 = tpu.matmul %43, %45, %cst_28 {dimension_numbers = #tpu.dot_dimension_numbers<[1], [0], [0], [1], [0, 0, 1, 1], [], []>} : vector<64x128xbf16>, vector<128x128xbf16>, vector<64x128xf32> -> vector<64x128xf32>
    %47 = arith.addf %41, %46 : vector<64x128xf32>
    %48 = vector.extract_strided_slice %1 {offsets = [2, 1, 0], sizes = [8, 8, 128], strides = [1, 1, 1]} : vector<10x10x128xbf16> to vector<8x8x128xbf16>
    %49 = vector.shape_cast %48 : vector<8x8x128xbf16> to vector<64x128xbf16>
    %c7 = arith.constant 7 : index
    %c0_29 = arith.constant 0 : index
    %c0_30 = arith.constant 0 : index
    %50 = vector.load %arg3[%c7, %c0_29, %c0_30] : memref<9x128x128xbf16, #tpu.memory_space<vmem>>, vector<1x128x128xbf16>
    %51 = vector.shape_cast %50 : vector<1x128x128xbf16> to vector<128x128xbf16>
    %cst_31 = arith.constant dense<0.000000e+00> : vector<64x128xf32>
    %52 = tpu.matmul %49, %51, %cst_31 {dimension_numbers = #tpu.dot_dimension_numbers<[1], [0], [0], [1], [0, 0, 1, 1], [], []>} : vector<64x128xbf16>, vector<128x128xbf16>, vector<64x128xf32> -> vector<64x128xf32>
    %53 = arith.addf %47, %52 : vector<64x128xf32>
    %54 = vector.extract_strided_slice %1 {offsets = [2, 2, 0], sizes = [8, 8, 128], strides = [1, 1, 1]} : vector<10x10x128xbf16> to vector<8x8x128xbf16>
    %55 = vector.shape_cast %54 : vector<8x8x128xbf16> to vector<64x128xbf16>
    %c8 = arith.constant 8 : index
    %c0_32 = arith.constant 0 : index
    %c0_33 = arith.constant 0 : index
    %56 = vector.load %arg3[%c8, %c0_32, %c0_33] : memref<9x128x128xbf16, #tpu.memory_space<vmem>>, vector<1x128x128xbf16>
    %57 = vector.shape_cast %56 : vector<1x128x128xbf16> to vector<128x128xbf16>
    %cst_34 = arith.constant dense<0.000000e+00> : vector<64x128xf32>
    %58 = tpu.matmul %55, %57, %cst_34 {dimension_numbers = #tpu.dot_dimension_numbers<[1], [0], [0], [1], [0, 0, 1, 1], [], []>} : vector<64x128xbf16>, vector<128x128xbf16>, vector<64x128xf32> -> vector<64x128xf32>
    %59 = arith.addf %53, %58 : vector<64x128xf32>
    %c0_35 = arith.constant 0 : index
    %c0_36 = arith.constant 0 : index
    %60 = vector.load %arg4[%c0_35, %c0_36] : memref<1x128xf32, #tpu.memory_space<vmem>>, vector<1x128xf32>
    %61 = vector.broadcast %60 : vector<1x128xf32> to vector<64x128xf32>
    %62 = arith.mulf %59, %61 : vector<64x128xf32>
    %c0_37 = arith.constant 0 : index
    %c0_38 = arith.constant 0 : index
    %63 = vector.load %arg5[%c0_37, %c0_38] : memref<1x128xf32, #tpu.memory_space<vmem>>, vector<1x128xf32>
    %64 = vector.broadcast %63 : vector<1x128xf32> to vector<64x128xf32>
    %65 = arith.addf %62, %64 : vector<64x128xf32>
    %cst_39 = arith.constant 0.000000e+00 : f32
    %66 = vector.broadcast %cst_39 : f32 to vector<64x128xf32>
    %67 = arith.maximumf %65, %66 : vector<64x128xf32>
    %68 = arith.truncf %67 : vector<64x128xf32> to vector<64x128xbf16>
    %c0_40 = arith.constant 0 : index
    %c0_41 = arith.constant 0 : index
    %69 = vector.load %arg6[%c0_40, %c0_41] : memref<128x128xbf16, #tpu.memory_space<vmem>>, vector<128x128xbf16>
    %cst_42 = arith.constant dense<0.000000e+00> : vector<64x128xf32>
    %70 = tpu.matmul %68, %69, %cst_42 {dimension_numbers = #tpu.dot_dimension_numbers<[1], [0], [0], [1], [0, 0, 1, 1], [], []>} : vector<64x128xbf16>, vector<128x128xbf16>, vector<64x128xf32> -> vector<64x128xf32>
    %c0_43 = arith.constant 0 : index
    %c0_44 = arith.constant 0 : index
    %71 = vector.load %arg7[%c0_43, %c0_44] : memref<1x128xf32, #tpu.memory_space<vmem>>, vector<1x128xf32>
    %72 = vector.broadcast %71 : vector<1x128xf32> to vector<64x128xf32>
    %73 = arith.mulf %70, %72 : vector<64x128xf32>
    %c0_45 = arith.constant 0 : index
    %c0_46 = arith.constant 0 : index
    %74 = vector.load %arg8[%c0_45, %c0_46] : memref<1x128xf32, #tpu.memory_space<vmem>>, vector<1x128xf32>
    %75 = vector.broadcast %74 : vector<1x128xf32> to vector<64x128xf32>
    %76 = arith.addf %73, %75 : vector<64x128xf32>
    %cst_47 = arith.constant dense<0.000000e+00> : vector<128xf32>
    %77 = vector.multi_reduction <add>, %76, %cst_47 [0] : vector<64x128xf32> to vector<128xf32>
    %78 = vector.shape_cast %77 : vector<128xf32> to vector<1x128xf32>
    %cst_48 = arith.constant 6.400000e+01 : f32
    %79 = vector.broadcast %cst_48 : f32 to vector<1x128xf32>
    %80 = arith.divf %78, %79 : vector<1x128xf32>
    %81 = arith.truncf %80 : vector<1x128xf32> to vector<1x128xbf16>
    %c0_49 = arith.constant 0 : index
    %c0_50 = arith.constant 0 : index
    %82 = vector.load %arg9[%c0_49, %c0_50] : memref<128x128xbf16, #tpu.memory_space<vmem>>, vector<128x128xbf16>
    %cst_51 = arith.constant dense<0.000000e+00> : vector<1x128xf32>
    %83 = tpu.matmul %81, %82, %cst_51 {dimension_numbers = #tpu.dot_dimension_numbers<[1], [0], [0], [1], [0, 0, 1, 1], [], []>} : vector<1x128xbf16>, vector<128x128xbf16>, vector<1x128xf32> -> vector<1x128xf32>
    %c0_52 = arith.constant 0 : index
    %c0_53 = arith.constant 0 : index
    %84 = vector.load %arg10[%c0_52, %c0_53] : memref<1x128xf32, #tpu.memory_space<vmem>>, vector<1x128xf32>
    %85 = arith.addf %83, %84 : vector<1x128xf32>
    %cst_54 = arith.constant 0.000000e+00 : f32
    %86 = vector.broadcast %cst_54 : f32 to vector<1x128xf32>
    %87 = arith.maximumf %85, %86 : vector<1x128xf32>
    %88 = arith.truncf %87 : vector<1x128xf32> to vector<1x128xbf16>
    %c0_55 = arith.constant 0 : index
    %c0_56 = arith.constant 0 : index
    %89 = vector.load %arg11[%c0_55, %c0_56] : memref<128x128xbf16, #tpu.memory_space<vmem>>, vector<128x128xbf16>
    %cst_57 = arith.constant dense<0.000000e+00> : vector<1x128xf32>
    %90 = tpu.matmul %88, %89, %cst_57 {dimension_numbers = #tpu.dot_dimension_numbers<[1], [0], [0], [1], [0, 0, 1, 1], [], []>} : vector<1x128xbf16>, vector<128x128xbf16>, vector<1x128xf32> -> vector<1x128xf32>
    %c0_58 = arith.constant 0 : index
    %c0_59 = arith.constant 0 : index
    %91 = vector.load %arg12[%c0_58, %c0_59] : memref<1x128xf32, #tpu.memory_space<vmem>>, vector<1x128xf32>
    %92 = arith.addf %90, %91 : vector<1x128xf32>
    %93 = arith.negf %92 : vector<1x128xf32>
    %94 = math.exp %93 : vector<1x128xf32>
    %cst_60 = arith.constant 1.000000e+00 : f32
    %95 = vector.broadcast %cst_60 : f32 to vector<1x128xf32>
    %96 = arith.addf %95, %94 : vector<1x128xf32>
    %97 = arith.divf %95, %96 : vector<1x128xf32>
    %98 = vector.broadcast %97 : vector<1x128xf32> to vector<64x128xf32>
    %99 = arith.mulf %76, %98 : vector<64x128xf32>
    %c0_61 = arith.constant 0 : index
    %c0_62 = arith.constant 0 : index
    %100 = vector.load %arg13[%c0_61, %c0_62] : memref<128x128xbf16, #tpu.memory_space<vmem>>, vector<128x128xbf16>
    %cst_63 = arith.constant dense<0.000000e+00> : vector<64x128xf32>
    %101 = tpu.matmul %4, %100, %cst_63 {dimension_numbers = #tpu.dot_dimension_numbers<[1], [0], [0], [1], [0, 0, 1, 1], [], []>} : vector<64x128xbf16>, vector<128x128xbf16>, vector<64x128xf32> -> vector<64x128xf32>
    %c0_64 = arith.constant 0 : index
    %c0_65 = arith.constant 0 : index
    %102 = vector.load %arg14[%c0_64, %c0_65] : memref<1x128xf32, #tpu.memory_space<vmem>>, vector<1x128xf32>
    %103 = vector.broadcast %102 : vector<1x128xf32> to vector<64x128xf32>
    %104 = arith.mulf %101, %103 : vector<64x128xf32>
    %c0_66 = arith.constant 0 : index
    %c0_67 = arith.constant 0 : index
    %105 = vector.load %arg15[%c0_66, %c0_67] : memref<1x128xf32, #tpu.memory_space<vmem>>, vector<1x128xf32>
    %106 = vector.broadcast %105 : vector<1x128xf32> to vector<64x128xf32>
    %107 = arith.addf %104, %106 : vector<64x128xf32>
    %108 = arith.addf %99, %107 : vector<64x128xf32>
    %cst_68 = arith.constant 0.000000e+00 : f32
    %109 = vector.broadcast %cst_68 : f32 to vector<64x128xf32>
    %110 = arith.maximumf %108, %109 : vector<64x128xf32>
    %cst_69 = arith.constant dense<0.000000e+00> : vector<128xf32>
    %111 = vector.multi_reduction <add>, %110, %cst_69 [0] : vector<64x128xf32> to vector<128xf32>
    %112 = vector.shape_cast %111 : vector<128xf32> to vector<1x128xf32>
    %cst_70 = arith.constant 6.400000e+01 : f32
    %113 = vector.broadcast %cst_70 : f32 to vector<1x128xf32>
    %114 = arith.divf %112, %113 : vector<1x128xf32>
    %115 = arith.truncf %114 : vector<1x128xf32> to vector<1x128xbf16>
    %c0_71 = arith.constant 0 : index
    %c0_72 = arith.constant 0 : index
    %116 = vector.load %arg16[%c0_71, %c0_72] : memref<128x128xbf16, #tpu.memory_space<vmem>>, vector<128x128xbf16>
    %cst_73 = arith.constant dense<0.000000e+00> : vector<1x128xf32>
    %117 = tpu.matmul %115, %116, %cst_73 {dimension_numbers = #tpu.dot_dimension_numbers<[1], [0], [0], [1], [0, 0, 1, 1], [], []>} : vector<1x128xbf16>, vector<128x128xbf16>, vector<1x128xf32> -> vector<1x128xf32>
    %c0_74 = arith.constant 0 : index
    %c0_75 = arith.constant 0 : index
    %118 = vector.load %arg17[%c0_74, %c0_75] : memref<1x128xf32, #tpu.memory_space<vmem>>, vector<1x128xf32>
    %119 = arith.addf %117, %118 : vector<1x128xf32>
    %120 = vector.shape_cast %119 : vector<1x128xf32> to vector<1x128xf32>
    %121 = vector.broadcast %120 : vector<1x128xf32> to vector<8x128xf32>
    %c0_76 = arith.constant 0 : index
    %c0_77 = arith.constant 0 : index
    %c0_78 = arith.constant 0 : index
    %122 = vector.load %arg18[%c0_76, %c0_77, %c0_78] : memref<1x8x128xf32, #tpu.memory_space<vmem>>, vector<1x8x128xf32>
    %123 = vector.shape_cast %122 : vector<1x8x128xf32> to vector<8x128xf32>
    %124 = vector.shape_cast %121 : vector<8x128xf32> to vector<1x8x128xf32>
    tpu.vector_store %arg18[%c0_76, %c0_77, %c0_78], %124 {strides = array<i32>} : memref<1x8x128xf32, #tpu.memory_space<vmem>>, vector<1x8x128xf32>,
    return
  }
  func.func @transform_0(%arg0: i32) -> (i32, i32, i32, i32) {
    %c0_i32 = arith.constant 0 : i32
    %c0_i32_0 = arith.constant 0 : i32
    %c0_i32_1 = arith.constant 0 : i32
    %c0_i32_2 = arith.constant 0 : i32
    return %arg0, %c0_i32, %c0_i32_0, %c0_i32_1 : i32, i32, i32, i32
  }
  func.func @transform_1(%arg0: i32) -> (i32, i32, i32, i32) {
    %c0_i32 = arith.constant 0 : i32
    %c0_i32_0 = arith.constant 0 : i32
    %c0_i32_1 = arith.constant 0 : i32
    %c0_i32_2 = arith.constant 0 : i32
    return %arg0, %c0_i32, %c0_i32_0, %c0_i32_1 : i32, i32, i32, i32
  }
  func.func @transform_2(%arg0: i32) -> (i32, i32, i32) {
    %c0_i32 = arith.constant 0 : i32
    %c0_i32_0 = arith.constant 0 : i32
    %c0_i32_1 = arith.constant 0 : i32
    %c0_i32_2 = arith.constant 0 : i32
    return %c0_i32, %c0_i32_0, %c0_i32_1 : i32, i32, i32
  }
  func.func @transform_3(%arg0: i32) -> (i32, i32) {
    %c0_i32 = arith.constant 0 : i32
    %c0_i32_0 = arith.constant 0 : i32
    %c0_i32_1 = arith.constant 0 : i32
    return %c0_i32, %c0_i32_0 : i32, i32
  }
  func.func @transform_4(%arg0: i32) -> (i32, i32) {
    %c0_i32 = arith.constant 0 : i32
    %c0_i32_0 = arith.constant 0 : i32
    %c0_i32_1 = arith.constant 0 : i32
    return %c0_i32, %c0_i32_0 : i32, i32
  }
  func.func @transform_5(%arg0: i32) -> (i32, i32) {
    %c0_i32 = arith.constant 0 : i32
    %c0_i32_0 = arith.constant 0 : i32
    %c0_i32_1 = arith.constant 0 : i32
    return %c0_i32, %c0_i32_0 : i32, i32
  }
  func.func @transform_6(%arg0: i32) -> (i32, i32) {
    %c0_i32 = arith.constant 0 : i32
    %c0_i32_0 = arith.constant 0 : i32
    %c0_i32_1 = arith.constant 0 : i32
    return %c0_i32, %c0_i32_0 : i32, i32
  }
  func.func @transform_7(%arg0: i32) -> (i32, i32) {
    %c0_i32 = arith.constant 0 : i32
    %c0_i32_0 = arith.constant 0 : i32
    %c0_i32_1 = arith.constant 0 : i32
    return %c0_i32, %c0_i32_0 : i32, i32
  }
  func.func @transform_8(%arg0: i32) -> (i32, i32) {
    %c0_i32 = arith.constant 0 : i32
    %c0_i32_0 = arith.constant 0 : i32
    %c0_i32_1 = arith.constant 0 : i32
    return %c0_i32, %c0_i32_0 : i32, i32
  }
  func.func @transform_9(%arg0: i32) -> (i32, i32) {
    %c0_i32 = arith.constant 0 : i32
    %c0_i32_0 = arith.constant 0 : i32
    %c0_i32_1 = arith.constant 0 : i32
    return %c0_i32, %c0_i32_0 : i32, i32
  }
  func.func @transform_10(%arg0: i32) -> (i32, i32) {
    %c0_i32 = arith.constant 0 : i32
    %c0_i32_0 = arith.constant 0 : i32
    %c0_i32_1 = arith.constant 0 : i32
    return %c0_i32, %c0_i32_0 : i32, i32
  }
  func.func @transform_11(%arg0: i32) -> (i32, i32) {
    %c0_i32 = arith.constant 0 : i32
    %c0_i32_0 = arith.constant 0 : i32
    %c0_i32_1 = arith.constant 0 : i32
    return %c0_i32, %c0_i32_0 : i32, i32
  }
  func.func @transform_12(%arg0: i32) -> (i32, i32) {
    %c0_i32 = arith.constant 0 : i32
    %c0_i32_0 = arith.constant 0 : i32
    %c0_i32_1 = arith.constant 0 : i32
    return %c0_i32, %c0_i32_0 : i32, i32
  }
  func.func @transform_13(%arg0: i32) -> (i32, i32) {
    %c0_i32 = arith.constant 0 : i32
    %c0_i32_0 = arith.constant 0 : i32
    %c0_i32_1 = arith.constant 0 : i32
    return %c0_i32, %c0_i32_0 : i32, i32
  }
  func.func @transform_14(%arg0: i32) -> (i32, i32) {
    %c0_i32 = arith.constant 0 : i32
    %c0_i32_0 = arith.constant 0 : i32
    %c0_i32_1 = arith.constant 0 : i32
    return %c0_i32, %c0_i32_0 : i32, i32
  }
  func.func @transform_15(%arg0: i32) -> (i32, i32) {
    %c0_i32 = arith.constant 0 : i32
    %c0_i32_0 = arith.constant 0 : i32
    %c0_i32_1 = arith.constant 0 : i32
    return %c0_i32, %c0_i32_0 : i32, i32
  }
  func.func @transform_16(%arg0: i32) -> (i32, i32) {
    %c0_i32 = arith.constant 0 : i32
    %c0_i32_0 = arith.constant 0 : i32
    %c0_i32_1 = arith.constant 0 : i32
    return %c0_i32, %c0_i32_0 : i32, i32
  }
  func.func @transform_17(%arg0: i32) -> (i32, i32, i32) {
    %c0_i32 = arith.constant 0 : i32
    %c0_i32_0 = arith.constant 0 : i32
    %c0_i32_1 = arith.constant 0 : i32
    return %arg0, %c0_i32, %c0_i32_0 : i32, i32, i32
  }
}

</mosaic_0001>

<llo_original>
// kernel: cassava_forward.4
$region0: #{cassava_forward.4}
  #allocation0 [shape = 'u32[]', space=smem, size = 0x4, offset = 0x4, fixed_abs, tag = 'smem constant byte address 0x4 - core index']
  #allocation1 [shape = 'u32[144,128]{1,0:T(1,128)}', space=vmem, size = 0x12000, scoped, tag = 'internal scratch']
  %s0 = inlined_call_operand.vmem [shape: bf16[512,147], index: 0, kind: input, shape index: {}]
  %s1 = inlined_call_operand.vmem [shape: bf16[147,128], index: 1, kind: input, shape index: {}]
  %s2 = inlined_call_operand.vmem [shape: f32[1,128], index: 2, kind: input, shape index: {}]
  %s3 = inlined_call_operand.vmem [shape: f32[1,128], index: 3, kind: input, shape index: {}]
  %s4 = inlined_call_operand.vmem [shape: bf16[512,128], index: 4, kind: output, shape index: {}]
  %s5 = sld [smem:[#allocation0]]
  $region49: #{cassava_forward.4} parent=0
    _
  %s7 = ssub.s32 1, %s5
  %s8 = scalar_select 0, %s7, %s5
  loop: start=0, step=1, limit=4
  $region2: #{cassava_forward.4} parent=0 // loop_pre_header
    _
  $region3: #{cassava_forward.4} parent=0 // loop_header
    %s10 = sphi 0, %s14
    %p11 = scmp.ge.s32.totalorder %s10, 4
    %s20 = sphi 0, %s22
    %s23 = sphi 0, %s20
    %s24 = sphi 0, %s23
    %s40 = sphi 0, %s24
    %s44 = sphi 0, %s44
    %s46 = sphi 0, %s44
    %s47 = sphi 0, %s46
    %s61 = sphi 0, %s47
    %s65 = sphi 0, %s65
    %s67 = sphi 0, %s65
    %s68 = sphi 0, %s67
    %s82 = sphi 0, %s68
    %s86 = sphi 0, %s86
    %s88 = sphi 0, %s86
    %s89 = sphi 0, %s88
    %s103 = sphi 0, %s89
    %s109 = sphi 0, %s111
    %s112 = sphi 0, %s109
    %s113 = sphi 0, %s112
    %s129 = sphi 0, %s113
  $region4: #{cassava_forward.4} parent=0 // loop_header_branch
    %13 = sbr.rel (%p11) target = $region8
  $region5: #{cassava_forward.4} parent=0 // loop_body
    %s15 = ssub.s32 %s10, 1
    %s16 = ssub.s32 %s10, 2
    %s17 = sadd.s32 %s10, 1
    %s18 = ssub.s32 %s10, %s17
    %p19 = scmp.eq.s32.totalorder %s18, 0
    %s21 = sadd.s32 %s20, 1
    %s22 = scalar_select %p19, %s20, %s21
    %p25 = pneg %p19
    %p26 = scmp.eq.s32.totalorder %s10, 1
    %p27 = por %p25, %p26
    %p28 = scmp.ne.s32.totalorder %s20, %s23
    %p29 = scmp.eq.s32.totalorder %s10, 0
    %p30 = por %p28, %p29
    %p31 = scmp.ne.s32.totalorder %s20, %s23
    %p32 = scmp.eq.s32.totalorder %s15, 1
    %p33 = por %p31, %p32
    %p34 = scmp.ne.s32.totalorder %s23, %s24
    %p35 = scmp.eq.s32.totalorder %s15, 0
    %p36 = por %p34, %p35
    %p37 = scmp.ne.s32.totalorder %s23, %s24
    %p38 = scmp.eq.s32.totalorder %s16, 1
    %p39 = por %p37, %p38
    %p41 = scmp.ne.s32.totalorder %s24, %s40
    %p42 = scmp.eq.s32.totalorder %s16, 0
    %p43 = por %p41, %p42
    %s45 = sadd.s32 %s44, 1
    %p48 = scmp.eq.s32.totalorder %s10, 1
    %p49 = scmp.ne.s32.totalorder %s44, %s46
    %p50 = scmp.eq.s32.totalorder %s10, 0
    %p51 = por %p49, %p50
    %p52 = scmp.ne.s32.totalorder %s44, %s46
    %p53 = scmp.eq.s32.totalorder %s15, 1
    %p54 = por %p52, %p53
    %p55 = scmp.ne.s32.totalorder %s46, %s47
    %p56 = scmp.eq.s32.totalorder %s15, 0
    %p57 = por %p55, %p56
    %p58 = scmp.ne.s32.totalorder %s46, %s47
    %p59 = scmp.eq.s32.totalorder %s16, 1
    %p60 = por %p58, %p59
    %p62 = scmp.ne.s32.totalorder %s47, %s61
    %p63 = scmp.eq.s32.totalorder %s16, 0
    %p64 = por %p62, %p63
    %s66 = sadd.s32 %s65, 1
    %p69 = scmp.eq.s32.totalorder %s10, 1
    %p70 = scmp.ne.s32.totalorder %s65, %s67
    %p71 = scmp.eq.s32.totalorder %s10, 0
    %p72 = por %p70, %p71
    %p73 = scmp.ne.s32.totalorder %s65, %s67
    %p74 = scmp.eq.s32.totalorder %s15, 1
    %p75 = por %p73, %p74
    %p76 = scmp.ne.s32.totalorder %s67, %s68
    %p77 = scmp.eq.s32.totalorder %s15, 0
    %p78 = por %p76, %p77
    %p79 = scmp.ne.s32.totalorder %s67, %s68
    %p80 = scmp.eq.s32.totalorder %s16, 1
    %p81 = por %p79, %p80
    %p83 = scmp.ne.s32.totalorder %s68, %s82
    %p84 = scmp.eq.s32.totalorder %s16, 0
    %p85 = por %p83, %p84
    %s87 = sadd.s32 %s86, 1
    %p90 = scmp.eq.s32.totalorder %s10, 1
    %p91 = scmp.ne.s32.totalorder %s86, %s88
    %p92 = scmp.eq.s32.totalorder %s10, 0
    %p93 = por %p91, %p92
    %p94 = scmp.ne.s32.totalorder %s86, %s88
    %p95 = scmp.eq.s32.totalorder %s15, 1
    %p96 = por %p94, %p95
    %p97 = scmp.ne.s32.totalorder %s88, %s89
    %p98 = scmp.eq.s32.totalorder %s15, 0
    %p99 = por %p97, %p98
    %p100 = scmp.ne.s32.totalorder %s88, %s89
    %p101 = scmp.eq.s32.totalorder %s16, 1
    %p102 = por %p100, %p101
    %p104 = scmp.ne.s32.totalorder %s89, %s103
    %p105 = scmp.eq.s32.totalorder %s16, 0
    %p106 = por %p104, %p105
    %s107 = ssub.s32 %s10, %s17
    %p108 = scmp.eq.s32.totalorder %s107, 0
    %s110 = sadd.s32 %s109, 1
    %s111 = scalar_select %p108, %s109, %s110
    %p114 = pneg %p108
    %p115 = scmp.eq.s32.totalorder %s10, 1
    %p116 = por %p114, %p115
    %p117 = scmp.ne.s32.totalorder %s109, %s112
    %p118 = scmp.eq.s32.totalorder %s10, 0
    %p119 = por %p117, %p118
    %p120 = scmp.ne.s32.totalorder %s109, %s112
    %p121 = scmp.eq.s32.totalorder %s15, 1
    %p122 = por %p120, %p121
    %p123 = scmp.ne.s32.totalorder %s112, %s113
    %p124 = scmp.eq.s32.totalorder %s15, 0
    %p125 = por %p123, %p124
    %p126 = scmp.ne.s32.totalorder %s112, %s113
    %p127 = scmp.eq.s32.totalorder %s16, 1
    %p128 = por %p126, %p127
    %p130 = scmp.ne.s32.totalorder %s113, %s129
    %p131 = scmp.eq.s32.totalorder %s16, 0
    %p132 = por %p130, %p131
    %p133 = scmp.le.s32.totalorder 1, %s10
    %p134 = scmp.lt.s32.totalorder %s10, 3
    %p135 = pnand %p133, %p134
    %p136 = pneg %p135
    // Predicated region
    $region9: #{cassava_forward.4} parent=5 // pred_check
      _
    $region10: #{cassava_forward.4} parent=5 // pred_check_branch
      %138 = sbr.rel (%p135) target = $region12
    $region11: #{cassava_forward.4} parent=5 // pred_region
      %s139 = ssub.s32 %s10, 1
      // Predicated region
      $region13: #{cassava_forward.4} parent=11 // pred_check
        %p140 = pneg %p57
      $region14: #{cassava_forward.4} parent=11 // pred_check_branch
        %142 = sbr.rel (%p140) target = $region16
      $region15: #{cassava_forward.4} parent=11 // pred_region
        _
      $region16: #{cassava_forward.4} parent=11 // pred_fallthru
        _
      // Predicated region
      $region17: #{cassava_forward.4} parent=11 // pred_check
        %p143 = pneg %p78
      $region18: #{cassava_forward.4} parent=11 // pred_check_branch
        %145 = sbr.rel (%p143) target = $region20
      $region19: #{cassava_forward.4} parent=11 // pred_region
        _
      $region20: #{cassava_forward.4} parent=11 // pred_fallthru
        _
      // Predicated region
      $region21: #{cassava_forward.4} parent=11 // pred_check
        %p146 = pneg %p99
      $region22: #{cassava_forward.4} parent=11 // pred_check_branch
        %148 = sbr.rel (%p146) target = $region24
      $region23: #{cassava_forward.4} parent=11 // pred_region
        _
      $region24: #{cassava_forward.4} parent=11 // pred_fallthru
        _
    $region12: #{cassava_forward.4} parent=5 // pred_fallthru
      _
    %p149 = scmp.lt.s32.totalorder %s10, 2
    // Predicated region
    $region25: #{cassava_forward.4} parent=5 // pred_check
      %p150 = pneg %p149
    $region26: #{cassava_forward.4} parent=5 // pred_check_branch
      %152 = sbr.rel (%p150) target = $region28
    $region27: #{cassava_forward.4} parent=5 // pred_region
      // Predicated region
      $region29: #{cassava_forward.4} parent=27 // pred_check
        %p153 = pneg %p30
      $region30: #{cassava_forward.4} parent=27 // pred_check_branch
        %155 = sbr.rel (%p153) target = $region32
      $region31: #{cassava_forward.4} parent=27 // pred_region
        %s156 = smul.u32 32, %s10
        %p157 = scmp.lt.s32.totalorder %s156, 63
        %s158 = scalar_select %p157, %s156, 63
        %s159 = smul.addr %s158, 2
        %s160 = smul.addr %s159, 4
        %s161 = scalar_lea.vmem %s0, %s160
        %s162 = smul.u32 32, %s10
      $region32: #{cassava_forward.4} parent=27 // pred_fallthru
        _
    $region28: #{cassava_forward.4} parent=5 // pred_fallthru
      _
    %p163 = scmp.le.s32.totalorder 1, %s10
    %p164 = scmp.lt.s32.totalorder %s10, 3
    %p165 = pnand %p163, %p164
    %p166 = pneg %p165
    // Predicated region
    $region33: #{cassava_forward.4} parent=5 // pred_check
      _
    $region34: #{cassava_forward.4} parent=5 // pred_check_branch
      %168 = sbr.rel (%p165) target = $region36
    $region35: #{cassava_forward.4} parent=5 // pred_region
      %s169 = ssub.s32 %s10, 1
      %s170 = smul.u32 32, %s15
      %p171 = scmp.lt.s32.totalorder %s170, 63
      %s172 = scalar_select %p171, %s170, 63
      %s173 = smul.addr %s172, 2
      %s174 = smul.addr %s173, 4
      %s175 = scalar_lea.vmem %s0, %s174
      %p176 = pneg %p36
      %p177 = pneg %p33
      %p178 = pneg %p57
      %p179 = pneg %p54
      %p180 = pneg %p78
      %p181 = pneg %p75
      %p182 = pneg %p99
      %p183 = pneg %p96
      %p184 = pneg %p125
      %p185 = pneg %p122
      %s186 = smul.u32 32, %s15
      %p187 = scmp.lt.s32.totalorder %s186, 63
      %s188 = scalar_select %p187, %s186, 63
      %s189 = smul.addr %s188, 4
      %s190 = scalar_lea.vmem %s4, %s189
      %s191 = smul.u32 32, %s15
      %p192 = scmp.lt.s32.totalorder %s191, 63
      %s193 = scalar_select %p192, %s191, 63
      %s194 = smul.addr %s193, 2
      %s195 = smul.addr %s194, 4
      %s196 = scalar_lea.vmem %s0, %s195
      %s197 = smul.u32 32, %s15
      %s198 = smul.u32 32, %s15
      %p199 = scmp.lt.s32.totalorder %s198, 63
      %s200 = scalar_select %p199, %s198, 63
      %s201 = smul.addr %s200, 4
      %s202 = scalar_lea.vmem %s4, %s201
      %s203 = smul.u32 32, %s15
      %v205 = vld [vmem:[%s196] sm:$0xff]
      %v206 = vld [vmem:[%s196 + $0x8] sm:$0xff]
      %v207 = vld [vmem:[%s196 + $0x10] sm:$0xff]
      %v208 = vld [vmem:[%s196 + $0x18] sm:$0xff]
      %v209 = vld [vmem:[%s196 + $0x20] sm:$0xff]
      %v210 = vld [vmem:[%s196 + $0x28] sm:$0xff]
      %v211 = vld [vmem:[%s196 + $0x30] sm:$0xff]
      %v212 = vld [vmem:[%s196 + $0x38] sm:$0xff]
      %v213 = vld [vmem:[%s196 + $0x40] sm:$0xff]
      %v214 = vld [vmem:[%s196 + $0x48] sm:$0xff]
      %v215 = vld [vmem:[%s196 + $0x50] sm:$0xff]
      %v216 = vld [vmem:[%s196 + $0x58] sm:$0xff]
      %v217 = vld [vmem:[%s196 + $0x60] sm:$0xff]
      %v218 = vld [vmem:[%s196 + $0x68] sm:$0xff]
      %v219 = vld [vmem:[%s196 + $0x70] sm:$0xff]
      %v220 = vld [vmem:[%s196 + $0x78] sm:$0xff]
      %v221 = vld [vmem:[%s196 + $0x80] sm:$0xff]
      %v222 = vld [vmem:[%s196 + $0x88] sm:$0xff]
      %v223 = vld [vmem:[%s196 + $0x90] sm:$0xff]
      %v224 = vld [vmem:[%s196 + $0x98] sm:$0xff]
      %v225 = vld [vmem:[%s196 + $0xa0] sm:$0xff]
      %v226 = vld [vmem:[%s196 + $0xa8] sm:$0xff]
      %v227 = vld [vmem:[%s196 + $0xb0] sm:$0xff]
      %v228 = vld [vmem:[%s196 + $0xb8] sm:$0xff]
      %v229 = vld [vmem:[%s196 + $0xc0] sm:$0xff]
      %v230 = vld [vmem:[%s196 + $0xc8] sm:$0xff]
      %v231 = vld [vmem:[%s196 + $0xd0] sm:$0xff]
      %v232 = vld [vmem:[%s196 + $0xd8] sm:$0xff]
      %v233 = vld [vmem:[%s196 + $0xe0] sm:$0xff]
      %v234 = vld [vmem:[%s196 + $0xe8] sm:$0xff]
      %v235 = vld [vmem:[%s196 + $0xf0] sm:$0xff]
      %v236 = vld [vmem:[%s196 + $0xf8] sm:$0xff]
      %v237 = vld [vmem:[%s1] sm:$0xf]
      %v238 = vld [vmem:[%s1 + $0x4] sm:$0xf]
      %v239 = vld [vmem:[%s1 + $0x8] sm:$0xf]
      %v240 = vld [vmem:[%s1 + $0xc] sm:$0xf]
      %v241 = vld [vmem:[%s1 + $0x10] sm:$0xf]
      %v242 = vld [vmem:[%s1 + $0x14] sm:$0xf]
      %v243 = vld [vmem:[%s1 + $0x18] sm:$0xf]
      %v244 = vld [vmem:[%s1 + $0x1c] sm:$0xf]
      %v245 = vld [vmem:[%s1 + $0x20] sm:$0xf]
      %v246 = vld [vmem:[%s1 + $0x24] sm:$0xf]
      %v247 = vld [vmem:[%s1 + $0x28] sm:$0xf]
      %v248 = vld [vmem:[%s1 + $0x2c] sm:$0xf]
      %v249 = vld [vmem:[%s1 + $0x30] sm:$0xf]
      %v250 = vld [vmem:[%s1 + $0x34] sm:$0xf]
      %v251 = vld [vmem:[%s1 + $0x38] sm:$0xf]
      %v252 = vld [vmem:[%s1 + $0x3c] sm:$0xf]
      %v253 = vld [vmem:[%s1 + $0x40] sm:$0xf]
      %v254 = vld [vmem:[%s1 + $0x44] sm:$0xf]
      %v255 = vld [vmem:[%s1 + $0x48] sm:$0x3]
      %v288 = vunpack.c.l.b16 %v205
      %v289 = vunpack.c.h.b16 %v205
      %v290 = vunpack.c.l.b16 %v206
      %v291 = vunpack.c.h.b16 %v206
      %v292 = vunpack.c.l.b16 %v207
      %v293 = vunpack.c.h.b16 %v207
      %v294 = vunpack.c.l.b16 %v208
      %v295 = vunpack.c.h.b16 %v208
      %v296 = vunpack.c.l.b16 %v209
      %v297 = vunpack.c.h.b16 %v209
      %v298 = vunpack.c.l.b16 %v210
      %v299 = vunpack.c.h.b16 %v210
      %v300 = vunpack.c.l.b16 %v211
      %v301 = vunpack.c.h.b16 %v211
      %v302 = vunpack.c.l.b16 %v212
      %v303 = vunpack.c.h.b16 %v212
      %v304 = vunpack.c.l.b16 %v213
      %v305 = vunpack.c.h.b16 %v213
      %v306 = vunpack.c.l.b16 %v214
      %v307 = vunpack.c.h.b16 %v214
      %v308 = vunpack.c.l.b16 %v215
      %v309 = vunpack.c.h.b16 %v215
      %v310 = vunpack.c.l.b16 %v216
      %v311 = vunpack.c.h.b16 %v216
      %v312 = vunpack.c.l.b16 %v217
      %v313 = vunpack.c.h.b16 %v217
      %v314 = vunpack.c.l.b16 %v218
      %v315 = vunpack.c.h.b16 %v218
      %v316 = vunpack.c.l.b16 %v219
      %v317 = vunpack.c.h.b16 %v219
      %v318 = vunpack.c.l.b16 %v220
      %v319 = vunpack.c.h.b16 %v220
      %v320 = vunpack.c.l.b16 %v221
      %v321 = vunpack.c.h.b16 %v221
      %v322 = vunpack.c.l.b16 %v222
      %v323 = vunpack.c.h.b16 %v222
      %v324 = vunpack.c.l.b16 %v223
      %v325 = vunpack.c.h.b16 %v223
      %v326 = vunpack.c.l.b16 %v224
      %v327 = vunpack.c.h.b16 %v224
      %v328 = vunpack.c.l.b16 %v225
      %v329 = vunpack.c.h.b16 %v225
      %v330 = vunpack.c.l.b16 %v226
      %v331 = vunpack.c.h.b16 %v226
      %v332 = vunpack.c.l.b16 %v227
      %v333 = vunpack.c.h.b16 %v227
      %v334 = vunpack.c.l.b16 %v228
      %v335 = vunpack.c.h.b16 %v228
      %v336 = vunpack.c.l.b16 %v229
      %v337 = vunpack.c.h.b16 %v229
      %v338 = vunpack.c.l.b16 %v230
      %v339 = vunpack.c.h.b16 %v230
      %v340 = vunpack.c.l.b16 %v231
      %v341 = vunpack.c.h.b16 %v231
      %v342 = vunpack.c.l.b16 %v232
      %v343 = vunpack.c.h.b16 %v232
      %v344 = vunpack.c.l.b16 %v233
      %v345 = vunpack.c.h.b16 %v233
      %v346 = vunpack.c.l.b16 %v234
      %v347 = vunpack.c.h.b16 %v234
      %v348 = vunpack.c.l.b16 %v235
      %v349 = vunpack.c.h.b16 %v235
      %v350 = vunpack.c.l.b16 %v236
      %v351 = vunpack.c.h.b16 %v236
      %v352 = vpack.c.b16 %v290, %v288
      %v353 = vpack.c.b16 %v291, %v289
      %v354 = vpack.c.b16 %v294, %v292
      %v355 = vpack.c.b16 %v295, %v293
      %v356 = vpack.c.b16 %v298, %v296
      %v357 = vpack.c.b16 %v299, %v297
      %v358 = vpack.c.b16 %v302, %v300
      %v359 = vpack.c.b16 %v303, %v301
      %v360 = vpack.c.b16 %v306, %v304
      %v361 = vpack.c.b16 %v307, %v305
      %v362 = vpack.c.b16 %v310, %v308
      %v363 = vpack.c.b16 %v311, %v309
      %v364 = vpack.c.b16 %v314, %v312
      %v365 = vpack.c.b16 %v315, %v313
      %v366 = vpack.c.b16 %v318, %v316
      %v367 = vpack.c.b16 %v319, %v317
      %v368 = vpack.c.b16 %v322, %v320
      %v369 = vpack.c.b16 %v323, %v321
      %v370 = vpack.c.b16 %v326, %v324
      %v371 = vpack.c.b16 %v327, %v325
      %v372 = vpack.c.b16 %v330, %v328
      %v373 = vpack.c.b16 %v331, %v329
      %v374 = vpack.c.b16 %v334, %v332
      %v375 = vpack.c.b16 %v335, %v333
      %v376 = vpack.c.b16 %v338, %v336
      %v377 = vpack.c.b16 %v339, %v337
      %v378 = vpack.c.b16 %v342, %v340
      %v379 = vpack.c.b16 %v343, %v341
      %v380 = vpack.c.b16 %v346, %v344
      %v381 = vpack.c.b16 %v347, %v345
      %v382 = vpack.c.b16 %v350, %v348
      %v383 = vpack.c.b16 %v351, %v349
      %v419 = vunpack.c.l.b16 %v237
      %v420 = vunpack.c.l.b16 %v238
      %v421 = vunpack.c.l.b16 %v239
      %v422 = vunpack.c.l.b16 %v240
      %v423 = vunpack.c.l.b16 %v241
      %v424 = vunpack.c.l.b16 %v242
      %v425 = vunpack.c.l.b16 %v243
      %v426 = vunpack.c.l.b16 %v244
      %v427 = vunpack.c.l.b16 %v245
      %v428 = vunpack.c.l.b16 %v246
      %v429 = vunpack.c.l.b16 %v247
      %v430 = vunpack.c.l.b16 %v248
      %v431 = vunpack.c.l.b16 %v249
      %v432 = vunpack.c.l.b16 %v250
      %v433 = vunpack.c.l.b16 %v251
      %v434 = vunpack.c.l.b16 %v252
      %v435 = vunpack.c.l.b16 %v253
      %v436 = vunpack.c.l.b16 %v254
      %v437 = vunpack.c.l.b16 %v255
      %v438 = vpack.c.b16 %v420, %v419
      %v439 = vpack.c.b16 %v422, %v421
      %v440 = vpack.c.b16 %v424, %v423
      %v441 = vpack.c.b16 %v426, %v425
      %v442 = vpack.c.b16 %v428, %v427
      %v443 = vpack.c.b16 %v430, %v429
      %v444 = vpack.c.b16 %v432, %v431
      %v445 = vpack.c.b16 %v434, %v433
      %v446 = vpack.c.b16 %v436, %v435
      %v447 = vpack.c.b16 %v437, %v437
      %vm457 = vcmask 154624
      %v459 = vsel %vm457, %v353, 0
      %v462 = vsel %vm457, %v355, 0
      %v465 = vsel %vm457, %v357, 0
      %v468 = vsel %vm457, %v359, 0
      %v471 = vsel %vm457, %v361, 0
      %v474 = vsel %vm457, %v363, 0
      %v477 = vsel %vm457, %v365, 0
      %v480 = vsel %vm457, %v367, 0
      %v483 = vsel %vm457, %v369, 0
      %v486 = vsel %vm457, %v371, 0
      %v489 = vsel %vm457, %v373, 0
      %v492 = vsel %vm457, %v375, 0
      %v495 = vsel %vm457, %v377, 0
      %v498 = vsel %vm457, %v379, 0
      %v501 = vsel %vm457, %v381, 0
      %v504 = vsel %vm457, %v383, 0
      %vm506 = vcmask 1040384
      %vm507 = vcmask 1041408
      %v508 = vsel %vm506, 4294967295, 65535
      %v509 = vsel %vm507, %v508, 0
      %v511 = vand.u32 %v447, %v509
      %513 = vmatprep.subr.bf16.mxu0 0
      %514 = vmatpush1.bf16.msra.mxu0 %v438
      %515 = vmatprep.subr.bf16.mxu0 0
      %516 = vmatpush1.bf16.msra.mxu0 %v439
      %517 = vmatprep.subr.bf16.mxu0 0
      %518 = vmatpush1.bf16.msra.mxu0 %v440
      %519 = vmatprep.subr.bf16.mxu0 0
      %520 = vmatpush1.bf16.msra.mxu0 %v441
      %521 = vmatprep.subr.bf16.mxu0 0
      %522 = vmatpush1.bf16.msra.mxu0 %v442
      %523 = vmatprep.subr.bf16.mxu0 0
      %524 = vmatpush1.bf16.msra.mxu0 %v443
      %525 = vmatprep.subr.bf16.mxu0 0
      %526 = vmatpush1.bf16.msra.mxu0 %v444
      %527 = vmatprep.subr.bf16.mxu0 0
      %528 = vmatpush1.bf16.msra.mxu0 %v445
      %529 = vmatprep.subr.bf16.mxu0 0
      %530 = vmatpush1.bf16.msra.mxu0 %v446
      %531 = vmatprep.subr.bf16.mxu0 0
      %532 = vmatpush1.bf16.msra.mxu0 %v511
      %533 = vmatprep.subr.bf16.mxu0 0
      %534 = vmatpush1.bf16.msra.mxu0 0
      %535 = vmatprep.subr.bf16.mxu0 0
      %536 = vmatpush1.bf16.msra.mxu0 0
      %537 = vmatprep.subr.bf16.mxu0 0
      %538 = vmatpush1.bf16.msra.mxu0 0
      %539 = vmatprep.subr.bf16.mxu0 0
      %540 = vmatpush1.bf16.msra.mxu0 0
      %541 = vmatprep.subr.bf16.mxu0 0
      %542 = vmatpush1.bf16.msra.mxu0 0
      %543 = vmatprep.subr.bf16.mxu0 0
      %544 = vmatpush1.bf16.msra.mxu0 0
      %545 = vmatprep.mubr.bf16.mxu0 %v459
      %546 = vmatmul.mubr.bf16.gmra.mrb[0].mxu0 %v352
      %v547 = vpop.f32.mrb[0].mxu0
      %v548 = vadd.f32 0.0, %v547
      %v549 = vpop.f32.mrb[0].mxu0
      %v550 = vpop.f32.mrb[0].mxu0
      %v551 = vadd.f32 0.0, %v550
      %v552 = vpop.f32.mrb[0].mxu0
      %553 = vmatprep.mubr.bf16.mxu0 %v462
      %554 = vmatmul.mubr.bf16.gmra.mrb[0].mxu0 %v354
      %v555 = vpop.f32.mrb[0].mxu0
      %v556 = vadd.f32 0.0, %v555
      %v557 = vpop.f32.mrb[0].mxu0
      %v558 = vpop.f32.mrb[0].mxu0
      %v559 = vadd.f32 0.0, %v558
      %v560 = vpop.f32.mrb[0].mxu0
      %561 = vmatprep.mubr.bf16.mxu0 %v465
      %562 = vmatmul.mubr.bf16.gmra.mrb[0].mxu0 %v356
      %v563 = vpop.f32.mrb[0].mxu0
      %v564 = vadd.f32 0.0, %v563
      %v565 = vpop.f32.mrb[0].mxu0
      %v566 = vpop.f32.mrb[0].mxu0
      %v567 = vadd.f32 0.0, %v566
      %v568 = vpop.f32.mrb[0].mxu0
      %569 = vmatprep.mubr.bf16.mxu0 %v468
      %570 = vmatmul.mubr.bf16.gmra.mrb[0].mxu0 %v358
      %v571 = vpop.f32.mrb[0].mxu0
      %v572 = vadd.f32 0.0, %v571
      %v573 = vpop.f32.mrb[0].mxu0
      %v574 = vpop.f32.mrb[0].mxu0
      %v575 = vadd.f32 0.0, %v574
      %v576 = vpop.f32.mrb[0].mxu0
      %577 = vmatprep.mubr.bf16.mxu0 %v471
      %578 = vmatmul.mubr.bf16.gmra.mrb[0].mxu0 %v360
      %v579 = vpop.f32.mrb[0].mxu0
      %v580 = vadd.f32 0.0, %v579
      %v581 = vpop.f32.mrb[0].mxu0
      %v582 = vpop.f32.mrb[0].mxu0
      %v583 = vadd.f32 0.0, %v582
      %v584 = vpop.f32.mrb[0].mxu0
      %585 = vmatprep.mubr.bf16.mxu0 %v474
      %586 = vmatmul.mubr.bf16.gmra.mrb[0].mxu0 %v362
      %v587 = vpop.f32.mrb[0].mxu0
      %v588 = vadd.f32 0.0, %v587
      %v589 = vpop.f32.mrb[0].mxu0
      %v590 = vpop.f32.mrb[0].mxu0
      %v591 = vadd.f32 0.0, %v590
      %v592 = vpop.f32.mrb[0].mxu0
      %593 = vmatprep.mubr.bf16.mxu0 %v477
      %594 = vmatmul.mubr.bf16.gmra.mrb[0].mxu0 %v364
      %v595 = vpop.f32.mrb[0].mxu0
      %v596 = vadd.f32 0.0, %v595
      %v597 = vpop.f32.mrb[0].mxu0
      %v598 = vpop.f32.mrb[0].mxu0
      %v599 = vadd.f32 0.0, %v598
      %v600 = vpop.f32.mrb[0].mxu0
      %601 = vmatprep.mubr.bf16.mxu0 %v480
      %602 = vmatmul.mubr.bf16.gmra.mrb[0].mxu0 %v366
      %v603 = vpop.f32.mrb[0].mxu0
      %v604 = vadd.f32 0.0, %v603
      %v605 = vpop.f32.mrb[0].mxu0
      %v606 = vpop.f32.mrb[0].mxu0
      %v607 = vadd.f32 0.0, %v606
      %v608 = vpop.f32.mrb[0].mxu0
      %609 = vmatprep.mubr.bf16.mxu0 %v483
      %610 = vmatmul.mubr.bf16.gmra.mrb[0].mxu0 %v368
      %v611 = vpop.f32.mrb[0].mxu0
      %v612 = vadd.f32 0.0, %v611
      %v613 = vpop.f32.mrb[0].mxu0
      %v614 = vpop.f32.mrb[0].mxu0
      %v615 = vadd.f32 0.0, %v614
      %v616 = vpop.f32.mrb[0].mxu0
      %617 = vmatprep.mubr.bf16.mxu0 %v486
      %618 = vmatmul.mubr.bf16.gmra.mrb[0].mxu0 %v370
      %v619 = vpop.f32.mrb[0].mxu0
      %v620 = vadd.f32 0.0, %v619
      %v621 = vpop.f32.mrb[0].mxu0
      %v622 = vpop.f32.mrb[0].mxu0
      %v623 = vadd.f32 0.0, %v622
      %v624 = vpop.f32.mrb[0].mxu0
      %625 = vmatprep.mubr.bf16.mxu0 %v489
      %626 = vmatmul.mubr.bf16.gmra.mrb[0].mxu0 %v372
      %v627 = vpop.f32.mrb[0].mxu0
      %v628 = vadd.f32 0.0, %v627
      %v629 = vpop.f32.mrb[0].mxu0
      %v630 = vpop.f32.mrb[0].mxu0
      %v631 = vadd.f32 0.0, %v630
      %v632 = vpop.f32.mrb[0].mxu0
      %633 = vmatprep.mubr.bf16.mxu0 %v492
      %634 = vmatmul.mubr.bf16.gmra.mrb[0].mxu0 %v374
      %v635 = vpop.f32.mrb[0].mxu0
      %v636 = vadd.f32 0.0, %v635
      %v637 = vpop.f32.mrb[0].mxu0
      %v638 = vpop.f32.mrb[0].mxu0
      %v639 = vadd.f32 0.0, %v638
      %v640 = vpop.f32.mrb[0].mxu0
      %641 = vmatprep.mubr.bf16.mxu0 %v495
      %642 = vmatmul.mubr.bf16.gmra.mrb[0].mxu0 %v376
      %v643 = vpop.f32.mrb[0].mxu0
      %v644 = vadd.f32 0.0, %v643
      %v645 = vpop.f32.mrb[0].mxu0
      %v646 = vpop.f32.mrb[0].mxu0
      %v647 = vadd.f32 0.0, %v646
      %v648 = vpop.f32.mrb[0].mxu0
      %649 = vmatprep.mubr.bf16.mxu0 %v498
      %650 = vmatmul.mubr.bf16.gmra.mrb[0].mxu0 %v378
      %v651 = vpop.f32.mrb[0].mxu0
      %v652 = vadd.f32 0.0, %v651
      %v653 = vpop.f32.mrb[0].mxu0
      %v654 = vpop.f32.mrb[0].mxu0
      %v655 = vadd.f32 0.0, %v654
      %v656 = vpop.f32.mrb[0].mxu0
      %657 = vmatprep.mubr.bf16.mxu0 %v501
      %658 = vmatmul.mubr.bf16.gmra.mrb[0].mxu0 %v380
      %v659 = vpop.f32.mrb[0].mxu0
      %v660 = vadd.f32 0.0, %v659
      %v661 = vpop.f32.mrb[0].mxu0
      %v662 = vpop.f32.mrb[0].mxu0
      %v663 = vadd.f32 0.0, %v662
      %v664 = vpop.f32.mrb[0].mxu0
      %665 = vmatprep.mubr.bf16.mxu0 %v504
      %666 = vmatmul.mubr.bf16.gmra.mrb[0].mxu0 %v382
      %v667 = vpop.f32.mrb[0].mxu0
      %v668 = vadd.f32 0.0, %v667
      %v669 = vpop.f32.mrb[0].mxu0
      %v670 = vpop.f32.mrb[0].mxu0
      %v671 = vadd.f32 0.0, %v670
      %v672 = vpop.f32.mrb[0].mxu0
      %673 = vdwg.mxu0
      %v674 = vld [vmem:[%s2] sm:$0x1]
      %v676 = vlaneseq
      %v677 = vshrl.u32 %v676, 7
      %v678 = vsub.s32 0, %v677
      %v679 = vrot.slane %v674, %v678
      %v681 = vmul.f32 %v548, %v679
      %v682 = vmul.f32 %v551, %v679
      %v683 = vmul.f32 %v556, %v679
      %v684 = vmul.f32 %v559, %v679
      %v685 = vmul.f32 %v564, %v679
      %v686 = vmul.f32 %v567, %v679
      %v687 = vmul.f32 %v572, %v679
      %v688 = vmul.f32 %v575, %v679
      %v689 = vmul.f32 %v580, %v679
      %v690 = vmul.f32 %v583, %v679
      %v691 = vmul.f32 %v588, %v679
      %v692 = vmul.f32 %v591, %v679
      %v693 = vmul.f32 %v596, %v679
      %v694 = vmul.f32 %v599, %v679
      %v695 = vmul.f32 %v604, %v679
      %v696 = vmul.f32 %v607, %v679
      %v697 = vmul.f32 %v612, %v679
      %v698 = vmul.f32 %v615, %v679
      %v699 = vmul.f32 %v620, %v679
      %v700 = vmul.f32 %v623, %v679
      %v701 = vmul.f32 %v628, %v679
      %v702 = vmul.f32 %v631, %v679
      %v703 = vmul.f32 %v636, %v679
      %v704 = vmul.f32 %v639, %v679
      %v705 = vmul.f32 %v644, %v679
      %v706 = vmul.f32 %v647, %v679
      %v707 = vmul.f32 %v652, %v679
      %v708 = vmul.f32 %v655, %v679
      %v709 = vmul.f32 %v660, %v679
      %v710 = vmul.f32 %v663, %v679
      %v711 = vmul.f32 %v668, %v679
      %v712 = vmul.f32 %v671, %v679
      %v713 = vld [vmem:[%s3] sm:$0x1]
      %v715 = vlaneseq
      %v716 = vshrl.u32 %v715, 7
      %v717 = vsub.s32 0, %v716
      %v718 = vrot.slane %v713, %v717
      %v720 = vadd.f32 %v681, %v718
      %v721 = vadd.f32 %v682, %v718
      %v722 = vadd.f32 %v683, %v718
      %v723 = vadd.f32 %v684, %v718
      %v724 = vadd.f32 %v685, %v718
      %v725 = vadd.f32 %v686, %v718
      %v726 = vadd.f32 %v687, %v718
      %v727 = vadd.f32 %v688, %v718
      %v728 = vadd.f32 %v689, %v718
      %v729 = vadd.f32 %v690, %v718
      %v730 = vadd.f32 %v691, %v718
      %v731 = vadd.f32 %v692, %v718
      %v732 = vadd.f32 %v693, %v718
      %v733 = vadd.f32 %v694, %v718
      %v734 = vadd.f32 %v695, %v718
      %v735 = vadd.f32 %v696, %v718
      %v736 = vadd.f32 %v697, %v718
      %v737 = vadd.f32 %v698, %v718
      %v738 = vadd.f32 %v699, %v718
      %v739 = vadd.f32 %v700, %v718
      %v740 = vadd.f32 %v701, %v718
      %v741 = vadd.f32 %v702, %v718
      %v742 = vadd.f32 %v703, %v718
      %v743 = vadd.f32 %v704, %v718
      %v744 = vadd.f32 %v705, %v718
      %v745 = vadd.f32 %v706, %v718
      %v746 = vadd.f32 %v707, %v718
      %v747 = vadd.f32 %v708, %v718
      %v748 = vadd.f32 %v709, %v718
      %v749 = vadd.f32 %v710, %v718
      %v750 = vadd.f32 %v711, %v718
      %v751 = vadd.f32 %v712, %v718
      %v752 = vmax.f32 %v720, 0.0
      %v753 = vmax.f32 %v721, 0.0
      %v754 = vmax.f32 %v722, 0.0
      %v755 = vmax.f32 %v723, 0.0
      %v756 = vmax.f32 %v724, 0.0
      %v757 = vmax.f32 %v725, 0.0
      %v758 = vmax.f32 %v726, 0.0
      %v759 = vmax.f32 %v727, 0.0
      %v760 = vmax.f32 %v728, 0.0
      %v761 = vmax.f32 %v729, 0.0
      %v762 = vmax.f32 %v730, 0.0
      %v763 = vmax.f32 %v731, 0.0
      %v764 = vmax.f32 %v732, 0.0
      %v765 = vmax.f32 %v733, 0.0
      %v766 = vmax.f32 %v734, 0.0
      %v767 = vmax.f32 %v735, 0.0
      %v768 = vmax.f32 %v736, 0.0
      %v769 = vmax.f32 %v737, 0.0
      %v770 = vmax.f32 %v738, 0.0
      %v771 = vmax.f32 %v739, 0.0
      %v772 = vmax.f32 %v740, 0.0
      %v773 = vmax.f32 %v741, 0.0
      %v774 = vmax.f32 %v742, 0.0
      %v775 = vmax.f32 %v743, 0.0
      %v776 = vmax.f32 %v744, 0.0
      %v777 = vmax.f32 %v745, 0.0
      %v778 = vmax.f32 %v746, 0.0
      %v779 = vmax.f32 %v747, 0.0
      %v780 = vmax.f32 %v748, 0.0
      %v781 = vmax.f32 %v749, 0.0
      %v782 = vmax.f32 %v750, 0.0
      %v783 = vmax.f32 %v751, 0.0
      %v784 = vpack.c.bf16 %v753, %v752
      %v785 = vpack.c.bf16 %v755, %v754
      %v786 = vpack.c.bf16 %v757, %v756
      %v787 = vpack.c.bf16 %v759, %v758
      %v788 = vpack.c.bf16 %v761, %v760
      %v789 = vpack.c.bf16 %v763, %v762
      %v790 = vpack.c.bf16 %v765, %v764
      %v791 = vpack.c.bf16 %v767, %v766
      %v792 = vpack.c.bf16 %v769, %v768
      %v793 = vpack.c.bf16 %v771, %v770
      %v794 = vpack.c.bf16 %v773, %v772
      %v795 = vpack.c.bf16 %v775, %v774
      %v796 = vpack.c.bf16 %v777, %v776
      %v797 = vpack.c.bf16 %v779, %v778
      %v798 = vpack.c.bf16 %v781, %v780
      %v799 = vpack.c.bf16 %v783, %v782
      %v816 = vunpack.c.l.b16 %v784
      %v817 = vunpack.c.h.b16 %v784
      %v818 = vunpack.c.l.b16 %v785
      %v819 = vunpack.c.h.b16 %v785
      %v820 = vunpack.c.l.b16 %v786
      %v821 = vunpack.c.h.b16 %v786
      %v822 = vunpack.c.l.b16 %v787
      %v823 = vunpack.c.h.b16 %v787
      %v824 = vunpack.c.l.b16 %v788
      %v825 = vunpack.c.h.b16 %v788
      %v826 = vunpack.c.l.b16 %v789
      %v827 = vunpack.c.h.b16 %v789
      %v828 = vunpack.c.l.b16 %v790
      %v829 = vunpack.c.h.b16 %v790
      %v830 = vunpack.c.l.b16 %v791
      %v831 = vunpack.c.h.b16 %v791
      %v832 = vunpack.c.l.b16 %v792
      %v833 = vunpack.c.h.b16 %v792
      %v834 = vunpack.c.l.b16 %v793
      %v835 = vunpack.c.h.b16 %v793
      %v836 = vunpack.c.l.b16 %v794
      %v837 = vunpack.c.h.b16 %v794
      %v838 = vunpack.c.l.b16 %v795
      %v839 = vunpack.c.h.b16 %v795
      %v840 = vunpack.c.l.b16 %v796
      %v841 = vunpack.c.h.b16 %v796
      %v842 = vunpack.c.l.b16 %v797
      %v843 = vunpack.c.h.b16 %v797
      %v844 = vunpack.c.l.b16 %v798
      %v845 = vunpack.c.h.b16 %v798
      %v846 = vunpack.c.l.b16 %v799
      %v847 = vunpack.c.h.b16 %v799
      %v848 = vpack.c.b16 %v816, %v816
      %v849 = vpack.c.b16 %v817, %v817
      %v850 = vpack.c.b16 %v818, %v818
      %v851 = vpack.c.b16 %v819, %v819
      %v852 = vpack.c.b16 %v820, %v820
      %v853 = vpack.c.b16 %v821, %v821
      %v854 = vpack.c.b16 %v822, %v822
      %v855 = vpack.c.b16 %v823, %v823
      %v856 = vpack.c.b16 %v824, %v824
      %v857 = vpack.c.b16 %v825, %v825
      %v858 = vpack.c.b16 %v826, %v826
      %v859 = vpack.c.b16 %v827, %v827
      %v860 = vpack.c.b16 %v828, %v828
      %v861 = vpack.c.b16 %v829, %v829
      %v862 = vpack.c.b16 %v830, %v830
      %v863 = vpack.c.b16 %v831, %v831
      %v864 = vpack.c.b16 %v832, %v832
      %v865 = vpack.c.b16 %v833, %v833
      %v866 = vpack.c.b16 %v834, %v834
      %v867 = vpack.c.b16 %v835, %v835
      %v868 = vpack.c.b16 %v836, %v836
      %v869 = vpack.c.b16 %v837, %v837
      %v870 = vpack.c.b16 %v838, %v838
      %v871 = vpack.c.b16 %v839, %v839
      %v872 = vpack.c.b16 %v840, %v840
      %v873 = vpack.c.b16 %v841, %v841
      %v874 = vpack.c.b16 %v842, %v842
      %v875 = vpack.c.b16 %v843, %v843
      %v876 = vpack.c.b16 %v844, %v844
      %v877 = vpack.c.b16 %v845, %v845
      %v878 = vpack.c.b16 %v846, %v846
      %v879 = vpack.c.b16 %v847, %v847
      %912 = vst [vmem:[%s202] sm:$0xf] %v848
      %913 = vst [vmem:[%s202 + $0x4] sm:$0xf] %v849
      %914 = vst [vmem:[%s202 + $0x8] sm:$0xf] %v850
      %915 = vst [vmem:[%s202 + $0xc] sm:$0xf] %v851
      %916 = vst [vmem:[%s202 + $0x10] sm:$0xf] %v852
      %917 = vst [vmem:[%s202 + $0x14] sm:$0xf] %v853
      %918 = vst [vmem:[%s202 + $0x18] sm:$0xf] %v854
      %919 = vst [vmem:[%s202 + $0x1c] sm:$0xf] %v855
      %920 = vst [vmem:[%s202 + $0x20] sm:$0xf] %v856
      %921 = vst [vmem:[%s202 + $0x24] sm:$0xf] %v857
      %922 = vst [vmem:[%s202 + $0x28] sm:$0xf] %v858
      %923 = vst [vmem:[%s202 + $0x2c] sm:$0xf] %v859
      %924 = vst [vmem:[%s202 + $0x30] sm:$0xf] %v860
      %925 = vst [vmem:[%s202 + $0x34] sm:$0xf] %v861
      %926 = vst [vmem:[%s202 + $0x38] sm:$0xf] %v862
      %927 = vst [vmem:[%s202 + $0x3c] sm:$0xf] %v863
      %928 = vst [vmem:[%s202 + $0x40] sm:$0xf] %v864
      %929 = vst [vmem:[%s202 + $0x44] sm:$0xf] %v865
      %930 = vst [vmem:[%s202 + $0x48] sm:$0xf] %v866
      %931 = vst [vmem:[%s202 + $0x4c] sm:$0xf] %v867
      %932 = vst [vmem:[%s202 + $0x50] sm:$0xf] %v868
      %933 = vst [vmem:[%s202 + $0x54] sm:$0xf] %v869
      %934 = vst [vmem:[%s202 + $0x58] sm:$0xf] %v870
      %935 = vst [vmem:[%s202 + $0x5c] sm:$0xf] %v871
      %936 = vst [vmem:[%s202 + $0x60] sm:$0xf] %v872
      %937 = vst [vmem:[%s202 + $0x64] sm:$0xf] %v873
      %938 = vst [vmem:[%s202 + $0x68] sm:$0xf] %v874
      %939 = vst [vmem:[%s202 + $0x6c] sm:$0xf] %v875
      %940 = vst [vmem:[%s202 + $0x70] sm:$0xf] %v876
      %941 = vst [vmem:[%s202 + $0x74] sm:$0xf] %v877
      %942 = vst [vmem:[%s202 + $0x78] sm:$0xf] %v878
      %943 = vst [vmem:[%s202 + $0x7c] sm:$0xf] %v879
      %s944 = smul.u32 32, %s15
      %p945 = scmp.lt.s32.totalorder %s944, 63
      %s946 = scalar_select %p945, %s944, 63
      %s947 = smul.addr %s946, 4
      %s948 = scalar_lea.vmem %s4, %s947
      // Predicated region
      $region37: #{cassava_forward.4} parent=35 // pred_check
        %p949 = pneg %p122
      $region38: #{cassava_forward.4} parent=35 // pred_check_branch
        %951 = sbr.rel (%p949) target = $region40
      $region39: #{cassava_forward.4} parent=35 // pred_region
        %s952 = smul.u32 32, %s15
      $region40: #{cassava_forward.4} parent=35 // pred_fallthru
        _
    $region36: #{cassava_forward.4} parent=5 // pred_fallthru
      _
    %p953 = scmp.le.s32.totalorder 2, %s10
    // Predicated region
    $region41: #{cassava_forward.4} parent=5 // pred_check
      %p954 = pneg %p953
    $region42: #{cassava_forward.4} parent=5 // pred_check_branch
      %956 = sbr.rel (%p954) target = $region44
    $region43: #{cassava_forward.4} parent=5 // pred_region
      %s957 = ssub.s32 %s10, 2
      // Predicated region
      $region45: #{cassava_forward.4} parent=43 // pred_check
        %p958 = pneg %p128
      $region46: #{cassava_forward.4} parent=43 // pred_check_branch
        %960 = sbr.rel (%p958) target = $region48
      $region47: #{cassava_forward.4} parent=43 // pred_region
        %s961 = smul.u32 32, %s16
        %p962 = scmp.lt.s32.totalorder %s961, 63
        %s963 = scalar_select %p962, %s961, 63
        %s964 = smul.addr %s963, 4
        %s965 = scalar_lea.vmem %s4, %s964
      $region48: #{cassava_forward.4} parent=43 // pred_fallthru
        _
    $region44: #{cassava_forward.4} parent=5 // pred_fallthru
      _
  $region6: #{cassava_forward.4} parent=0 // loop_footer
    %s14 = sadd.s32 1, %s10
  $region7: #{cassava_forward.4} parent=0 // loop_footer_branch
    %9 = sbr.rel target = $region3
  $region8: #{cassava_forward.4} parent=0 // loop_exit
    _

// kernel: cassava_forward.6
$region0: #{cassava_forward.6}
  #allocation0 [shape = 'u32[]', space=smem, size = 0x4, offset = 0x4, fixed_abs, tag = 'smem constant byte address 0x4 - core index']
  #allocation1 [shape = 'u32[144,128]{1,0:T(1,128)}', space=vmem, size = 0x12000, scoped, tag = 'internal scratch']
  %s0 = inlined_call_operand.vmem [shape: bf16[128,128], index: 0, kind: input, shape index: {}]
  %s1 = inlined_call_operand.vmem [shape: bf16[128,128], index: 1, kind: input, shape index: {}]
  %s2 = inlined_call_operand.vmem [shape: f32[1,128], index: 2, kind: input, shape index: {}]
  %s3 = inlined_call_operand.vmem [shape: f32[1,128], index: 3, kind: input, shape index: {}]
  %s4 = inlined_call_operand.vmem [shape: bf16[128,128], index: 4, kind: output, shape index: {}]
  %s5 = sld [smem:[#allocation0]]
  $region26: #{cassava_forward.6} parent=0
    _
  %s7 = ssub.s32 1, %s5
  %s8 = scalar_select 0, %s7, %s5
  // Predicated region
  $region2: #{cassava_forward.6} parent=0 // pred_check
    _
  $region3: #{cassava_forward.6} parent=0 // pred_check_branch
    %10 = sbr.rel (0) target = $region5
  $region4: #{cassava_forward.6} parent=0 // pred_region
    _
  $region5: #{cassava_forward.6} parent=0 // pred_fallthru
    _
  // Predicated region
  $region6: #{cassava_forward.6} parent=0 // pred_check
    _
  $region7: #{cassava_forward.6} parent=0 // pred_check_branch
    %12 = sbr.rel (0) target = $region9
  $region8: #{cassava_forward.6} parent=0 // pred_region
    _
  $region9: #{cassava_forward.6} parent=0 // pred_fallthru
    _
  // Predicated region
  $region10: #{cassava_forward.6} parent=0 // pred_check
    _
  $region11: #{cassava_forward.6} parent=0 // pred_check_branch
    %14 = sbr.rel (0) target = $region13
  $region12: #{cassava_forward.6} parent=0 // pred_region
    _
  $region13: #{cassava_forward.6} parent=0 // pred_fallthru
    _
  // Predicated region
  $region14: #{cassava_forward.6} parent=0 // pred_check
    _
  $region15: #{cassava_forward.6} parent=0 // pred_check_branch
    %16 = sbr.rel (0) target = $region17
  $region16: #{cassava_forward.6} parent=0 // pred_region
    _
  $region17: #{cassava_forward.6} parent=0 // pred_fallthru
    _
  %v18 = vld [vmem:[%s0] sm:$0xf]
  %v19 = vld [vmem:[%s0 + $0x4] sm:$0xf]
  %v20 = vld [vmem:[%s0 + $0x8] sm:$0xf]
  %v21 = vld [vmem:[%s0 + $0xc] sm:$0xf]
  %v22 = vld [vmem:[%s0 + $0x10] sm:$0xf]
  %v23 = vld [vmem:[%s0 + $0x14] sm:$0xf]
  %v24 = vld [vmem:[%s0 + $0x18] sm:$0xf]
  %v25 = vld [vmem:[%s0 + $0x1c] sm:$0xf]
  %v26 = vld [vmem:[%s0 + $0x20] sm:$0xf]
  %v27 = vld [vmem:[%s0 + $0x24] sm:$0xf]
  %v28 = vld [vmem:[%s0 + $0x28] sm:$0xf]
  %v29 = vld [vmem:[%s0 + $0x2c] sm:$0xf]
  %v30 = vld [vmem:[%s0 + $0x30] sm:$0xf]
  %v31 = vld [vmem:[%s0 + $0x34] sm:$0xf]
  %v32 = vld [vmem:[%s0 + $0x38] sm:$0xf]
  %v33 = vld [vmem:[%s0 + $0x3c] sm:$0xf]
  %v34 = vld [vmem:[%s1] sm:$0xf]
  %v35 = vld [vmem:[%s1 + $0x4] sm:$0xf]
  %v36 = vld [vmem:[%s1 + $0x8] sm:$0xf]
  %v37 = vld [vmem:[%s1 + $0xc] sm:$0xf]
  %v38 = vld [vmem:[%s1 + $0x10] sm:$0xf]
  %v39 = vld [vmem:[%s1 + $0x14] sm:$0xf]
  %v40 = vld [vmem:[%s1 + $0x18] sm:$0xf]
  %v41 = vld [vmem:[%s1 + $0x1c] sm:$0xf]
  %v42 = vld [vmem:[%s1 + $0x20] sm:$0xf]
  %v43 = vld [vmem:[%s1 + $0x24] sm:$0xf]
  %v44 = vld [vmem:[%s1 + $0x28] sm:$0xf]
  %v45 = vld [vmem:[%s1 + $0x2c] sm:$0xf]
  %v46 = vld [vmem:[%s1 + $0x30] sm:$0xf]
  %v47 = vld [vmem:[%s1 + $0x34] sm:$0xf]
  %v48 = vld [vmem:[%s1 + $0x38] sm:$0xf]
  %v49 = vld [vmem:[%s1 + $0x3c] sm:$0xf]
  %v66 = vunpack.c.l.b16 %v18
  %v67 = vunpack.c.l.b16 %v19
  %v68 = vunpack.c.l.b16 %v20
  %v69 = vunpack.c.l.b16 %v21
  %v70 = vunpack.c.l.b16 %v22
  %v71 = vunpack.c.l.b16 %v23
  %v72 = vunpack.c.l.b16 %v24
  %v73 = vunpack.c.l.b16 %v25
  %v74 = vunpack.c.l.b16 %v26
  %v75 = vunpack.c.l.b16 %v27
  %v76 = vunpack.c.l.b16 %v28
  %v77 = vunpack.c.l.b16 %v29
  %v78 = vunpack.c.l.b16 %v30
  %v79 = vunpack.c.l.b16 %v31
  %v80 = vunpack.c.l.b16 %v32
  %v81 = vunpack.c.l.b16 %v33
  %v82 = vpack.c.b16 %v67, %v66
  %v83 = vpack.c.b16 %v69, %v68
  %v84 = vpack.c.b16 %v71, %v70
  %v85 = vpack.c.b16 %v73, %v72
  %v86 = vpack.c.b16 %v75, %v74
  %v87 = vpack.c.b16 %v77, %v76
  %v88 = vpack.c.b16 %v79, %v78
  %v89 = vpack.c.b16 %v81, %v80
  %v114 = vunpack.c.l.b16 %v34
  %v115 = vunpack.c.l.b16 %v35
  %v116 = vunpack.c.l.b16 %v36
  %v117 = vunpack.c.l.b16 %v37
  %v118 = vunpack.c.l.b16 %v38
  %v119 = vunpack.c.l.b16 %v39
  %v120 = vunpack.c.l.b16 %v40
  %v121 = vunpack.c.l.b16 %v41
  %v122 = vunpack.c.l.b16 %v42
  %v123 = vunpack.c.l.b16 %v43
  %v124 = vunpack.c.l.b16 %v44
  %v125 = vunpack.c.l.b16 %v45
  %v126 = vunpack.c.l.b16 %v46
  %v127 = vunpack.c.l.b16 %v47
  %v128 = vunpack.c.l.b16 %v48
  %v129 = vunpack.c.l.b16 %v49
  %v130 = vpack.c.b16 %v115, %v114
  %v131 = vpack.c.b16 %v117, %v116
  %v132 = vpack.c.b16 %v119, %v118
  %v133 = vpack.c.b16 %v121, %v120
  %v134 = vpack.c.b16 %v123, %v122
  %v135 = vpack.c.b16 %v125, %v124
  %v136 = vpack.c.b16 %v127, %v126
  %v137 = vpack.c.b16 %v129, %v128
  %146 = vmatprep.subr.bf16.mxu0 0
  %147 = vmatpush1.bf16.msra.mxu0 %v130
  %148 = vmatprep.subr.bf16.mxu0 0
  %149 = vmatpush1.bf16.msra.mxu0 %v131
  %150 = vmatprep.subr.bf16.mxu0 0
  %151 = vmatpush1.bf16.msra.mxu0 %v132
  %152 = vmatprep.subr.bf16.mxu0 0
  %153 = vmatpush1.bf16.msra.mxu0 %v133
  %154 = vmatprep.subr.bf16.mxu0 0
  %155 = vmatpush1.bf16.msra.mxu0 %v134
  %156 = vmatprep.subr.bf16.mxu0 0
  %157 = vmatpush1.bf16.msra.mxu0 %v135
  %158 = vmatprep.subr.bf16.mxu0 0
  %159 = vmatpush1.bf16.msra.mxu0 %v136
  %160 = vmatprep.subr.bf16.mxu0 0
  %161 = vmatpush1.bf16.msra.mxu0 %v137
  %162 = vmatprep.subr.bf16.mxu0 0
  %163 = vmatpush1.bf16.msra.mxu0 0
  %164 = vmatprep.subr.bf16.mxu0 0
  %165 = vmatpush1.bf16.msra.mxu0 0
  %166 = vmatprep.subr.bf16.mxu0 0
  %167 = vmatpush1.bf16.msra.mxu0 0
  %168 = vmatprep.subr.bf16.mxu0 0
  %169 = vmatpush1.bf16.msra.mxu0 0
  %170 = vmatprep.subr.bf16.mxu0 0
  %171 = vmatpush1.bf16.msra.mxu0 0
  %172 = vmatprep.subr.bf16.mxu0 0
  %173 = vmatpush1.bf16.msra.mxu0 0
  %174 = vmatprep.subr.bf16.mxu0 0
  %175 = vmatpush1.bf16.msra.mxu0 0
  %176 = vmatprep.subr.bf16.mxu0 0
  %177 = vmatpush1.bf16.msra.mxu0 0
  %178 = vmatprep.mubr.bf16.mxu0 0
  %179 = vmatmul.mubr.bf16.gmra.mrb[0].mxu0 %v82
  %v180 = vpop.f32.mrb[0].mxu0
  %v181 = vadd.f32 0.0, %v180
  %v182 = vpop.f32.mrb[0].mxu0
  %v183 = vpop.f32.mrb[0].mxu0
  %v184 = vadd.f32 0.0, %v183
  %v185 = vpop.f32.mrb[0].mxu0
  %186 = vmatprep.mubr.bf16.mxu0 0
  %187 = vmatmul.mubr.bf16.gmra.mrb[0].mxu0 %v83
  %v188 = vpop.f32.mrb[0].mxu0
  %v189 = vadd.f32 0.0, %v188
  %v190 = vpop.f32.mrb[0].mxu0
  %v191 = vpop.f32.mrb[0].mxu0
  %v192 = vadd.f32 0.0, %v191
  %v193 = vpop.f32.mrb[0].mxu0
  %194 = vmatprep.mubr.bf16.mxu0 0
  %195 = vmatmul.mubr.bf16.gmra.mrb[0].mxu0 %v84
  %v196 = vpop.f32.mrb[0].mxu0
  %v197 = vadd.f32 0.0, %v196
  %v198 = vpop.f32.mrb[0].mxu0
  %v199 = vpop.f32.mrb[0].mxu0
  %v200 = vadd.f32 0.0, %v199
  %v201 = vpop.f32.mrb[0].mxu0
  %202 = vmatprep.mubr.bf16.mxu0 0
  %203 = vmatmul.mubr.bf16.gmra.mrb[0].mxu0 %v85
  %v204 = vpop.f32.mrb[0].mxu0
  %v205 = vadd.f32 0.0, %v204
  %v206 = vpop.f32.mrb[0].mxu0
  %v207 = vpop.f32.mrb[0].mxu0
  %v208 = vadd.f32 0.0, %v207
  %v209 = vpop.f32.mrb[0].mxu0
  %210 = vmatprep.mubr.bf16.mxu0 0
  %211 = vmatmul.mubr.bf16.gmra.mrb[0].mxu0 %v86
  %v212 = vpop.f32.mrb[0].mxu0
  %v213 = vadd.f32 0.0, %v212
  %v214 = vpop.f32.mrb[0].mxu0
  %v215 = vpop.f32.mrb[0].mxu0
  %v216 = vadd.f32 0.0, %v215
  %v217 = vpop.f32.mrb[0].mxu0
  %218 = vmatprep.mubr.bf16.mxu0 0
  %219 = vmatmul.mubr.bf16.gmra.mrb[0].mxu0 %v87
  %v220 = vpop.f32.mrb[0].mxu0
  %v221 = vadd.f32 0.0, %v220
  %v222 = vpop.f32.mrb[0].mxu0
  %v223 = vpop.f32.mrb[0].mxu0
  %v224 = vadd.f32 0.0, %v223
  %v225 = vpop.f32.mrb[0].mxu0
  %226 = vmatprep.mubr.bf16.mxu0 0
  %227 = vmatmul.mubr.bf16.gmra.mrb[0].mxu0 %v88
  %v228 = vpop.f32.mrb[0].mxu0
  %v229 = vadd.f32 0.0, %v228
  %v230 = vpop.f32.mrb[0].mxu0
  %v231 = vpop.f32.mrb[0].mxu0
  %v232 = vadd.f32 0.0, %v231
  %v233 = vpop.f32.mrb[0].mxu0
  %234 = vmatprep.mubr.bf16.mxu0 0
  %235 = vmatmul.mubr.bf16.gmra.mrb[0].mxu0 %v89
  %v236 = vpop.f32.mrb[0].mxu0
  %v237 = vadd.f32 0.0, %v236
  %v238 = vpop.f32.mrb[0].mxu0
  %v239 = vpop.f32.mrb[0].mxu0
  %v240 = vadd.f32 0.0, %v239
  %v241 = vpop.f32.mrb[0].mxu0
  %242 = vdwg.mxu0
  %v243 = vld [vmem:[%s2] sm:$0x1]
  %v245 = vlaneseq
  %v246 = vshrl.u32 %v245, 7
  %v247 = vsub.s32 0, %v246
  %v248 = vrot.slane %v243, %v247
  %v250 = vmul.f32 %v181, %v248
  %v251 = vmul.f32 %v184, %v248
  %v252 = vmul.f32 %v189, %v248
  %v253 = vmul.f32 %v192, %v248
  %v254 = vmul.f32 %v197, %v248
  %v255 = vmul.f32 %v200, %v248
  %v256 = vmul.f32 %v205, %v248
  %v257 = vmul.f32 %v208, %v248
  %v258 = vmul.f32 %v213, %v248
  %v259 = vmul.f32 %v216, %v248
  %v260 = vmul.f32 %v221, %v248
  %v261 = vmul.f32 %v224, %v248
  %v262 = vmul.f32 %v229, %v248
  %v263 = vmul.f32 %v232, %v248
  %v264 = vmul.f32 %v237, %v248
  %v265 = vmul.f32 %v240, %v248
  %v266 = vld [vmem:[%s3] sm:$0x1]
  %v268 = vlaneseq
  %v269 = vshrl.u32 %v268, 7
  %v270 = vsub.s32 0, %v269
  %v271 = vrot.slane %v266, %v270
  %v273 = vadd.f32 %v250, %v271
  %v274 = vadd.f32 %v251, %v271
  %v275 = vadd.f32 %v252, %v271
  %v276 = vadd.f32 %v253, %v271
  %v277 = vadd.f32 %v254, %v271
  %v278 = vadd.f32 %v255, %v271
  %v279 = vadd.f32 %v256, %v271
  %v280 = vadd.f32 %v257, %v271
  %v281 = vadd.f32 %v258, %v271
  %v282 = vadd.f32 %v259, %v271
  %v283 = vadd.f32 %v260, %v271
  %v284 = vadd.f32 %v261, %v271
  %v285 = vadd.f32 %v262, %v271
  %v286 = vadd.f32 %v263, %v271
  %v287 = vadd.f32 %v264, %v271
  %v288 = vadd.f32 %v265, %v271
  %v289 = vmax.f32 %v273, 0.0
  %v290 = vmax.f32 %v274, 0.0
  %v291 = vmax.f32 %v275, 0.0
  %v292 = vmax.f32 %v276, 0.0
  %v293 = vmax.f32 %v277, 0.0
  %v294 = vmax.f32 %v278, 0.0
  %v295 = vmax.f32 %v279, 0.0
  %v296 = vmax.f32 %v280, 0.0
  %v297 = vmax.f32 %v281, 0.0
  %v298 = vmax.f32 %v282, 0.0
  %v299 = vmax.f32 %v283, 0.0
  %v300 = vmax.f32 %v284, 0.0
  %v301 = vmax.f32 %v285, 0.0
  %v302 = vmax.f32 %v286, 0.0
  %v303 = vmax.f32 %v287, 0.0
  %v304 = vmax.f32 %v288, 0.0
  %v305 = vpack.c.bf16 %v290, %v289
  %v306 = vpack.c.bf16 %v292, %v291
  %v307 = vpack.c.bf16 %v294, %v293
  %v308 = vpack.c.bf16 %v296, %v295
  %v309 = vpack.c.bf16 %v298, %v297
  %v310 = vpack.c.bf16 %v300, %v299
  %v311 = vpack.c.bf16 %v302, %v301
  %v312 = vpack.c.bf16 %v304, %v303
  %v321 = vunpack.c.l.b16 %v305
  %v322 = vunpack.c.h.b16 %v305
  %v323 = vunpack.c.l.b16 %v306
  %v324 = vunpack.c.h.b16 %v306
  %v325 = vunpack.c.l.b16 %v307
  %v326 = vunpack.c.h.b16 %v307
  %v327 = vunpack.c.l.b16 %v308
  %v328 = vunpack.c.h.b16 %v308
  %v329 = vunpack.c.l.b16 %v309
  %v330 = vunpack.c.h.b16 %v309
  %v331 = vunpack.c.l.b16 %v310
  %v332 = vunpack.c.h.b16 %v310
  %v333 = vunpack.c.l.b16 %v311
  %v334 = vunpack.c.h.b16 %v311
  %v335 = vunpack.c.l.b16 %v312
  %v336 = vunpack.c.h.b16 %v312
  %v337 = vpack.c.b16 %v321, %v321
  %v338 = vpack.c.b16 %v322, %v322
  %v339 = vpack.c.b16 %v323, %v323
  %v340 = vpack.c.b16 %v324, %v324
  %v341 = vpack.c.b16 %v325, %v325
  %v342 = vpack.c.b16 %v326, %v326
  %v343 = vpack.c.b16 %v327, %v327
  %v344 = vpack.c.b16 %v328, %v328
  %v345 = vpack.c.b16 %v329, %v329
  %v346 = vpack.c.b16 %v330, %v330
  %v347 = vpack.c.b16 %v331, %v331
  %v348 = vpack.c.b16 %v332, %v332
  %v349 = vpack.c.b16 %v333, %v333
  %v350 = vpack.c.b16 %v334, %v334
  %v351 = vpack.c.b16 %v335, %v335
  %v352 = vpack.c.b16 %v336, %v336
  %369 = vst [vmem:[%s4] sm:$0xf] %v337
  %370 = vst [vmem:[%s4 + $0x4] sm:$0xf] %v338
  %371 = vst [vmem:[%s4 + $0x8] sm:$0xf] %v339
  %372 = vst [vmem:[%s4 + $0xc] sm:$0xf] %v340
  %373 = vst [vmem:[%s4 + $0x10] sm:$0xf] %v341
  %374 = vst [vmem:[%s4 + $0x14] sm:$0xf] %v342
  %375 = vst [vmem:[%s4 + $0x18] sm:$0xf] %v343
  %376 = vst [vmem:[%s4 + $0x1c] sm:$0xf] %v344
  %377 = vst [vmem:[%s4 + $0x20] sm:$0xf] %v345
  %378 = vst [vmem:[%s4 + $0x24] sm:$0xf] %v346
  %379 = vst [vmem:[%s4 + $0x28] sm:$0xf] %v347
  %380 = vst [vmem:[%s4 + $0x2c] sm:$0xf] %v348
  %381 = vst [vmem:[%s4 + $0x30] sm:$0xf] %v349
  %382 = vst [vmem:[%s4 + $0x34] sm:$0xf] %v350
  %383 = vst [vmem:[%s4 + $0x38] sm:$0xf] %v351
  %384 = vst [vmem:[%s4 + $0x3c] sm:$0xf] %v352
  // Predicated region
  $region18: #{cassava_forward.6} parent=0 // pred_check
    _
  $region19: #{cassava_forward.6} parent=0 // pred_check_branch
    %386 = sbr.rel (0) target = $region21
  $region20: #{cassava_forward.6} parent=0 // pred_region
    _
  $region21: #{cassava_forward.6} parent=0 // pred_fallthru
    _
  // Predicated region
  $region22: #{cassava_forward.6} parent=0 // pred_check
    _
  $region23: #{cassava_forward.6} parent=0 // pred_check_branch
    %388 = sbr.rel (0) target = $region25
  $region24: #{cassava_forward.6} parent=0 // pred_region
    _
  $region25: #{cassava_forward.6} parent=0 // pred_fallthru
    _

// kernel: cassava_forward.5
$region0: #{cassava_forward.5}
  #allocation0 [shape = 'u32[]', space=smem, size = 0x4, offset = 0x4, fixed_abs, tag = 'smem constant byte address 0x4 - core index']
  #allocation1 [shape = 'u32[144,128]{1,0:T(1,128)}', space=vmem, size = 0x12000, scoped, tag = 'internal scratch']
  %s0 = inlined_call_operand.vmem [shape: bf16[128,9,128], index: 0, kind: input, shape index: {}]
  %s1 = inlined_call_operand.vmem [shape: bf16[128,128], index: 1, kind: output, shape index: {}]
  %s2 = sld [smem:[#allocation0]]
  $region14: #{cassava_forward.5} parent=0
    _
  %s4 = ssub.s32 1, %s2
  %s5 = scalar_select 0, %s4, %s2
  // Predicated region
  $region2: #{cassava_forward.5} parent=0 // pred_check
    _
  $region3: #{cassava_forward.5} parent=0 // pred_check_branch
    %7 = sbr.rel (0) target = $region5
  $region4: #{cassava_forward.5} parent=0 // pred_region
    _
  $region5: #{cassava_forward.5} parent=0 // pred_fallthru
    _
  %v9 = vld [vmem:[%s0] sm:$0xf]
  %v10 = vld [vmem:[%s0 + $0x4] sm:$0x1]
  %v11 = vld [vmem:[%s0 + $0x8] sm:$0xf]
  %v12 = vld [vmem:[%s0 + $0xc] sm:$0x1]
  %v13 = vld [vmem:[%s0 + $0x10] sm:$0xf]
  %v14 = vld [vmem:[%s0 + $0x14] sm:$0x1]
  %v15 = vld [vmem:[%s0 + $0x18] sm:$0xf]
  %v16 = vld [vmem:[%s0 + $0x1c] sm:$0x1]
  %v17 = vld [vmem:[%s0 + $0x20] sm:$0xf]
  %v18 = vld [vmem:[%s0 + $0x24] sm:$0x1]
  %v19 = vld [vmem:[%s0 + $0x28] sm:$0xf]
  %v20 = vld [vmem:[%s0 + $0x2c] sm:$0x1]
  %v21 = vld [vmem:[%s0 + $0x30] sm:$0xf]
  %v22 = vld [vmem:[%s0 + $0x34] sm:$0x1]
  %v23 = vld [vmem:[%s0 + $0x38] sm:$0xf]
  %v24 = vld [vmem:[%s0 + $0x3c] sm:$0x1]
  %v25 = vld [vmem:[%s0 + $0x40] sm:$0xf]
  %v26 = vld [vmem:[%s0 + $0x44] sm:$0x1]
  %v27 = vld [vmem:[%s0 + $0x48] sm:$0xf]
  %v28 = vld [vmem:[%s0 + $0x4c] sm:$0x1]
  %v29 = vld [vmem:[%s0 + $0x50] sm:$0xf]
  %v30 = vld [vmem:[%s0 + $0x54] sm:$0x1]
  %v31 = vld [vmem:[%s0 + $0x58] sm:$0xf]
  %v32 = vld [vmem:[%s0 + $0x5c] sm:$0x1]
  %v33 = vld [vmem:[%s0 + $0x60] sm:$0xf]
  %v34 = vld [vmem:[%s0 + $0x64] sm:$0x1]
  %v35 = vld [vmem:[%s0 + $0x68] sm:$0xf]
  %v36 = vld [vmem:[%s0 + $0x6c] sm:$0x1]
  %v37 = vld [vmem:[%s0 + $0x70] sm:$0xf]
  %v38 = vld [vmem:[%s0 + $0x74] sm:$0x1]
  %v39 = vld [vmem:[%s0 + $0x78] sm:$0xf]
  %v40 = vld [vmem:[%s0 + $0x7c] sm:$0x1]
  %v41 = vld [vmem:[%s0 + $0x80] sm:$0xf]
  %v42 = vld [vmem:[%s0 + $0x84] sm:$0x1]
  %v43 = vld [vmem:[%s0 + $0x88] sm:$0xf]
  %v44 = vld [vmem:[%s0 + $0x8c] sm:$0x1]
  %v45 = vld [vmem:[%s0 + $0x90] sm:$0xf]
  %v46 = vld [vmem:[%s0 + $0x94] sm:$0x1]
  %v47 = vld [vmem:[%s0 + $0x98] sm:$0xf]
  %v48 = vld [vmem:[%s0 + $0x9c] sm:$0x1]
  %v49 = vld [vmem:[%s0 + $0xa0] sm:$0xf]
  %v50 = vld [vmem:[%s0 + $0xa4] sm:$0x1]
  %v51 = vld [vmem:[%s0 + $0xa8] sm:$0xf]
  %v52 = vld [vmem:[%s0 + $0xac] sm:$0x1]
  %v53 = vld [vmem:[%s0 + $0xb0] sm:$0xf]
  %v54 = vld [vmem:[%s0 + $0xb4] sm:$0x1]
  %v55 = vld [vmem:[%s0 + $0xb8] sm:$0xf]
  %v56 = vld [vmem:[%s0 + $0xbc] sm:$0x1]
  %v57 = vld [vmem:[%s0 + $0xc0] sm:$0xf]
  %v58 = vld [vmem:[%s0 + $0xc4] sm:$0x1]
  %v59 = vld [vmem:[%s0 + $0xc8] sm:$0xf]
  %v60 = vld [vmem:[%s0 + $0xcc] sm:$0x1]
  %v61 = vld [vmem:[%s0 + $0xd0] sm:$0xf]
  %v62 = vld [vmem:[%s0 + $0xd4] sm:$0x1]
  %v63 = vld [vmem:[%s0 + $0xd8] sm:$0xf]
  %v64 = vld [vmem:[%s0 + $0xdc] sm:$0x1]
  %v65 = vld [vmem:[%s0 + $0xe0] sm:$0xf]
  %v66 = vld [vmem:[%s0 + $0xe4] sm:$0x1]
  %v67 = vld [vmem:[%s0 + $0xe8] sm:$0xf]
  %v68 = vld [vmem:[%s0 + $0xec] sm:$0x1]
  %v69 = vld [vmem:[%s0 + $0xf0] sm:$0xf]
  %v70 = vld [vmem:[%s0 + $0xf4] sm:$0x1]
  %v71 = vld [vmem:[%s0 + $0xf8] sm:$0xf]
  %v72 = vld [vmem:[%s0 + $0xfc] sm:$0x1]
  %v73 = vld [vmem:[%s0 + $0x100] sm:$0xf]
  %v74 = vld [vmem:[%s0 + $0x104] sm:$0x1]
  %v75 = vld [vmem:[%s0 + $0x108] sm:$0xf]
  %v76 = vld [vmem:[%s0 + $0x10c] sm:$0x1]
  %v77 = vld [vmem:[%s0 + $0x110] sm:$0xf]
  %v78 = vld [vmem:[%s0 + $0x114] sm:$0x1]
  %v79 = vld [vmem:[%s0 + $0x118] sm:$0xf]
  %v80 = vld [vmem:[%s0 + $0x11c] sm:$0x1]
  %v81 = vld [vmem:[%s0 + $0x120] sm:$0xf]
  %v82 = vld [vmem:[%s0 + $0x124] sm:$0x1]
  %v83 = vld [vmem:[%s0 + $0x128] sm:$0xf]
  %v84 = vld [vmem:[%s0 + $0x12c] sm:$0x1]
  %v85 = vld [vmem:[%s0 + $0x130] sm:$0xf]
  %v86 = vld [vmem:[%s0 + $0x134] sm:$0x1]
  %v87 = vld [vmem:[%s0 + $0x138] sm:$0xf]
  %v88 = vld [vmem:[%s0 + $0x13c] sm:$0x1]
  %v89 = vld [vmem:[%s0 + $0x140] sm:$0xf]
  %v90 = vld [vmem:[%s0 + $0x144] sm:$0x1]
  %v91 = vld [vmem:[%s0 + $0x148] sm:$0xf]
  %v92 = vld [vmem:[%s0 + $0x14c] sm:$0x1]
  %v93 = vld [vmem:[%s0 + $0x150] sm:$0xf]
  %v94 = vld [vmem:[%s0 + $0x154] sm:$0x1]
  %v95 = vld [vmem:[%s0 + $0x158] sm:$0xf]
  %v96 = vld [vmem:[%s0 + $0x15c] sm:$0x1]
  %v97 = vld [vmem:[%s0 + $0x160] sm:$0xf]
  %v98 = vld [vmem:[%s0 + $0x164] sm:$0x1]
  %v99 = vld [vmem:[%s0 + $0x168] sm:$0xf]
  %v100 = vld [vmem:[%s0 + $0x16c] sm:$0x1]
  %v101 = vld [vmem:[%s0 + $0x170] sm:$0xf]
  %v102 = vld [vmem:[%s0 + $0x174] sm:$0x1]
  %v103 = vld [vmem:[%s0 + $0x178] sm:$0xf]
  %v104 = vld [vmem:[%s0 + $0x17c] sm:$0x1]
  %v105 = vld [vmem:[%s0 + $0x180] sm:$0xf]
  %v106 = vld [vmem:[%s0 + $0x184] sm:$0x1]
  %v107 = vld [vmem:[%s0 + $0x188] sm:$0xf]
  %v108 = vld [vmem:[%s0 + $0x18c] sm:$0x1]
  %v109 = vld [vmem:[%s0 + $0x190] sm:$0xf]
  %v110 = vld [vmem:[%s0 + $0x194] sm:$0x1]
  %v111 = vld [vmem:[%s0 + $0x198] sm:$0xf]
  %v112 = vld [vmem:[%s0 + $0x19c] sm:$0x1]
  %v113 = vld [vmem:[%s0 + $0x1a0] sm:$0xf]
  %v114 = vld [vmem:[%s0 + $0x1a4] sm:$0x1]
  %v115 = vld [vmem:[%s0 + $0x1a8] sm:$0xf]
  %v116 = vld [vmem:[%s0 + $0x1ac] sm:$0x1]
  %v117 = vld [vmem:[%s0 + $0x1b0] sm:$0xf]
  %v118 = vld [vmem:[%s0 + $0x1b4] sm:$0x1]
  %v119 = vld [vmem:[%s0 + $0x1b8] sm:$0xf]
  %v120 = vld [vmem:[%s0 + $0x1bc] sm:$0x1]
  %v121 = vld [vmem:[%s0 + $0x1c0] sm:$0xf]
  %v122 = vld [vmem:[%s0 + $0x1c4] sm:$0x1]
  %v123 = vld [vmem:[%s0 + $0x1c8] sm:$0xf]
  %v124 = vld [vmem:[%s0 + $0x1cc] sm:$0x1]
  %v125 = vld [vmem:[%s0 + $0x1d0] sm:$0xf]
  %v126 = vld [vmem:[%s0 + $0x1d4] sm:$0x1]
  %v127 = vld [vmem:[%s0 + $0x1d8] sm:$0xf]
  %v128 = vld [vmem:[%s0 + $0x1dc] sm:$0x1]
  %v129 = vld [vmem:[%s0 + $0x1e0] sm:$0xf]
  %v130 = vld [vmem:[%s0 + $0x1e4] sm:$0x1]
  %v131 = vld [vmem:[%s0 + $0x1e8] sm:$0xf]
  %v132 = vld [vmem:[%s0 + $0x1ec] sm:$0x1]
  %v133 = vld [vmem:[%s0 + $0x1f0] sm:$0xf]
  %v134 = vld [vmem:[%s0 + $0x1f4] sm:$0x1]
  %v135 = vld [vmem:[%s0 + $0x1f8] sm:$0xf]
  %v136 = vld [vmem:[%s0 + $0x1fc] sm:$0x1]
  %v137 = vld [vmem:[%s0 + $0x200] sm:$0xf]
  %v138 = vld [vmem:[%s0 + $0x204] sm:$0x1]
  %v139 = vld [vmem:[%s0 + $0x208] sm:$0xf]
  %v140 = vld [vmem:[%s0 + $0x20c] sm:$0x1]
  %v141 = vld [vmem:[%s0 + $0x210] sm:$0xf]
  %v142 = vld [vmem:[%s0 + $0x214] sm:$0x1]
  %v143 = vld [vmem:[%s0 + $0x218] sm:$0xf]
  %v144 = vld [vmem:[%s0 + $0x21c] sm:$0x1]
  %v145 = vld [vmem:[%s0 + $0x220] sm:$0xf]
  %v146 = vld [vmem:[%s0 + $0x224] sm:$0x1]
  %v147 = vld [vmem:[%s0 + $0x228] sm:$0xf]
  %v148 = vld [vmem:[%s0 + $0x22c] sm:$0x1]
  %v149 = vld [vmem:[%s0 + $0x230] sm:$0xf]
  %v150 = vld [vmem:[%s0 + $0x234] sm:$0x1]
  %v151 = vld [vmem:[%s0 + $0x238] sm:$0xf]
  %v152 = vld [vmem:[%s0 + $0x23c] sm:$0x1]
  %v153 = vld [vmem:[%s0 + $0x240] sm:$0xf]
  %v154 = vld [vmem:[%s0 + $0x244] sm:$0x1]
  %v155 = vld [vmem:[%s0 + $0x248] sm:$0xf]
  %v156 = vld [vmem:[%s0 + $0x24c] sm:$0x1]
  %v157 = vld [vmem:[%s0 + $0x250] sm:$0xf]
  %v158 = vld [vmem:[%s0 + $0x254] sm:$0x1]
  %v159 = vld [vmem:[%s0 + $0x258] sm:$0xf]
  %v160 = vld [vmem:[%s0 + $0x25c] sm:$0x1]
  %v161 = vld [vmem:[%s0 + $0x260] sm:$0xf]
  %v162 = vld [vmem:[%s0 + $0x264] sm:$0x1]
  %v163 = vld [vmem:[%s0 + $0x268] sm:$0xf]
  %v164 = vld [vmem:[%s0 + $0x26c] sm:$0x1]
  %v165 = vld [vmem:[%s0 + $0x270] sm:$0xf]
  %v166 = vld [vmem:[%s0 + $0x274] sm:$0x1]
  %v167 = vld [vmem:[%s0 + $0x278] sm:$0xf]
  %v168 = vld [vmem:[%s0 + $0x27c] sm:$0x1]
  %v169 = vld [vmem:[%s0 + $0x280] sm:$0xf]
  %v170 = vld [vmem:[%s0 + $0x284] sm:$0x1]
  %v171 = vld [vmem:[%s0 + $0x288] sm:$0xf]
  %v172 = vld [vmem:[%s0 + $0x28c] sm:$0x1]
  %v173 = vld [vmem:[%s0 + $0x290] sm:$0xf]
  %v174 = vld [vmem:[%s0 + $0x294] sm:$0x1]
  %v175 = vld [vmem:[%s0 + $0x298] sm:$0xf]
  %v176 = vld [vmem:[%s0 + $0x29c] sm:$0x1]
  %v177 = vld [vmem:[%s0 + $0x2a0] sm:$0xf]
  %v178 = vld [vmem:[%s0 + $0x2a4] sm:$0x1]
  %v179 = vld [vmem:[%s0 + $0x2a8] sm:$0xf]
  %v180 = vld [vmem:[%s0 + $0x2ac] sm:$0x1]
  %v181 = vld [vmem:[%s0 + $0x2b0] sm:$0xf]
  %v182 = vld [vmem:[%s0 + $0x2b4] sm:$0x1]
  %v183 = vld [vmem:[%s0 + $0x2b8] sm:$0xf]
  %v184 = vld [vmem:[%s0 + $0x2bc] sm:$0x1]
  %v185 = vld [vmem:[%s0 + $0x2c0] sm:$0xf]
  %v186 = vld [vmem:[%s0 + $0x2c4] sm:$0x1]
  %v187 = vld [vmem:[%s0 + $0x2c8] sm:$0xf]
  %v188 = vld [vmem:[%s0 + $0x2cc] sm:$0x1]
  %v189 = vld [vmem:[%s0 + $0x2d0] sm:$0xf]
  %v190 = vld [vmem:[%s0 + $0x2d4] sm:$0x1]
  %v191 = vld [vmem:[%s0 + $0x2d8] sm:$0xf]
  %v192 = vld [vmem:[%s0 + $0x2dc] sm:$0x1]
  %v193 = vld [vmem:[%s0 + $0x2e0] sm:$0xf]
  %v194 = vld [vmem:[%s0 + $0x2e4] sm:$0x1]
  %v195 = vld [vmem:[%s0 + $0x2e8] sm:$0xf]
  %v196 = vld [vmem:[%s0 + $0x2ec] sm:$0x1]
  %v197 = vld [vmem:[%s0 + $0x2f0] sm:$0xf]
  %v198 = vld [vmem:[%s0 + $0x2f4] sm:$0x1]
  %v199 = vld [vmem:[%s0 + $0x2f8] sm:$0xf]
  %v200 = vld [vmem:[%s0 + $0x2fc] sm:$0x1]
  %v201 = vld [vmem:[%s0 + $0x300] sm:$0xf]
  %v202 = vld [vmem:[%s0 + $0x304] sm:$0x1]
  %v203 = vld [vmem:[%s0 + $0x308] sm:$0xf]
  %v204 = vld [vmem:[%s0 + $0x30c] sm:$0x1]
  %v205 = vld [vmem:[%s0 + $0x310] sm:$0xf]
  %v206 = vld [vmem:[%s0 + $0x314] sm:$0x1]
  %v207 = vld [vmem:[%s0 + $0x318] sm:$0xf]
  %v208 = vld [vmem:[%s0 + $0x31c] sm:$0x1]
  %v209 = vld [vmem:[%s0 + $0x320] sm:$0xf]
  %v210 = vld [vmem:[%s0 + $0x324] sm:$0x1]
  %v211 = vld [vmem:[%s0 + $0x328] sm:$0xf]
  %v212 = vld [vmem:[%s0 + $0x32c] sm:$0x1]
  %v213 = vld [vmem:[%s0 + $0x330] sm:$0xf]
  %v214 = vld [vmem:[%s0 + $0x334] sm:$0x1]
  %v215 = vld [vmem:[%s0 + $0x338] sm:$0xf]
  %v216 = vld [vmem:[%s0 + $0x33c] sm:$0x1]
  %v217 = vld [vmem:[%s0 + $0x340] sm:$0xf]
  %v218 = vld [vmem:[%s0 + $0x344] sm:$0x1]
  %v219 = vld [vmem:[%s0 + $0x348] sm:$0xf]
  %v220 = vld [vmem:[%s0 + $0x34c] sm:$0x1]
  %v221 = vld [vmem:[%s0 + $0x350] sm:$0xf]
  %v222 = vld [vmem:[%s0 + $0x354] sm:$0x1]
  %v223 = vld [vmem:[%s0 + $0x358] sm:$0xf]
  %v224 = vld [vmem:[%s0 + $0x35c] sm:$0x1]
  %v225 = vld [vmem:[%s0 + $0x360] sm:$0xf]
  %v226 = vld [vmem:[%s0 + $0x364] sm:$0x1]
  %v227 = vld [vmem:[%s0 + $0x368] sm:$0xf]
  %v228 = vld [vmem:[%s0 + $0x36c] sm:$0x1]
  %v229 = vld [vmem:[%s0 + $0x370] sm:$0xf]
  %v230 = vld [vmem:[%s0 + $0x374] sm:$0x1]
  %v231 = vld [vmem:[%s0 + $0x378] sm:$0xf]
  %v232 = vld [vmem:[%s0 + $0x37c] sm:$0x1]
  %v233 = vld [vmem:[%s0 + $0x380] sm:$0xf]
  %v234 = vld [vmem:[%s0 + $0x384] sm:$0x1]
  %v235 = vld [vmem:[%s0 + $0x388] sm:$0xf]
  %v236 = vld [vmem:[%s0 + $0x38c] sm:$0x1]
  %v237 = vld [vmem:[%s0 + $0x390] sm:$0xf]
  %v238 = vld [vmem:[%s0 + $0x394] sm:$0x1]
  %v239 = vld [vmem:[%s0 + $0x398] sm:$0xf]
  %v240 = vld [vmem:[%s0 + $0x39c] sm:$0x1]
  %v241 = vld [vmem:[%s0 + $0x3a0] sm:$0xf]
  %v242 = vld [vmem:[%s0 + $0x3a4] sm:$0x1]
  %v243 = vld [vmem:[%s0 + $0x3a8] sm:$0xf]
  %v244 = vld [vmem:[%s0 + $0x3ac] sm:$0x1]
  %v245 = vld [vmem:[%s0 + $0x3b0] sm:$0xf]
  %v246 = vld [vmem:[%s0 + $0x3b4] sm:$0x1]
  %v247 = vld [vmem:[%s0 + $0x3b8] sm:$0xf]
  %v248 = vld [vmem:[%s0 + $0x3bc] sm:$0x1]
  %v249 = vld [vmem:[%s0 + $0x3c0] sm:$0xf]
  %v250 = vld [vmem:[%s0 + $0x3c4] sm:$0x1]
  %v251 = vld [vmem:[%s0 + $0x3c8] sm:$0xf]
  %v252 = vld [vmem:[%s0 + $0x3cc] sm:$0x1]
  %v253 = vld [vmem:[%s0 + $0x3d0] sm:$0xf]
  %v254 = vld [vmem:[%s0 + $0x3d4] sm:$0x1]
  %v255 = vld [vmem:[%s0 + $0x3d8] sm:$0xf]
  %v256 = vld [vmem:[%s0 + $0x3dc] sm:$0x1]
  %v257 = vld [vmem:[%s0 + $0x3e0] sm:$0xf]
  %v258 = vld [vmem:[%s0 + $0x3e4] sm:$0x1]
  %v259 = vld [vmem:[%s0 + $0x3e8] sm:$0xf]
  %v260 = vld [vmem:[%s0 + $0x3ec] sm:$0x1]
  %v261 = vld [vmem:[%s0 + $0x3f0] sm:$0xf]
  %v262 = vld [vmem:[%s0 + $0x3f4] sm:$0x1]
  %v263 = vld [vmem:[%s0 + $0x3f8] sm:$0xf]
  %v264 = vld [vmem:[%s0 + $0x3fc] sm:$0x1]
  %v521 = vunpack.c.l.b16 %v9
  %v522 = vunpack.c.l.b16 %v10
  %v523 = vunpack.c.l.b16 %v11
  %v524 = vunpack.c.l.b16 %v12
  %v525 = vunpack.c.l.b16 %v13
  %v526 = vunpack.c.l.b16 %v14
  %v527 = vunpack.c.l.b16 %v15
  %v528 = vunpack.c.l.b16 %v16
  %v529 = vunpack.c.l.b16 %v17
  %v530 = vunpack.c.l.b16 %v18
  %v531 = vunpack.c.l.b16 %v19
  %v532 = vunpack.c.l.b16 %v20
  %v533 = vunpack.c.l.b16 %v21
  %v534 = vunpack.c.l.b16 %v22
  %v535 = vunpack.c.l.b16 %v23
  %v536 = vunpack.c.l.b16 %v24
  %v537 = vunpack.c.l.b16 %v25
  %v538 = vunpack.c.l.b16 %v26
  %v539 = vunpack.c.l.b16 %v27
  %v540 = vunpack.c.l.b16 %v28
  %v541 = vunpack.c.l.b16 %v29
  %v542 = vunpack.c.l.b16 %v30
  %v543 = vunpack.c.l.b16 %v31
  %v544 = vunpack.c.l.b16 %v32
  %v545 = vunpack.c.l.b16 %v33
  %v546 = vunpack.c.l.b16 %v34
  %v547 = vunpack.c.l.b16 %v35
  %v548 = vunpack.c.l.b16 %v36
  %v549 = vunpack.c.l.b16 %v37
  %v550 = vunpack.c.l.b16 %v38
  %v551 = vunpack.c.l.b16 %v39
  %v552 = vunpack.c.l.b16 %v40
  %v553 = vunpack.c.l.b16 %v41
  %v554 = vunpack.c.l.b16 %v42
  %v555 = vunpack.c.l.b16 %v43
  %v556 = vunpack.c.l.b16 %v44
  %v557 = vunpack.c.l.b16 %v45
  %v558 = vunpack.c.l.b16 %v46
  %v559 = vunpack.c.l.b16 %v47
  %v560 = vunpack.c.l.b16 %v48
  %v561 = vunpack.c.l.b16 %v49
  %v562 = vunpack.c.l.b16 %v50
  %v563 = vunpack.c.l.b16 %v51
  %v564 = vunpack.c.l.b16 %v52
  %v565 = vunpack.c.l.b16 %v53
  %v566 = vunpack.c.l.b16 %v54
  %v567 = vunpack.c.l.b16 %v55
  %v568 = vunpack.c.l.b16 %v56
  %v569 = vunpack.c.l.b16 %v57
  %v570 = vunpack.c.l.b16 %v58
  %v571 = vunpack.c.l.b16 %v59
  %v572 = vunpack.c.l.b16 %v60
  %v573 = vunpack.c.l.b16 %v61
  %v574 = vunpack.c.l.b16 %v62
  %v575 = vunpack.c.l.b16 %v63
  %v576 = vunpack.c.l.b16 %v64
  %v577 = vunpack.c.l.b16 %v65
  %v578 = vunpack.c.l.b16 %v66
  %v579 = vunpack.c.l.b16 %v67
  %v580 = vunpack.c.l.b16 %v68
  %v581 = vunpack.c.l.b16 %v69
  %v582 = vunpack.c.l.b16 %v70
  %v583 = vunpack.c.l.b16 %v71
  %v584 = vunpack.c.l.b16 %v72
  %v585 = vunpack.c.l.b16 %v73
  %v586 = vunpack.c.l.b16 %v74
  %v587 = vunpack.c.l.b16 %v75
  %v588 = vunpack.c.l.b16 %v76
  %v589 = vunpack.c.l.b16 %v77
  %v590 = vunpack.c.l.b16 %v78
  %v591 = vunpack.c.l.b16 %v79
  %v592 = vunpack.c.l.b16 %v80
  %v593 = vunpack.c.l.b16 %v81
  %v594 = vunpack.c.l.b16 %v82
  %v595 = vunpack.c.l.b16 %v83
  %v596 = vunpack.c.l.b16 %v84
  %v597 = vunpack.c.l.b16 %v85
  %v598 = vunpack.c.l.b16 %v86
  %v599 = vunpack.c.l.b16 %v87
  %v600 = vunpack.c.l.b16 %v88
  %v601 = vunpack.c.l.b16 %v89
  %v602 = vunpack.c.l.b16 %v90
  %v603 = vunpack.c.l.b16 %v91
  %v604 = vunpack.c.l.b16 %v92
  %v605 = vunpack.c.l.b16 %v93
  %v606 = vunpack.c.l.b16 %v94
  %v607 = vunpack.c.l.b16 %v95
  %v608 = vunpack.c.l.b16 %v96
  %v609 = vunpack.c.l.b16 %v97
  %v610 = vunpack.c.l.b16 %v98
  %v611 = vunpack.c.l.b16 %v99
  %v612 = vunpack.c.l.b16 %v100
  %v613 = vunpack.c.l.b16 %v101
  %v614 = vunpack.c.l.b16 %v102
  %v615 = vunpack.c.l.b16 %v103
  %v616 = vunpack.c.l.b16 %v104
  %v617 = vunpack.c.l.b16 %v105
  %v618 = vunpack.c.l.b16 %v106
  %v619 = vunpack.c.l.b16 %v107
  %v620 = vunpack.c.l.b16 %v108
  %v621 = vunpack.c.l.b16 %v109
  %v622 = vunpack.c.l.b16 %v110
  %v623 = vunpack.c.l.b16 %v111
  %v624 = vunpack.c.l.b16 %v112
  %v625 = vunpack.c.l.b16 %v113
  %v626 = vunpack.c.l.b16 %v114
  %v627 = vunpack.c.l.b16 %v115
  %v628 = vunpack.c.l.b16 %v116
  %v629 = vunpack.c.l.b16 %v117
  %v630 = vunpack.c.l.b16 %v118
  %v631 = vunpack.c.l.b16 %v119
  %v632 = vunpack.c.l.b16 %v120
  %v633 = vunpack.c.l.b16 %v121
  %v634 = vunpack.c.l.b16 %v122
  %v635 = vunpack.c.l.b16 %v123
  %v636 = vunpack.c.l.b16 %v124
  %v637 = vunpack.c.l.b16 %v125
  %v638 = vunpack.c.l.b16 %v126
  %v639 = vunpack.c.l.b16 %v127
  %v640 = vunpack.c.l.b16 %v128
  %v641 = vunpack.c.l.b16 %v129
  %v642 = vunpack.c.l.b16 %v130
  %v643 = vunpack.c.l.b16 %v131
  %v644 = vunpack.c.l.b16 %v132
  %v645 = vunpack.c.l.b16 %v133
  %v646 = vunpack.c.l.b16 %v134
  %v647 = vunpack.c.l.b16 %v135
  %v648 = vunpack.c.l.b16 %v136
  %v649 = vunpack.c.l.b16 %v137
  %v650 = vunpack.c.l.b16 %v138
  %v651 = vunpack.c.l.b16 %v139
  %v652 = vunpack.c.l.b16 %v140
  %v653 = vunpack.c.l.b16 %v141
  %v654 = vunpack.c.l.b16 %v142
  %v655 = vunpack.c.l.b16 %v143
  %v656 = vunpack.c.l.b16 %v144
  %v657 = vunpack.c.l.b16 %v145
  %v658 = vunpack.c.l.b16 %v146
  %v659 = vunpack.c.l.b16 %v147
  %v660 = vunpack.c.l.b16 %v148
  %v661 = vunpack.c.l.b16 %v149
  %v662 = vunpack.c.l.b16 %v150
  %v663 = vunpack.c.l.b16 %v151
  %v664 = vunpack.c.l.b16 %v152
  %v665 = vunpack.c.l.b16 %v153
  %v666 = vunpack.c.l.b16 %v154
  %v667 = vunpack.c.l.b16 %v155
  %v668 = vunpack.c.l.b16 %v156
  %v669 = vunpack.c.l.b16 %v157
  %v670 = vunpack.c.l.b16 %v158
  %v671 = vunpack.c.l.b16 %v159
  %v672 = vunpack.c.l.b16 %v160
  %v673 = vunpack.c.l.b16 %v161
  %v674 = vunpack.c.l.b16 %v162
  %v675 = vunpack.c.l.b16 %v163
  %v676 = vunpack.c.l.b16 %v164
  %v677 = vunpack.c.l.b16 %v165
  %v678 = vunpack.c.l.b16 %v166
  %v679 = vunpack.c.l.b16 %v167
  %v680 = vunpack.c.l.b16 %v168
  %v681 = vunpack.c.l.b16 %v169
  %v682 = vunpack.c.l.b16 %v170
  %v683 = vunpack.c.l.b16 %v171
  %v684 = vunpack.c.l.b16 %v172
  %v685 = vunpack.c.l.b16 %v173
  %v686 = vunpack.c.l.b16 %v174
  %v687 = vunpack.c.l.b16 %v175
  %v688 = vunpack.c.l.b16 %v176
  %v689 = vunpack.c.l.b16 %v177
  %v690 = vunpack.c.l.b16 %v178
  %v691 = vunpack.c.l.b16 %v179
  %v692 = vunpack.c.l.b16 %v180
  %v693 = vunpack.c.l.b16 %v181
  %v694 = vunpack.c.l.b16 %v182
  %v695 = vunpack.c.l.b16 %v183
  %v696 = vunpack.c.l.b16 %v184
  %v697 = vunpack.c.l.b16 %v185
  %v698 = vunpack.c.l.b16 %v186
  %v699 = vunpack.c.l.b16 %v187
  %v700 = vunpack.c.l.b16 %v188
  %v701 = vunpack.c.l.b16 %v189
  %v702 = vunpack.c.l.b16 %v190
  %v703 = vunpack.c.l.b16 %v191
  %v704 = vunpack.c.l.b16 %v192
  %v705 = vunpack.c.l.b16 %v193
  %v706 = vunpack.c.l.b16 %v194
  %v707 = vunpack.c.l.b16 %v195
  %v708 = vunpack.c.l.b16 %v196
  %v709 = vunpack.c.l.b16 %v197
  %v710 = vunpack.c.l.b16 %v198
  %v711 = vunpack.c.l.b16 %v199
  %v712 = vunpack.c.l.b16 %v200
  %v713 = vunpack.c.l.b16 %v201
  %v714 = vunpack.c.l.b16 %v202
  %v715 = vunpack.c.l.b16 %v203
  %v716 = vunpack.c.l.b16 %v204
  %v717 = vunpack.c.l.b16 %v205
  %v718 = vunpack.c.l.b16 %v206
  %v719 = vunpack.c.l.b16 %v207
  %v720 = vunpack.c.l.b16 %v208
  %v721 = vunpack.c.l.b16 %v209
  %v722 = vunpack.c.l.b16 %v210
  %v723 = vunpack.c.l.b16 %v211
  %v724 = vunpack.c.l.b16 %v212
  %v725 = vunpack.c.l.b16 %v213
  %v726 = vunpack.c.l.b16 %v214
  %v727 = vunpack.c.l.b16 %v215
  %v728 = vunpack.c.l.b16 %v216
  %v729 = vunpack.c.l.b16 %v217
  %v730 = vunpack.c.l.b16 %v218
  %v731 = vunpack.c.l.b16 %v219
  %v732 = vunpack.c.l.b16 %v220
  %v733 = vunpack.c.l.b16 %v221
  %v734 = vunpack.c.l.b16 %v222
  %v735 = vunpack.c.l.b16 %v223
  %v736 = vunpack.c.l.b16 %v224
  %v737 = vunpack.c.l.b16 %v225
  %v738 = vunpack.c.l.b16 %v226
  %v739 = vunpack.c.l.b16 %v227
  %v740 = vunpack.c.l.b16 %v228
  %v741 = vunpack.c.l.b16 %v229
  %v742 = vunpack.c.l.b16 %v230
  %v743 = vunpack.c.l.b16 %v231
  %v744 = vunpack.c.l.b16 %v232
  %v745 = vunpack.c.l.b16 %v233
  %v746 = vunpack.c.l.b16 %v234
  %v747 = vunpack.c.l.b16 %v235
  %v748 = vunpack.c.l.b16 %v236
  %v749 = vunpack.c.l.b16 %v237
  %v750 = vunpack.c.l.b16 %v238
  %v751 = vunpack.c.l.b16 %v239
  %v752 = vunpack.c.l.b16 %v240
  %v753 = vunpack.c.l.b16 %v241
  %v754 = vunpack.c.l.b16 %v242
  %v755 = vunpack.c.l.b16 %v243
  %v756 = vunpack.c.l.b16 %v244
  %v757 = vunpack.c.l.b16 %v245
  %v758 = vunpack.c.l.b16 %v246
  %v759 = vunpack.c.l.b16 %v247
  %v760 = vunpack.c.l.b16 %v248
  %v761 = vunpack.c.l.b16 %v249
  %v762 = vunpack.c.l.b16 %v250
  %v763 = vunpack.c.l.b16 %v251
  %v764 = vunpack.c.l.b16 %v252
  %v765 = vunpack.c.l.b16 %v253
  %v766 = vunpack.c.l.b16 %v254
  %v767 = vunpack.c.l.b16 %v255
  %v768 = vunpack.c.l.b16 %v256
  %v769 = vunpack.c.l.b16 %v257
  %v770 = vunpack.c.l.b16 %v258
  %v771 = vunpack.c.l.b16 %v259
  %v772 = vunpack.c.l.b16 %v260
  %v773 = vunpack.c.l.b16 %v261
  %v774 = vunpack.c.l.b16 %v262
  %v775 = vunpack.c.l.b16 %v263
  %v776 = vunpack.c.l.b16 %v264
  %v777 = vpack.c.b16 %v522, %v521
  %v778 = vpack.c.b16 %v524, %v523
  %v779 = vpack.c.b16 %v526, %v525
  %v780 = vpack.c.b16 %v528, %v527
  %v781 = vpack.c.b16 %v530, %v529
  %v782 = vpack.c.b16 %v532, %v531
  %v783 = vpack.c.b16 %v534, %v533
  %v784 = vpack.c.b16 %v536, %v535
  %v785 = vpack.c.b16 %v538, %v537
  %v786 = vpack.c.b16 %v540, %v539
  %v787 = vpack.c.b16 %v542, %v541
  %v788 = vpack.c.b16 %v544, %v543
  %v789 = vpack.c.b16 %v546, %v545
  %v790 = vpack.c.b16 %v548, %v547
  %v791 = vpack.c.b16 %v550, %v549
  %v792 = vpack.c.b16 %v552, %v551
  %v793 = vpack.c.b16 %v554, %v553
  %v794 = vpack.c.b16 %v556, %v555
  %v795 = vpack.c.b16 %v558, %v557
  %v796 = vpack.c.b16 %v560, %v559
  %v797 = vpack.c.b16 %v562, %v561
  %v798 = vpack.c.b16 %v564, %v563
  %v799 = vpack.c.b16 %v566, %v565
  %v800 = vpack.c.b16 %v568, %v567
  %v801 = vpack.c.b16 %v570, %v569
  %v802 = vpack.c.b16 %v572, %v571
  %v803 = vpack.c.b16 %v574, %v573
  %v804 = vpack.c.b16 %v576, %v575
  %v805 = vpack.c.b16 %v578, %v577
  %v806 = vpack.c.b16 %v580, %v579
  %v807 = vpack.c.b16 %v582, %v581
  %v808 = vpack.c.b16 %v584, %v583
  %v809 = vpack.c.b16 %v586, %v585
  %v810 = vpack.c.b16 %v588, %v587
  %v811 = vpack.c.b16 %v590, %v589
  %v812 = vpack.c.b16 %v592, %v591
  %v813 = vpack.c.b16 %v594, %v593
  %v814 = vpack.c.b16 %v596, %v595
  %v815 = vpack.c.b16 %v598, %v597
  %v816 = vpack.c.b16 %v600, %v599
  %v817 = vpack.c.b16 %v602, %v601
  %v818 = vpack.c.b16 %v604, %v603
  %v819 = vpack.c.b16 %v606, %v605
  %v820 = vpack.c.b16 %v608, %v607
  %v821 = vpack.c.b16 %v610, %v609
  %v822 = vpack.c.b16 %v612, %v611
  %v823 = vpack.c.b16 %v614, %v613
  %v824 = vpack.c.b16 %v616, %v615
  %v825 = vpack.c.b16 %v618, %v617
  %v826 = vpack.c.b16 %v620, %v619
  %v827 = vpack.c.b16 %v622, %v621
  %v828 = vpack.c.b16 %v624, %v623
  %v829 = vpack.c.b16 %v626, %v625
  %v830 = vpack.c.b16 %v628, %v627
  %v831 = vpack.c.b16 %v630, %v629
  %v832 = vpack.c.b16 %v632, %v631
  %v833 = vpack.c.b16 %v634, %v633
  %v834 = vpack.c.b16 %v636, %v635
  %v835 = vpack.c.b16 %v638, %v637
  %v836 = vpack.c.b16 %v640, %v639
  %v837 = vpack.c.b16 %v642, %v641
  %v838 = vpack.c.b16 %v644, %v643
  %v839 = vpack.c.b16 %v646, %v645
  %v840 = vpack.c.b16 %v648, %v647
  %v841 = vpack.c.b16 %v650, %v649
  %v842 = vpack.c.b16 %v652, %v651
  %v843 = vpack.c.b16 %v654, %v653
  %v844 = vpack.c.b16 %v656, %v655
  %v845 = vpack.c.b16 %v658, %v657
  %v846 = vpack.c.b16 %v660, %v659
  %v847 = vpack.c.b16 %v662, %v661
  %v848 = vpack.c.b16 %v664, %v663
  %v849 = vpack.c.b16 %v666, %v665
  %v850 = vpack.c.b16 %v668, %v667
  %v851 = vpack.c.b16 %v670, %v669
  %v852 = vpack.c.b16 %v672, %v671
  %v853 = vpack.c.b16 %v674, %v673
  %v854 = vpack.c.b16 %v676, %v675
  %v855 = vpack.c.b16 %v678, %v677
  %v856 = vpack.c.b16 %v680, %v679
  %v857 = vpack.c.b16 %v682, %v681
  %v858 = vpack.c.b16 %v684, %v683
  %v859 = vpack.c.b16 %v686, %v685
  %v860 = vpack.c.b16 %v688, %v687
  %v861 = vpack.c.b16 %v690, %v689
  %v862 = vpack.c.b16 %v692, %v691
  %v863 = vpack.c.b16 %v694, %v693
  %v864 = vpack.c.b16 %v696, %v695
  %v865 = vpack.c.b16 %v698, %v697
  %v866 = vpack.c.b16 %v700, %v699
  %v867 = vpack.c.b16 %v702, %v701
  %v868 = vpack.c.b16 %v704, %v703
  %v869 = vpack.c.b16 %v706, %v705
  %v870 = vpack.c.b16 %v708, %v707
  %v871 = vpack.c.b16 %v710, %v709
  %v872 = vpack.c.b16 %v712, %v711
  %v873 = vpack.c.b16 %v714, %v713
  %v874 = vpack.c.b16 %v716, %v715
  %v875 = vpack.c.b16 %v718, %v717
  %v876 = vpack.c.b16 %v720, %v719
  %v877 = vpack.c.b16 %v722, %v721
  %v878 = vpack.c.b16 %v724, %v723
  %v879 = vpack.c.b16 %v726, %v725
  %v880 = vpack.c.b16 %v728, %v727
  %v881 = vpack.c.b16 %v730, %v729
  %v882 = vpack.c.b16 %v732, %v731
  %v883 = vpack.c.b16 %v734, %v733
  %v884 = vpack.c.b16 %v736, %v735
  %v885 = vpack.c.b16 %v738, %v737
  %v886 = vpack.c.b16 %v740, %v739
  %v887 = vpack.c.b16 %v742, %v741
  %v888 = vpack.c.b16 %v744, %v743
  %v889 = vpack.c.b16 %v746, %v745
  %v890 = vpack.c.b16 %v748, %v747
  %v891 = vpack.c.b16 %v750, %v749
  %v892 = vpack.c.b16 %v752, %v751
  %v893 = vpack.c.b16 %v754, %v753
  %v894 = vpack.c.b16 %v756, %v755
  %v895 = vpack.c.b16 %v758, %v757
  %v896 = vpack.c.b16 %v760, %v759
  %v897 = vpack.c.b16 %v762, %v761
  %v898 = vpack.c.b16 %v764, %v763
  %v899 = vpack.c.b16 %v766, %v765
  %v900 = vpack.c.b16 %v768, %v767
  %v901 = vpack.c.b16 %v770, %v769
  %v902 = vpack.c.b16 %v772, %v771
  %v903 = vpack.c.b16 %v774, %v773
  %v904 = vpack.c.b16 %v776, %v775
  %vm1033 = vcmask 1044480
  %vm1034 = vsmask.f32 4352
  %vm1035 = vmand %vm1033, %vm1034
  %v1036 = vsel %vm1035, %v777, 4286644096
  %v1037 = vunpack.i.l.bf16 %v1036
  %v1038 = vunpack.i.h.bf16 %v1036
  %v1039 = vmax.f32 %v1037, %v1038
  %v1040 = vrot.slane %v1039, 4
  %v1041 = vmax.f32 %v1039, %v1040
  %v1042 = vrot.slane %v1041, 2
  %v1043 = vmax.f32 %v1041, %v1042
  %v1044 = vrot.slane %v1043, 1
  %v1045 = vmax.f32 %v1043, %v1044
  %v1046 = vpack.i.bf16 %v1045, %v1045
  %v1047 = vsel %vm1035, %v778, 4286644096
  %v1048 = vunpack.i.l.bf16 %v1047
  %v1049 = vunpack.i.h.bf16 %v1047
  %v1050 = vmax.f32 %v1048, %v1049
  %v1051 = vrot.slane %v1050, 4
  %v1052 = vmax.f32 %v1050, %v1051
  %v1053 = vrot.slane %v1052, 2
  %v1054 = vmax.f32 %v1052, %v1053
  %v1055 = vrot.slane %v1054, 1
  %v1056 = vmax.f32 %v1054, %v1055
  %v1057 = vpack.i.bf16 %v1056, %v1056
  %v1058 = vsel %vm1035, %v779, 4286644096
  %v1059 = vunpack.i.l.bf16 %v1058
  %v1060 = vunpack.i.h.bf16 %v1058
  %v1061 = vmax.f32 %v1059, %v1060
  %v1062 = vrot.slane %v1061, 4
  %v1063 = vmax.f32 %v1061, %v1062
  %v1064 = vrot.slane %v1063, 2
  %v1065 = vmax.f32 %v1063, %v1064
  %v1066 = vrot.slane %v1065, 1
  %v1067 = vmax.f32 %v1065, %v1066
  %v1068 = vpack.i.bf16 %v1067, %v1067
  %v1069 = vsel %vm1035, %v780, 4286644096
  %v1070 = vunpack.i.l.bf16 %v1069
  %v1071 = vunpack.i.h.bf16 %v1069
  %v1072 = vmax.f32 %v1070, %v1071
  %v1073 = vrot.slane %v1072, 4
  %v1074 = vmax.f32 %v1072, %v1073
  %v1075 = vrot.slane %v1074, 2
  %v1076 = vmax.f32 %v1074, %v1075
  %v1077 = vrot.slane %v1076, 1
  %v1078 = vmax.f32 %v1076, %v1077
  %v1079 = vpack.i.bf16 %v1078, %v1078
  %v1080 = vsel %vm1035, %v781, 4286644096
  %v1081 = vunpack.i.l.bf16 %v1080
  %v1082 = vunpack.i.h.bf16 %v1080
  %v1083 = vmax.f32 %v1081, %v1082
  %v1084 = vrot.slane %v1083, 4
  %v1085 = vmax.f32 %v1083, %v1084
  %v1086 = vrot.slane %v1085, 2
  %v1087 = vmax.f32 %v1085, %v1086
  %v1088 = vrot.slane %v1087, 1
  %v1089 = vmax.f32 %v1087, %v1088
  %v1090 = vpack.i.bf16 %v1089, %v1089
  %v1091 = vsel %vm1035, %v782, 4286644096
  %v1092 = vunpack.i.l.bf16 %v1091
  %v1093 = vunpack.i.h.bf16 %v1091
  %v1094 = vmax.f32 %v1092, %v1093
  %v1095 = vrot.slane %v1094, 4
  %v1096 = vmax.f32 %v1094, %v1095
  %v1097 = vrot.slane %v1096, 2
  %v1098 = vmax.f32 %v1096, %v1097
  %v1099 = vrot.slane %v1098, 1
  %v1100 = vmax.f32 %v1098, %v1099
  %v1101 = vpack.i.bf16 %v1100, %v1100
  %v1102 = vsel %vm1035, %v783, 4286644096
  %v1103 = vunpack.i.l.bf16 %v1102
  %v1104 = vunpack.i.h.bf16 %v1102
  %v1105 = vmax.f32 %v1103, %v1104
  %v1106 = vrot.slane %v1105, 4
  %v1107 = vmax.f32 %v1105, %v1106
  %v1108 = vrot.slane %v1107, 2
  %v1109 = vmax.f32 %v1107, %v1108
  %v1110 = vrot.slane %v1109, 1
  %v1111 = vmax.f32 %v1109, %v1110
  %v1112 = vpack.i.bf16 %v1111, %v1111
  %v1113 = vsel %vm1035, %v784, 4286644096
  %v1114 = vunpack.i.l.bf16 %v1113
  %v1115 = vunpack.i.h.bf16 %v1113
  %v1116 = vmax.f32 %v1114, %v1115
  %v1117 = vrot.slane %v1116, 4
  %v1118 = vmax.f32 %v1116, %v1117
  %v1119 = vrot.slane %v1118, 2
  %v1120 = vmax.f32 %v1118, %v1119
  %v1121 = vrot.slane %v1120, 1
  %v1122 = vmax.f32 %v1120, %v1121
  %v1123 = vpack.i.bf16 %v1122, %v1122
  %v1124 = vsel %vm1035, %v785, 4286644096
  %v1125 = vunpack.i.l.bf16 %v1124
  %v1126 = vunpack.i.h.bf16 %v1124
  %v1127 = vmax.f32 %v1125, %v1126
  %v1128 = vrot.slane %v1127, 4
  %v1129 = vmax.f32 %v1127, %v1128
  %v1130 = vrot.slane %v1129, 2
  %v1131 = vmax.f32 %v1129, %v1130
  %v1132 = vrot.slane %v1131, 1
  %v1133 = vmax.f32 %v1131, %v1132
  %v1134 = vpack.i.bf16 %v1133, %v1133
  %v1135 = vsel %vm1035, %v786, 4286644096
  %v1136 = vunpack.i.l.bf16 %v1135
  %v1137 = vunpack.i.h.bf16 %v1135
  %v1138 = vmax.f32 %v1136, %v1137
  %v1139 = vrot.slane %v1138, 4
  %v1140 = vmax.f32 %v1138, %v1139
  %v1141 = vrot.slane %v1140, 2
  %v1142 = vmax.f32 %v1140, %v1141
  %v1143 = vrot.slane %v1142, 1
  %v1144 = vmax.f32 %v1142, %v1143
  %v1145 = vpack.i.bf16 %v1144, %v1144
  %v1146 = vsel %vm1035, %v787, 4286644096
  %v1147 = vunpack.i.l.bf16 %v1146
  %v1148 = vunpack.i.h.bf16 %v1146
  %v1149 = vmax.f32 %v1147, %v1148
  %v1150 = vrot.slane %v1149, 4
  %v1151 = vmax.f32 %v1149, %v1150
  %v1152 = vrot.slane %v1151, 2
  %v1153 = vmax.f32 %v1151, %v1152
  %v1154 = vrot.slane %v1153, 1
  %v1155 = vmax.f32 %v1153, %v1154
  %v1156 = vpack.i.bf16 %v1155, %v1155
  %v1157 = vsel %vm1035, %v788, 4286644096
  %v1158 = vunpack.i.l.bf16 %v1157
  %v1159 = vunpack.i.h.bf16 %v1157
  %v1160 = vmax.f32 %v1158, %v1159
  %v1161 = vrot.slane %v1160, 4
  %v1162 = vmax.f32 %v1160, %v1161
  %v1163 = vrot.slane %v1162, 2
  %v1164 = vmax.f32 %v1162, %v1163
  %v1165 = vrot.slane %v1164, 1
  %v1166 = vmax.f32 %v1164, %v1165
  %v1167 = vpack.i.bf16 %v1166, %v1166
  %v1168 = vsel %vm1035, %v789, 4286644096
  %v1169 = vunpack.i.l.bf16 %v1168
  %v1170 = vunpack.i.h.bf16 %v1168
  %v1171 = vmax.f32 %v1169, %v1170
  %v1172 = vrot.slane %v1171, 4
  %v1173 = vmax.f32 %v1171, %v1172
  %v1174 = vrot.slane %v1173, 2
  %v1175 = vmax.f32 %v1173, %v1174
  %v1176 = vrot.slane %v1175, 1
  %v1177 = vmax.f32 %v1175, %v1176
  %v1178 = vpack.i.bf16 %v1177, %v1177
  %v1179 = vsel %vm1035, %v790, 4286644096
  %v1180 = vunpack.i.l.bf16 %v1179
  %v1181 = vunpack.i.h.bf16 %v1179
  %v1182 = vmax.f32 %v1180, %v1181
  %v1183 = vrot.slane %v1182, 4
  %v1184 = vmax.f32 %v1182, %v1183
  %v1185 = vrot.slane %v1184, 2
  %v1186 = vmax.f32 %v1184, %v1185
  %v1187 = vrot.slane %v1186, 1
  %v1188 = vmax.f32 %v1186, %v1187
  %v1189 = vpack.i.bf16 %v1188, %v1188
  %v1190 = vsel %vm1035, %v791, 4286644096
  %v1191 = vunpack.i.l.bf16 %v1190
  %v1192 = vunpack.i.h.bf16 %v1190
  %v1193 = vmax.f32 %v1191, %v1192
  %v1194 = vrot.slane %v1193, 4
  %v1195 = vmax.f32 %v1193, %v1194
  %v1196 = vrot.slane %v1195, 2
  %v1197 = vmax.f32 %v1195, %v1196
  %v1198 = vrot.slane %v1197, 1
  %v1199 = vmax.f32 %v1197, %v1198
  %v1200 = vpack.i.bf16 %v1199, %v1199
  %v1201 = vsel %vm1035, %v792, 4286644096
  %v1202 = vunpack.i.l.bf16 %v1201
  %v1203 = vunpack.i.h.bf16 %v1201
  %v1204 = vmax.f32 %v1202, %v1203
  %v1205 = vrot.slane %v1204, 4
  %v1206 = vmax.f32 %v1204, %v1205
  %v1207 = vrot.slane %v1206, 2
  %v1208 = vmax.f32 %v1206, %v1207
  %v1209 = vrot.slane %v1208, 1
  %v1210 = vmax.f32 %v1208, %v1209
  %v1211 = vpack.i.bf16 %v1210, %v1210
  %v1212 = vsel %vm1035, %v793, 4286644096
  %v1213 = vunpack.i.l.bf16 %v1212
  %v1214 = vunpack.i.h.bf16 %v1212
  %v1215 = vmax.f32 %v1213, %v1214
  %v1216 = vrot.slane %v1215, 4
  %v1217 = vmax.f32 %v1215, %v1216
  %v1218 = vrot.slane %v1217, 2
  %v1219 = vmax.f32 %v1217, %v1218
  %v1220 = vrot.slane %v1219, 1
  %v1221 = vmax.f32 %v1219, %v1220
  %v1222 = vpack.i.bf16 %v1221, %v1221
  %v1223 = vsel %vm1035, %v794, 4286644096
  %v1224 = vunpack.i.l.bf16 %v1223
  %v1225 = vunpack.i.h.bf16 %v1223
  %v1226 = vmax.f32 %v1224, %v1225
  %v1227 = vrot.slane %v1226, 4
  %v1228 = vmax.f32 %v1226, %v1227
  %v1229 = vrot.slane %v1228, 2
  %v1230 = vmax.f32 %v1228, %v1229
  %v1231 = vrot.slane %v1230, 1
  %v1232 = vmax.f32 %v1230, %v1231
  %v1233 = vpack.i.bf16 %v1232, %v1232
  %v1234 = vsel %vm1035, %v795, 4286644096
  %v1235 = vunpack.i.l.bf16 %v1234
  %v1236 = vunpack.i.h.bf16 %v1234
  %v1237 = vmax.f32 %v1235, %v1236
  %v1238 = vrot.slane %v1237, 4
  %v1239 = vmax.f32 %v1237, %v1238
  %v1240 = vrot.slane %v1239, 2
  %v1241 = vmax.f32 %v1239, %v1240
  %v1242 = vrot.slane %v1241, 1
  %v1243 = vmax.f32 %v1241, %v1242
  %v1244 = vpack.i.bf16 %v1243, %v1243
  %v1245 = vsel %vm1035, %v796, 4286644096
  %v1246 = vunpack.i.l.bf16 %v1245
  %v1247 = vunpack.i.h.bf16 %v1245
  %v1248 = vmax.f32 %v1246, %v1247
  %v1249 = vrot.slane %v1248, 4
  %v1250 = vmax.f32 %v1248, %v1249
  %v1251 = vrot.slane %v1250, 2
  %v1252 = vmax.f32 %v1250, %v1251
  %v1253 = vrot.slane %v1252, 1
  %v1254 = vmax.f32 %v1252, %v1253
  %v1255 = vpack.i.bf16 %v1254, %v1254
  %v1256 = vsel %vm1035, %v797, 4286644096
  %v1257 = vunpack.i.l.bf16 %v1256
  %v1258 = vunpack.i.h.bf16 %v1256
  %v1259 = vmax.f32 %v1257, %v1258
  %v1260 = vrot.slane %v1259, 4
  %v1261 = vmax.f32 %v1259, %v1260
  %v1262 = vrot.slane %v1261, 2
  %v1263 = vmax.f32 %v1261, %v1262
  %v1264 = vrot.slane %v1263, 1
  %v1265 = vmax.f32 %v1263, %v1264
  %v1266 = vpack.i.bf16 %v1265, %v1265
  %v1267 = vsel %vm1035, %v798, 4286644096
  %v1268 = vunpack.i.l.bf16 %v1267
  %v1269 = vunpack.i.h.bf16 %v1267
  %v1270 = vmax.f32 %v1268, %v1269
  %v1271 = vrot.slane %v1270, 4
  %v1272 = vmax.f32 %v1270, %v1271
  %v1273 = vrot.slane %v1272, 2
  %v1274 = vmax.f32 %v1272, %v1273
  %v1275 = vrot.slane %v1274, 1
  %v1276 = vmax.f32 %v1274, %v1275
  %v1277 = vpack.i.bf16 %v1276, %v1276
  %v1278 = vsel %vm1035, %v799, 4286644096
  %v1279 = vunpack.i.l.bf16 %v1278
  %v1280 = vunpack.i.h.bf16 %v1278
  %v1281 = vmax.f32 %v1279, %v1280
  %v1282 = vrot.slane %v1281, 4
  %v1283 = vmax.f32 %v1281, %v1282
  %v1284 = vrot.slane %v1283, 2
  %v1285 = vmax.f32 %v1283, %v1284
  %v1286 = vrot.slane %v1285, 1
  %v1287 = vmax.f32 %v1285, %v1286
  %v1288 = vpack.i.bf16 %v1287, %v1287
  %v1289 = vsel %vm1035, %v800, 4286644096
  %v1290 = vunpack.i.l.bf16 %v1289
  %v1291 = vunpack.i.h.bf16 %v1289
  %v1292 = vmax.f32 %v1290, %v1291
  %v1293 = vrot.slane %v1292, 4
  %v1294 = vmax.f32 %v1292, %v1293
  %v1295 = vrot.slane %v1294, 2
  %v1296 = vmax.f32 %v1294, %v1295
  %v1297 = vrot.slane %v1296, 1
  %v1298 = vmax.f32 %v1296, %v1297
  %v1299 = vpack.i.bf16 %v1298, %v1298
  %v1300 = vsel %vm1035, %v801, 4286644096
  %v1301 = vunpack.i.l.bf16 %v1300
  %v1302 = vunpack.i.h.bf16 %v1300
  %v1303 = vmax.f32 %v1301, %v1302
  %v1304 = vrot.slane %v1303, 4
  %v1305 = vmax.f32 %v1303, %v1304
  %v1306 = vrot.slane %v1305, 2
  %v1307 = vmax.f32 %v1305, %v1306
  %v1308 = vrot.slane %v1307, 1
  %v1309 = vmax.f32 %v1307, %v1308
  %v1310 = vpack.i.bf16 %v1309, %v1309
  %v1311 = vsel %vm1035, %v802, 4286644096
  %v1312 = vunpack.i.l.bf16 %v1311
  %v1313 = vunpack.i.h.bf16 %v1311
  %v1314 = vmax.f32 %v1312, %v1313
  %v1315 = vrot.slane %v1314, 4
  %v1316 = vmax.f32 %v1314, %v1315
  %v1317 = vrot.slane %v1316, 2
  %v1318 = vmax.f32 %v1316, %v1317
  %v1319 = vrot.slane %v1318, 1
  %v1320 = vmax.f32 %v1318, %v1319
  %v1321 = vpack.i.bf16 %v1320, %v1320
  %v1322 = vsel %vm1035, %v803, 4286644096
  %v1323 = vunpack.i.l.bf16 %v1322
  %v1324 = vunpack.i.h.bf16 %v1322
  %v1325 = vmax.f32 %v1323, %v1324
  %v1326 = vrot.slane %v1325, 4
  %v1327 = vmax.f32 %v1325, %v1326
  %v1328 = vrot.slane %v1327, 2
  %v1329 = vmax.f32 %v1327, %v1328
  %v1330 = vrot.slane %v1329, 1
  %v1331 = vmax.f32 %v1329, %v1330
  %v1332 = vpack.i.bf16 %v1331, %v1331
  %v1333 = vsel %vm1035, %v804, 4286644096
  %v1334 = vunpack.i.l.bf16 %v1333
  %v1335 = vunpack.i.h.bf16 %v1333
  %v1336 = vmax.f32 %v1334, %v1335
  %v1337 = vrot.slane %v1336, 4
  %v1338 = vmax.f32 %v1336, %v1337
  %v1339 = vrot.slane %v1338, 2
  %v1340 = vmax.f32 %v1338, %v1339
  %v1341 = vrot.slane %v1340, 1
  %v1342 = vmax.f32 %v1340, %v1341
  %v1343 = vpack.i.bf16 %v1342, %v1342
  %v1344 = vsel %vm1035, %v805, 4286644096
  %v1345 = vunpack.i.l.bf16 %v1344
  %v1346 = vunpack.i.h.bf16 %v1344
  %v1347 = vmax.f32 %v1345, %v1346
  %v1348 = vrot.slane %v1347, 4
  %v1349 = vmax.f32 %v1347, %v1348
  %v1350 = vrot.slane %v1349, 2
  %v1351 = vmax.f32 %v1349, %v1350
  %v1352 = vrot.slane %v1351, 1
  %v1353 = vmax.f32 %v1351, %v1352
  %v1354 = vpack.i.bf16 %v1353, %v1353
  %v1355 = vsel %vm1035, %v806, 4286644096
  %v1356 = vunpack.i.l.bf16 %v1355
  %v1357 = vunpack.i.h.bf16 %v1355
  %v1358 = vmax.f32 %v1356, %v1357
  %v1359 = vrot.slane %v1358, 4
  %v1360 = vmax.f32 %v1358, %v1359
  %v1361 = vrot.slane %v1360, 2
  %v1362 = vmax.f32 %v1360, %v1361
  %v1363 = vrot.slane %v1362, 1
  %v1364 = vmax.f32 %v1362, %v1363
  %v1365 = vpack.i.bf16 %v1364, %v1364
  %v1366 = vsel %vm1035, %v807, 4286644096
  %v1367 = vunpack.i.l.bf16 %v1366
  %v1368 = vunpack.i.h.bf16 %v1366
  %v1369 = vmax.f32 %v1367, %v1368
  %v1370 = vrot.slane %v1369, 4
  %v1371 = vmax.f32 %v1369, %v1370
  %v1372 = vrot.slane %v1371, 2
  %v1373 = vmax.f32 %v1371, %v1372
  %v1374 = vrot.slane %v1373, 1
  %v1375 = vmax.f32 %v1373, %v1374
  %v1376 = vpack.i.bf16 %v1375, %v1375
  %v1377 = vsel %vm1035, %v808, 4286644096
  %v1378 = vunpack.i.l.bf16 %v1377
  %v1379 = vunpack.i.h.bf16 %v1377
  %v1380 = vmax.f32 %v1378, %v1379
  %v1381 = vrot.slane %v1380, 4
  %v1382 = vmax.f32 %v1380, %v1381
  %v1383 = vrot.slane %v1382, 2
  %v1384 = vmax.f32 %v1382, %v1383
  %v1385 = vrot.slane %v1384, 1
  %v1386 = vmax.f32 %v1384, %v1385
  %v1387 = vpack.i.bf16 %v1386, %v1386
  %v1388 = vsel %vm1035, %v809, 4286644096
  %v1389 = vunpack.i.l.bf16 %v1388
  %v1390 = vunpack.i.h.bf16 %v1388
  %v1391 = vmax.f32 %v1389, %v1390
  %v1392 = vrot.slane %v1391, 4
  %v1393 = vmax.f32 %v1391, %v1392
  %v1394 = vrot.slane %v1393, 2
  %v1395 = vmax.f32 %v1393, %v1394
  %v1396 = vrot.slane %v1395, 1
  %v1397 = vmax.f32 %v1395, %v1396
  %v1398 = vpack.i.bf16 %v1397, %v1397
  %v1399 = vsel %vm1035, %v810, 4286644096
  %v1400 = vunpack.i.l.bf16 %v1399
  %v1401 = vunpack.i.h.bf16 %v1399
  %v1402 = vmax.f32 %v1400, %v1401
  %v1403 = vrot.slane %v1402, 4
  %v1404 = vmax.f32 %v1402, %v1403
  %v1405 = vrot.slane %v1404, 2
  %v1406 = vmax.f32 %v1404, %v1405
  %v1407 = vrot.slane %v1406, 1
  %v1408 = vmax.f32 %v1406, %v1407
  %v1409 = vpack.i.bf16 %v1408, %v1408
  %v1410 = vsel %vm1035, %v811, 4286644096
  %v1411 = vunpack.i.l.bf16 %v1410
  %v1412 = vunpack.i.h.bf16 %v1410
  %v1413 = vmax.f32 %v1411, %v1412
  %v1414 = vrot.slane %v1413, 4
  %v1415 = vmax.f32 %v1413, %v1414
  %v1416 = vrot.slane %v1415, 2
  %v1417 = vmax.f32 %v1415, %v1416
  %v1418 = vrot.slane %v1417, 1
  %v1419 = vmax.f32 %v1417, %v1418
  %v1420 = vpack.i.bf16 %v1419, %v1419
  %v1421 = vsel %vm1035, %v812, 4286644096
  %v1422 = vunpack.i.l.bf16 %v1421
  %v1423 = vunpack.i.h.bf16 %v1421
  %v1424 = vmax.f32 %v1422, %v1423
  %v1425 = vrot.slane %v1424, 4
  %v1426 = vmax.f32 %v1424, %v1425
  %v1427 = vrot.slane %v1426, 2
  %v1428 = vmax.f32 %v1426, %v1427
  %v1429 = vrot.slane %v1428, 1
  %v1430 = vmax.f32 %v1428, %v1429
  %v1431 = vpack.i.bf16 %v1430, %v1430
  %v1432 = vsel %vm1035, %v813, 4286644096
  %v1433 = vunpack.i.l.bf16 %v1432
  %v1434 = vunpack.i.h.bf16 %v1432
  %v1435 = vmax.f32 %v1433, %v1434
  %v1436 = vrot.slane %v1435, 4
  %v1437 = vmax.f32 %v1435, %v1436
  %v1438 = vrot.slane %v1437, 2
  %v1439 = vmax.f32 %v1437, %v1438
  %v1440 = vrot.slane %v1439, 1
  %v1441 = vmax.f32 %v1439, %v1440
  %v1442 = vpack.i.bf16 %v1441, %v1441
  %v1443 = vsel %vm1035, %v814, 4286644096
  %v1444 = vunpack.i.l.bf16 %v1443
  %v1445 = vunpack.i.h.bf16 %v1443
  %v1446 = vmax.f32 %v1444, %v1445
  %v1447 = vrot.slane %v1446, 4
  %v1448 = vmax.f32 %v1446, %v1447
  %v1449 = vrot.slane %v1448, 2
  %v1450 = vmax.f32 %v1448, %v1449
  %v1451 = vrot.slane %v1450, 1
  %v1452 = vmax.f32 %v1450, %v1451
  %v1453 = vpack.i.bf16 %v1452, %v1452
  %v1454 = vsel %vm1035, %v815, 4286644096
  %v1455 = vunpack.i.l.bf16 %v1454
  %v1456 = vunpack.i.h.bf16 %v1454
  %v1457 = vmax.f32 %v1455, %v1456
  %v1458 = vrot.slane %v1457, 4
  %v1459 = vmax.f32 %v1457, %v1458
  %v1460 = vrot.slane %v1459, 2
  %v1461 = vmax.f32 %v1459, %v1460
  %v1462 = vrot.slane %v1461, 1
  %v1463 = vmax.f32 %v1461, %v1462
  %v1464 = vpack.i.bf16 %v1463, %v1463
  %v1465 = vsel %vm1035, %v816, 4286644096
  %v1466 = vunpack.i.l.bf16 %v1465
  %v1467 = vunpack.i.h.bf16 %v1465
  %v1468 = vmax.f32 %v1466, %v1467
  %v1469 = vrot.slane %v1468, 4
  %v1470 = vmax.f32 %v1468, %v1469
  %v1471 = vrot.slane %v1470, 2
  %v1472 = vmax.f32 %v1470, %v1471
  %v1473 = vrot.slane %v1472, 1
  %v1474 = vmax.f32 %v1472, %v1473
  %v1475 = vpack.i.bf16 %v1474, %v1474
  %v1476 = vsel %vm1035, %v817, 4286644096
  %v1477 = vunpack.i.l.bf16 %v1476
  %v1478 = vunpack.i.h.bf16 %v1476
  %v1479 = vmax.f32 %v1477, %v1478
  %v1480 = vrot.slane %v1479, 4
  %v1481 = vmax.f32 %v1479, %v1480
  %v1482 = vrot.slane %v1481, 2
  %v1483 = vmax.f32 %v1481, %v1482
  %v1484 = vrot.slane %v1483, 1
  %v1485 = vmax.f32 %v1483, %v1484
  %v1486 = vpack.i.bf16 %v1485, %v1485
  %v1487 = vsel %vm1035, %v818, 4286644096
  %v1488 = vunpack.i.l.bf16 %v1487
  %v1489 = vunpack.i.h.bf16 %v1487
  %v1490 = vmax.f32 %v1488, %v1489
  %v1491 = vrot.slane %v1490, 4
  %v1492 = vmax.f32 %v1490, %v1491
  %v1493 = vrot.slane %v1492, 2
  %v1494 = vmax.f32 %v1492, %v1493
  %v1495 = vrot.slane %v1494, 1
  %v1496 = vmax.f32 %v1494, %v1495
  %v1497 = vpack.i.bf16 %v1496, %v1496
  %v1498 = vsel %vm1035, %v819, 4286644096
  %v1499 = vunpack.i.l.bf16 %v1498
  %v1500 = vunpack.i.h.bf16 %v1498
  %v1501 = vmax.f32 %v1499, %v1500
  %v1502 = vrot.slane %v1501, 4
  %v1503 = vmax.f32 %v1501, %v1502
  %v1504 = vrot.slane %v1503, 2
  %v1505 = vmax.f32 %v1503, %v1504
  %v1506 = vrot.slane %v1505, 1
  %v1507 = vmax.f32 %v1505, %v1506
  %v1508 = vpack.i.bf16 %v1507, %v1507
  %v1509 = vsel %vm1035, %v820, 4286644096
  %v1510 = vunpack.i.l.bf16 %v1509
  %v1511 = vunpack.i.h.bf16 %v1509
  %v1512 = vmax.f32 %v1510, %v1511
  %v1513 = vrot.slane %v1512, 4
  %v1514 = vmax.f32 %v1512, %v1513
  %v1515 = vrot.slane %v1514, 2
  %v1516 = vmax.f32 %v1514, %v1515
  %v1517 = vrot.slane %v1516, 1
  %v1518 = vmax.f32 %v1516, %v1517
  %v1519 = vpack.i.bf16 %v1518, %v1518
  %v1520 = vsel %vm1035, %v821, 4286644096
  %v1521 = vunpack.i.l.bf16 %v1520
  %v1522 = vunpack.i.h.bf16 %v1520
  %v1523 = vmax.f32 %v1521, %v1522
  %v1524 = vrot.slane %v1523, 4
  %v1525 = vmax.f32 %v1523, %v1524
  %v1526 = vrot.slane %v1525, 2
  %v1527 = vmax.f32 %v1525, %v1526
  %v1528 = vrot.slane %v1527, 1
  %v1529 = vmax.f32 %v1527, %v1528
  %v1530 = vpack.i.bf16 %v1529, %v1529
  %v1531 = vsel %vm1035, %v822, 4286644096
  %v1532 = vunpack.i.l.bf16 %v1531
  %v1533 = vunpack.i.h.bf16 %v1531
  %v1534 = vmax.f32 %v1532, %v1533
  %v1535 = vrot.slane %v1534, 4
  %v1536 = vmax.f32 %v1534, %v1535
  %v1537 = vrot.slane %v1536, 2
  %v1538 = vmax.f32 %v1536, %v1537
  %v1539 = vrot.slane %v1538, 1
  %v1540 = vmax.f32 %v1538, %v1539
  %v1541 = vpack.i.bf16 %v1540, %v1540
  %v1542 = vsel %vm1035, %v823, 4286644096
  %v1543 = vunpack.i.l.bf16 %v1542
  %v1544 = vunpack.i.h.bf16 %v1542
  %v1545 = vmax.f32 %v1543, %v1544
  %v1546 = vrot.slane %v1545, 4
  %v1547 = vmax.f32 %v1545, %v1546
  %v1548 = vrot.slane %v1547, 2
  %v1549 = vmax.f32 %v1547, %v1548
  %v1550 = vrot.slane %v1549, 1
  %v1551 = vmax.f32 %v1549, %v1550
  %v1552 = vpack.i.bf16 %v1551, %v1551
  %v1553 = vsel %vm1035, %v824, 4286644096
  %v1554 = vunpack.i.l.bf16 %v1553
  %v1555 = vunpack.i.h.bf16 %v1553
  %v1556 = vmax.f32 %v1554, %v1555
  %v1557 = vrot.slane %v1556, 4
  %v1558 = vmax.f32 %v1556, %v1557
  %v1559 = vrot.slane %v1558, 2
  %v1560 = vmax.f32 %v1558, %v1559
  %v1561 = vrot.slane %v1560, 1
  %v1562 = vmax.f32 %v1560, %v1561
  %v1563 = vpack.i.bf16 %v1562, %v1562
  %v1564 = vsel %vm1035, %v825, 4286644096
  %v1565 = vunpack.i.l.bf16 %v1564
  %v1566 = vunpack.i.h.bf16 %v1564
  %v1567 = vmax.f32 %v1565, %v1566
  %v1568 = vrot.slane %v1567, 4
  %v1569 = vmax.f32 %v1567, %v1568
  %v1570 = vrot.slane %v1569, 2
  %v1571 = vmax.f32 %v1569, %v1570
  %v1572 = vrot.slane %v1571, 1
  %v1573 = vmax.f32 %v1571, %v1572
  %v1574 = vpack.i.bf16 %v1573, %v1573
  %v1575 = vsel %vm1035, %v826, 4286644096
  %v1576 = vunpack.i.l.bf16 %v1575
  %v1577 = vunpack.i.h.bf16 %v1575
  %v1578 = vmax.f32 %v1576, %v1577
  %v1579 = vrot.slane %v1578, 4
  %v1580 = vmax.f32 %v1578, %v1579
  %v1581 = vrot.slane %v1580, 2
  %v1582 = vmax.f32 %v1580, %v1581
  %v1583 = vrot.slane %v1582, 1
  %v1584 = vmax.f32 %v1582, %v1583
  %v1585 = vpack.i.bf16 %v1584, %v1584
  %v1586 = vsel %vm1035, %v827, 4286644096
  %v1587 = vunpack.i.l.bf16 %v1586
  %v1588 = vunpack.i.h.bf16 %v1586
  %v1589 = vmax.f32 %v1587, %v1588
  %v1590 = vrot.slane %v1589, 4
  %v1591 = vmax.f32 %v1589, %v1590
  %v1592 = vrot.slane %v1591, 2
  %v1593 = vmax.f32 %v1591, %v1592
  %v1594 = vrot.slane %v1593, 1
  %v1595 = vmax.f32 %v1593, %v1594
  %v1596 = vpack.i.bf16 %v1595, %v1595
  %v1597 = vsel %vm1035, %v828, 4286644096
  %v1598 = vunpack.i.l.bf16 %v1597
  %v1599 = vunpack.i.h.bf16 %v1597
  %v1600 = vmax.f32 %v1598, %v1599
  %v1601 = vrot.slane %v1600, 4
  %v1602 = vmax.f32 %v1600, %v1601
  %v1603 = vrot.slane %v1602, 2
  %v1604 = vmax.f32 %v1602, %v1603
  %v1605 = vrot.slane %v1604, 1
  %v1606 = vmax.f32 %v1604, %v1605
  %v1607 = vpack.i.bf16 %v1606, %v1606
  %v1608 = vsel %vm1035, %v829, 4286644096
  %v1609 = vunpack.i.l.bf16 %v1608
  %v1610 = vunpack.i.h.bf16 %v1608
  %v1611 = vmax.f32 %v1609, %v1610
  %v1612 = vrot.slane %v1611, 4
  %v1613 = vmax.f32 %v1611, %v1612
  %v1614 = vrot.slane %v1613, 2
  %v1615 = vmax.f32 %v1613, %v1614
  %v1616 = vrot.slane %v1615, 1
  %v1617 = vmax.f32 %v1615, %v1616
  %v1618 = vpack.i.bf16 %v1617, %v1617
  %v1619 = vsel %vm1035, %v830, 4286644096
  %v1620 = vunpack.i.l.bf16 %v1619
  %v1621 = vunpack.i.h.bf16 %v1619
  %v1622 = vmax.f32 %v1620, %v1621
  %v1623 = vrot.slane %v1622, 4
  %v1624 = vmax.f32 %v1622, %v1623
  %v1625 = vrot.slane %v1624, 2
  %v1626 = vmax.f32 %v1624, %v1625
  %v1627 = vrot.slane %v1626, 1
  %v1628 = vmax.f32 %v1626, %v1627
  %v1629 = vpack.i.bf16 %v1628, %v1628
  %v1630 = vsel %vm1035, %v831, 4286644096
  %v1631 = vunpack.i.l.bf16 %v1630
  %v1632 = vunpack.i.h.bf16 %v1630
  %v1633 = vmax.f32 %v1631, %v1632
  %v1634 = vrot.slane %v1633, 4
  %v1635 = vmax.f32 %v1633, %v1634
  %v1636 = vrot.slane %v1635, 2
  %v1637 = vmax.f32 %v1635, %v1636
  %v1638 = vrot.slane %v1637, 1
  %v1639 = vmax.f32 %v1637, %v1638
  %v1640 = vpack.i.bf16 %v1639, %v1639
  %v1641 = vsel %vm1035, %v832, 4286644096
  %v1642 = vunpack.i.l.bf16 %v1641
  %v1643 = vunpack.i.h.bf16 %v1641
  %v1644 = vmax.f32 %v1642, %v1643
  %v1645 = vrot.slane %v1644, 4
  %v1646 = vmax.f32 %v1644, %v1645
  %v1647 = vrot.slane %v1646, 2
  %v1648 = vmax.f32 %v1646, %v1647
  %v1649 = vrot.slane %v1648, 1
  %v1650 = vmax.f32 %v1648, %v1649
  %v1651 = vpack.i.bf16 %v1650, %v1650
  %v1652 = vsel %vm1035, %v833, 4286644096
  %v1653 = vunpack.i.l.bf16 %v1652
  %v1654 = vunpack.i.h.bf16 %v1652
  %v1655 = vmax.f32 %v1653, %v1654
  %v1656 = vrot.slane %v1655, 4
  %v1657 = vmax.f32 %v1655, %v1656
  %v1658 = vrot.slane %v1657, 2
  %v1659 = vmax.f32 %v1657, %v1658
  %v1660 = vrot.slane %v1659, 1
  %v1661 = vmax.f32 %v1659, %v1660
  %v1662 = vpack.i.bf16 %v1661, %v1661
  %v1663 = vsel %vm1035, %v834, 4286644096
  %v1664 = vunpack.i.l.bf16 %v1663
  %v1665 = vunpack.i.h.bf16 %v1663
  %v1666 = vmax.f32 %v1664, %v1665
  %v1667 = vrot.slane %v1666, 4
  %v1668 = vmax.f32 %v1666, %v1667
  %v1669 = vrot.slane %v1668, 2
  %v1670 = vmax.f32 %v1668, %v1669
  %v1671 = vrot.slane %v1670, 1
  %v1672 = vmax.f32 %v1670, %v1671
  %v1673 = vpack.i.bf16 %v1672, %v1672
  %v1674 = vsel %vm1035, %v835, 4286644096
  %v1675 = vunpack.i.l.bf16 %v1674
  %v1676 = vunpack.i.h.bf16 %v1674
  %v1677 = vmax.f32 %v1675, %v1676
  %v1678 = vrot.slane %v1677, 4
  %v1679 = vmax.f32 %v1677, %v1678
  %v1680 = vrot.slane %v1679, 2
  %v1681 = vmax.f32 %v1679, %v1680
  %v1682 = vrot.slane %v1681, 1
  %v1683 = vmax.f32 %v1681, %v1682
  %v1684 = vpack.i.bf16 %v1683, %v1683
  %v1685 = vsel %vm1035, %v836, 4286644096
  %v1686 = vunpack.i.l.bf16 %v1685
  %v1687 = vunpack.i.h.bf16 %v1685
  %v1688 = vmax.f32 %v1686, %v1687
  %v1689 = vrot.slane %v1688, 4
  %v1690 = vmax.f32 %v1688, %v1689
  %v1691 = vrot.slane %v1690, 2
  %v1692 = vmax.f32 %v1690, %v1691
  %v1693 = vrot.slane %v1692, 1
  %v1694 = vmax.f32 %v1692, %v1693
  %v1695 = vpack.i.bf16 %v1694, %v1694
  %v1696 = vsel %vm1035, %v837, 4286644096
  %v1697 = vunpack.i.l.bf16 %v1696
  %v1698 = vunpack.i.h.bf16 %v1696
  %v1699 = vmax.f32 %v1697, %v1698
  %v1700 = vrot.slane %v1699, 4
  %v1701 = vmax.f32 %v1699, %v1700
  %v1702 = vrot.slane %v1701, 2
  %v1703 = vmax.f32 %v1701, %v1702
  %v1704 = vrot.slane %v1703, 1
  %v1705 = vmax.f32 %v1703, %v1704
  %v1706 = vpack.i.bf16 %v1705, %v1705
  %v1707 = vsel %vm1035, %v838, 4286644096
  %v1708 = vunpack.i.l.bf16 %v1707
  %v1709 = vunpack.i.h.bf16 %v1707
  %v1710 = vmax.f32 %v1708, %v1709
  %v1711 = vrot.slane %v1710, 4
  %v1712 = vmax.f32 %v1710, %v1711
  %v1713 = vrot.slane %v1712, 2
  %v1714 = vmax.f32 %v1712, %v1713
  %v1715 = vrot.slane %v1714, 1
  %v1716 = vmax.f32 %v1714, %v1715
  %v1717 = vpack.i.bf16 %v1716, %v1716
  %v1718 = vsel %vm1035, %v839, 4286644096
  %v1719 = vunpack.i.l.bf16 %v1718
  %v1720 = vunpack.i.h.bf16 %v1718
  %v1721 = vmax.f32 %v1719, %v1720
  %v1722 = vrot.slane %v1721, 4
  %v1723 = vmax.f32 %v1721, %v1722
  %v1724 = vrot.slane %v1723, 2
  %v1725 = vmax.f32 %v1723, %v1724
  %v1726 = vrot.slane %v1725, 1
  %v1727 = vmax.f32 %v1725, %v1726
  %v1728 = vpack.i.bf16 %v1727, %v1727
  %v1729 = vsel %vm1035, %v840, 4286644096
  %v1730 = vunpack.i.l.bf16 %v1729
  %v1731 = vunpack.i.h.bf16 %v1729
  %v1732 = vmax.f32 %v1730, %v1731
  %v1733 = vrot.slane %v1732, 4
  %v1734 = vmax.f32 %v1732, %v1733
  %v1735 = vrot.slane %v1734, 2
  %v1736 = vmax.f32 %v1734, %v1735
  %v1737 = vrot.slane %v1736, 1
  %v1738 = vmax.f32 %v1736, %v1737
  %v1739 = vpack.i.bf16 %v1738, %v1738
  %v1740 = vsel %vm1035, %v841, 4286644096
  %v1741 = vunpack.i.l.bf16 %v1740
  %v1742 = vunpack.i.h.bf16 %v1740
  %v1743 = vmax.f32 %v1741, %v1742
  %v1744 = vrot.slane %v1743, 4
  %v1745 = vmax.f32 %v1743, %v1744
  %v1746 = vrot.slane %v1745, 2
  %v1747 = vmax.f32 %v1745, %v1746
  %v1748 = vrot.slane %v1747, 1
  %v1749 = vmax.f32 %v1747, %v1748
  %v1750 = vpack.i.bf16 %v1749, %v1749
  %v1751 = vsel %vm1035, %v842, 4286644096
  %v1752 = vunpack.i.l.bf16 %v1751
  %v1753 = vunpack.i.h.bf16 %v1751
  %v1754 = vmax.f32 %v1752, %v1753
  %v1755 = vrot.slane %v1754, 4
  %v1756 = vmax.f32 %v1754, %v1755
  %v1757 = vrot.slane %v1756, 2
  %v1758 = vmax.f32 %v1756, %v1757
  %v1759 = vrot.slane %v1758, 1
  %v1760 = vmax.f32 %v1758, %v1759
  %v1761 = vpack.i.bf16 %v1760, %v1760
  %v1762 = vsel %vm1035, %v843, 4286644096
  %v1763 = vunpack.i.l.bf16 %v1762
  %v1764 = vunpack.i.h.bf16 %v1762
  %v1765 = vmax.f32 %v1763, %v1764
  %v1766 = vrot.slane %v1765, 4
  %v1767 = vmax.f32 %v1765, %v1766
  %v1768 = vrot.slane %v1767, 2
  %v1769 = vmax.f32 %v1767, %v1768
  %v1770 = vrot.slane %v1769, 1
  %v1771 = vmax.f32 %v1769, %v1770
  %v1772 = vpack.i.bf16 %v1771, %v1771
  %v1773 = vsel %vm1035, %v844, 4286644096
  %v1774 = vunpack.i.l.bf16 %v1773
  %v1775 = vunpack.i.h.bf16 %v1773
  %v1776 = vmax.f32 %v1774, %v1775
  %v1777 = vrot.slane %v1776, 4
  %v1778 = vmax.f32 %v1776, %v1777
  %v1779 = vrot.slane %v1778, 2
  %v1780 = vmax.f32 %v1778, %v1779
  %v1781 = vrot.slane %v1780, 1
  %v1782 = vmax.f32 %v1780, %v1781
  %v1783 = vpack.i.bf16 %v1782, %v1782
  %v1784 = vsel %vm1035, %v845, 4286644096
  %v1785 = vunpack.i.l.bf16 %v1784
  %v1786 = vunpack.i.h.bf16 %v1784
  %v1787 = vmax.f32 %v1785, %v1786
  %v1788 = vrot.slane %v1787, 4
  %v1789 = vmax.f32 %v1787, %v1788
  %v1790 = vrot.slane %v1789, 2
  %v1791 = vmax.f32 %v1789, %v1790
  %v1792 = vrot.slane %v1791, 1
  %v1793 = vmax.f32 %v1791, %v1792
  %v1794 = vpack.i.bf16 %v1793, %v1793
  %v1795 = vsel %vm1035, %v846, 4286644096
  %v1796 = vunpack.i.l.bf16 %v1795
  %v1797 = vunpack.i.h.bf16 %v1795
  %v1798 = vmax.f32 %v1796, %v1797
  %v1799 = vrot.slane %v1798, 4
  %v1800 = vmax.f32 %v1798, %v1799
  %v1801 = vrot.slane %v1800, 2
  %v1802 = vmax.f32 %v1800, %v1801
  %v1803 = vrot.slane %v1802, 1
  %v1804 = vmax.f32 %v1802, %v1803
  %v1805 = vpack.i.bf16 %v1804, %v1804
  %v1806 = vsel %vm1035, %v847, 4286644096
  %v1807 = vunpack.i.l.bf16 %v1806
  %v1808 = vunpack.i.h.bf16 %v1806
  %v1809 = vmax.f32 %v1807, %v1808
  %v1810 = vrot.slane %v1809, 4
  %v1811 = vmax.f32 %v1809, %v1810
  %v1812 = vrot.slane %v1811, 2
  %v1813 = vmax.f32 %v1811, %v1812
  %v1814 = vrot.slane %v1813, 1
  %v1815 = vmax.f32 %v1813, %v1814
  %v1816 = vpack.i.bf16 %v1815, %v1815
  %v1817 = vsel %vm1035, %v848, 4286644096
  %v1818 = vunpack.i.l.bf16 %v1817
  %v1819 = vunpack.i.h.bf16 %v1817
  %v1820 = vmax.f32 %v1818, %v1819
  %v1821 = vrot.slane %v1820, 4
  %v1822 = vmax.f32 %v1820, %v1821
  %v1823 = vrot.slane %v1822, 2
  %v1824 = vmax.f32 %v1822, %v1823
  %v1825 = vrot.slane %v1824, 1
  %v1826 = vmax.f32 %v1824, %v1825
  %v1827 = vpack.i.bf16 %v1826, %v1826
  %v1828 = vsel %vm1035, %v849, 4286644096
  %v1829 = vunpack.i.l.bf16 %v1828
  %v1830 = vunpack.i.h.bf16 %v1828
  %v1831 = vmax.f32 %v1829, %v1830
  %v1832 = vrot.slane %v1831, 4
  %v1833 = vmax.f32 %v1831, %v1832
  %v1834 = vrot.slane %v1833, 2
  %v1835 = vmax.f32 %v1833, %v1834
  %v1836 = vrot.slane %v1835, 1
  %v1837 = vmax.f32 %v1835, %v1836
  %v1838 = vpack.i.bf16 %v1837, %v1837
  %v1839 = vsel %vm1035, %v850, 4286644096
  %v1840 = vunpack.i.l.bf16 %v1839
  %v1841 = vunpack.i.h.bf16 %v1839
  %v1842 = vmax.f32 %v1840, %v1841
  %v1843 = vrot.slane %v1842, 4
  %v1844 = vmax.f32 %v1842, %v1843
  %v1845 = vrot.slane %v1844, 2
  %v1846 = vmax.f32 %v1844, %v1845
  %v1847 = vrot.slane %v1846, 1
  %v1848 = vmax.f32 %v1846, %v1847
  %v1849 = vpack.i.bf16 %v1848, %v1848
  %v1850 = vsel %vm1035, %v851, 4286644096
  %v1851 = vunpack.i.l.bf16 %v1850
  %v1852 = vunpack.i.h.bf16 %v1850
  %v1853 = vmax.f32 %v1851, %v1852
  %v1854 = vrot.slane %v1853, 4
  %v1855 = vmax.f32 %v1853, %v1854
  %v1856 = vrot.slane %v1855, 2
  %v1857 = vmax.f32 %v1855, %v1856
  %v1858 = vrot.slane %v1857, 1
  %v1859 = vmax.f32 %v1857, %v1858
  %v1860 = vpack.i.bf16 %v1859, %v1859
  %v1861 = vsel %vm1035, %v852, 4286644096
  %v1862 = vunpack.i.l.bf16 %v1861
  %v1863 = vunpack.i.h.bf16 %v1861
  %v1864 = vmax.f32 %v1862, %v1863
  %v1865 = vrot.slane %v1864, 4
  %v1866 = vmax.f32 %v1864, %v1865
  %v1867 = vrot.slane %v1866, 2
  %v1868 = vmax.f32 %v1866, %v1867
  %v1869 = vrot.slane %v1868, 1
  %v1870 = vmax.f32 %v1868, %v1869
  %v1871 = vpack.i.bf16 %v1870, %v1870
  %v1872 = vsel %vm1035, %v853, 4286644096
  %v1873 = vunpack.i.l.bf16 %v1872
  %v1874 = vunpack.i.h.bf16 %v1872
  %v1875 = vmax.f32 %v1873, %v1874
  %v1876 = vrot.slane %v1875, 4
  %v1877 = vmax.f32 %v1875, %v1876
  %v1878 = vrot.slane %v1877, 2
  %v1879 = vmax.f32 %v1877, %v1878
  %v1880 = vrot.slane %v1879, 1
  %v1881 = vmax.f32 %v1879, %v1880
  %v1882 = vpack.i.bf16 %v1881, %v1881
  %v1883 = vsel %vm1035, %v854, 4286644096
  %v1884 = vunpack.i.l.bf16 %v1883
  %v1885 = vunpack.i.h.bf16 %v1883
  %v1886 = vmax.f32 %v1884, %v1885
  %v1887 = vrot.slane %v1886, 4
  %v1888 = vmax.f32 %v1886, %v1887
  %v1889 = vrot.slane %v1888, 2
  %v1890 = vmax.f32 %v1888, %v1889
  %v1891 = vrot.slane %v1890, 1
  %v1892 = vmax.f32 %v1890, %v1891
  %v1893 = vpack.i.bf16 %v1892, %v1892
  %v1894 = vsel %vm1035, %v855, 4286644096
  %v1895 = vunpack.i.l.bf16 %v1894
  %v1896 = vunpack.i.h.bf16 %v1894
  %v1897 = vmax.f32 %v1895, %v1896
  %v1898 = vrot.slane %v1897, 4
  %v1899 = vmax.f32 %v1897, %v1898
  %v1900 = vrot.slane %v1899, 2
  %v1901 = vmax.f32 %v1899, %v1900
  %v1902 = vrot.slane %v1901, 1
  %v1903 = vmax.f32 %v1901, %v1902
  %v1904 = vpack.i.bf16 %v1903, %v1903
  %v1905 = vsel %vm1035, %v856, 4286644096
  %v1906 = vunpack.i.l.bf16 %v1905
  %v1907 = vunpack.i.h.bf16 %v1905
  %v1908 = vmax.f32 %v1906, %v1907
  %v1909 = vrot.slane %v1908, 4
  %v1910 = vmax.f32 %v1908, %v1909
  %v1911 = vrot.slane %v1910, 2
  %v1912 = vmax.f32 %v1910, %v1911
  %v1913 = vrot.slane %v1912, 1
  %v1914 = vmax.f32 %v1912, %v1913
  %v1915 = vpack.i.bf16 %v1914, %v1914
  %v1916 = vsel %vm1035, %v857, 4286644096
  %v1917 = vunpack.i.l.bf16 %v1916
  %v1918 = vunpack.i.h.bf16 %v1916
  %v1919 = vmax.f32 %v1917, %v1918
  %v1920 = vrot.slane %v1919, 4
  %v1921 = vmax.f32 %v1919, %v1920
  %v1922 = vrot.slane %v1921, 2
  %v1923 = vmax.f32 %v1921, %v1922
  %v1924 = vrot.slane %v1923, 1
  %v1925 = vmax.f32 %v1923, %v1924
  %v1926 = vpack.i.bf16 %v1925, %v1925
  %v1927 = vsel %vm1035, %v858, 4286644096
  %v1928 = vunpack.i.l.bf16 %v1927
  %v1929 = vunpack.i.h.bf16 %v1927
  %v1930 = vmax.f32 %v1928, %v1929
  %v1931 = vrot.slane %v1930, 4
  %v1932 = vmax.f32 %v1930, %v1931
  %v1933 = vrot.slane %v1932, 2
  %v1934 = vmax.f32 %v1932, %v1933
  %v1935 = vrot.slane %v1934, 1
  %v1936 = vmax.f32 %v1934, %v1935
  %v1937 = vpack.i.bf16 %v1936, %v1936
  %v1938 = vsel %vm1035, %v859, 4286644096
  %v1939 = vunpack.i.l.bf16 %v1938
  %v1940 = vunpack.i.h.bf16 %v1938
  %v1941 = vmax.f32 %v1939, %v1940
  %v1942 = vrot.slane %v1941, 4
  %v1943 = vmax.f32 %v1941, %v1942
  %v1944 = vrot.slane %v1943, 2
  %v1945 = vmax.f32 %v1943, %v1944
  %v1946 = vrot.slane %v1945, 1
  %v1947 = vmax.f32 %v1945, %v1946
  %v1948 = vpack.i.bf16 %v1947, %v1947
  %v1949 = vsel %vm1035, %v860, 4286644096
  %v1950 = vunpack.i.l.bf16 %v1949
  %v1951 = vunpack.i.h.bf16 %v1949
  %v1952 = vmax.f32 %v1950, %v1951
  %v1953 = vrot.slane %v1952, 4
  %v1954 = vmax.f32 %v1952, %v1953
  %v1955 = vrot.slane %v1954, 2
  %v1956 = vmax.f32 %v1954, %v1955
  %v1957 = vrot.slane %v1956, 1
  %v1958 = vmax.f32 %v1956, %v1957
  %v1959 = vpack.i.bf16 %v1958, %v1958
  %v1960 = vsel %vm1035, %v861, 4286644096
  %v1961 = vunpack.i.l.bf16 %v1960
  %v1962 = vunpack.i.h.bf16 %v1960
  %v1963 = vmax.f32 %v1961, %v1962
  %v1964 = vrot.slane %v1963, 4
  %v1965 = vmax.f32 %v1963, %v1964
  %v1966 = vrot.slane %v1965, 2
  %v1967 = vmax.f32 %v1965, %v1966
  %v1968 = vrot.slane %v1967, 1
  %v1969 = vmax.f32 %v1967, %v1968
  %v1970 = vpack.i.bf16 %v1969, %v1969
  %v1971 = vsel %vm1035, %v862, 4286644096
  %v1972 = vunpack.i.l.bf16 %v1971
  %v1973 = vunpack.i.h.bf16 %v1971
  %v1974 = vmax.f32 %v1972, %v1973
  %v1975 = vrot.slane %v1974, 4
  %v1976 = vmax.f32 %v1974, %v1975
  %v1977 = vrot.slane %v1976, 2
  %v1978 = vmax.f32 %v1976, %v1977
  %v1979 = vrot.slane %v1978, 1
  %v1980 = vmax.f32 %v1978, %v1979
  %v1981 = vpack.i.bf16 %v1980, %v1980
  %v1982 = vsel %vm1035, %v863, 4286644096
  %v1983 = vunpack.i.l.bf16 %v1982
  %v1984 = vunpack.i.h.bf16 %v1982
  %v1985 = vmax.f32 %v1983, %v1984
  %v1986 = vrot.slane %v1985, 4
  %v1987 = vmax.f32 %v1985, %v1986
  %v1988 = vrot.slane %v1987, 2
  %v1989 = vmax.f32 %v1987, %v1988
  %v1990 = vrot.slane %v1989, 1
  %v1991 = vmax.f32 %v1989, %v1990
  %v1992 = vpack.i.bf16 %v1991, %v1991
  %v1993 = vsel %vm1035, %v864, 4286644096
  %v1994 = vunpack.i.l.bf16 %v1993
  %v1995 = vunpack.i.h.bf16 %v1993
  %v1996 = vmax.f32 %v1994, %v1995
  %v1997 = vrot.slane %v1996, 4
  %v1998 = vmax.f32 %v1996, %v1997
  %v1999 = vrot.slane %v1998, 2
  %v2000 = vmax.f32 %v1998, %v1999
  %v2001 = vrot.slane %v2000, 1
  %v2002 = vmax.f32 %v2000, %v2001
  %v2003 = vpack.i.bf16 %v2002, %v2002
  %v2004 = vsel %vm1035, %v865, 4286644096
  %v2005 = vunpack.i.l.bf16 %v2004
  %v2006 = vunpack.i.h.bf16 %v2004
  %v2007 = vmax.f32 %v2005, %v2006
  %v2008 = vrot.slane %v2007, 4
  %v2009 = vmax.f32 %v2007, %v2008
  %v2010 = vrot.slane %v2009, 2
  %v2011 = vmax.f32 %v2009, %v2010
  %v2012 = vrot.slane %v2011, 1
  %v2013 = vmax.f32 %v2011, %v2012
  %v2014 = vpack.i.bf16 %v2013, %v2013
  %v2015 = vsel %vm1035, %v866, 4286644096
  %v2016 = vunpack.i.l.bf16 %v2015
  %v2017 = vunpack.i.h.bf16 %v2015
  %v2018 = vmax.f32 %v2016, %v2017
  %v2019 = vrot.slane %v2018, 4
  %v2020 = vmax.f32 %v2018, %v2019
  %v2021 = vrot.slane %v2020, 2
  %v2022 = vmax.f32 %v2020, %v2021
  %v2023 = vrot.slane %v2022, 1
  %v2024 = vmax.f32 %v2022, %v2023
  %v2025 = vpack.i.bf16 %v2024, %v2024
  %v2026 = vsel %vm1035, %v867, 4286644096
  %v2027 = vunpack.i.l.bf16 %v2026
  %v2028 = vunpack.i.h.bf16 %v2026
  %v2029 = vmax.f32 %v2027, %v2028
  %v2030 = vrot.slane %v2029, 4
  %v2031 = vmax.f32 %v2029, %v2030
  %v2032 = vrot.slane %v2031, 2
  %v2033 = vmax.f32 %v2031, %v2032
  %v2034 = vrot.slane %v2033, 1
  %v2035 = vmax.f32 %v2033, %v2034
  %v2036 = vpack.i.bf16 %v2035, %v2035
  %v2037 = vsel %vm1035, %v868, 4286644096
  %v2038 = vunpack.i.l.bf16 %v2037
  %v2039 = vunpack.i.h.bf16 %v2037
  %v2040 = vmax.f32 %v2038, %v2039
  %v2041 = vrot.slane %v2040, 4
  %v2042 = vmax.f32 %v2040, %v2041
  %v2043 = vrot.slane %v2042, 2
  %v2044 = vmax.f32 %v2042, %v2043
  %v2045 = vrot.slane %v2044, 1
  %v2046 = vmax.f32 %v2044, %v2045
  %v2047 = vpack.i.bf16 %v2046, %v2046
  %v2048 = vsel %vm1035, %v869, 4286644096
  %v2049 = vunpack.i.l.bf16 %v2048
  %v2050 = vunpack.i.h.bf16 %v2048
  %v2051 = vmax.f32 %v2049, %v2050
  %v2052 = vrot.slane %v2051, 4
  %v2053 = vmax.f32 %v2051, %v2052
  %v2054 = vrot.slane %v2053, 2
  %v2055 = vmax.f32 %v2053, %v2054
  %v2056 = vrot.slane %v2055, 1
  %v2057 = vmax.f32 %v2055, %v2056
  %v2058 = vpack.i.bf16 %v2057, %v2057
  %v2059 = vsel %vm1035, %v870, 4286644096
  %v2060 = vunpack.i.l.bf16 %v2059
  %v2061 = vunpack.i.h.bf16 %v2059
  %v2062 = vmax.f32 %v2060, %v2061
  %v2063 = vrot.slane %v2062, 4
  %v2064 = vmax.f32 %v2062, %v2063
  %v2065 = vrot.slane %v2064, 2
  %v2066 = vmax.f32 %v2064, %v2065
  %v2067 = vrot.slane %v2066, 1
  %v2068 = vmax.f32 %v2066, %v2067
  %v2069 = vpack.i.bf16 %v2068, %v2068
  %v2070 = vsel %vm1035, %v871, 4286644096
  %v2071 = vunpack.i.l.bf16 %v2070
  %v2072 = vunpack.i.h.bf16 %v2070
  %v2073 = vmax.f32 %v2071, %v2072
  %v2074 = vrot.slane %v2073, 4
  %v2075 = vmax.f32 %v2073, %v2074
  %v2076 = vrot.slane %v2075, 2
  %v2077 = vmax.f32 %v2075, %v2076
  %v2078 = vrot.slane %v2077, 1
  %v2079 = vmax.f32 %v2077, %v2078
  %v2080 = vpack.i.bf16 %v2079, %v2079
  %v2081 = vsel %vm1035, %v872, 4286644096
  %v2082 = vunpack.i.l.bf16 %v2081
  %v2083 = vunpack.i.h.bf16 %v2081
  %v2084 = vmax.f32 %v2082, %v2083
  %v2085 = vrot.slane %v2084, 4
  %v2086 = vmax.f32 %v2084, %v2085
  %v2087 = vrot.slane %v2086, 2
  %v2088 = vmax.f32 %v2086, %v2087
  %v2089 = vrot.slane %v2088, 1
  %v2090 = vmax.f32 %v2088, %v2089
  %v2091 = vpack.i.bf16 %v2090, %v2090
  %v2092 = vsel %vm1035, %v873, 4286644096
  %v2093 = vunpack.i.l.bf16 %v2092
  %v2094 = vunpack.i.h.bf16 %v2092
  %v2095 = vmax.f32 %v2093, %v2094
  %v2096 = vrot.slane %v2095, 4
  %v2097 = vmax.f32 %v2095, %v2096
  %v2098 = vrot.slane %v2097, 2
  %v2099 = vmax.f32 %v2097, %v2098
  %v2100 = vrot.slane %v2099, 1
  %v2101 = vmax.f32 %v2099, %v2100
  %v2102 = vpack.i.bf16 %v2101, %v2101
  %v2103 = vsel %vm1035, %v874, 4286644096
  %v2104 = vunpack.i.l.bf16 %v2103
  %v2105 = vunpack.i.h.bf16 %v2103
  %v2106 = vmax.f32 %v2104, %v2105
  %v2107 = vrot.slane %v2106, 4
  %v2108 = vmax.f32 %v2106, %v2107
  %v2109 = vrot.slane %v2108, 2
  %v2110 = vmax.f32 %v2108, %v2109
  %v2111 = vrot.slane %v2110, 1
  %v2112 = vmax.f32 %v2110, %v2111
  %v2113 = vpack.i.bf16 %v2112, %v2112
  %v2114 = vsel %vm1035, %v875, 4286644096
  %v2115 = vunpack.i.l.bf16 %v2114
  %v2116 = vunpack.i.h.bf16 %v2114
  %v2117 = vmax.f32 %v2115, %v2116
  %v2118 = vrot.slane %v2117, 4
  %v2119 = vmax.f32 %v2117, %v2118
  %v2120 = vrot.slane %v2119, 2
  %v2121 = vmax.f32 %v2119, %v2120
  %v2122 = vrot.slane %v2121, 1
  %v2123 = vmax.f32 %v2121, %v2122
  %v2124 = vpack.i.bf16 %v2123, %v2123
  %v2125 = vsel %vm1035, %v876, 4286644096
  %v2126 = vunpack.i.l.bf16 %v2125
  %v2127 = vunpack.i.h.bf16 %v2125
  %v2128 = vmax.f32 %v2126, %v2127
  %v2129 = vrot.slane %v2128, 4
  %v2130 = vmax.f32 %v2128, %v2129
  %v2131 = vrot.slane %v2130, 2
  %v2132 = vmax.f32 %v2130, %v2131
  %v2133 = vrot.slane %v2132, 1
  %v2134 = vmax.f32 %v2132, %v2133
  %v2135 = vpack.i.bf16 %v2134, %v2134
  %v2136 = vsel %vm1035, %v877, 4286644096
  %v2137 = vunpack.i.l.bf16 %v2136
  %v2138 = vunpack.i.h.bf16 %v2136
  %v2139 = vmax.f32 %v2137, %v2138
  %v2140 = vrot.slane %v2139, 4
  %v2141 = vmax.f32 %v2139, %v2140
  %v2142 = vrot.slane %v2141, 2
  %v2143 = vmax.f32 %v2141, %v2142
  %v2144 = vrot.slane %v2143, 1
  %v2145 = vmax.f32 %v2143, %v2144
  %v2146 = vpack.i.bf16 %v2145, %v2145
  %v2147 = vsel %vm1035, %v878, 4286644096
  %v2148 = vunpack.i.l.bf16 %v2147
  %v2149 = vunpack.i.h.bf16 %v2147
  %v2150 = vmax.f32 %v2148, %v2149
  %v2151 = vrot.slane %v2150, 4
  %v2152 = vmax.f32 %v2150, %v2151
  %v2153 = vrot.slane %v2152, 2
  %v2154 = vmax.f32 %v2152, %v2153
  %v2155 = vrot.slane %v2154, 1
  %v2156 = vmax.f32 %v2154, %v2155
  %v2157 = vpack.i.bf16 %v2156, %v2156
  %v2158 = vsel %vm1035, %v879, 4286644096
  %v2159 = vunpack.i.l.bf16 %v2158
  %v2160 = vunpack.i.h.bf16 %v2158
  %v2161 = vmax.f32 %v2159, %v2160
  %v2162 = vrot.slane %v2161, 4
  %v2163 = vmax.f32 %v2161, %v2162
  %v2164 = vrot.slane %v2163, 2
  %v2165 = vmax.f32 %v2163, %v2164
  %v2166 = vrot.slane %v2165, 1
  %v2167 = vmax.f32 %v2165, %v2166
  %v2168 = vpack.i.bf16 %v2167, %v2167
  %v2169 = vsel %vm1035, %v880, 4286644096
  %v2170 = vunpack.i.l.bf16 %v2169
  %v2171 = vunpack.i.h.bf16 %v2169
  %v2172 = vmax.f32 %v2170, %v2171
  %v2173 = vrot.slane %v2172, 4
  %v2174 = vmax.f32 %v2172, %v2173
  %v2175 = vrot.slane %v2174, 2
  %v2176 = vmax.f32 %v2174, %v2175
  %v2177 = vrot.slane %v2176, 1
  %v2178 = vmax.f32 %v2176, %v2177
  %v2179 = vpack.i.bf16 %v2178, %v2178
  %v2180 = vsel %vm1035, %v881, 4286644096
  %v2181 = vunpack.i.l.bf16 %v2180
  %v2182 = vunpack.i.h.bf16 %v2180
  %v2183 = vmax.f32 %v2181, %v2182
  %v2184 = vrot.slane %v2183, 4
  %v2185 = vmax.f32 %v2183, %v2184
  %v2186 = vrot.slane %v2185, 2
  %v2187 = vmax.f32 %v2185, %v2186
  %v2188 = vrot.slane %v2187, 1
  %v2189 = vmax.f32 %v2187, %v2188
  %v2190 = vpack.i.bf16 %v2189, %v2189
  %v2191 = vsel %vm1035, %v882, 4286644096
  %v2192 = vunpack.i.l.bf16 %v2191
  %v2193 = vunpack.i.h.bf16 %v2191
  %v2194 = vmax.f32 %v2192, %v2193
  %v2195 = vrot.slane %v2194, 4
  %v2196 = vmax.f32 %v2194, %v2195
  %v2197 = vrot.slane %v2196, 2
  %v2198 = vmax.f32 %v2196, %v2197
  %v2199 = vrot.slane %v2198, 1
  %v2200 = vmax.f32 %v2198, %v2199
  %v2201 = vpack.i.bf16 %v2200, %v2200
  %v2202 = vsel %vm1035, %v883, 4286644096
  %v2203 = vunpack.i.l.bf16 %v2202
  %v2204 = vunpack.i.h.bf16 %v2202
  %v2205 = vmax.f32 %v2203, %v2204
  %v2206 = vrot.slane %v2205, 4
  %v2207 = vmax.f32 %v2205, %v2206
  %v2208 = vrot.slane %v2207, 2
  %v2209 = vmax.f32 %v2207, %v2208
  %v2210 = vrot.slane %v2209, 1
  %v2211 = vmax.f32 %v2209, %v2210
  %v2212 = vpack.i.bf16 %v2211, %v2211
  %v2213 = vsel %vm1035, %v884, 4286644096
  %v2214 = vunpack.i.l.bf16 %v2213
  %v2215 = vunpack.i.h.bf16 %v2213
  %v2216 = vmax.f32 %v2214, %v2215
  %v2217 = vrot.slane %v2216, 4
  %v2218 = vmax.f32 %v2216, %v2217
  %v2219 = vrot.slane %v2218, 2
  %v2220 = vmax.f32 %v2218, %v2219
  %v2221 = vrot.slane %v2220, 1
  %v2222 = vmax.f32 %v2220, %v2221
  %v2223 = vpack.i.bf16 %v2222, %v2222
  %v2224 = vsel %vm1035, %v885, 4286644096
  %v2225 = vunpack.i.l.bf16 %v2224
  %v2226 = vunpack.i.h.bf16 %v2224
  %v2227 = vmax.f32 %v2225, %v2226
  %v2228 = vrot.slane %v2227, 4
  %v2229 = vmax.f32 %v2227, %v2228
  %v2230 = vrot.slane %v2229, 2
  %v2231 = vmax.f32 %v2229, %v2230
  %v2232 = vrot.slane %v2231, 1
  %v2233 = vmax.f32 %v2231, %v2232
  %v2234 = vpack.i.bf16 %v2233, %v2233
  %v2235 = vsel %vm1035, %v886, 4286644096
  %v2236 = vunpack.i.l.bf16 %v2235
  %v2237 = vunpack.i.h.bf16 %v2235
  %v2238 = vmax.f32 %v2236, %v2237
  %v2239 = vrot.slane %v2238, 4
  %v2240 = vmax.f32 %v2238, %v2239
  %v2241 = vrot.slane %v2240, 2
  %v2242 = vmax.f32 %v2240, %v2241
  %v2243 = vrot.slane %v2242, 1
  %v2244 = vmax.f32 %v2242, %v2243
  %v2245 = vpack.i.bf16 %v2244, %v2244
  %v2246 = vsel %vm1035, %v887, 4286644096
  %v2247 = vunpack.i.l.bf16 %v2246
  %v2248 = vunpack.i.h.bf16 %v2246
  %v2249 = vmax.f32 %v2247, %v2248
  %v2250 = vrot.slane %v2249, 4
  %v2251 = vmax.f32 %v2249, %v2250
  %v2252 = vrot.slane %v2251, 2
  %v2253 = vmax.f32 %v2251, %v2252
  %v2254 = vrot.slane %v2253, 1
  %v2255 = vmax.f32 %v2253, %v2254
  %v2256 = vpack.i.bf16 %v2255, %v2255
  %v2257 = vsel %vm1035, %v888, 4286644096
  %v2258 = vunpack.i.l.bf16 %v2257
  %v2259 = vunpack.i.h.bf16 %v2257
  %v2260 = vmax.f32 %v2258, %v2259
  %v2261 = vrot.slane %v2260, 4
  %v2262 = vmax.f32 %v2260, %v2261
  %v2263 = vrot.slane %v2262, 2
  %v2264 = vmax.f32 %v2262, %v2263
  %v2265 = vrot.slane %v2264, 1
  %v2266 = vmax.f32 %v2264, %v2265
  %v2267 = vpack.i.bf16 %v2266, %v2266
  %v2268 = vsel %vm1035, %v889, 4286644096
  %v2269 = vunpack.i.l.bf16 %v2268
  %v2270 = vunpack.i.h.bf16 %v2268
  %v2271 = vmax.f32 %v2269, %v2270
  %v2272 = vrot.slane %v2271, 4
  %v2273 = vmax.f32 %v2271, %v2272
  %v2274 = vrot.slane %v2273, 2
  %v2275 = vmax.f32 %v2273, %v2274
  %v2276 = vrot.slane %v2275, 1
  %v2277 = vmax.f32 %v2275, %v2276
  %v2278 = vpack.i.bf16 %v2277, %v2277
  %v2279 = vsel %vm1035, %v890, 4286644096
  %v2280 = vunpack.i.l.bf16 %v2279
  %v2281 = vunpack.i.h.bf16 %v2279
  %v2282 = vmax.f32 %v2280, %v2281
  %v2283 = vrot.slane %v2282, 4
  %v2284 = vmax.f32 %v2282, %v2283
  %v2285 = vrot.slane %v2284, 2
  %v2286 = vmax.f32 %v2284, %v2285
  %v2287 = vrot.slane %v2286, 1
  %v2288 = vmax.f32 %v2286, %v2287
  %v2289 = vpack.i.bf16 %v2288, %v2288
  %v2290 = vsel %vm1035, %v891, 4286644096
  %v2291 = vunpack.i.l.bf16 %v2290
  %v2292 = vunpack.i.h.bf16 %v2290
  %v2293 = vmax.f32 %v2291, %v2292
  %v2294 = vrot.slane %v2293, 4
  %v2295 = vmax.f32 %v2293, %v2294
  %v2296 = vrot.slane %v2295, 2
  %v2297 = vmax.f32 %v2295, %v2296
  %v2298 = vrot.slane %v2297, 1
  %v2299 = vmax.f32 %v2297, %v2298
  %v2300 = vpack.i.bf16 %v2299, %v2299
  %v2301 = vsel %vm1035, %v892, 4286644096
  %v2302 = vunpack.i.l.bf16 %v2301
  %v2303 = vunpack.i.h.bf16 %v2301
  %v2304 = vmax.f32 %v2302, %v2303
  %v2305 = vrot.slane %v2304, 4
  %v2306 = vmax.f32 %v2304, %v2305
  %v2307 = vrot.slane %v2306, 2
  %v2308 = vmax.f32 %v2306, %v2307
  %v2309 = vrot.slane %v2308, 1
  %v2310 = vmax.f32 %v2308, %v2309
  %v2311 = vpack.i.bf16 %v2310, %v2310
  %v2312 = vsel %vm1035, %v893, 4286644096
  %v2313 = vunpack.i.l.bf16 %v2312
  %v2314 = vunpack.i.h.bf16 %v2312
  %v2315 = vmax.f32 %v2313, %v2314
  %v2316 = vrot.slane %v2315, 4
  %v2317 = vmax.f32 %v2315, %v2316
  %v2318 = vrot.slane %v2317, 2
  %v2319 = vmax.f32 %v2317, %v2318
  %v2320 = vrot.slane %v2319, 1
  %v2321 = vmax.f32 %v2319, %v2320
  %v2322 = vpack.i.bf16 %v2321, %v2321
  %v2323 = vsel %vm1035, %v894, 4286644096
  %v2324 = vunpack.i.l.bf16 %v2323
  %v2325 = vunpack.i.h.bf16 %v2323
  %v2326 = vmax.f32 %v2324, %v2325
  %v2327 = vrot.slane %v2326, 4
  %v2328 = vmax.f32 %v2326, %v2327
  %v2329 = vrot.slane %v2328, 2
  %v2330 = vmax.f32 %v2328, %v2329
  %v2331 = vrot.slane %v2330, 1
  %v2332 = vmax.f32 %v2330, %v2331
  %v2333 = vpack.i.bf16 %v2332, %v2332
  %v2334 = vsel %vm1035, %v895, 4286644096
  %v2335 = vunpack.i.l.bf16 %v2334
  %v2336 = vunpack.i.h.bf16 %v2334
  %v2337 = vmax.f32 %v2335, %v2336
  %v2338 = vrot.slane %v2337, 4
  %v2339 = vmax.f32 %v2337, %v2338
  %v2340 = vrot.slane %v2339, 2
  %v2341 = vmax.f32 %v2339, %v2340
  %v2342 = vrot.slane %v2341, 1
  %v2343 = vmax.f32 %v2341, %v2342
  %v2344 = vpack.i.bf16 %v2343, %v2343
  %v2345 = vsel %vm1035, %v896, 4286644096
  %v2346 = vunpack.i.l.bf16 %v2345
  %v2347 = vunpack.i.h.bf16 %v2345
  %v2348 = vmax.f32 %v2346, %v2347
  %v2349 = vrot.slane %v2348, 4
  %v2350 = vmax.f32 %v2348, %v2349
  %v2351 = vrot.slane %v2350, 2
  %v2352 = vmax.f32 %v2350, %v2351
  %v2353 = vrot.slane %v2352, 1
  %v2354 = vmax.f32 %v2352, %v2353
  %v2355 = vpack.i.bf16 %v2354, %v2354
  %v2356 = vsel %vm1035, %v897, 4286644096
  %v2357 = vunpack.i.l.bf16 %v2356
  %v2358 = vunpack.i.h.bf16 %v2356
  %v2359 = vmax.f32 %v2357, %v2358
  %v2360 = vrot.slane %v2359, 4
  %v2361 = vmax.f32 %v2359, %v2360
  %v2362 = vrot.slane %v2361, 2
  %v2363 = vmax.f32 %v2361, %v2362
  %v2364 = vrot.slane %v2363, 1
  %v2365 = vmax.f32 %v2363, %v2364
  %v2366 = vpack.i.bf16 %v2365, %v2365
  %v2367 = vsel %vm1035, %v898, 4286644096
  %v2368 = vunpack.i.l.bf16 %v2367
  %v2369 = vunpack.i.h.bf16 %v2367
  %v2370 = vmax.f32 %v2368, %v2369
  %v2371 = vrot.slane %v2370, 4
  %v2372 = vmax.f32 %v2370, %v2371
  %v2373 = vrot.slane %v2372, 2
  %v2374 = vmax.f32 %v2372, %v2373
  %v2375 = vrot.slane %v2374, 1
  %v2376 = vmax.f32 %v2374, %v2375
  %v2377 = vpack.i.bf16 %v2376, %v2376
  %v2378 = vsel %vm1035, %v899, 4286644096
  %v2379 = vunpack.i.l.bf16 %v2378
  %v2380 = vunpack.i.h.bf16 %v2378
  %v2381 = vmax.f32 %v2379, %v2380
  %v2382 = vrot.slane %v2381, 4
  %v2383 = vmax.f32 %v2381, %v2382
  %v2384 = vrot.slane %v2383, 2
  %v2385 = vmax.f32 %v2383, %v2384
  %v2386 = vrot.slane %v2385, 1
  %v2387 = vmax.f32 %v2385, %v2386
  %v2388 = vpack.i.bf16 %v2387, %v2387
  %v2389 = vsel %vm1035, %v900, 4286644096
  %v2390 = vunpack.i.l.bf16 %v2389
  %v2391 = vunpack.i.h.bf16 %v2389
  %v2392 = vmax.f32 %v2390, %v2391
  %v2393 = vrot.slane %v2392, 4
  %v2394 = vmax.f32 %v2392, %v2393
  %v2395 = vrot.slane %v2394, 2
  %v2396 = vmax.f32 %v2394, %v2395
  %v2397 = vrot.slane %v2396, 1
  %v2398 = vmax.f32 %v2396, %v2397
  %v2399 = vpack.i.bf16 %v2398, %v2398
  %v2400 = vsel %vm1035, %v901, 4286644096
  %v2401 = vunpack.i.l.bf16 %v2400
  %v2402 = vunpack.i.h.bf16 %v2400
  %v2403 = vmax.f32 %v2401, %v2402
  %v2404 = vrot.slane %v2403, 4
  %v2405 = vmax.f32 %v2403, %v2404
  %v2406 = vrot.slane %v2405, 2
  %v2407 = vmax.f32 %v2405, %v2406
  %v2408 = vrot.slane %v2407, 1
  %v2409 = vmax.f32 %v2407, %v2408
  %v2410 = vpack.i.bf16 %v2409, %v2409
  %v2411 = vsel %vm1035, %v902, 4286644096
  %v2412 = vunpack.i.l.bf16 %v2411
  %v2413 = vunpack.i.h.bf16 %v2411
  %v2414 = vmax.f32 %v2412, %v2413
  %v2415 = vrot.slane %v2414, 4
  %v2416 = vmax.f32 %v2414, %v2415
  %v2417 = vrot.slane %v2416, 2
  %v2418 = vmax.f32 %v2416, %v2417
  %v2419 = vrot.slane %v2418, 1
  %v2420 = vmax.f32 %v2418, %v2419
  %v2421 = vpack.i.bf16 %v2420, %v2420
  %v2422 = vsel %vm1035, %v903, 4286644096
  %v2423 = vunpack.i.l.bf16 %v2422
  %v2424 = vunpack.i.h.bf16 %v2422
  %v2425 = vmax.f32 %v2423, %v2424
  %v2426 = vrot.slane %v2425, 4
  %v2427 = vmax.f32 %v2425, %v2426
  %v2428 = vrot.slane %v2427, 2
  %v2429 = vmax.f32 %v2427, %v2428
  %v2430 = vrot.slane %v2429, 1
  %v2431 = vmax.f32 %v2429, %v2430
  %v2432 = vpack.i.bf16 %v2431, %v2431
  %v2433 = vsel %vm1035, %v904, 4286644096
  %v2434 = vunpack.i.l.bf16 %v2433
  %v2435 = vunpack.i.h.bf16 %v2433
  %v2436 = vmax.f32 %v2434, %v2435
  %v2437 = vrot.slane %v2436, 4
  %v2438 = vmax.f32 %v2436, %v2437
  %v2439 = vrot.slane %v2438, 2
  %v2440 = vmax.f32 %v2438, %v2439
  %v2441 = vrot.slane %v2440, 1
  %v2442 = vmax.f32 %v2440, %v2441
  %v2443 = vpack.i.bf16 %v2442, %v2442
  %v2572 = vunpack.c.l.b16 %v1046
  %v2573 = vunpack.c.l.b16 %v1057
  %v2574 = vunpack.c.l.b16 %v1068
  %v2575 = vunpack.c.l.b16 %v1079
  %v2576 = vunpack.c.l.b16 %v1090
  %v2577 = vunpack.c.l.b16 %v1101
  %v2578 = vunpack.c.l.b16 %v1112
  %v2579 = vunpack.c.l.b16 %v1123
  %v2580 = vunpack.c.l.b16 %v1134
  %v2581 = vunpack.c.l.b16 %v1145
  %v2582 = vunpack.c.l.b16 %v1156
  %v2583 = vunpack.c.l.b16 %v1167
  %v2584 = vunpack.c.l.b16 %v1178
  %v2585 = vunpack.c.l.b16 %v1189
  %v2586 = vunpack.c.l.b16 %v1200
  %v2587 = vunpack.c.l.b16 %v1211
  %v2588 = vunpack.c.l.b16 %v1222
  %v2589 = vunpack.c.l.b16 %v1233
  %v2590 = vunpack.c.l.b16 %v1244
  %v2591 = vunpack.c.l.b16 %v1255
  %v2592 = vunpack.c.l.b16 %v1266
  %v2593 = vunpack.c.l.b16 %v1277
  %v2594 = vunpack.c.l.b16 %v1288
  %v2595 = vunpack.c.l.b16 %v1299
  %v2596 = vunpack.c.l.b16 %v1310
  %v2597 = vunpack.c.l.b16 %v1321
  %v2598 = vunpack.c.l.b16 %v1332
  %v2599 = vunpack.c.l.b16 %v1343
  %v2600 = vunpack.c.l.b16 %v1354
  %v2601 = vunpack.c.l.b16 %v1365
  %v2602 = vunpack.c.l.b16 %v1376
  %v2603 = vunpack.c.l.b16 %v1387
  %v2604 = vunpack.c.l.b16 %v1398
  %v2605 = vunpack.c.l.b16 %v1409
  %v2606 = vunpack.c.l.b16 %v1420
  %v2607 = vunpack.c.l.b16 %v1431
  %v2608 = vunpack.c.l.b16 %v1442
  %v2609 = vunpack.c.l.b16 %v1453
  %v2610 = vunpack.c.l.b16 %v1464
  %v2611 = vunpack.c.l.b16 %v1475
  %v2612 = vunpack.c.l.b16 %v1486
  %v2613 = vunpack.c.l.b16 %v1497
  %v2614 = vunpack.c.l.b16 %v1508
  %v2615 = vunpack.c.l.b16 %v1519
  %v2616 = vunpack.c.l.b16 %v1530
  %v2617 = vunpack.c.l.b16 %v1541
  %v2618 = vunpack.c.l.b16 %v1552
  %v2619 = vunpack.c.l.b16 %v1563
  %v2620 = vunpack.c.l.b16 %v1574
  %v2621 = vunpack.c.l.b16 %v1585
  %v2622 = vunpack.c.l.b16 %v1596
  %v2623 = vunpack.c.l.b16 %v1607
  %v2624 = vunpack.c.l.b16 %v1618
  %v2625 = vunpack.c.l.b16 %v1629
  %v2626 = vunpack.c.l.b16 %v1640
  %v2627 = vunpack.c.l.b16 %v1651
  %v2628 = vunpack.c.l.b16 %v1662
  %v2629 = vunpack.c.l.b16 %v1673
  %v2630 = vunpack.c.l.b16 %v1684
  %v2631 = vunpack.c.l.b16 %v1695
  %v2632 = vunpack.c.l.b16 %v1706
  %v2633 = vunpack.c.l.b16 %v1717
  %v2634 = vunpack.c.l.b16 %v1728
  %v2635 = vunpack.c.l.b16 %v1739
  %v2636 = vunpack.c.l.b16 %v1750
  %v2637 = vunpack.c.l.b16 %v1761
  %v2638 = vunpack.c.l.b16 %v1772
  %v2639 = vunpack.c.l.b16 %v1783
  %v2640 = vunpack.c.l.b16 %v1794
  %v2641 = vunpack.c.l.b16 %v1805
  %v2642 = vunpack.c.l.b16 %v1816
  %v2643 = vunpack.c.l.b16 %v1827
  %v2644 = vunpack.c.l.b16 %v1838
  %v2645 = vunpack.c.l.b16 %v1849
  %v2646 = vunpack.c.l.b16 %v1860
  %v2647 = vunpack.c.l.b16 %v1871
  %v2648 = vunpack.c.l.b16 %v1882
  %v2649 = vunpack.c.l.b16 %v1893
  %v2650 = vunpack.c.l.b16 %v1904
  %v2651 = vunpack.c.l.b16 %v1915
  %v2652 = vunpack.c.l.b16 %v1926
  %v2653 = vunpack.c.l.b16 %v1937
  %v2654 = vunpack.c.l.b16 %v1948
  %v2655 = vunpack.c.l.b16 %v1959
  %v2656 = vunpack.c.l.b16 %v1970
  %v2657 = vunpack.c.l.b16 %v1981
  %v2658 = vunpack.c.l.b16 %v1992
  %v2659 = vunpack.c.l.b16 %v2003
  %v2660 = vunpack.c.l.b16 %v2014
  %v2661 = vunpack.c.l.b16 %v2025
  %v2662 = vunpack.c.l.b16 %v2036
  %v2663 = vunpack.c.l.b16 %v2047
  %v2664 = vunpack.c.l.b16 %v2058
  %v2665 = vunpack.c.l.b16 %v2069
  %v2666 = vunpack.c.l.b16 %v2080
  %v2667 = vunpack.c.l.b16 %v2091
  %v2668 = vunpack.c.l.b16 %v2102
  %v2669 = vunpack.c.l.b16 %v2113
  %v2670 = vunpack.c.l.b16 %v2124
  %v2671 = vunpack.c.l.b16 %v2135
  %v2672 = vunpack.c.l.b16 %v2146
  %v2673 = vunpack.c.l.b16 %v2157
  %v2674 = vunpack.c.l.b16 %v2168
  %v2675 = vunpack.c.l.b16 %v2179
  %v2676 = vunpack.c.l.b16 %v2190
  %v2677 = vunpack.c.l.b16 %v2201
  %v2678 = vunpack.c.l.b16 %v2212
  %v2679 = vunpack.c.l.b16 %v2223
  %v2680 = vunpack.c.l.b16 %v2234
  %v2681 = vunpack.c.l.b16 %v2245
  %v2682 = vunpack.c.l.b16 %v2256
  %v2683 = vunpack.c.l.b16 %v2267
  %v2684 = vunpack.c.l.b16 %v2278
  %v2685 = vunpack.c.l.b16 %v2289
  %v2686 = vunpack.c.l.b16 %v2300
  %v2687 = vunpack.c.l.b16 %v2311
  %v2688 = vunpack.c.l.b16 %v2322
  %v2689 = vunpack.c.l.b16 %v2333
  %v2690 = vunpack.c.l.b16 %v2344
  %v2691 = vunpack.c.l.b16 %v2355
  %v2692 = vunpack.c.l.b16 %v2366
  %v2693 = vunpack.c.l.b16 %v2377
  %v2694 = vunpack.c.l.b16 %v2388
  %v2695 = vunpack.c.l.b16 %v2399
  %v2696 = vunpack.c.l.b16 %v2410
  %v2697 = vunpack.c.l.b16 %v2421
  %v2698 = vunpack.c.l.b16 %v2432
  %v2699 = vunpack.c.l.b16 %v2443
  %v2700 = vpack.c.b16 %v2572, %v2572
  %v2701 = vpack.c.b16 %v2573, %v2573
  %v2702 = vpack.c.b16 %v2574, %v2574
  %v2703 = vpack.c.b16 %v2575, %v2575
  %v2704 = vpack.c.b16 %v2576, %v2576
  %v2705 = vpack.c.b16 %v2577, %v2577
  %v2706 = vpack.c.b16 %v2578, %v2578
  %v2707 = vpack.c.b16 %v2579, %v2579
  %v2708 = vpack.c.b16 %v2580, %v2580
  %v2709 = vpack.c.b16 %v2581, %v2581
  %v2710 = vpack.c.b16 %v2582, %v2582
  %v2711 = vpack.c.b16 %v2583, %v2583
  %v2712 = vpack.c.b16 %v2584, %v2584
  %v2713 = vpack.c.b16 %v2585, %v2585
  %v2714 = vpack.c.b16 %v2586, %v2586
  %v2715 = vpack.c.b16 %v2587, %v2587
  %v2716 = vpack.c.b16 %v2588, %v2588
  %v2717 = vpack.c.b16 %v2589, %v2589
  %v2718 = vpack.c.b16 %v2590, %v2590
  %v2719 = vpack.c.b16 %v2591, %v2591
  %v2720 = vpack.c.b16 %v2592, %v2592
  %v2721 = vpack.c.b16 %v2593, %v2593
  %v2722 = vpack.c.b16 %v2594, %v2594
  %v2723 = vpack.c.b16 %v2595, %v2595
  %v2724 = vpack.c.b16 %v2596, %v2596
  %v2725 = vpack.c.b16 %v2597, %v2597
  %v2726 = vpack.c.b16 %v2598, %v2598
  %v2727 = vpack.c.b16 %v2599, %v2599
  %v2728 = vpack.c.b16 %v2600, %v2600
  %v2729 = vpack.c.b16 %v2601, %v2601
  %v2730 = vpack.c.b16 %v2602, %v2602
  %v2731 = vpack.c.b16 %v2603, %v2603
  %v2732 = vpack.c.b16 %v2604, %v2604
  %v2733 = vpack.c.b16 %v2605, %v2605
  %v2734 = vpack.c.b16 %v2606, %v2606
  %v2735 = vpack.c.b16 %v2607, %v2607
  %v2736 = vpack.c.b16 %v2608, %v2608
  %v2737 = vpack.c.b16 %v2609, %v2609
  %v2738 = vpack.c.b16 %v2610, %v2610
  %v2739 = vpack.c.b16 %v2611, %v2611
  %v2740 = vpack.c.b16 %v2612, %v2612
  %v2741 = vpack.c.b16 %v2613, %v2613
  %v2742 = vpack.c.b16 %v2614, %v2614
  %v2743 = vpack.c.b16 %v2615, %v2615
  %v2744 = vpack.c.b16 %v2616, %v2616
  %v2745 = vpack.c.b16 %v2617, %v2617
  %v2746 = vpack.c.b16 %v2618, %v2618
  %v2747 = vpack.c.b16 %v2619, %v2619
  %v2748 = vpack.c.b16 %v2620, %v2620
  %v2749 = vpack.c.b16 %v2621, %v2621
  %v2750 = vpack.c.b16 %v2622, %v2622
  %v2751 = vpack.c.b16 %v2623, %v2623
  %v2752 = vpack.c.b16 %v2624, %v2624
  %v2753 = vpack.c.b16 %v2625, %v2625
  %v2754 = vpack.c.b16 %v2626, %v2626
  %v2755 = vpack.c.b16 %v2627, %v2627
  %v2756 = vpack.c.b16 %v2628, %v2628
  %v2757 = vpack.c.b16 %v2629, %v2629
  %v2758 = vpack.c.b16 %v2630, %v2630
  %v2759 = vpack.c.b16 %v2631, %v2631
  %v2760 = vpack.c.b16 %v2632, %v2632
  %v2761 = vpack.c.b16 %v2633, %v2633
  %v2762 = vpack.c.b16 %v2634, %v2634
  %v2763 = vpack.c.b16 %v2635, %v2635
  %v2764 = vpack.c.b16 %v2636, %v2636
  %v2765 = vpack.c.b16 %v2637, %v2637
  %v2766 = vpack.c.b16 %v2638, %v2638
  %v2767 = vpack.c.b16 %v2639, %v2639
  %v2768 = vpack.c.b16 %v2640, %v2640
  %v2769 = vpack.c.b16 %v2641, %v2641
  %v2770 = vpack.c.b16 %v2642, %v2642
  %v2771 = vpack.c.b16 %v2643, %v2643
  %v2772 = vpack.c.b16 %v2644, %v2644
  %v2773 = vpack.c.b16 %v2645, %v2645
  %v2774 = vpack.c.b16 %v2646, %v2646
  %v2775 = vpack.c.b16 %v2647, %v2647
  %v2776 = vpack.c.b16 %v2648, %v2648
  %v2777 = vpack.c.b16 %v2649, %v2649
  %v2778 = vpack.c.b16 %v2650, %v2650
  %v2779 = vpack.c.b16 %v2651, %v2651
  %v2780 = vpack.c.b16 %v2652, %v2652
  %v2781 = vpack.c.b16 %v2653, %v2653
  %v2782 = vpack.c.b16 %v2654, %v2654
  %v2783 = vpack.c.b16 %v2655, %v2655
  %v2784 = vpack.c.b16 %v2656, %v2656
  %v2785 = vpack.c.b16 %v2657, %v2657
  %v2786 = vpack.c.b16 %v2658, %v2658
  %v2787 = vpack.c.b16 %v2659, %v2659
  %v2788 = vpack.c.b16 %v2660, %v2660
  %v2789 = vpack.c.b16 %v2661, %v2661
  %v2790 = vpack.c.b16 %v2662, %v2662
  %v2791 = vpack.c.b16 %v2663, %v2663
  %v2792 = vpack.c.b16 %v2664, %v2664
  %v2793 = vpack.c.b16 %v2665, %v2665
  %v2794 = vpack.c.b16 %v2666, %v2666
  %v2795 = vpack.c.b16 %v2667, %v2667
  %v2796 = vpack.c.b16 %v2668, %v2668
  %v2797 = vpack.c.b16 %v2669, %v2669
  %v2798 = vpack.c.b16 %v2670, %v2670
  %v2799 = vpack.c.b16 %v2671, %v2671
  %v2800 = vpack.c.b16 %v2672, %v2672
  %v2801 = vpack.c.b16 %v2673, %v2673
  %v2802 = vpack.c.b16 %v2674, %v2674
  %v2803 = vpack.c.b16 %v2675, %v2675
  %v2804 = vpack.c.b16 %v2676, %v2676
  %v2805 = vpack.c.b16 %v2677, %v2677
  %v2806 = vpack.c.b16 %v2678, %v2678
  %v2807 = vpack.c.b16 %v2679, %v2679
  %v2808 = vpack.c.b16 %v2680, %v2680
  %v2809 = vpack.c.b16 %v2681, %v2681
  %v2810 = vpack.c.b16 %v2682, %v2682
  %v2811 = vpack.c.b16 %v2683, %v2683
  %v2812 = vpack.c.b16 %v2684, %v2684
  %v2813 = vpack.c.b16 %v2685, %v2685
  %v2814 = vpack.c.b16 %v2686, %v2686
  %v2815 = vpack.c.b16 %v2687, %v2687
  %v2816 = vpack.c.b16 %v2688, %v2688
  %v2817 = vpack.c.b16 %v2689, %v2689
  %v2818 = vpack.c.b16 %v2690, %v2690
  %v2819 = vpack.c.b16 %v2691, %v2691
  %v2820 = vpack.c.b16 %v2692, %v2692
  %v2821 = vpack.c.b16 %v2693, %v2693
  %v2822 = vpack.c.b16 %v2694, %v2694
  %v2823 = vpack.c.b16 %v2695, %v2695
  %v2824 = vpack.c.b16 %v2696, %v2696
  %v2825 = vpack.c.b16 %v2697, %v2697
  %v2826 = vpack.c.b16 %v2698, %v2698
  %v2827 = vpack.c.b16 %v2699, %v2699
  %v2828 = vunpack.c.l.b16 %v2700
  %v2829 = vunpack.c.l.b16 %v2701
  %v2830 = vunpack.c.l.b16 %v2702
  %v2831 = vunpack.c.l.b16 %v2703
  %v2832 = vunpack.c.l.b16 %v2704
  %v2833 = vunpack.c.l.b16 %v2705
  %v2834 = vunpack.c.l.b16 %v2706
  %v2835 = vunpack.c.l.b16 %v2707
  %v2836 = vunpack.c.l.b16 %v2708
  %v2837 = vunpack.c.l.b16 %v2709
  %v2838 = vunpack.c.l.b16 %v2710
  %v2839 = vunpack.c.l.b16 %v2711
  %v2840 = vunpack.c.l.b16 %v2712
  %v2841 = vunpack.c.l.b16 %v2713
  %v2842 = vunpack.c.l.b16 %v2714
  %v2843 = vunpack.c.l.b16 %v2715
  %v2844 = vunpack.c.l.b16 %v2716
  %v2845 = vunpack.c.l.b16 %v2717
  %v2846 = vunpack.c.l.b16 %v2718
  %v2847 = vunpack.c.l.b16 %v2719
  %v2848 = vunpack.c.l.b16 %v2720
  %v2849 = vunpack.c.l.b16 %v2721
  %v2850 = vunpack.c.l.b16 %v2722
  %v2851 = vunpack.c.l.b16 %v2723
  %v2852 = vunpack.c.l.b16 %v2724
  %v2853 = vunpack.c.l.b16 %v2725
  %v2854 = vunpack.c.l.b16 %v2726
  %v2855 = vunpack.c.l.b16 %v2727
  %v2856 = vunpack.c.l.b16 %v2728
  %v2857 = vunpack.c.l.b16 %v2729
  %v2858 = vunpack.c.l.b16 %v2730
  %v2859 = vunpack.c.l.b16 %v2731
  %v2860 = vunpack.c.l.b16 %v2732
  %v2861 = vunpack.c.l.b16 %v2733
  %v2862 = vunpack.c.l.b16 %v2734
  %v2863 = vunpack.c.l.b16 %v2735
  %v2864 = vunpack.c.l.b16 %v2736
  %v2865 = vunpack.c.l.b16 %v2737
  %v2866 = vunpack.c.l.b16 %v2738
  %v2867 = vunpack.c.l.b16 %v2739
  %v2868 = vunpack.c.l.b16 %v2740
  %v2869 = vunpack.c.l.b16 %v2741
  %v2870 = vunpack.c.l.b16 %v2742
  %v2871 = vunpack.c.l.b16 %v2743
  %v2872 = vunpack.c.l.b16 %v2744
  %v2873 = vunpack.c.l.b16 %v2745
  %v2874 = vunpack.c.l.b16 %v2746
  %v2875 = vunpack.c.l.b16 %v2747
  %v2876 = vunpack.c.l.b16 %v2748
  %v2877 = vunpack.c.l.b16 %v2749
  %v2878 = vunpack.c.l.b16 %v2750
  %v2879 = vunpack.c.l.b16 %v2751
  %v2880 = vunpack.c.l.b16 %v2752
  %v2881 = vunpack.c.l.b16 %v2753
  %v2882 = vunpack.c.l.b16 %v2754
  %v2883 = vunpack.c.l.b16 %v2755
  %v2884 = vunpack.c.l.b16 %v2756
  %v2885 = vunpack.c.l.b16 %v2757
  %v2886 = vunpack.c.l.b16 %v2758
  %v2887 = vunpack.c.l.b16 %v2759
  %v2888 = vunpack.c.l.b16 %v2760
  %v2889 = vunpack.c.l.b16 %v2761
  %v2890 = vunpack.c.l.b16 %v2762
  %v2891 = vunpack.c.l.b16 %v2763
  %v2892 = vunpack.c.l.b16 %v2764
  %v2893 = vunpack.c.l.b16 %v2765
  %v2894 = vunpack.c.l.b16 %v2766
  %v2895 = vunpack.c.l.b16 %v2767
  %v2896 = vunpack.c.l.b16 %v2768
  %v2897 = vunpack.c.l.b16 %v2769
  %v2898 = vunpack.c.l.b16 %v2770
  %v2899 = vunpack.c.l.b16 %v2771
  %v2900 = vunpack.c.l.b16 %v2772
  %v2901 = vunpack.c.l.b16 %v2773
  %v2902 = vunpack.c.l.b16 %v2774
  %v2903 = vunpack.c.l.b16 %v2775
  %v2904 = vunpack.c.l.b16 %v2776
  %v2905 = vunpack.c.l.b16 %v2777
  %v2906 = vunpack.c.l.b16 %v2778
  %v2907 = vunpack.c.l.b16 %v2779
  %v2908 = vunpack.c.l.b16 %v2780
  %v2909 = vunpack.c.l.b16 %v2781
  %v2910 = vunpack.c.l.b16 %v2782
  %v2911 = vunpack.c.l.b16 %v2783
  %v2912 = vunpack.c.l.b16 %v2784
  %v2913 = vunpack.c.l.b16 %v2785
  %v2914 = vunpack.c.l.b16 %v2786
  %v2915 = vunpack.c.l.b16 %v2787
  %v2916 = vunpack.c.l.b16 %v2788
  %v2917 = vunpack.c.l.b16 %v2789
  %v2918 = vunpack.c.l.b16 %v2790
  %v2919 = vunpack.c.l.b16 %v2791
  %v2920 = vunpack.c.l.b16 %v2792
  %v2921 = vunpack.c.l.b16 %v2793
  %v2922 = vunpack.c.l.b16 %v2794
  %v2923 = vunpack.c.l.b16 %v2795
  %v2924 = vunpack.c.l.b16 %v2796
  %v2925 = vunpack.c.l.b16 %v2797
  %v2926 = vunpack.c.l.b16 %v2798
  %v2927 = vunpack.c.l.b16 %v2799
  %v2928 = vunpack.c.l.b16 %v2800
  %v2929 = vunpack.c.l.b16 %v2801
  %v2930 = vunpack.c.l.b16 %v2802
  %v2931 = vunpack.c.l.b16 %v2803
  %v2932 = vunpack.c.l.b16 %v2804
  %v2933 = vunpack.c.l.b16 %v2805
  %v2934 = vunpack.c.l.b16 %v2806
  %v2935 = vunpack.c.l.b16 %v2807
  %v2936 = vunpack.c.l.b16 %v2808
  %v2937 = vunpack.c.l.b16 %v2809
  %v2938 = vunpack.c.l.b16 %v2810
  %v2939 = vunpack.c.l.b16 %v2811
  %v2940 = vunpack.c.l.b16 %v2812
  %v2941 = vunpack.c.l.b16 %v2813
  %v2942 = vunpack.c.l.b16 %v2814
  %v2943 = vunpack.c.l.b16 %v2815
  %v2944 = vunpack.c.l.b16 %v2816
  %v2945 = vunpack.c.l.b16 %v2817
  %v2946 = vunpack.c.l.b16 %v2818
  %v2947 = vunpack.c.l.b16 %v2819
  %v2948 = vunpack.c.l.b16 %v2820
  %v2949 = vunpack.c.l.b16 %v2821
  %v2950 = vunpack.c.l.b16 %v2822
  %v2951 = vunpack.c.l.b16 %v2823
  %v2952 = vunpack.c.l.b16 %v2824
  %v2953 = vunpack.c.l.b16 %v2825
  %v2954 = vunpack.c.l.b16 %v2826
  %v2955 = vunpack.c.l.b16 %v2827
  %vm2956 = vcmask 1041409
  %v2957 = vsel %vm2956, %v2829, %v2828
  %vm2958 = vcmask 1042434
  %v2959 = vsel %vm2958, %v2830, %v2957
  %vm2960 = vcmask 1043459
  %v2961 = vsel %vm2960, %v2831, %v2959
  %vm2962 = vcmask 1044484
  %v2963 = vsel %vm2962, %v2832, %v2961
  %vm2964 = vcmask 1045509
  %v2965 = vsel %vm2964, %v2833, %v2963
  %vm2966 = vcmask 1046534
  %v2967 = vsel %vm2966, %v2834, %v2965
  %vm2968 = vcmask 1047559
  %v2969 = vsel %vm2968, %v2835, %v2967
  %v2970 = vsel %vm2956, %v2837, %v2836
  %v2971 = vsel %vm2958, %v2838, %v2970
  %v2972 = vsel %vm2960, %v2839, %v2971
  %v2973 = vsel %vm2962, %v2840, %v2972
  %v2974 = vsel %vm2964, %v2841, %v2973
  %v2975 = vsel %vm2966, %v2842, %v2974
  %v2976 = vsel %vm2968, %v2843, %v2975
  %v2977 = vsel %vm2956, %v2845, %v2844
  %v2978 = vsel %vm2958, %v2846, %v2977
  %v2979 = vsel %vm2960, %v2847, %v2978
  %v2980 = vsel %vm2962, %v2848, %v2979
  %v2981 = vsel %vm2964, %v2849, %v2980
  %v2982 = vsel %vm2966, %v2850, %v2981
  %v2983 = vsel %vm2968, %v2851, %v2982
  %v2984 = vsel %vm2956, %v2853, %v2852
  %v2985 = vsel %vm2958, %v2854, %v2984
  %v2986 = vsel %vm2960, %v2855, %v2985
  %v2987 = vsel %vm2962, %v2856, %v2986
  %v2988 = vsel %vm2964, %v2857, %v2987
  %v2989 = vsel %vm2966, %v2858, %v2988
  %v2990 = vsel %vm2968, %v2859, %v2989
  %v2991 = vsel %vm2956, %v2861, %v2860
  %v2992 = vsel %vm2958, %v2862, %v2991
  %v2993 = vsel %vm2960, %v2863, %v2992
  %v2994 = vsel %vm2962, %v2864, %v2993
  %v2995 = vsel %vm2964, %v2865, %v2994
  %v2996 = vsel %vm2966, %v2866, %v2995
  %v2997 = vsel %vm2968, %v2867, %v2996
  %v2998 = vsel %vm2956, %v2869, %v2868
  %v2999 = vsel %vm2958, %v2870, %v2998
  %v3000 = vsel %vm2960, %v2871, %v2999
  %v3001 = vsel %vm2962, %v2872, %v3000
  %v3002 = vsel %vm2964, %v2873, %v3001
  %v3003 = vsel %vm2966, %v2874, %v3002
  %v3004 = vsel %vm2968, %v2875, %v3003
  %v3005 = vsel %vm2956, %v2877, %v2876
  %v3006 = vsel %vm2958, %v2878, %v3005
  %v3007 = vsel %vm2960, %v2879, %v3006
  %v3008 = vsel %vm2962, %v2880, %v3007
  %v3009 = vsel %vm2964, %v2881, %v3008
  %v3010 = vsel %vm2966, %v2882, %v3009
  %v3011 = vsel %vm2968, %v2883, %v3010
  %v3012 = vsel %vm2956, %v2885, %v2884
  %v3013 = vsel %vm2958, %v2886, %v3012
  %v3014 = vsel %vm2960, %v2887, %v3013
  %v3015 = vsel %vm2962, %v2888, %v3014
  %v3016 = vsel %vm2964, %v2889, %v3015
  %v3017 = vsel %vm2966, %v2890, %v3016
  %v3018 = vsel %vm2968, %v2891, %v3017
  %v3019 = vsel %vm2956, %v2893, %v2892
  %v3020 = vsel %vm2958, %v2894, %v3019
  %v3021 = vsel %vm2960, %v2895, %v3020
  %v3022 = vsel %vm2962, %v2896, %v3021
  %v3023 = vsel %vm2964, %v2897, %v3022
  %v3024 = vsel %vm2966, %v2898, %v3023
  %v3025 = vsel %vm2968, %v2899, %v3024
  %v3026 = vsel %vm2956, %v2901, %v2900
  %v3027 = vsel %vm2958, %v2902, %v3026
  %v3028 = vsel %vm2960, %v2903, %v3027
  %v3029 = vsel %vm2962, %v2904, %v3028
  %v3030 = vsel %vm2964, %v2905, %v3029
  %v3031 = vsel %vm2966, %v2906, %v3030
  %v3032 = vsel %vm2968, %v2907, %v3031
  %v3033 = vsel %vm2956, %v2909, %v2908
  %v3034 = vsel %vm2958, %v2910, %v3033
  %v3035 = vsel %vm2960, %v2911, %v3034
  %v3036 = vsel %vm2962, %v2912, %v3035
  %v3037 = vsel %vm2964, %v2913, %v3036
  %v3038 = vsel %vm2966, %v2914, %v3037
  %v3039 = vsel %vm2968, %v2915, %v3038
  %v3040 = vsel %vm2956, %v2917, %v2916
  %v3041 = vsel %vm2958, %v2918, %v3040
  %v3042 = vsel %vm2960, %v2919, %v3041
  %v3043 = vsel %vm2962, %v2920, %v3042
  %v3044 = vsel %vm2964, %v2921, %v3043
  %v3045 = vsel %vm2966, %v2922, %v3044
  %v3046 = vsel %vm2968, %v2923, %v3045
  %v3047 = vsel %vm2956, %v2925, %v2924
  %v3048 = vsel %vm2958, %v2926, %v3047
  %v3049 = vsel %vm2960, %v2927, %v3048
  %v3050 = vsel %vm2962, %v2928, %v3049
  %v3051 = vsel %vm2964, %v2929, %v3050
  %v3052 = vsel %vm2966, %v2930, %v3051
  %v3053 = vsel %vm2968, %v2931, %v3052
  %v3054 = vsel %vm2956, %v2933, %v2932
  %v3055 = vsel %vm2958, %v2934, %v3054
  %v3056 = vsel %vm2960, %v2935, %v3055
  %v3057 = vsel %vm2962, %v2936, %v3056
  %v3058 = vsel %vm2964, %v2937, %v3057
  %v3059 = vsel %vm2966, %v2938, %v3058
  %v3060 = vsel %vm2968, %v2939, %v3059
  %v3061 = vsel %vm2956, %v2941, %v2940
  %v3062 = vsel %vm2958, %v2942, %v3061
  %v3063 = vsel %vm2960, %v2943, %v3062
  %v3064 = vsel %vm2962, %v2944, %v3063
  %v3065 = vsel %vm2964, %v2945, %v3064
  %v3066 = vsel %vm2966, %v2946, %v3065
  %v3067 = vsel %vm2968, %v2947, %v3066
  %v3068 = vsel %vm2956, %v2949, %v2948
  %v3069 = vsel %vm2958, %v2950, %v3068
  %v3070 = vsel %vm2960, %v2951, %v3069
  %v3071 = vsel %vm2962, %v2952, %v3070
  %v3072 = vsel %vm2964, %v2953, %v3071
  %v3073 = vsel %vm2966, %v2954, %v3072
  %v3074 = vsel %vm2968, %v2955, %v3073
  %v3075 = vpack.c.b16 %v2969, %v2969
  %v3076 = vpack.c.b16 %v2976, %v2976
  %v3077 = vpack.c.b16 %v2983, %v2983
  %v3078 = vpack.c.b16 %v2990, %v2990
  %v3079 = vpack.c.b16 %v2997, %v2997
  %v3080 = vpack.c.b16 %v3004, %v3004
  %v3081 = vpack.c.b16 %v3011, %v3011
  %v3082 = vpack.c.b16 %v3018, %v3018
  %v3083 = vpack.c.b16 %v3025, %v3025
  %v3084 = vpack.c.b16 %v3032, %v3032
  %v3085 = vpack.c.b16 %v3039, %v3039
  %v3086 = vpack.c.b16 %v3046, %v3046
  %v3087 = vpack.c.b16 %v3053, %v3053
  %v3088 = vpack.c.b16 %v3060, %v3060
  %v3089 = vpack.c.b16 %v3067, %v3067
  %v3090 = vpack.c.b16 %v3074, %v3074
  %3107 = vst [vmem:[%s1] sm:$0xf] %v3075
  %3108 = vst [vmem:[%s1 + $0x4] sm:$0xf] %v3076
  %3109 = vst [vmem:[%s1 + $0x8] sm:$0xf] %v3077
  %3110 = vst [vmem:[%s1 + $0xc] sm:$0xf] %v3078
  %3111 = vst [vmem:[%s1 + $0x10] sm:$0xf] %v3079
  %3112 = vst [vmem:[%s1 + $0x14] sm:$0xf] %v3080
  %3113 = vst [vmem:[%s1 + $0x18] sm:$0xf] %v3081
  %3114 = vst [vmem:[%s1 + $0x1c] sm:$0xf] %v3082
  %3115 = vst [vmem:[%s1 + $0x20] sm:$0xf] %v3083
  %3116 = vst [vmem:[%s1 + $0x24] sm:$0xf] %v3084
  %3117 = vst [vmem:[%s1 + $0x28] sm:$0xf] %v3085
  %3118 = vst [vmem:[%s1 + $0x2c] sm:$0xf] %v3086
  %3119 = vst [vmem:[%s1 + $0x30] sm:$0xf] %v3087
  %3120 = vst [vmem:[%s1 + $0x34] sm:$0xf] %v3088
  %3121 = vst [vmem:[%s1 + $0x38] sm:$0xf] %v3089
  %3122 = vst [vmem:[%s1 + $0x3c] sm:$0xf] %v3090
  // Predicated region
  $region6: #{cassava_forward.5} parent=0 // pred_check
    _
  $region7: #{cassava_forward.5} parent=0 // pred_check_branch
    %3124 = sbr.rel (0) target = $region9
  $region8: #{cassava_forward.5} parent=0 // pred_region
    _
  $region9: #{cassava_forward.5} parent=0 // pred_fallthru
    _
  // Predicated region
  $region10: #{cassava_forward.5} parent=0 // pred_check
    _
  $region11: #{cassava_forward.5} parent=0 // pred_check_branch
    %3126 = sbr.rel (0) target = $region13
  $region12: #{cassava_forward.5} parent=0 // pred_region
    _
  $region13: #{cassava_forward.5} parent=0 // pred_fallthru
    _

// kernel: cassava_forward.7
$region0: #{cassava_forward.7}
  #allocation0 [shape = 'u32[]', space=smem, size = 0x4, offset = 0x4, fixed_abs, tag = 'smem constant byte address 0x4 - core index']
  #allocation1 [shape = 'u32[144,128]{1,0:T(1,128)}', space=vmem, size = 0x12000, scoped, tag = 'internal scratch']
  %s0 = inlined_call_operand.vmem [shape: bf16[2,10,10,128], index: 0, kind: input, shape index: {}]
  %s1 = inlined_call_operand.vmem [shape: bf16[2,8,8,128], index: 1, kind: input, shape index: {}]
  %s2 = inlined_call_operand.vmem [shape: bf16[9,128,128], index: 2, kind: input, shape index: {}]
  %s3 = inlined_call_operand.vmem [shape: f32[1,128], index: 3, kind: input, shape index: {}]
  %s4 = inlined_call_operand.vmem [shape: f32[1,128], index: 4, kind: input, shape index: {}]
  %s5 = inlined_call_operand.vmem [shape: bf16[128,128], index: 5, kind: input, shape index: {}]
  %s6 = inlined_call_operand.vmem [shape: f32[1,128], index: 6, kind: input, shape index: {}]
  %s7 = inlined_call_operand.vmem [shape: f32[1,128], index: 7, kind: input, shape index: {}]
  %s8 = inlined_call_operand.vmem [shape: bf16[128,128], index: 8, kind: input, shape index: {}]
  %s9 = inlined_call_operand.vmem [shape: f32[1,128], index: 9, kind: input, shape index: {}]
  %s10 = inlined_call_operand.vmem [shape: bf16[128,128], index: 10, kind: input, shape index: {}]
  %s11 = inlined_call_operand.vmem [shape: f32[1,128], index: 11, kind: input, shape index: {}]
  %s12 = inlined_call_operand.vmem [shape: bf16[128,128], index: 12, kind: input, shape index: {}]
  %s13 = inlined_call_operand.vmem [shape: f32[1,128], index: 13, kind: input, shape index: {}]
  %s14 = inlined_call_operand.vmem [shape: f32[1,128], index: 14, kind: input, shape index: {}]
  %s15 = inlined_call_operand.vmem [shape: bf16[128,128], index: 15, kind: input, shape index: {}]
  %s16 = inlined_call_operand.vmem [shape: f32[1,128], index: 16, kind: input, shape index: {}]
  %s17 = inlined_call_operand.vmem [shape: f32[2,8,128], index: 17, kind: output, shape index: {}]
  %s18 = sld [smem:[#allocation0]]
  $region101: #{cassava_forward.7} parent=0
    _
  %s20 = ssub.s32 1, %s18
  %s21 = scalar_select 0, %s20, %s18
  loop: start=0, step=1, limit=4
  $region2: #{cassava_forward.7} parent=0 // loop_pre_header
    _
  $region3: #{cassava_forward.7} parent=0 // loop_header
    %s23 = sphi 0, %s27
    %p24 = scmp.ge.s32.totalorder %s23, 4
    %s33 = sphi 0, %s35
    %s36 = sphi 0, %s33
    %s37 = sphi 0, %s36
    %s53 = sphi 0, %s37
    %s59 = sphi 0, %s61
    %s62 = sphi 0, %s59
    %s63 = sphi 0, %s62
    %s79 = sphi 0, %s63
    %s83 = sphi 0, %s83
    %s85 = sphi 0, %s83
    %s86 = sphi 0, %s85
    %s100 = sphi 0, %s86
    %s104 = sphi 0, %s104
    %s106 = sphi 0, %s104
    %s107 = sphi 0, %s106
    %s121 = sphi 0, %s107
    %s125 = sphi 0, %s125
    %s127 = sphi 0, %s125
    %s128 = sphi 0, %s127
    %s142 = sphi 0, %s128
    %s146 = sphi 0, %s146
    %s148 = sphi 0, %s146
    %s149 = sphi 0, %s148
    %s163 = sphi 0, %s149
    %s167 = sphi 0, %s167
    %s169 = sphi 0, %s167
    %s170 = sphi 0, %s169
    %s184 = sphi 0, %s170
    %s188 = sphi 0, %s188
    %s190 = sphi 0, %s188
    %s191 = sphi 0, %s190
    %s205 = sphi 0, %s191
    %s209 = sphi 0, %s209
    %s211 = sphi 0, %s209
    %s212 = sphi 0, %s211
    %s226 = sphi 0, %s212
    %s230 = sphi 0, %s230
    %s232 = sphi 0, %s230
    %s233 = sphi 0, %s232
    %s247 = sphi 0, %s233
    %s251 = sphi 0, %s251
    %s253 = sphi 0, %s251
    %s254 = sphi 0, %s253
    %s268 = sphi 0, %s254
    %s272 = sphi 0, %s272
    %s274 = sphi 0, %s272
    %s275 = sphi 0, %s274
    %s289 = sphi 0, %s275
    %s293 = sphi 0, %s293
    %s295 = sphi 0, %s293
    %s296 = sphi 0, %s295
    %s310 = sphi 0, %s296
    %s314 = sphi 0, %s314
    %s316 = sphi 0, %s314
    %s317 = sphi 0, %s316
    %s331 = sphi 0, %s317
    %s335 = sphi 0, %s335
    %s337 = sphi 0, %s335
    %s338 = sphi 0, %s337
    %s352 = sphi 0, %s338
    %s356 = sphi 0, %s356
    %s358 = sphi 0, %s356
    %s359 = sphi 0, %s358
    %s373 = sphi 0, %s359
    %s377 = sphi 0, %s377
    %s379 = sphi 0, %s377
    %s380 = sphi 0, %s379
    %s394 = sphi 0, %s380
    %s400 = sphi 0, %s402
    %s403 = sphi 0, %s400
    %s404 = sphi 0, %s403
    %s420 = sphi 0, %s404
  $region4: #{cassava_forward.7} parent=0 // loop_header_branch
    %26 = sbr.rel (%p24) target = $region8
  $region5: #{cassava_forward.7} parent=0 // loop_body
    %s28 = ssub.s32 %s23, 1
    %s29 = ssub.s32 %s23, 2
    %s30 = sadd.s32 %s23, 1
    %s31 = ssub.s32 %s23, %s30
    %p32 = scmp.eq.s32.totalorder %s31, 0
    %s34 = sadd.s32 %s33, 1
    %s35 = scalar_select %p32, %s33, %s34
    %p38 = pneg %p32
    %p39 = scmp.eq.s32.totalorder %s23, 1
    %p40 = por %p38, %p39
    %p41 = scmp.ne.s32.totalorder %s33, %s36
    %p42 = scmp.eq.s32.totalorder %s23, 0
    %p43 = por %p41, %p42
    %p44 = scmp.ne.s32.totalorder %s33, %s36
    %p45 = scmp.eq.s32.totalorder %s28, 1
    %p46 = por %p44, %p45
    %p47 = scmp.ne.s32.totalorder %s36, %s37
    %p48 = scmp.eq.s32.totalorder %s28, 0
    %p49 = por %p47, %p48
    %p50 = scmp.ne.s32.totalorder %s36, %s37
    %p51 = scmp.eq.s32.totalorder %s29, 1
    %p52 = por %p50, %p51
    %p54 = scmp.ne.s32.totalorder %s37, %s53
    %p55 = scmp.eq.s32.totalorder %s29, 0
    %p56 = por %p54, %p55
    %s57 = ssub.s32 %s23, %s30
    %p58 = scmp.eq.s32.totalorder %s57, 0
    %s60 = sadd.s32 %s59, 1
    %s61 = scalar_select %p58, %s59, %s60
    %p64 = pneg %p58
    %p65 = scmp.eq.s32.totalorder %s23, 1
    %p66 = por %p64, %p65
    %p67 = scmp.ne.s32.totalorder %s59, %s62
    %p68 = scmp.eq.s32.totalorder %s23, 0
    %p69 = por %p67, %p68
    %p70 = scmp.ne.s32.totalorder %s59, %s62
    %p71 = scmp.eq.s32.totalorder %s28, 1
    %p72 = por %p70, %p71
    %p73 = scmp.ne.s32.totalorder %s62, %s63
    %p74 = scmp.eq.s32.totalorder %s28, 0
    %p75 = por %p73, %p74
    %p76 = scmp.ne.s32.totalorder %s62, %s63
    %p77 = scmp.eq.s32.totalorder %s29, 1
    %p78 = por %p76, %p77
    %p80 = scmp.ne.s32.totalorder %s63, %s79
    %p81 = scmp.eq.s32.totalorder %s29, 0
    %p82 = por %p80, %p81
    %s84 = sadd.s32 %s83, 1
    %p87 = scmp.eq.s32.totalorder %s23, 1
    %p88 = scmp.ne.s32.totalorder %s83, %s85
    %p89 = scmp.eq.s32.totalorder %s23, 0
    %p90 = por %p88, %p89
    %p91 = scmp.ne.s32.totalorder %s83, %s85
    %p92 = scmp.eq.s32.totalorder %s28, 1
    %p93 = por %p91, %p92
    %p94 = scmp.ne.s32.totalorder %s85, %s86
    %p95 = scmp.eq.s32.totalorder %s28, 0
    %p96 = por %p94, %p95
    %p97 = scmp.ne.s32.totalorder %s85, %s86
    %p98 = scmp.eq.s32.totalorder %s29, 1
    %p99 = por %p97, %p98
    %p101 = scmp.ne.s32.totalorder %s86, %s100
    %p102 = scmp.eq.s32.totalorder %s29, 0
    %p103 = por %p101, %p102
    %s105 = sadd.s32 %s104, 1
    %p108 = scmp.eq.s32.totalorder %s23, 1
    %p109 = scmp.ne.s32.totalorder %s104, %s106
    %p110 = scmp.eq.s32.totalorder %s23, 0
    %p111 = por %p109, %p110
    %p112 = scmp.ne.s32.totalorder %s104, %s106
    %p113 = scmp.eq.s32.totalorder %s28, 1
    %p114 = por %p112, %p113
    %p115 = scmp.ne.s32.totalorder %s106, %s107
    %p116 = scmp.eq.s32.totalorder %s28, 0
    %p117 = por %p115, %p116
    %p118 = scmp.ne.s32.totalorder %s106, %s107
    %p119 = scmp.eq.s32.totalorder %s29, 1
    %p120 = por %p118, %p119
    %p122 = scmp.ne.s32.totalorder %s107, %s121
    %p123 = scmp.eq.s32.totalorder %s29, 0
    %p124 = por %p122, %p123
    %s126 = sadd.s32 %s125, 1
    %p129 = scmp.eq.s32.totalorder %s23, 1
    %p130 = scmp.ne.s32.totalorder %s125, %s127
    %p131 = scmp.eq.s32.totalorder %s23, 0
    %p132 = por %p130, %p131
    %p133 = scmp.ne.s32.totalorder %s125, %s127
    %p134 = scmp.eq.s32.totalorder %s28, 1
    %p135 = por %p133, %p134
    %p136 = scmp.ne.s32.totalorder %s127, %s128
    %p137 = scmp.eq.s32.totalorder %s28, 0
    %p138 = por %p136, %p137
    %p139 = scmp.ne.s32.totalorder %s127, %s128
    %p140 = scmp.eq.s32.totalorder %s29, 1
    %p141 = por %p139, %p140
    %p143 = scmp.ne.s32.totalorder %s128, %s142
    %p144 = scmp.eq.s32.totalorder %s29, 0
    %p145 = por %p143, %p144
    %s147 = sadd.s32 %s146, 1
    %p150 = scmp.eq.s32.totalorder %s23, 1
    %p151 = scmp.ne.s32.totalorder %s146, %s148
    %p152 = scmp.eq.s32.totalorder %s23, 0
    %p153 = por %p151, %p152
    %p154 = scmp.ne.s32.totalorder %s146, %s148
    %p155 = scmp.eq.s32.totalorder %s28, 1
    %p156 = por %p154, %p155
    %p157 = scmp.ne.s32.totalorder %s148, %s149
    %p158 = scmp.eq.s32.totalorder %s28, 0
    %p159 = por %p157, %p158
    %p160 = scmp.ne.s32.totalorder %s148, %s149
    %p161 = scmp.eq.s32.totalorder %s29, 1
    %p162 = por %p160, %p161
    %p164 = scmp.ne.s32.totalorder %s149, %s163
    %p165 = scmp.eq.s32.totalorder %s29, 0
    %p166 = por %p164, %p165
    %s168 = sadd.s32 %s167, 1
    %p171 = scmp.eq.s32.totalorder %s23, 1
    %p172 = scmp.ne.s32.totalorder %s167, %s169
    %p173 = scmp.eq.s32.totalorder %s23, 0
    %p174 = por %p172, %p173
    %p175 = scmp.ne.s32.totalorder %s167, %s169
    %p176 = scmp.eq.s32.totalorder %s28, 1
    %p177 = por %p175, %p176
    %p178 = scmp.ne.s32.totalorder %s169, %s170
    %p179 = scmp.eq.s32.totalorder %s28, 0
    %p180 = por %p178, %p179
    %p181 = scmp.ne.s32.totalorder %s169, %s170
    %p182 = scmp.eq.s32.totalorder %s29, 1
    %p183 = por %p181, %p182
    %p185 = scmp.ne.s32.totalorder %s170, %s184
    %p186 = scmp.eq.s32.totalorder %s29, 0
    %p187 = por %p185, %p186
    %s189 = sadd.s32 %s188, 1
    %p192 = scmp.eq.s32.totalorder %s23, 1
    %p193 = scmp.ne.s32.totalorder %s188, %s190
    %p194 = scmp.eq.s32.totalorder %s23, 0
    %p195 = por %p193, %p194
    %p196 = scmp.ne.s32.totalorder %s188, %s190
    %p197 = scmp.eq.s32.totalorder %s28, 1
    %p198 = por %p196, %p197
    %p199 = scmp.ne.s32.totalorder %s190, %s191
    %p200 = scmp.eq.s32.totalorder %s28, 0
    %p201 = por %p199, %p200
    %p202 = scmp.ne.s32.totalorder %s190, %s191
    %p203 = scmp.eq.s32.totalorder %s29, 1
    %p204 = por %p202, %p203
    %p206 = scmp.ne.s32.totalorder %s191, %s205
    %p207 = scmp.eq.s32.totalorder %s29, 0
    %p208 = por %p206, %p207
    %s210 = sadd.s32 %s209, 1
    %p213 = scmp.eq.s32.totalorder %s23, 1
    %p214 = scmp.ne.s32.totalorder %s209, %s211
    %p215 = scmp.eq.s32.totalorder %s23, 0
    %p216 = por %p214, %p215
    %p217 = scmp.ne.s32.totalorder %s209, %s211
    %p218 = scmp.eq.s32.totalorder %s28, 1
    %p219 = por %p217, %p218
    %p220 = scmp.ne.s32.totalorder %s211, %s212
    %p221 = scmp.eq.s32.totalorder %s28, 0
    %p222 = por %p220, %p221
    %p223 = scmp.ne.s32.totalorder %s211, %s212
    %p224 = scmp.eq.s32.totalorder %s29, 1
    %p225 = por %p223, %p224
    %p227 = scmp.ne.s32.totalorder %s212, %s226
    %p228 = scmp.eq.s32.totalorder %s29, 0
    %p229 = por %p227, %p228
    %s231 = sadd.s32 %s230, 1
    %p234 = scmp.eq.s32.totalorder %s23, 1
    %p235 = scmp.ne.s32.totalorder %s230, %s232
    %p236 = scmp.eq.s32.totalorder %s23, 0
    %p237 = por %p235, %p236
    %p238 = scmp.ne.s32.totalorder %s230, %s232
    %p239 = scmp.eq.s32.totalorder %s28, 1
    %p240 = por %p238, %p239
    %p241 = scmp.ne.s32.totalorder %s232, %s233
    %p242 = scmp.eq.s32.totalorder %s28, 0
    %p243 = por %p241, %p242
    %p244 = scmp.ne.s32.totalorder %s232, %s233
    %p245 = scmp.eq.s32.totalorder %s29, 1
    %p246 = por %p244, %p245
    %p248 = scmp.ne.s32.totalorder %s233, %s247
    %p249 = scmp.eq.s32.totalorder %s29, 0
    %p250 = por %p248, %p249
    %s252 = sadd.s32 %s251, 1
    %p255 = scmp.eq.s32.totalorder %s23, 1
    %p256 = scmp.ne.s32.totalorder %s251, %s253
    %p257 = scmp.eq.s32.totalorder %s23, 0
    %p258 = por %p256, %p257
    %p259 = scmp.ne.s32.totalorder %s251, %s253
    %p260 = scmp.eq.s32.totalorder %s28, 1
    %p261 = por %p259, %p260
    %p262 = scmp.ne.s32.totalorder %s253, %s254
    %p263 = scmp.eq.s32.totalorder %s28, 0
    %p264 = por %p262, %p263
    %p265 = scmp.ne.s32.totalorder %s253, %s254
    %p266 = scmp.eq.s32.totalorder %s29, 1
    %p267 = por %p265, %p266
    %p269 = scmp.ne.s32.totalorder %s254, %s268
    %p270 = scmp.eq.s32.totalorder %s29, 0
    %p271 = por %p269, %p270
    %s273 = sadd.s32 %s272, 1
    %p276 = scmp.eq.s32.totalorder %s23, 1
    %p277 = scmp.ne.s32.totalorder %s272, %s274
    %p278 = scmp.eq.s32.totalorder %s23, 0
    %p279 = por %p277, %p278
    %p280 = scmp.ne.s32.totalorder %s272, %s274
    %p281 = scmp.eq.s32.totalorder %s28, 1
    %p282 = por %p280, %p281
    %p283 = scmp.ne.s32.totalorder %s274, %s275
    %p284 = scmp.eq.s32.totalorder %s28, 0
    %p285 = por %p283, %p284
    %p286 = scmp.ne.s32.totalorder %s274, %s275
    %p287 = scmp.eq.s32.totalorder %s29, 1
    %p288 = por %p286, %p287
    %p290 = scmp.ne.s32.totalorder %s275, %s289
    %p291 = scmp.eq.s32.totalorder %s29, 0
    %p292 = por %p290, %p291
    %s294 = sadd.s32 %s293, 1
    %p297 = scmp.eq.s32.totalorder %s23, 1
    %p298 = scmp.ne.s32.totalorder %s293, %s295
    %p299 = scmp.eq.s32.totalorder %s23, 0
    %p300 = por %p298, %p299
    %p301 = scmp.ne.s32.totalorder %s293, %s295
    %p302 = scmp.eq.s32.totalorder %s28, 1
    %p303 = por %p301, %p302
    %p304 = scmp.ne.s32.totalorder %s295, %s296
    %p305 = scmp.eq.s32.totalorder %s28, 0
    %p306 = por %p304, %p305
    %p307 = scmp.ne.s32.totalorder %s295, %s296
    %p308 = scmp.eq.s32.totalorder %s29, 1
    %p309 = por %p307, %p308
    %p311 = scmp.ne.s32.totalorder %s296, %s310
    %p312 = scmp.eq.s32.totalorder %s29, 0
    %p313 = por %p311, %p312
    %s315 = sadd.s32 %s314, 1
    %p318 = scmp.eq.s32.totalorder %s23, 1
    %p319 = scmp.ne.s32.totalorder %s314, %s316
    %p320 = scmp.eq.s32.totalorder %s23, 0
    %p321 = por %p319, %p320
    %p322 = scmp.ne.s32.totalorder %s314, %s316
    %p323 = scmp.eq.s32.totalorder %s28, 1
    %p324 = por %p322, %p323
    %p325 = scmp.ne.s32.totalorder %s316, %s317
    %p326 = scmp.eq.s32.totalorder %s28, 0
    %p327 = por %p325, %p326
    %p328 = scmp.ne.s32.totalorder %s316, %s317
    %p329 = scmp.eq.s32.totalorder %s29, 1
    %p330 = por %p328, %p329
    %p332 = scmp.ne.s32.totalorder %s317, %s331
    %p333 = scmp.eq.s32.totalorder %s29, 0
    %p334 = por %p332, %p333
    %s336 = sadd.s32 %s335, 1
    %p339 = scmp.eq.s32.totalorder %s23, 1
    %p340 = scmp.ne.s32.totalorder %s335, %s337
    %p341 = scmp.eq.s32.totalorder %s23, 0
    %p342 = por %p340, %p341
    %p343 = scmp.ne.s32.totalorder %s335, %s337
    %p344 = scmp.eq.s32.totalorder %s28, 1
    %p345 = por %p343, %p344
    %p346 = scmp.ne.s32.totalorder %s337, %s338
    %p347 = scmp.eq.s32.totalorder %s28, 0
    %p348 = por %p346, %p347
    %p349 = scmp.ne.s32.totalorder %s337, %s338
    %p350 = scmp.eq.s32.totalorder %s29, 1
    %p351 = por %p349, %p350
    %p353 = scmp.ne.s32.totalorder %s338, %s352
    %p354 = scmp.eq.s32.totalorder %s29, 0
    %p355 = por %p353, %p354
    %s357 = sadd.s32 %s356, 1
    %p360 = scmp.eq.s32.totalorder %s23, 1
    %p361 = scmp.ne.s32.totalorder %s356, %s358
    %p362 = scmp.eq.s32.totalorder %s23, 0
    %p363 = por %p361, %p362
    %p364 = scmp.ne.s32.totalorder %s356, %s358
    %p365 = scmp.eq.s32.totalorder %s28, 1
    %p366 = por %p364, %p365
    %p367 = scmp.ne.s32.totalorder %s358, %s359
    %p368 = scmp.eq.s32.totalorder %s28, 0
    %p369 = por %p367, %p368
    %p370 = scmp.ne.s32.totalorder %s358, %s359
    %p371 = scmp.eq.s32.totalorder %s29, 1
    %p372 = por %p370, %p371
    %p374 = scmp.ne.s32.totalorder %s359, %s373
    %p375 = scmp.eq.s32.totalorder %s29, 0
    %p376 = por %p374, %p375
    %s378 = sadd.s32 %s377, 1
    %p381 = scmp.eq.s32.totalorder %s23, 1
    %p382 = scmp.ne.s32.totalorder %s377, %s379
    %p383 = scmp.eq.s32.totalorder %s23, 0
    %p384 = por %p382, %p383
    %p385 = scmp.ne.s32.totalorder %s377, %s379
    %p386 = scmp.eq.s32.totalorder %s28, 1
    %p387 = por %p385, %p386
    %p388 = scmp.ne.s32.totalorder %s379, %s380
    %p389 = scmp.eq.s32.totalorder %s28, 0
    %p390 = por %p388, %p389
    %p391 = scmp.ne.s32.totalorder %s379, %s380
    %p392 = scmp.eq.s32.totalorder %s29, 1
    %p393 = por %p391, %p392
    %p395 = scmp.ne.s32.totalorder %s380, %s394
    %p396 = scmp.eq.s32.totalorder %s29, 0
    %p397 = por %p395, %p396
    %s398 = ssub.s32 %s23, %s30
    %p399 = scmp.eq.s32.totalorder %s398, 0
    %s401 = sadd.s32 %s400, 1
    %s402 = scalar_select %p399, %s400, %s401
    %p405 = pneg %p399
    %p406 = scmp.eq.s32.totalorder %s23, 1
    %p407 = por %p405, %p406
    %p408 = scmp.ne.s32.totalorder %s400, %s403
    %p409 = scmp.eq.s32.totalorder %s23, 0
    %p410 = por %p408, %p409
    %p411 = scmp.ne.s32.totalorder %s400, %s403
    %p412 = scmp.eq.s32.totalorder %s28, 1
    %p413 = por %p411, %p412
    %p414 = scmp.ne.s32.totalorder %s403, %s404
    %p415 = scmp.eq.s32.totalorder %s28, 0
    %p416 = por %p414, %p415
    %p417 = scmp.ne.s32.totalorder %s403, %s404
    %p418 = scmp.eq.s32.totalorder %s29, 1
    %p419 = por %p417, %p418
    %p421 = scmp.ne.s32.totalorder %s404, %s420
    %p422 = scmp.eq.s32.totalorder %s29, 0
    %p423 = por %p421, %p422
    %p424 = scmp.le.s32.totalorder 1, %s23
    %p425 = scmp.lt.s32.totalorder %s23, 3
    %p426 = pnand %p424, %p425
    %p427 = pneg %p426
    // Predicated region
    $region9: #{cassava_forward.7} parent=5 // pred_check
      _
    $region10: #{cassava_forward.7} parent=5 // pred_check_branch
      %429 = sbr.rel (%p426) target = $region12
    $region11: #{cassava_forward.7} parent=5 // pred_region
      %s430 = ssub.s32 %s23, 1
      // Predicated region
      $region13: #{cassava_forward.7} parent=11 // pred_check
        %p431 = pneg %p96
      $region14: #{cassava_forward.7} parent=11 // pred_check_branch
        %433 = sbr.rel (%p431) target = $region16
      $region15: #{cassava_forward.7} parent=11 // pred_region
        _
      $region16: #{cassava_forward.7} parent=11 // pred_fallthru
        _
      // Predicated region
      $region17: #{cassava_forward.7} parent=11 // pred_check
        %p434 = pneg %p117
      $region18: #{cassava_forward.7} parent=11 // pred_check_branch
        %436 = sbr.rel (%p434) target = $region20
      $region19: #{cassava_forward.7} parent=11 // pred_region
        _
      $region20: #{cassava_forward.7} parent=11 // pred_fallthru
        _
      // Predicated region
      $region21: #{cassava_forward.7} parent=11 // pred_check
        %p437 = pneg %p138
      $region22: #{cassava_forward.7} parent=11 // pred_check_branch
        %439 = sbr.rel (%p437) target = $region24
      $region23: #{cassava_forward.7} parent=11 // pred_region
        _
      $region24: #{cassava_forward.7} parent=11 // pred_fallthru
        _
      // Predicated region
      $region25: #{cassava_forward.7} parent=11 // pred_check
        %p440 = pneg %p159
      $region26: #{cassava_forward.7} parent=11 // pred_check_branch
        %442 = sbr.rel (%p440) target = $region28
      $region27: #{cassava_forward.7} parent=11 // pred_region
        _
      $region28: #{cassava_forward.7} parent=11 // pred_fallthru
        _
      // Predicated region
      $region29: #{cassava_forward.7} parent=11 // pred_check
        %p443 = pneg %p180
      $region30: #{cassava_forward.7} parent=11 // pred_check_branch
        %445 = sbr.rel (%p443) target = $region32
      $region31: #{cassava_forward.7} parent=11 // pred_region
        _
      $region32: #{cassava_forward.7} parent=11 // pred_fallthru
        _
      // Predicated region
      $region33: #{cassava_forward.7} parent=11 // pred_check
        %p446 = pneg %p201
      $region34: #{cassava_forward.7} parent=11 // pred_check_branch
        %448 = sbr.rel (%p446) target = $region36
      $region35: #{cassava_forward.7} parent=11 // pred_region
        _
      $region36: #{cassava_forward.7} parent=11 // pred_fallthru
        _
      // Predicated region
      $region37: #{cassava_forward.7} parent=11 // pred_check
        %p449 = pneg %p222
      $region38: #{cassava_forward.7} parent=11 // pred_check_branch
        %451 = sbr.rel (%p449) target = $region40
      $region39: #{cassava_forward.7} parent=11 // pred_region
        _
      $region40: #{cassava_forward.7} parent=11 // pred_fallthru
        _
      // Predicated region
      $region41: #{cassava_forward.7} parent=11 // pred_check
        %p452 = pneg %p243
      $region42: #{cassava_forward.7} parent=11 // pred_check_branch
        %454 = sbr.rel (%p452) target = $region44
      $region43: #{cassava_forward.7} parent=11 // pred_region
        _
      $region44: #{cassava_forward.7} parent=11 // pred_fallthru
        _
      // Predicated region
      $region45: #{cassava_forward.7} parent=11 // pred_check
        %p455 = pneg %p264
      $region46: #{cassava_forward.7} parent=11 // pred_check_branch
        %457 = sbr.rel (%p455) target = $region48
      $region47: #{cassava_forward.7} parent=11 // pred_region
        _
      $region48: #{cassava_forward.7} parent=11 // pred_fallthru
        _
      // Predicated region
      $region49: #{cassava_forward.7} parent=11 // pred_check
        %p458 = pneg %p285
      $region50: #{cassava_forward.7} parent=11 // pred_check_branch
        %460 = sbr.rel (%p458) target = $region52
      $region51: #{cassava_forward.7} parent=11 // pred_region
        _
      $region52: #{cassava_forward.7} parent=11 // pred_fallthru
        _
      // Predicated region
      $region53: #{cassava_forward.7} parent=11 // pred_check
        %p461 = pneg %p306
      $region54: #{cassava_forward.7} parent=11 // pred_check_branch
        %463 = sbr.rel (%p461) target = $region56
      $region55: #{cassava_forward.7} parent=11 // pred_region
        _
      $region56: #{cassava_forward.7} parent=11 // pred_fallthru
        _
      // Predicated region
      $region57: #{cassava_forward.7} parent=11 // pred_check
        %p464 = pneg %p327
      $region58: #{cassava_forward.7} parent=11 // pred_check_branch
        %466 = sbr.rel (%p464) target = $region60
      $region59: #{cassava_forward.7} parent=11 // pred_region
        _
      $region60: #{cassava_forward.7} parent=11 // pred_fallthru
        _
      // Predicated region
      $region61: #{cassava_forward.7} parent=11 // pred_check
        %p467 = pneg %p348
      $region62: #{cassava_forward.7} parent=11 // pred_check_branch
        %469 = sbr.rel (%p467) target = $region64
      $region63: #{cassava_forward.7} parent=11 // pred_region
        _
      $region64: #{cassava_forward.7} parent=11 // pred_fallthru
        _
      // Predicated region
      $region65: #{cassava_forward.7} parent=11 // pred_check
        %p470 = pneg %p369
      $region66: #{cassava_forward.7} parent=11 // pred_check_branch
        %472 = sbr.rel (%p470) target = $region68
      $region67: #{cassava_forward.7} parent=11 // pred_region
        _
      $region68: #{cassava_forward.7} parent=11 // pred_fallthru
        _
      // Predicated region
      $region69: #{cassava_forward.7} parent=11 // pred_check
        %p473 = pneg %p390
      $region70: #{cassava_forward.7} parent=11 // pred_check_branch
        %475 = sbr.rel (%p473) target = $region72
      $region71: #{cassava_forward.7} parent=11 // pred_region
        _
      $region72: #{cassava_forward.7} parent=11 // pred_fallthru
        _
    $region12: #{cassava_forward.7} parent=5 // pred_fallthru
      _
    %p476 = scmp.lt.s32.totalorder %s23, 2
    // Predicated region
    $region73: #{cassava_forward.7} parent=5 // pred_check
      %p477 = pneg %p476
    $region74: #{cassava_forward.7} parent=5 // pred_check_branch
      %479 = sbr.rel (%p477) target = $region76
    $region75: #{cassava_forward.7} parent=5 // pred_region
      // Predicated region
      $region77: #{cassava_forward.7} parent=75 // pred_check
        %p480 = pneg %p43
      $region78: #{cassava_forward.7} parent=75 // pred_check_branch
        %482 = sbr.rel (%p480) target = $region80
      $region79: #{cassava_forward.7} parent=75 // pred_region
        %p483 = scmp.lt.s32.totalorder %s23, 1
        %s484 = scalar_select %p483, %s23, 1
        %s485 = smul.addr %s484, 20
        %s486 = smul.addr %s485, 4
        %s487 = scalar_lea.vmem %s0, %s486
      $region80: #{cassava_forward.7} parent=75 // pred_fallthru
        _
      // Predicated region
      $region81: #{cassava_forward.7} parent=75 // pred_check
        %p488 = pneg %p69
      $region82: #{cassava_forward.7} parent=75 // pred_check_branch
        %490 = sbr.rel (%p488) target = $region84
      $region83: #{cassava_forward.7} parent=75 // pred_region
        %p491 = scmp.lt.s32.totalorder %s23, 1
        %s492 = scalar_select %p491, %s23, 1
        %s493 = smul.addr %s492, 8
        %s494 = smul.addr %s493, 4
        %s495 = scalar_lea.vmem %s1, %s494
      $region84: #{cassava_forward.7} parent=75 // pred_fallthru
        _
    $region76: #{cassava_forward.7} parent=5 // pred_fallthru
      _
    %p496 = scmp.le.s32.totalorder 1, %s23
    %p497 = scmp.lt.s32.totalorder %s23, 3
    %p498 = pnand %p496, %p497
    %p499 = pneg %p498
    // Predicated region
    $region85: #{cassava_forward.7} parent=5 // pred_check
      _
    $region86: #{cassava_forward.7} parent=5 // pred_check_branch
      %501 = sbr.rel (%p498) target = $region88
    $region87: #{cassava_forward.7} parent=5 // pred_region
      %s502 = ssub.s32 %s23, 1
      %p503 = scmp.lt.s32.totalorder %s28, 1
      %s504 = scalar_select %p503, %s28, 1
      %s505 = smul.addr %s504, 20
      %s506 = smul.addr %s505, 4
      %s507 = scalar_lea.vmem %s0, %s506
      %p508 = pneg %p49
      %p509 = pneg %p46
      %p510 = scmp.lt.s32.totalorder %s28, 1
      %s511 = scalar_select %p510, %s28, 1
      %s512 = smul.addr %s511, 8
      %s513 = smul.addr %s512, 4
      %s514 = scalar_lea.vmem %s1, %s513
      %p515 = pneg %p75
      %p516 = pneg %p72
      %p517 = pneg %p96
      %p518 = pneg %p93
      %p519 = pneg %p117
      %p520 = pneg %p114
      %p521 = pneg %p138
      %p522 = pneg %p135
      %p523 = pneg %p159
      %p524 = pneg %p156
      %p525 = pneg %p180
      %p526 = pneg %p177
      %p527 = pneg %p201
      %p528 = pneg %p198
      %p529 = pneg %p222
      %p530 = pneg %p219
      %p531 = pneg %p243
      %p532 = pneg %p240
      %p533 = pneg %p264
      %p534 = pneg %p261
      %p535 = pneg %p285
      %p536 = pneg %p282
      %p537 = pneg %p306
      %p538 = pneg %p303
      %p539 = pneg %p327
      %p540 = pneg %p324
      %p541 = pneg %p348
      %p542 = pneg %p345
      %p543 = pneg %p369
      %p544 = pneg %p366
      %p545 = pneg %p390
      %p546 = pneg %p387
      %p547 = pneg %p416
      %p548 = pneg %p413
      %p549 = scmp.lt.s32.totalorder %s28, 1
      %s550 = scalar_select %p549, %s28, 1
      %s551 = smul.addr %s550, 8
      %s552 = scalar_lea.vmem %s17, %s551
      %p553 = scmp.lt.s32.totalorder %s28, 1
      %s554 = scalar_select %p553, %s28, 1
      %s555 = smul.addr %s554, 20
      %s556 = smul.addr %s555, 4
      %s557 = scalar_lea.vmem %s0, %s556
      %p558 = scmp.lt.s32.totalorder %s28, 1
      %s559 = scalar_select %p558, %s28, 1
      %s560 = smul.addr %s559, 8
      %s561 = smul.addr %s560, 4
      %s562 = scalar_lea.vmem %s1, %s561
      %p563 = scmp.lt.s32.totalorder %s28, 1
      %s564 = scalar_select %p563, %s28, 1
      %s565 = smul.addr %s564, 8
      %s566 = scalar_lea.vmem %s17, %s565
      %v568 = vld [vmem:[%s557] sm:$0xf]
      %v569 = vld [vmem:[%s557 + $0x4] sm:$0x1]
      %v570 = vld [vmem:[%s557 + $0x8] sm:$0xf]
      %v571 = vld [vmem:[%s557 + $0xc] sm:$0x1]
      %v572 = vld [vmem:[%s557 + $0x10] sm:$0xf]
      %v573 = vld [vmem:[%s557 + $0x14] sm:$0x1]
      %v574 = vld [vmem:[%s557 + $0x18] sm:$0xf]
      %v575 = vld [vmem:[%s557 + $0x1c] sm:$0x1]
      %v576 = vld [vmem:[%s557 + $0x20] sm:$0xf]
      %v577 = vld [vmem:[%s557 + $0x24] sm:$0x1]
      %v578 = vld [vmem:[%s557 + $0x28] sm:$0xf]
      %v579 = vld [vmem:[%s557 + $0x2c] sm:$0x1]
      %v580 = vld [vmem:[%s557 + $0x30] sm:$0xf]
      %v581 = vld [vmem:[%s557 + $0x34] sm:$0x1]
      %v582 = vld [vmem:[%s557 + $0x38] sm:$0xf]
      %v583 = vld [vmem:[%s557 + $0x3c] sm:$0x1]
      %v584 = vld [vmem:[%s557 + $0x40] sm:$0xf]
      %v585 = vld [vmem:[%s557 + $0x44] sm:$0x1]
      %v586 = vld [vmem:[%s557 + $0x48] sm:$0xf]
      %v587 = vld [vmem:[%s557 + $0x4c] sm:$0x1]
      %v588 = vld [vmem:[%s562] sm:$0xf]
      %v589 = vld [vmem:[%s562 + $0x4] sm:$0xf]
      %v590 = vld [vmem:[%s562 + $0x8] sm:$0xf]
      %v591 = vld [vmem:[%s562 + $0xc] sm:$0xf]
      %v592 = vld [vmem:[%s562 + $0x10] sm:$0xf]
      %v593 = vld [vmem:[%s562 + $0x14] sm:$0xf]
      %v594 = vld [vmem:[%s562 + $0x18] sm:$0xf]
      %v595 = vld [vmem:[%s562 + $0x1c] sm:$0xf]
      %v596 = vld [vmem:[%s2] sm:$0xf]
      %v597 = vld [vmem:[%s2 + $0x4] sm:$0xf]
      %v598 = vld [vmem:[%s2 + $0x8] sm:$0xf]
      %v599 = vld [vmem:[%s2 + $0xc] sm:$0xf]
      %v600 = vld [vmem:[%s2 + $0x10] sm:$0xf]
      %v601 = vld [vmem:[%s2 + $0x14] sm:$0xf]
      %v602 = vld [vmem:[%s2 + $0x18] sm:$0xf]
      %v603 = vld [vmem:[%s2 + $0x1c] sm:$0xf]
      %v604 = vld [vmem:[%s2 + $0x20] sm:$0xf]
      %v605 = vld [vmem:[%s2 + $0x24] sm:$0xf]
      %v606 = vld [vmem:[%s2 + $0x28] sm:$0xf]
      %v607 = vld [vmem:[%s2 + $0x2c] sm:$0xf]
      %v608 = vld [vmem:[%s2 + $0x30] sm:$0xf]
      %v609 = vld [vmem:[%s2 + $0x34] sm:$0xf]
      %v610 = vld [vmem:[%s2 + $0x38] sm:$0xf]
      %v611 = vld [vmem:[%s2 + $0x3c] sm:$0xf]
      %vm612 = vsmask.f32 3328
      %vm613 = vsmask.f32 7440
      %vm614 = vmor %vm612, %vm613
      %v616 = vshrl.u32 %v568, 16
      %v618 = vrot.slane %v616, 4
      %v619 = vshll.u32 %v568, 16
      %v621 = vrot.slane %v619, 5
      %v622 = vor.u32 %v618, %v621
      %v623 = vrot.slane %v622, 4
      %v625 = vshll.u32 %v569, 16
      %v627 = vrot.slane %v625, 5
      %v628 = vsel %vm614, %v623, %v627
      %v630 = vshrl.u32 %v570, 16
      %v632 = vrot.slane %v630, 4
      %v633 = vshll.u32 %v570, 16
      %v635 = vrot.slane %v633, 5
      %v636 = vor.u32 %v632, %v635
      %v637 = vrot.slane %v636, 4
      %v639 = vshll.u32 %v571, 16
      %v641 = vrot.slane %v639, 5
      %v642 = vsel %vm614, %v637, %v641
      %v644 = vshrl.u32 %v572, 16
      %v646 = vrot.slane %v644, 4
      %v647 = vshll.u32 %v572, 16
      %v649 = vrot.slane %v647, 5
      %v650 = vor.u32 %v646, %v649
      %v651 = vrot.slane %v650, 4
      %v653 = vshll.u32 %v573, 16
      %v655 = vrot.slane %v653, 5
      %v656 = vsel %vm614, %v651, %v655
      %v658 = vshrl.u32 %v574, 16
      %v660 = vrot.slane %v658, 4
      %v661 = vshll.u32 %v574, 16
      %v663 = vrot.slane %v661, 5
      %v664 = vor.u32 %v660, %v663
      %v665 = vrot.slane %v664, 4
      %v667 = vshll.u32 %v575, 16
      %v669 = vrot.slane %v667, 5
      %v670 = vsel %vm614, %v665, %v669
      %v672 = vshrl.u32 %v576, 16
      %v674 = vrot.slane %v672, 4
      %v675 = vshll.u32 %v576, 16
      %v677 = vrot.slane %v675, 5
      %v678 = vor.u32 %v674, %v677
      %v679 = vrot.slane %v678, 4
      %v681 = vshll.u32 %v577, 16
      %v683 = vrot.slane %v681, 5
      %v684 = vsel %vm614, %v679, %v683
      %v686 = vshrl.u32 %v578, 16
      %v688 = vrot.slane %v686, 4
      %v689 = vshll.u32 %v578, 16
      %v691 = vrot.slane %v689, 5
      %v692 = vor.u32 %v688, %v691
      %v693 = vrot.slane %v692, 4
      %v695 = vshll.u32 %v579, 16
      %v697 = vrot.slane %v695, 5
      %v698 = vsel %vm614, %v693, %v697
      %v700 = vshrl.u32 %v580, 16
      %v702 = vrot.slane %v700, 4
      %v703 = vshll.u32 %v580, 16
      %v705 = vrot.slane %v703, 5
      %v706 = vor.u32 %v702, %v705
      %v707 = vrot.slane %v706, 4
      %v709 = vshll.u32 %v581, 16
      %v711 = vrot.slane %v709, 5
      %v712 = vsel %vm614, %v707, %v711
      %v714 = vshrl.u32 %v582, 16
      %v716 = vrot.slane %v714, 4
      %v717 = vshll.u32 %v582, 16
      %v719 = vrot.slane %v717, 5
      %v720 = vor.u32 %v716, %v719
      %v721 = vrot.slane %v720, 4
      %v723 = vshll.u32 %v583, 16
      %v725 = vrot.slane %v723, 5
      %v726 = vsel %vm614, %v721, %v725
      %s727 = scalar_lea.vmem %s2, 64
      %v728 = vld [vmem:[%s727] sm:$0xf]
      %v729 = vld [vmem:[%s727 + $0x4] sm:$0xf]
      %v730 = vld [vmem:[%s727 + $0x8] sm:$0xf]
      %v731 = vld [vmem:[%s727 + $0xc] sm:$0xf]
      %v732 = vld [vmem:[%s727 + $0x10] sm:$0xf]
      %v733 = vld [vmem:[%s727 + $0x14] sm:$0xf]
      %v734 = vld [vmem:[%s727 + $0x18] sm:$0xf]
      %v735 = vld [vmem:[%s727 + $0x1c] sm:$0xf]
      %v736 = vld [vmem:[%s727 + $0x20] sm:$0xf]
      %v737 = vld [vmem:[%s727 + $0x24] sm:$0xf]
      %v738 = vld [vmem:[%s727 + $0x28] sm:$0xf]
      %v739 = vld [vmem:[%s727 + $0x2c] sm:$0xf]
      %v740 = vld [vmem:[%s727 + $0x30] sm:$0xf]
      %v741 = vld [vmem:[%s727 + $0x34] sm:$0xf]
      %v742 = vld [vmem:[%s727 + $0x38] sm:$0xf]
      %v743 = vld [vmem:[%s727 + $0x3c] sm:$0xf]
      %v744 = vunpack.c.l.b16 %v628
      %v745 = vunpack.c.l.b16 %v642
      %v746 = vunpack.c.l.b16 %v656
      %v747 = vunpack.c.l.b16 %v670
      %v748 = vunpack.c.l.b16 %v684
      %v749 = vunpack.c.l.b16 %v698
      %v750 = vunpack.c.l.b16 %v712
      %v751 = vunpack.c.l.b16 %v726
      %v752 = vpack.c.b16 %v745, %v744
      %v753 = vpack.c.b16 %v747, %v746
      %v754 = vpack.c.b16 %v749, %v748
      %v755 = vpack.c.b16 %v751, %v750
      %v776 = vunpack.c.l.b16 %v728
      %v777 = vunpack.c.l.b16 %v729
      %v778 = vunpack.c.l.b16 %v730
      %v779 = vunpack.c.l.b16 %v731
      %v780 = vunpack.c.l.b16 %v732
      %v781 = vunpack.c.l.b16 %v733
      %v782 = vunpack.c.l.b16 %v734
      %v783 = vunpack.c.l.b16 %v735
      %v784 = vunpack.c.l.b16 %v736
      %v785 = vunpack.c.l.b16 %v737
      %v786 = vunpack.c.l.b16 %v738
      %v787 = vunpack.c.l.b16 %v739
      %v788 = vunpack.c.l.b16 %v740
      %v789 = vunpack.c.l.b16 %v741
      %v790 = vunpack.c.l.b16 %v742
      %v791 = vunpack.c.l.b16 %v743
      %v792 = vpack.c.b16 %v777, %v776
      %v793 = vpack.c.b16 %v779, %v778
      %v794 = vpack.c.b16 %v781, %v780
      %v795 = vpack.c.b16 %v783, %v782
      %v796 = vpack.c.b16 %v785, %v784
      %v797 = vpack.c.b16 %v787, %v786
      %v798 = vpack.c.b16 %v789, %v788
      %v799 = vpack.c.b16 %v791, %v790
      %808 = vmatprep.subr.bf16.mxu0 0
      %809 = vmatpush1.bf16.msra.mxu0 %v792
      %810 = vmatprep.subr.bf16.mxu0 0
      %811 = vmatpush1.bf16.msra.mxu0 %v793
      %812 = vmatprep.subr.bf16.mxu0 0
      %813 = vmatpush1.bf16.msra.mxu0 %v794
      %814 = vmatprep.subr.bf16.mxu0 0
      %815 = vmatpush1.bf16.msra.mxu0 %v795
      %816 = vmatprep.subr.bf16.mxu0 0
      %817 = vmatpush1.bf16.msra.mxu0 %v796
      %818 = vmatprep.subr.bf16.mxu0 0
      %819 = vmatpush1.bf16.msra.mxu0 %v797
      %820 = vmatprep.subr.bf16.mxu0 0
      %821 = vmatpush1.bf16.msra.mxu0 %v798
      %822 = vmatprep.subr.bf16.mxu0 0
      %823 = vmatpush1.bf16.msra.mxu0 %v799
      %824 = vmatprep.subr.bf16.mxu0 0
      %825 = vmatpush1.bf16.msra.mxu0 0
      %826 = vmatprep.subr.bf16.mxu0 0
      %827 = vmatpush1.bf16.msra.mxu0 0
      %828 = vmatprep.subr.bf16.mxu0 0
      %829 = vmatpush1.bf16.msra.mxu0 0
      %830 = vmatprep.subr.bf16.mxu0 0
      %831 = vmatpush1.bf16.msra.mxu0 0
      %832 = vmatprep.subr.bf16.mxu0 0
      %833 = vmatpush1.bf16.msra.mxu0 0
      %834 = vmatprep.subr.bf16.mxu0 0
      %835 = vmatpush1.bf16.msra.mxu0 0
      %836 = vmatprep.subr.bf16.mxu0 0
      %837 = vmatpush1.bf16.msra.mxu0 0
      %838 = vmatprep.subr.bf16.mxu0 0
      %839 = vmatpush1.bf16.msra.mxu0 0
      %840 = vmatprep.mubr.bf16.mxu0 0
      %841 = vmatmul.mubr.bf16.gmra.mrb[0].mxu0 %v752
      %v842 = vpop.f32.mrb[0].mxu0
      %v843 = vadd.f32 0.0, %v842
      %v844 = vpop.f32.mrb[0].mxu0
      %v845 = vpop.f32.mrb[0].mxu0
      %v846 = vadd.f32 0.0, %v845
      %v847 = vpop.f32.mrb[0].mxu0
      %848 = vmatprep.mubr.bf16.mxu0 0
      %849 = vmatmul.mubr.bf16.gmra.mrb[0].mxu0 %v753
      %v850 = vpop.f32.mrb[0].mxu0
      %v851 = vadd.f32 0.0, %v850
      %v852 = vpop.f32.mrb[0].mxu0
      %v853 = vpop.f32.mrb[0].mxu0
      %v854 = vadd.f32 0.0, %v853
      %v855 = vpop.f32.mrb[0].mxu0
      %856 = vmatprep.mubr.bf16.mxu0 0
      %857 = vmatmul.mubr.bf16.gmra.mrb[0].mxu0 %v754
      %v858 = vpop.f32.mrb[0].mxu0
      %v859 = vadd.f32 0.0, %v858
      %v860 = vpop.f32.mrb[0].mxu0
      %v861 = vpop.f32.mrb[0].mxu0
      %v862 = vadd.f32 0.0, %v861
      %v863 = vpop.f32.mrb[0].mxu0
      %864 = vmatprep.mubr.bf16.mxu0 0
      %865 = vmatmul.mubr.bf16.gmra.mrb[0].mxu0 %v755
      %v866 = vpop.f32.mrb[0].mxu0
      %v867 = vadd.f32 0.0, %v866
      %v868 = vpop.f32.mrb[0].mxu0
      %v869 = vpop.f32.mrb[0].mxu0
      %v870 = vadd.f32 0.0, %v869
      %v871 = vpop.f32.mrb[0].mxu0
      %872 = vdwg.mxu0
      %v881 = vunpack.c.l.b16 %v568
      %v882 = vunpack.c.l.b16 %v570
      %v883 = vunpack.c.l.b16 %v572
      %v884 = vunpack.c.l.b16 %v574
      %v885 = vunpack.c.l.b16 %v576
      %v886 = vunpack.c.l.b16 %v578
      %v887 = vunpack.c.l.b16 %v580
      %v888 = vunpack.c.l.b16 %v582
      %v889 = vpack.c.b16 %v882, %v881
      %v890 = vpack.c.b16 %v884, %v883
      %v891 = vpack.c.b16 %v886, %v885
      %v892 = vpack.c.b16 %v888, %v887
      %v913 = vunpack.c.l.b16 %v596
      %v914 = vunpack.c.l.b16 %v597
      %v915 = vunpack.c.l.b16 %v598
      %v916 = vunpack.c.l.b16 %v599
      %v917 = vunpack.c.l.b16 %v600
      %v918 = vunpack.c.l.b16 %v601
      %v919 = vunpack.c.l.b16 %v602
      %v920 = vunpack.c.l.b16 %v603
      %v921 = vunpack.c.l.b16 %v604
      %v922 = vunpack.c.l.b16 %v605
      %v923 = vunpack.c.l.b16 %v606
      %v924 = vunpack.c.l.b16 %v607
      %v925 = vunpack.c.l.b16 %v608
      %v926 = vunpack.c.l.b16 %v609
      %v927 = vunpack.c.l.b16 %v610
      %v928 = vunpack.c.l.b16 %v611
      %v929 = vpack.c.b16 %v914, %v913
      %v930 = vpack.c.b16 %v916, %v915
      %v931 = vpack.c.b16 %v918, %v917
      %v932 = vpack.c.b16 %v920, %v919
      %v933 = vpack.c.b16 %v922, %v921
      %v934 = vpack.c.b16 %v924, %v923
      %v935 = vpack.c.b16 %v926, %v925
      %v936 = vpack.c.b16 %v928, %v927
      %945 = vmatprep.subr.bf16.mxu0 0
      %946 = vmatpush1.bf16.msra.mxu0 %v929
      %947 = vmatprep.subr.bf16.mxu0 0
      %948 = vmatpush1.bf16.msra.mxu0 %v930
      %949 = vmatprep.subr.bf16.mxu0 0
      %950 = vmatpush1.bf16.msra.mxu0 %v931
      %951 = vmatprep.subr.bf16.mxu0 0
      %952 = vmatpush1.bf16.msra.mxu0 %v932
      %953 = vmatprep.subr.bf16.mxu0 0
      %954 = vmatpush1.bf16.msra.mxu0 %v933
      %955 = vmatprep.subr.bf16.mxu0 0
      %956 = vmatpush1.bf16.msra.mxu0 %v934
      %957 = vmatprep.subr.bf16.mxu0 0
      %958 = vmatpush1.bf16.msra.mxu0 %v935
      %959 = vmatprep.subr.bf16.mxu0 0
      %960 = vmatpush1.bf16.msra.mxu0 %v936
      %961 = vmatprep.subr.bf16.mxu0 0
      %962 = vmatpush1.bf16.msra.mxu0 0
      %963 = vmatprep.subr.bf16.mxu0 0
      %964 = vmatpush1.bf16.msra.mxu0 0
      %965 = vmatprep.subr.bf16.mxu0 0
      %966 = vmatpush1.bf16.msra.mxu0 0
      %967 = vmatprep.subr.bf16.mxu0 0
      %968 = vmatpush1.bf16.msra.mxu0 0
      %969 = vmatprep.subr.bf16.mxu0 0
      %970 = vmatpush1.bf16.msra.mxu0 0
      %971 = vmatprep.subr.bf16.mxu0 0
      %972 = vmatpush1.bf16.msra.mxu0 0
      %973 = vmatprep.subr.bf16.mxu0 0
      %974 = vmatpush1.bf16.msra.mxu0 0
      %975 = vmatprep.subr.bf16.mxu0 0
      %976 = vmatpush1.bf16.msra.mxu0 0
      %977 = vmatprep.mubr.bf16.mxu0 0
      %978 = vmatmul.mubr.bf16.gmra.mrb[0].mxu0 %v889
      %v979 = vpop.f32.mrb[0].mxu0
      %v980 = vadd.f32 %v843, %v979
      %v981 = vpop.f32.mrb[0].mxu0
      %v982 = vpop.f32.mrb[0].mxu0
      %v983 = vadd.f32 %v846, %v982
      %v984 = vpop.f32.mrb[0].mxu0
      %985 = vmatprep.mubr.bf16.mxu0 0
      %986 = vmatmul.mubr.bf16.gmra.mrb[0].mxu0 %v890
      %v987 = vpop.f32.mrb[0].mxu0
      %v988 = vadd.f32 %v851, %v987
      %v989 = vpop.f32.mrb[0].mxu0
      %v990 = vpop.f32.mrb[0].mxu0
      %v991 = vadd.f32 %v854, %v990
      %v992 = vpop.f32.mrb[0].mxu0
      %993 = vmatprep.mubr.bf16.mxu0 0
      %994 = vmatmul.mubr.bf16.gmra.mrb[0].mxu0 %v891
      %v995 = vpop.f32.mrb[0].mxu0
      %v996 = vadd.f32 %v859, %v995
      %v997 = vpop.f32.mrb[0].mxu0
      %v998 = vpop.f32.mrb[0].mxu0
      %v999 = vadd.f32 %v862, %v998
      %v1000 = vpop.f32.mrb[0].mxu0
      %1001 = vmatprep.mubr.bf16.mxu0 0
      %1002 = vmatmul.mubr.bf16.gmra.mrb[0].mxu0 %v892
      %v1003 = vpop.f32.mrb[0].mxu0
      %v1004 = vadd.f32 %v867, %v1003
      %v1005 = vpop.f32.mrb[0].mxu0
      %v1006 = vpop.f32.mrb[0].mxu0
      %v1007 = vadd.f32 %v870, %v1006
      %v1008 = vpop.f32.mrb[0].mxu0
      %1009 = vdwg.mxu0
      %vm1018 = vcmask 1042432
      %vm1019 = vcmask 1046532
      %vm1020 = vmor %vm1018, %vm1019
      %v1021 = vrot.slane %v568, 5
      %v1022 = vrot.slane %v1021, 4
      %v1023 = vrot.slane %v569, 5
      %v1024 = vsel %vm1020, %v1022, %v1023
      %v1025 = vrot.slane %v570, 5
      %v1026 = vrot.slane %v1025, 4
      %v1027 = vrot.slane %v571, 5
      %v1028 = vsel %vm1020, %v1026, %v1027
      %v1029 = vrot.slane %v572, 5
      %v1030 = vrot.slane %v1029, 4
      %v1031 = vrot.slane %v573, 5
      %v1032 = vsel %vm1020, %v1030, %v1031
      %v1033 = vrot.slane %v574, 5
      %v1034 = vrot.slane %v1033, 4
      %v1035 = vrot.slane %v575, 5
      %v1036 = vsel %vm1020, %v1034, %v1035
      %v1037 = vrot.slane %v576, 5
      %v1038 = vrot.slane %v1037, 4
      %v1039 = vrot.slane %v577, 5
      %v1040 = vsel %vm1020, %v1038, %v1039
      %v1041 = vrot.slane %v578, 5
      %v1042 = vrot.slane %v1041, 4
      %v1043 = vrot.slane %v579, 5
      %v1044 = vsel %vm1020, %v1042, %v1043
      %v1045 = vrot.slane %v580, 5
      %v1046 = vrot.slane %v1045, 4
      %v1047 = vrot.slane %v581, 5
      %v1048 = vsel %vm1020, %v1046, %v1047
      %v1049 = vrot.slane %v582, 5
      %v1050 = vrot.slane %v1049, 4
      %v1051 = vrot.slane %v583, 5
      %v1052 = vsel %vm1020, %v1050, %v1051
      %s1053 = scalar_lea.vmem %s2, 128
      %v1054 = vld [vmem:[%s1053] sm:$0xf]
      %v1055 = vld [vmem:[%s1053 + $0x4] sm:$0xf]
      %v1056 = vld [vmem:[%s1053 + $0x8] sm:$0xf]
      %v1057 = vld [vmem:[%s1053 + $0xc] sm:$0xf]
      %v1058 = vld [vmem:[%s1053 + $0x10] sm:$0xf]
      %v1059 = vld [vmem:[%s1053 + $0x14] sm:$0xf]
      %v1060 = vld [vmem:[%s1053 + $0x18] sm:$0xf]
      %v1061 = vld [vmem:[%s1053 + $0x1c] sm:$0xf]
      %v1062 = vld [vmem:[%s1053 + $0x20] sm:$0xf]
      %v1063 = vld [vmem:[%s1053 + $0x24] sm:$0xf]
      %v1064 = vld [vmem:[%s1053 + $0x28] sm:$0xf]
      %v1065 = vld [vmem:[%s1053 + $0x2c] sm:$0xf]
      %v1066 = vld [vmem:[%s1053 + $0x30] sm:$0xf]
      %v1067 = vld [vmem:[%s1053 + $0x34] sm:$0xf]
      %v1068 = vld [vmem:[%s1053 + $0x38] sm:$0xf]
      %v1069 = vld [vmem:[%s1053 + $0x3c] sm:$0xf]
      %v1070 = vunpack.c.l.b16 %v1024
      %v1071 = vunpack.c.l.b16 %v1028
      %v1072 = vunpack.c.l.b16 %v1032
      %v1073 = vunpack.c.l.b16 %v1036
      %v1074 = vunpack.c.l.b16 %v1040
      %v1075 = vunpack.c.l.b16 %v1044
      %v1076 = vunpack.c.l.b16 %v1048
      %v1077 = vunpack.c.l.b16 %v1052
      %v1078 = vpack.c.b16 %v1071, %v1070
      %v1079 = vpack.c.b16 %v1073, %v1072
      %v1080 = vpack.c.b16 %v1075, %v1074
      %v1081 = vpack.c.b16 %v1077, %v1076
      %v1102 = vunpack.c.l.b16 %v1054
      %v1103 = vunpack.c.l.b16 %v1055
      %v1104 = vunpack.c.l.b16 %v1056
      %v1105 = vunpack.c.l.b16 %v1057
      %v1106 = vunpack.c.l.b16 %v1058
      %v1107 = vunpack.c.l.b16 %v1059
      %v1108 = vunpack.c.l.b16 %v1060
      %v1109 = vunpack.c.l.b16 %v1061
      %v1110 = vunpack.c.l.b16 %v1062
      %v1111 = vunpack.c.l.b16 %v1063
      %v1112 = vunpack.c.l.b16 %v1064
      %v1113 = vunpack.c.l.b16 %v1065
      %v1114 = vunpack.c.l.b16 %v1066
      %v1115 = vunpack.c.l.b16 %v1067
      %v1116 = vunpack.c.l.b16 %v1068
      %v1117 = vunpack.c.l.b16 %v1069
      %v1118 = vpack.c.b16 %v1103, %v1102
      %v1119 = vpack.c.b16 %v1105, %v1104
      %v1120 = vpack.c.b16 %v1107, %v1106
      %v1121 = vpack.c.b16 %v1109, %v1108
      %v1122 = vpack.c.b16 %v1111, %v1110
      %v1123 = vpack.c.b16 %v1113, %v1112
      %v1124 = vpack.c.b16 %v1115, %v1114
      %v1125 = vpack.c.b16 %v1117, %v1116
      %1134 = vmatprep.subr.bf16.mxu0 0
      %1135 = vmatpush1.bf16.msra.mxu0 %v1118
      %1136 = vmatprep.subr.bf16.mxu0 0
      %1137 = vmatpush1.bf16.msra.mxu0 %v1119
      %1138 = vmatprep.subr.bf16.mxu0 0
      %1139 = vmatpush1.bf16.msra.mxu0 %v1120
      %1140 = vmatprep.subr.bf16.mxu0 0
      %1141 = vmatpush1.bf16.msra.mxu0 %v1121
      %1142 = vmatprep.subr.bf16.mxu0 0
      %1143 = vmatpush1.bf16.msra.mxu0 %v1122
      %1144 = vmatprep.subr.bf16.mxu0 0
      %1145 = vmatpush1.bf16.msra.mxu0 %v1123
      %1146 = vmatprep.subr.bf16.mxu0 0
      %1147 = vmatpush1.bf16.msra.mxu0 %v1124
      %1148 = vmatprep.subr.bf16.mxu0 0
      %1149 = vmatpush1.bf16.msra.mxu0 %v1125
      %1150 = vmatprep.subr.bf16.mxu0 0
      %1151 = vmatpush1.bf16.msra.mxu0 0
      %1152 = vmatprep.subr.bf16.mxu0 0
      %1153 = vmatpush1.bf16.msra.mxu0 0
      %1154 = vmatprep.subr.bf16.mxu0 0
      %1155 = vmatpush1.bf16.msra.mxu0 0
      %1156 = vmatprep.subr.bf16.mxu0 0
      %1157 = vmatpush1.bf16.msra.mxu0 0
      %1158 = vmatprep.subr.bf16.mxu0 0
      %1159 = vmatpush1.bf16.msra.mxu0 0
      %1160 = vmatprep.subr.bf16.mxu0 0
      %1161 = vmatpush1.bf16.msra.mxu0 0
      %1162 = vmatprep.subr.bf16.mxu0 0
      %1163 = vmatpush1.bf16.msra.mxu0 0
      %1164 = vmatprep.subr.bf16.mxu0 0
      %1165 = vmatpush1.bf16.msra.mxu0 0
      %1166 = vmatprep.mubr.bf16.mxu0 0
      %1167 = vmatmul.mubr.bf16.gmra.mrb[0].mxu0 %v1078
      %v1168 = vpop.f32.mrb[0].mxu0
      %v1169 = vadd.f32 0.0, %v1168
      %v1170 = vpop.f32.mrb[0].mxu0
      %v1171 = vpop.f32.mrb[0].mxu0
      %v1172 = vadd.f32 0.0, %v1171
      %v1173 = vpop.f32.mrb[0].mxu0
      %1174 = vmatprep.mubr.bf16.mxu0 0
      %1175 = vmatmul.mubr.bf16.gmra.mrb[0].mxu0 %v1079
      %v1176 = vpop.f32.mrb[0].mxu0
      %v1177 = vadd.f32 0.0, %v1176
      %v1178 = vpop.f32.mrb[0].mxu0
      %v1179 = vpop.f32.mrb[0].mxu0
      %v1180 = vadd.f32 0.0, %v1179
      %v1181 = vpop.f32.mrb[0].mxu0
      %1182 = vmatprep.mubr.bf16.mxu0 0
      %1183 = vmatmul.mubr.bf16.gmra.mrb[0].mxu0 %v1080
      %v1184 = vpop.f32.mrb[0].mxu0
      %v1185 = vadd.f32 0.0, %v1184
      %v1186 = vpop.f32.mrb[0].mxu0
      %v1187 = vpop.f32.mrb[0].mxu0
      %v1188 = vadd.f32 0.0, %v1187
      %v1189 = vpop.f32.mrb[0].mxu0
      %1190 = vmatprep.mubr.bf16.mxu0 0
      %1191 = vmatmul.mubr.bf16.gmra.mrb[0].mxu0 %v1081
      %v1192 = vpop.f32.mrb[0].mxu0
      %v1193 = vadd.f32 0.0, %v1192
      %v1194 = vpop.f32.mrb[0].mxu0
      %v1195 = vpop.f32.mrb[0].mxu0
      %v1196 = vadd.f32 0.0, %v1195
      %v1197 = vpop.f32.mrb[0].mxu0
      %1198 = vdwg.mxu0
      %v1199 = vadd.f32 %v980, %v1169
      %v1200 = vadd.f32 %v983, %v1172
      %v1201 = vadd.f32 %v988, %v1177
      %v1202 = vadd.f32 %v991, %v1180
      %v1203 = vadd.f32 %v996, %v1185
      %v1204 = vadd.f32 %v999, %v1188
      %v1205 = vadd.f32 %v1004, %v1193
      %v1206 = vadd.f32 %v1007, %v1196
      %s1207 = scalar_lea.vmem %s2, 192
      %v1208 = vld [vmem:[%s1207] sm:$0xf]
      %v1209 = vld [vmem:[%s1207 + $0x4] sm:$0xf]
      %v1210 = vld [vmem:[%s1207 + $0x8] sm:$0xf]
      %v1211 = vld [vmem:[%s1207 + $0xc] sm:$0xf]
      %v1212 = vld [vmem:[%s1207 + $0x10] sm:$0xf]
      %v1213 = vld [vmem:[%s1207 + $0x14] sm:$0xf]
      %v1214 = vld [vmem:[%s1207 + $0x18] sm:$0xf]
      %v1215 = vld [vmem:[%s1207 + $0x1c] sm:$0xf]
      %v1216 = vld [vmem:[%s1207 + $0x20] sm:$0xf]
      %v1217 = vld [vmem:[%s1207 + $0x24] sm:$0xf]
      %v1218 = vld [vmem:[%s1207 + $0x28] sm:$0xf]
      %v1219 = vld [vmem:[%s1207 + $0x2c] sm:$0xf]
      %v1220 = vld [vmem:[%s1207 + $0x30] sm:$0xf]
      %v1221 = vld [vmem:[%s1207 + $0x34] sm:$0xf]
      %v1222 = vld [vmem:[%s1207 + $0x38] sm:$0xf]
      %v1223 = vld [vmem:[%s1207 + $0x3c] sm:$0xf]
      %v1225 = vunpack.c.l.b16 %v584
      %v1226 = vpack.c.b16 %v883, %v882
      %v1227 = vpack.c.b16 %v885, %v884
      %v1228 = vpack.c.b16 %v887, %v886
      %v1229 = vpack.c.b16 %v1225, %v888
      %v1250 = vunpack.c.l.b16 %v1208
      %v1251 = vunpack.c.l.b16 %v1209
      %v1252 = vunpack.c.l.b16 %v1210
      %v1253 = vunpack.c.l.b16 %v1211
      %v1254 = vunpack.c.l.b16 %v1212
      %v1255 = vunpack.c.l.b16 %v1213
      %v1256 = vunpack.c.l.b16 %v1214
      %v1257 = vunpack.c.l.b16 %v1215
      %v1258 = vunpack.c.l.b16 %v1216
      %v1259 = vunpack.c.l.b16 %v1217
      %v1260 = vunpack.c.l.b16 %v1218
      %v1261 = vunpack.c.l.b16 %v1219
      %v1262 = vunpack.c.l.b16 %v1220
      %v1263 = vunpack.c.l.b16 %v1221
      %v1264 = vunpack.c.l.b16 %v1222
      %v1265 = vunpack.c.l.b16 %v1223
      %v1266 = vpack.c.b16 %v1251, %v1250
      %v1267 = vpack.c.b16 %v1253, %v1252
      %v1268 = vpack.c.b16 %v1255, %v1254
      %v1269 = vpack.c.b16 %v1257, %v1256
      %v1270 = vpack.c.b16 %v1259, %v1258
      %v1271 = vpack.c.b16 %v1261, %v1260
      %v1272 = vpack.c.b16 %v1263, %v1262
      %v1273 = vpack.c.b16 %v1265, %v1264
      %1282 = vmatprep.subr.bf16.mxu0 0
      %1283 = vmatpush1.bf16.msra.mxu0 %v1266
      %1284 = vmatprep.subr.bf16.mxu0 0
      %1285 = vmatpush1.bf16.msra.mxu0 %v1267
      %1286 = vmatprep.subr.bf16.mxu0 0
      %1287 = vmatpush1.bf16.msra.mxu0 %v1268
      %1288 = vmatprep.subr.bf16.mxu0 0
      %1289 = vmatpush1.bf16.msra.mxu0 %v1269
      %1290 = vmatprep.subr.bf16.mxu0 0
      %1291 = vmatpush1.bf16.msra.mxu0 %v1270
      %1292 = vmatprep.subr.bf16.mxu0 0
      %1293 = vmatpush1.bf16.msra.mxu0 %v1271
      %1294 = vmatprep.subr.bf16.mxu0 0
      %1295 = vmatpush1.bf16.msra.mxu0 %v1272
      %1296 = vmatprep.subr.bf16.mxu0 0
      %1297 = vmatpush1.bf16.msra.mxu0 %v1273
      %1298 = vmatprep.subr.bf16.mxu0 0
      %1299 = vmatpush1.bf16.msra.mxu0 0
      %1300 = vmatprep.subr.bf16.mxu0 0
      %1301 = vmatpush1.bf16.msra.mxu0 0
      %1302 = vmatprep.subr.bf16.mxu0 0
      %1303 = vmatpush1.bf16.msra.mxu0 0
      %1304 = vmatprep.subr.bf16.mxu0 0
      %1305 = vmatpush1.bf16.msra.mxu0 0
      %1306 = vmatprep.subr.bf16.mxu0 0
      %1307 = vmatpush1.bf16.msra.mxu0 0
      %1308 = vmatprep.subr.bf16.mxu0 0
      %1309 = vmatpush1.bf16.msra.mxu0 0
      %1310 = vmatprep.subr.bf16.mxu0 0
      %1311 = vmatpush1.bf16.msra.mxu0 0
      %1312 = vmatprep.subr.bf16.mxu0 0
      %1313 = vmatpush1.bf16.msra.mxu0 0
      %1314 = vmatprep.mubr.bf16.mxu0 0
      %1315 = vmatmul.mubr.bf16.gmra.mrb[0].mxu0 %v1226
      %v1316 = vpop.f32.mrb[0].mxu0
      %v1317 = vadd.f32 0.0, %v1316
      %v1318 = vpop.f32.mrb[0].mxu0
      %v1319 = vpop.f32.mrb[0].mxu0
      %v1320 = vadd.f32 0.0, %v1319
      %v1321 = vpop.f32.mrb[0].mxu0
      %1322 = vmatprep.mubr.bf16.mxu0 0
      %1323 = vmatmul.mubr.bf16.gmra.mrb[0].mxu0 %v1227
      %v1324 = vpop.f32.mrb[0].mxu0
      %v1325 = vadd.f32 0.0, %v1324
      %v1326 = vpop.f32.mrb[0].mxu0
      %v1327 = vpop.f32.mrb[0].mxu0
      %v1328 = vadd.f32 0.0, %v1327
      %v1329 = vpop.f32.mrb[0].mxu0
      %1330 = vmatprep.mubr.bf16.mxu0 0
      %1331 = vmatmul.mubr.bf16.gmra.mrb[0].mxu0 %v1228
      %v1332 = vpop.f32.mrb[0].mxu0
      %v1333 = vadd.f32 0.0, %v1332
      %v1334 = vpop.f32.mrb[0].mxu0
      %v1335 = vpop.f32.mrb[0].mxu0
      %v1336 = vadd.f32 0.0, %v1335
      %v1337 = vpop.f32.mrb[0].mxu0
      %1338 = vmatprep.mubr.bf16.mxu0 0
      %1339 = vmatmul.mubr.bf16.gmra.mrb[0].mxu0 %v1229
      %v1340 = vpop.f32.mrb[0].mxu0
      %v1341 = vadd.f32 0.0, %v1340
      %v1342 = vpop.f32.mrb[0].mxu0
      %v1343 = vpop.f32.mrb[0].mxu0
      %v1344 = vadd.f32 0.0, %v1343
      %v1345 = vpop.f32.mrb[0].mxu0
      %1346 = vdwg.mxu0
      %v1347 = vadd.f32 %v1199, %v1317
      %v1348 = vadd.f32 %v1200, %v1320
      %v1349 = vadd.f32 %v1201, %v1325
      %v1350 = vadd.f32 %v1202, %v1328
      %v1351 = vadd.f32 %v1203, %v1333
      %v1352 = vadd.f32 %v1204, %v1336
      %v1353 = vadd.f32 %v1205, %v1341
      %v1354 = vadd.f32 %v1206, %v1344
      %v1356 = vshrl.u32 %v584, 16
      %v1358 = vrot.slane %v1356, 4
      %v1359 = vshll.u32 %v584, 16
      %v1361 = vrot.slane %v1359, 5
      %v1362 = vor.u32 %v1358, %v1361
      %v1363 = vrot.slane %v1362, 4
      %v1365 = vshll.u32 %v585, 16
      %v1367 = vrot.slane %v1365, 5
      %v1368 = vsel %vm614, %v1363, %v1367
      %s1369 = scalar_lea.vmem %s2, 256
      %v1370 = vld [vmem:[%s1369] sm:$0xf]
      %v1371 = vld [vmem:[%s1369 + $0x4] sm:$0xf]
      %v1372 = vld [vmem:[%s1369 + $0x8] sm:$0xf]
      %v1373 = vld [vmem:[%s1369 + $0xc] sm:$0xf]
      %v1374 = vld [vmem:[%s1369 + $0x10] sm:$0xf]
      %v1375 = vld [vmem:[%s1369 + $0x14] sm:$0xf]
      %v1376 = vld [vmem:[%s1369 + $0x18] sm:$0xf]
      %v1377 = vld [vmem:[%s1369 + $0x1c] sm:$0xf]
      %v1378 = vld [vmem:[%s1369 + $0x20] sm:$0xf]
      %v1379 = vld [vmem:[%s1369 + $0x24] sm:$0xf]
      %v1380 = vld [vmem:[%s1369 + $0x28] sm:$0xf]
      %v1381 = vld [vmem:[%s1369 + $0x2c] sm:$0xf]
      %v1382 = vld [vmem:[%s1369 + $0x30] sm:$0xf]
      %v1383 = vld [vmem:[%s1369 + $0x34] sm:$0xf]
      %v1384 = vld [vmem:[%s1369 + $0x38] sm:$0xf]
      %v1385 = vld [vmem:[%s1369 + $0x3c] sm:$0xf]
      %v1386 = vunpack.c.l.b16 %v1368
      %v1387 = vpack.c.b16 %v746, %v745
      %v1388 = vpack.c.b16 %v748, %v747
      %v1389 = vpack.c.b16 %v750, %v749
      %v1390 = vpack.c.b16 %v1386, %v751
      %v1411 = vunpack.c.l.b16 %v1370
      %v1412 = vunpack.c.l.b16 %v1371
      %v1413 = vunpack.c.l.b16 %v1372
      %v1414 = vunpack.c.l.b16 %v1373
      %v1415 = vunpack.c.l.b16 %v1374
      %v1416 = vunpack.c.l.b16 %v1375
      %v1417 = vunpack.c.l.b16 %v1376
      %v1418 = vunpack.c.l.b16 %v1377
      %v1419 = vunpack.c.l.b16 %v1378
      %v1420 = vunpack.c.l.b16 %v1379
      %v1421 = vunpack.c.l.b16 %v1380
      %v1422 = vunpack.c.l.b16 %v1381
      %v1423 = vunpack.c.l.b16 %v1382
      %v1424 = vunpack.c.l.b16 %v1383
      %v1425 = vunpack.c.l.b16 %v1384
      %v1426 = vunpack.c.l.b16 %v1385
      %v1427 = vpack.c.b16 %v1412, %v1411
      %v1428 = vpack.c.b16 %v1414, %v1413
      %v1429 = vpack.c.b16 %v1416, %v1415
      %v1430 = vpack.c.b16 %v1418, %v1417
      %v1431 = vpack.c.b16 %v1420, %v1419
      %v1432 = vpack.c.b16 %v1422, %v1421
      %v1433 = vpack.c.b16 %v1424, %v1423
      %v1434 = vpack.c.b16 %v1426, %v1425
      %1443 = vmatprep.subr.bf16.mxu0 0
      %1444 = vmatpush1.bf16.msra.mxu0 %v1427
      %1445 = vmatprep.subr.bf16.mxu0 0
      %1446 = vmatpush1.bf16.msra.mxu0 %v1428
      %1447 = vmatprep.subr.bf16.mxu0 0
      %1448 = vmatpush1.bf16.msra.mxu0 %v1429
      %1449 = vmatprep.subr.bf16.mxu0 0
      %1450 = vmatpush1.bf16.msra.mxu0 %v1430
      %1451 = vmatprep.subr.bf16.mxu0 0
      %1452 = vmatpush1.bf16.msra.mxu0 %v1431
      %1453 = vmatprep.subr.bf16.mxu0 0
      %1454 = vmatpush1.bf16.msra.mxu0 %v1432
      %1455 = vmatprep.subr.bf16.mxu0 0
      %1456 = vmatpush1.bf16.msra.mxu0 %v1433
      %1457 = vmatprep.subr.bf16.mxu0 0
      %1458 = vmatpush1.bf16.msra.mxu0 %v1434
      %1459 = vmatprep.subr.bf16.mxu0 0
      %1460 = vmatpush1.bf16.msra.mxu0 0
      %1461 = vmatprep.subr.bf16.mxu0 0
      %1462 = vmatpush1.bf16.msra.mxu0 0
      %1463 = vmatprep.subr.bf16.mxu0 0
      %1464 = vmatpush1.bf16.msra.mxu0 0
      %1465 = vmatprep.subr.bf16.mxu0 0
      %1466 = vmatpush1.bf16.msra.mxu0 0
      %1467 = vmatprep.subr.bf16.mxu0 0
      %1468 = vmatpush1.bf16.msra.mxu0 0
      %1469 = vmatprep.subr.bf16.mxu0 0
      %1470 = vmatpush1.bf16.msra.mxu0 0
      %1471 = vmatprep.subr.bf16.mxu0 0
      %1472 = vmatpush1.bf16.msra.mxu0 0
      %1473 = vmatprep.subr.bf16.mxu0 0
      %1474 = vmatpush1.bf16.msra.mxu0 0
      %1475 = vmatprep.mubr.bf16.mxu0 0
      %1476 = vmatmul.mubr.bf16.gmra.mrb[0].mxu0 %v1387
      %v1477 = vpop.f32.mrb[0].mxu0
      %v1478 = vadd.f32 0.0, %v1477
      %v1479 = vpop.f32.mrb[0].mxu0
      %v1480 = vpop.f32.mrb[0].mxu0
      %v1481 = vadd.f32 0.0, %v1480
      %v1482 = vpop.f32.mrb[0].mxu0
      %1483 = vmatprep.mubr.bf16.mxu0 0
      %1484 = vmatmul.mubr.bf16.gmra.mrb[0].mxu0 %v1388
      %v1485 = vpop.f32.mrb[0].mxu0
      %v1486 = vadd.f32 0.0, %v1485
      %v1487 = vpop.f32.mrb[0].mxu0
      %v1488 = vpop.f32.mrb[0].mxu0
      %v1489 = vadd.f32 0.0, %v1488
      %v1490 = vpop.f32.mrb[0].mxu0
      %1491 = vmatprep.mubr.bf16.mxu0 0
      %1492 = vmatmul.mubr.bf16.gmra.mrb[0].mxu0 %v1389
      %v1493 = vpop.f32.mrb[0].mxu0
      %v1494 = vadd.f32 0.0, %v1493
      %v1495 = vpop.f32.mrb[0].mxu0
      %v1496 = vpop.f32.mrb[0].mxu0
      %v1497 = vadd.f32 0.0, %v1496
      %v1498 = vpop.f32.mrb[0].mxu0
      %1499 = vmatprep.mubr.bf16.mxu0 0
      %1500 = vmatmul.mubr.bf16.gmra.mrb[0].mxu0 %v1390
      %v1501 = vpop.f32.mrb[0].mxu0
      %v1502 = vadd.f32 0.0, %v1501
      %v1503 = vpop.f32.mrb[0].mxu0
      %v1504 = vpop.f32.mrb[0].mxu0
      %v1505 = vadd.f32 0.0, %v1504
      %v1506 = vpop.f32.mrb[0].mxu0
      %1507 = vdwg.mxu0
      %v1508 = vadd.f32 %v1347, %v1478
      %v1509 = vadd.f32 %v1348, %v1481
      %v1510 = vadd.f32 %v1349, %v1486
      %v1511 = vadd.f32 %v1350, %v1489
      %v1512 = vadd.f32 %v1351, %v1494
      %v1513 = vadd.f32 %v1352, %v1497
      %v1514 = vadd.f32 %v1353, %v1502
      %v1515 = vadd.f32 %v1354, %v1505
      %v1517 = vrot.slane %v584, 5
      %v1518 = vrot.slane %v1517, 4
      %v1519 = vrot.slane %v585, 5
      %v1520 = vsel %vm1020, %v1518, %v1519
      %s1521 = scalar_lea.vmem %s2, 320
      %v1522 = vld [vmem:[%s1521] sm:$0xf]
      %v1523 = vld [vmem:[%s1521 + $0x4] sm:$0xf]
      %v1524 = vld [vmem:[%s1521 + $0x8] sm:$0xf]
      %v1525 = vld [vmem:[%s1521 + $0xc] sm:$0xf]
      %v1526 = vld [vmem:[%s1521 + $0x10] sm:$0xf]
      %v1527 = vld [vmem:[%s1521 + $0x14] sm:$0xf]
      %v1528 = vld [vmem:[%s1521 + $0x18] sm:$0xf]
      %v1529 = vld [vmem:[%s1521 + $0x1c] sm:$0xf]
      %v1530 = vld [vmem:[%s1521 + $0x20] sm:$0xf]
      %v1531 = vld [vmem:[%s1521 + $0x24] sm:$0xf]
      %v1532 = vld [vmem:[%s1521 + $0x28] sm:$0xf]
      %v1533 = vld [vmem:[%s1521 + $0x2c] sm:$0xf]
      %v1534 = vld [vmem:[%s1521 + $0x30] sm:$0xf]
      %v1535 = vld [vmem:[%s1521 + $0x34] sm:$0xf]
      %v1536 = vld [vmem:[%s1521 + $0x38] sm:$0xf]
      %v1537 = vld [vmem:[%s1521 + $0x3c] sm:$0xf]
      %v1538 = vunpack.c.l.b16 %v1520
      %v1539 = vpack.c.b16 %v1072, %v1071
      %v1540 = vpack.c.b16 %v1074, %v1073
      %v1541 = vpack.c.b16 %v1076, %v1075
      %v1542 = vpack.c.b16 %v1538, %v1077
      %v1563 = vunpack.c.l.b16 %v1522
      %v1564 = vunpack.c.l.b16 %v1523
      %v1565 = vunpack.c.l.b16 %v1524
      %v1566 = vunpack.c.l.b16 %v1525
      %v1567 = vunpack.c.l.b16 %v1526
      %v1568 = vunpack.c.l.b16 %v1527
      %v1569 = vunpack.c.l.b16 %v1528
      %v1570 = vunpack.c.l.b16 %v1529
      %v1571 = vunpack.c.l.b16 %v1530
      %v1572 = vunpack.c.l.b16 %v1531
      %v1573 = vunpack.c.l.b16 %v1532
      %v1574 = vunpack.c.l.b16 %v1533
      %v1575 = vunpack.c.l.b16 %v1534
      %v1576 = vunpack.c.l.b16 %v1535
      %v1577 = vunpack.c.l.b16 %v1536
      %v1578 = vunpack.c.l.b16 %v1537
      %v1579 = vpack.c.b16 %v1564, %v1563
      %v1580 = vpack.c.b16 %v1566, %v1565
      %v1581 = vpack.c.b16 %v1568, %v1567
      %v1582 = vpack.c.b16 %v1570, %v1569
      %v1583 = vpack.c.b16 %v1572, %v1571
      %v1584 = vpack.c.b16 %v1574, %v1573
      %v1585 = vpack.c.b16 %v1576, %v1575
      %v1586 = vpack.c.b16 %v1578, %v1577
      %1595 = vmatprep.subr.bf16.mxu0 0
      %1596 = vmatpush1.bf16.msra.mxu0 %v1579
      %1597 = vmatprep.subr.bf16.mxu0 0
      %1598 = vmatpush1.bf16.msra.mxu0 %v1580
      %1599 = vmatprep.subr.bf16.mxu0 0
      %1600 = vmatpush1.bf16.msra.mxu0 %v1581
      %1601 = vmatprep.subr.bf16.mxu0 0
      %1602 = vmatpush1.bf16.msra.mxu0 %v1582
      %1603 = vmatprep.subr.bf16.mxu0 0
      %1604 = vmatpush1.bf16.msra.mxu0 %v1583
      %1605 = vmatprep.subr.bf16.mxu0 0
      %1606 = vmatpush1.bf16.msra.mxu0 %v1584
      %1607 = vmatprep.subr.bf16.mxu0 0
      %1608 = vmatpush1.bf16.msra.mxu0 %v1585
      %1609 = vmatprep.subr.bf16.mxu0 0
      %1610 = vmatpush1.bf16.msra.mxu0 %v1586
      %1611 = vmatprep.subr.bf16.mxu0 0
      %1612 = vmatpush1.bf16.msra.mxu0 0
      %1613 = vmatprep.subr.bf16.mxu0 0
      %1614 = vmatpush1.bf16.msra.mxu0 0
      %1615 = vmatprep.subr.bf16.mxu0 0
      %1616 = vmatpush1.bf16.msra.mxu0 0
      %1617 = vmatprep.subr.bf16.mxu0 0
      %1618 = vmatpush1.bf16.msra.mxu0 0
      %1619 = vmatprep.subr.bf16.mxu0 0
      %1620 = vmatpush1.bf16.msra.mxu0 0
      %1621 = vmatprep.subr.bf16.mxu0 0
      %1622 = vmatpush1.bf16.msra.mxu0 0
      %1623 = vmatprep.subr.bf16.mxu0 0
      %1624 = vmatpush1.bf16.msra.mxu0 0
      %1625 = vmatprep.subr.bf16.mxu0 0
      %1626 = vmatpush1.bf16.msra.mxu0 0
      %1627 = vmatprep.mubr.bf16.mxu0 0
      %1628 = vmatmul.mubr.bf16.gmra.mrb[0].mxu0 %v1539
      %v1629 = vpop.f32.mrb[0].mxu0
      %v1630 = vadd.f32 0.0, %v1629
      %v1631 = vpop.f32.mrb[0].mxu0
      %v1632 = vpop.f32.mrb[0].mxu0
      %v1633 = vadd.f32 0.0, %v1632
      %v1634 = vpop.f32.mrb[0].mxu0
      %1635 = vmatprep.mubr.bf16.mxu0 0
      %1636 = vmatmul.mubr.bf16.gmra.mrb[0].mxu0 %v1540
      %v1637 = vpop.f32.mrb[0].mxu0
      %v1638 = vadd.f32 0.0, %v1637
      %v1639 = vpop.f32.mrb[0].mxu0
      %v1640 = vpop.f32.mrb[0].mxu0
      %v1641 = vadd.f32 0.0, %v1640
      %v1642 = vpop.f32.mrb[0].mxu0
      %1643 = vmatprep.mubr.bf16.mxu0 0
      %1644 = vmatmul.mubr.bf16.gmra.mrb[0].mxu0 %v1541
      %v1645 = vpop.f32.mrb[0].mxu0
      %v1646 = vadd.f32 0.0, %v1645
      %v1647 = vpop.f32.mrb[0].mxu0
      %v1648 = vpop.f32.mrb[0].mxu0
      %v1649 = vadd.f32 0.0, %v1648
      %v1650 = vpop.f32.mrb[0].mxu0
      %1651 = vmatprep.mubr.bf16.mxu0 0
      %1652 = vmatmul.mubr.bf16.gmra.mrb[0].mxu0 %v1542
      %v1653 = vpop.f32.mrb[0].mxu0
      %v1654 = vadd.f32 0.0, %v1653
      %v1655 = vpop.f32.mrb[0].mxu0
      %v1656 = vpop.f32.mrb[0].mxu0
      %v1657 = vadd.f32 0.0, %v1656
      %v1658 = vpop.f32.mrb[0].mxu0
      %1659 = vdwg.mxu0
      %v1660 = vadd.f32 %v1508, %v1630
      %v1661 = vadd.f32 %v1509, %v1633
      %v1662 = vadd.f32 %v1510, %v1638
      %v1663 = vadd.f32 %v1511, %v1641
      %v1664 = vadd.f32 %v1512, %v1646
      %v1665 = vadd.f32 %v1513, %v1649
      %v1666 = vadd.f32 %v1514, %v1654
      %v1667 = vadd.f32 %v1515, %v1657
      %s1668 = scalar_lea.vmem %s2, 384
      %v1669 = vld [vmem:[%s1668] sm:$0xf]
      %v1670 = vld [vmem:[%s1668 + $0x4] sm:$0xf]
      %v1671 = vld [vmem:[%s1668 + $0x8] sm:$0xf]
      %v1672 = vld [vmem:[%s1668 + $0xc] sm:$0xf]
      %v1673 = vld [vmem:[%s1668 + $0x10] sm:$0xf]
      %v1674 = vld [vmem:[%s1668 + $0x14] sm:$0xf]
      %v1675 = vld [vmem:[%s1668 + $0x18] sm:$0xf]
      %v1676 = vld [vmem:[%s1668 + $0x1c] sm:$0xf]
      %v1677 = vld [vmem:[%s1668 + $0x20] sm:$0xf]
      %v1678 = vld [vmem:[%s1668 + $0x24] sm:$0xf]
      %v1679 = vld [vmem:[%s1668 + $0x28] sm:$0xf]
      %v1680 = vld [vmem:[%s1668 + $0x2c] sm:$0xf]
      %v1681 = vld [vmem:[%s1668 + $0x30] sm:$0xf]
      %v1682 = vld [vmem:[%s1668 + $0x34] sm:$0xf]
      %v1683 = vld [vmem:[%s1668 + $0x38] sm:$0xf]
      %v1684 = vld [vmem:[%s1668 + $0x3c] sm:$0xf]
      %v1686 = vunpack.c.l.b16 %v586
      %v1687 = vpack.c.b16 %v1686, %v1225
      %v1705 = vunpack.c.l.b16 %v1669
      %v1706 = vunpack.c.l.b16 %v1670
      %v1707 = vunpack.c.l.b16 %v1671
      %v1708 = vunpack.c.l.b16 %v1672
      %v1709 = vunpack.c.l.b16 %v1673
      %v1710 = vunpack.c.l.b16 %v1674
      %v1711 = vunpack.c.l.b16 %v1675
      %v1712 = vunpack.c.l.b16 %v1676
      %v1713 = vunpack.c.l.b16 %v1677
      %v1714 = vunpack.c.l.b16 %v1678
      %v1715 = vunpack.c.l.b16 %v1679
      %v1716 = vunpack.c.l.b16 %v1680
      %v1717 = vunpack.c.l.b16 %v1681
      %v1718 = vunpack.c.l.b16 %v1682
      %v1719 = vunpack.c.l.b16 %v1683
      %v1720 = vunpack.c.l.b16 %v1684
      %v1721 = vpack.c.b16 %v1706, %v1705
      %v1722 = vpack.c.b16 %v1708, %v1707
      %v1723 = vpack.c.b16 %v1710, %v1709
      %v1724 = vpack.c.b16 %v1712, %v1711
      %v1725 = vpack.c.b16 %v1714, %v1713
      %v1726 = vpack.c.b16 %v1716, %v1715
      %v1727 = vpack.c.b16 %v1718, %v1717
      %v1728 = vpack.c.b16 %v1720, %v1719
      %1737 = vmatprep.subr.bf16.mxu0 0
      %1738 = vmatpush1.bf16.msra.mxu0 %v1721
      %1739 = vmatprep.subr.bf16.mxu0 0
      %1740 = vmatpush1.bf16.msra.mxu0 %v1722
      %1741 = vmatprep.subr.bf16.mxu0 0
      %1742 = vmatpush1.bf16.msra.mxu0 %v1723
      %1743 = vmatprep.subr.bf16.mxu0 0
      %1744 = vmatpush1.bf16.msra.mxu0 %v1724
      %1745 = vmatprep.subr.bf16.mxu0 0
      %1746 = vmatpush1.bf16.msra.mxu0 %v1725
      %1747 = vmatprep.subr.bf16.mxu0 0
      %1748 = vmatpush1.bf16.msra.mxu0 %v1726
      %1749 = vmatprep.subr.bf16.mxu0 0
      %1750 = vmatpush1.bf16.msra.mxu0 %v1727
      %1751 = vmatprep.subr.bf16.mxu0 0
      %1752 = vmatpush1.bf16.msra.mxu0 %v1728
      %1753 = vmatprep.subr.bf16.mxu0 0
      %1754 = vmatpush1.bf16.msra.mxu0 0
      %1755 = vmatprep.subr.bf16.mxu0 0
      %1756 = vmatpush1.bf16.msra.mxu0 0
      %1757 = vmatprep.subr.bf16.mxu0 0
      %1758 = vmatpush1.bf16.msra.mxu0 0
      %1759 = vmatprep.subr.bf16.mxu0 0
      %1760 = vmatpush1.bf16.msra.mxu0 0
      %1761 = vmatprep.subr.bf16.mxu0 0
      %1762 = vmatpush1.bf16.msra.mxu0 0
      %1763 = vmatprep.subr.bf16.mxu0 0
      %1764 = vmatpush1.bf16.msra.mxu0 0
      %1765 = vmatprep.subr.bf16.mxu0 0
      %1766 = vmatpush1.bf16.msra.mxu0 0
      %1767 = vmatprep.subr.bf16.mxu0 0
      %1768 = vmatpush1.bf16.msra.mxu0 0
      %1769 = vmatprep.mubr.bf16.mxu0 0
      %1770 = vmatmul.mubr.bf16.gmra.mrb[0].mxu0 %v890
      %v1771 = vpop.f32.mrb[0].mxu0
      %v1772 = vadd.f32 0.0, %v1771
      %v1773 = vpop.f32.mrb[0].mxu0
      %v1774 = vpop.f32.mrb[0].mxu0
      %v1775 = vadd.f32 0.0, %v1774
      %v1776 = vpop.f32.mrb[0].mxu0
      %1777 = vmatprep.mubr.bf16.mxu0 0
      %1778 = vmatmul.mubr.bf16.gmra.mrb[0].mxu0 %v891
      %v1779 = vpop.f32.mrb[0].mxu0
      %v1780 = vadd.f32 0.0, %v1779
      %v1781 = vpop.f32.mrb[0].mxu0
      %v1782 = vpop.f32.mrb[0].mxu0
      %v1783 = vadd.f32 0.0, %v1782
      %v1784 = vpop.f32.mrb[0].mxu0
      %1785 = vmatprep.mubr.bf16.mxu0 0
      %1786 = vmatmul.mubr.bf16.gmra.mrb[0].mxu0 %v892
      %v1787 = vpop.f32.mrb[0].mxu0
      %v1788 = vadd.f32 0.0, %v1787
      %v1789 = vpop.f32.mrb[0].mxu0
      %v1790 = vpop.f32.mrb[0].mxu0
      %v1791 = vadd.f32 0.0, %v1790
      %v1792 = vpop.f32.mrb[0].mxu0
      %1793 = vmatprep.mubr.bf16.mxu0 0
      %1794 = vmatmul.mubr.bf16.gmra.mrb[0].mxu0 %v1687
      %v1795 = vpop.f32.mrb[0].mxu0
      %v1796 = vadd.f32 0.0, %v1795
      %v1797 = vpop.f32.mrb[0].mxu0
      %v1798 = vpop.f32.mrb[0].mxu0
      %v1799 = vadd.f32 0.0, %v1798
      %v1800 = vpop.f32.mrb[0].mxu0
      %1801 = vdwg.mxu0
      %v1802 = vadd.f32 %v1660, %v1772
      %v1803 = vadd.f32 %v1661, %v1775
      %v1804 = vadd.f32 %v1662, %v1780
      %v1805 = vadd.f32 %v1663, %v1783
      %v1806 = vadd.f32 %v1664, %v1788
      %v1807 = vadd.f32 %v1665, %v1791
      %v1808 = vadd.f32 %v1666, %v1796
      %v1809 = vadd.f32 %v1667, %v1799
      %v1811 = vshrl.u32 %v586, 16
      %v1813 = vrot.slane %v1811, 4
      %v1814 = vshll.u32 %v586, 16
      %v1816 = vrot.slane %v1814, 5
      %v1817 = vor.u32 %v1813, %v1816
      %v1818 = vrot.slane %v1817, 4
      %v1820 = vshll.u32 %v587, 16
      %v1822 = vrot.slane %v1820, 5
      %v1823 = vsel %vm614, %v1818, %v1822
      %s1824 = scalar_lea.vmem %s2, 448
      %v1825 = vld [vmem:[%s1824] sm:$0xf]
      %v1826 = vld [vmem:[%s1824 + $0x4] sm:$0xf]
      %v1827 = vld [vmem:[%s1824 + $0x8] sm:$0xf]
      %v1828 = vld [vmem:[%s1824 + $0xc] sm:$0xf]
      %v1829 = vld [vmem:[%s1824 + $0x10] sm:$0xf]
      %v1830 = vld [vmem:[%s1824 + $0x14] sm:$0xf]
      %v1831 = vld [vmem:[%s1824 + $0x18] sm:$0xf]
      %v1832 = vld [vmem:[%s1824 + $0x1c] sm:$0xf]
      %v1833 = vld [vmem:[%s1824 + $0x20] sm:$0xf]
      %v1834 = vld [vmem:[%s1824 + $0x24] sm:$0xf]
      %v1835 = vld [vmem:[%s1824 + $0x28] sm:$0xf]
      %v1836 = vld [vmem:[%s1824 + $0x2c] sm:$0xf]
      %v1837 = vld [vmem:[%s1824 + $0x30] sm:$0xf]
      %v1838 = vld [vmem:[%s1824 + $0x34] sm:$0xf]
      %v1839 = vld [vmem:[%s1824 + $0x38] sm:$0xf]
      %v1840 = vld [vmem:[%s1824 + $0x3c] sm:$0xf]
      %v1841 = vunpack.c.l.b16 %v1823
      %v1842 = vpack.c.b16 %v1841, %v1386
      %v1860 = vunpack.c.l.b16 %v1825
      %v1861 = vunpack.c.l.b16 %v1826
      %v1862 = vunpack.c.l.b16 %v1827
      %v1863 = vunpack.c.l.b16 %v1828
      %v1864 = vunpack.c.l.b16 %v1829
      %v1865 = vunpack.c.l.b16 %v1830
      %v1866 = vunpack.c.l.b16 %v1831
      %v1867 = vunpack.c.l.b16 %v1832
      %v1868 = vunpack.c.l.b16 %v1833
      %v1869 = vunpack.c.l.b16 %v1834
      %v1870 = vunpack.c.l.b16 %v1835
      %v1871 = vunpack.c.l.b16 %v1836
      %v1872 = vunpack.c.l.b16 %v1837
      %v1873 = vunpack.c.l.b16 %v1838
      %v1874 = vunpack.c.l.b16 %v1839
      %v1875 = vunpack.c.l.b16 %v1840
      %v1876 = vpack.c.b16 %v1861, %v1860
      %v1877 = vpack.c.b16 %v1863, %v1862
      %v1878 = vpack.c.b16 %v1865, %v1864
      %v1879 = vpack.c.b16 %v1867, %v1866
      %v1880 = vpack.c.b16 %v1869, %v1868
      %v1881 = vpack.c.b16 %v1871, %v1870
      %v1882 = vpack.c.b16 %v1873, %v1872
      %v1883 = vpack.c.b16 %v1875, %v1874
      %1892 = vmatprep.subr.bf16.mxu0 0
      %1893 = vmatpush1.bf16.msra.mxu0 %v1876
      %1894 = vmatprep.subr.bf16.mxu0 0
      %1895 = vmatpush1.bf16.msra.mxu0 %v1877
      %1896 = vmatprep.subr.bf16.mxu0 0
      %1897 = vmatpush1.bf16.msra.mxu0 %v1878
      %1898 = vmatprep.subr.bf16.mxu0 0
      %1899 = vmatpush1.bf16.msra.mxu0 %v1879
      %1900 = vmatprep.subr.bf16.mxu0 0
      %1901 = vmatpush1.bf16.msra.mxu0 %v1880
      %1902 = vmatprep.subr.bf16.mxu0 0
      %1903 = vmatpush1.bf16.msra.mxu0 %v1881
      %1904 = vmatprep.subr.bf16.mxu0 0
      %1905 = vmatpush1.bf16.msra.mxu0 %v1882
      %1906 = vmatprep.subr.bf16.mxu0 0
      %1907 = vmatpush1.bf16.msra.mxu0 %v1883
      %1908 = vmatprep.subr.bf16.mxu0 0
      %1909 = vmatpush1.bf16.msra.mxu0 0
      %1910 = vmatprep.subr.bf16.mxu0 0
      %1911 = vmatpush1.bf16.msra.mxu0 0
      %1912 = vmatprep.subr.bf16.mxu0 0
      %1913 = vmatpush1.bf16.msra.mxu0 0
      %1914 = vmatprep.subr.bf16.mxu0 0
      %1915 = vmatpush1.bf16.msra.mxu0 0
      %1916 = vmatprep.subr.bf16.mxu0 0
      %1917 = vmatpush1.bf16.msra.mxu0 0
      %1918 = vmatprep.subr.bf16.mxu0 0
      %1919 = vmatpush1.bf16.msra.mxu0 0
      %1920 = vmatprep.subr.bf16.mxu0 0
      %1921 = vmatpush1.bf16.msra.mxu0 0
      %1922 = vmatprep.subr.bf16.mxu0 0
      %1923 = vmatpush1.bf16.msra.mxu0 0
      %1924 = vmatprep.mubr.bf16.mxu0 0
      %1925 = vmatmul.mubr.bf16.gmra.mrb[0].mxu0 %v753
      %v1926 = vpop.f32.mrb[0].mxu0
      %v1927 = vadd.f32 0.0, %v1926
      %v1928 = vpop.f32.mrb[0].mxu0
      %v1929 = vpop.f32.mrb[0].mxu0
      %v1930 = vadd.f32 0.0, %v1929
      %v1931 = vpop.f32.mrb[0].mxu0
      %1932 = vmatprep.mubr.bf16.mxu0 0
      %1933 = vmatmul.mubr.bf16.gmra.mrb[0].mxu0 %v754
      %v1934 = vpop.f32.mrb[0].mxu0
      %v1935 = vadd.f32 0.0, %v1934
      %v1936 = vpop.f32.mrb[0].mxu0
      %v1937 = vpop.f32.mrb[0].mxu0
      %v1938 = vadd.f32 0.0, %v1937
      %v1939 = vpop.f32.mrb[0].mxu0
      %1940 = vmatprep.mubr.bf16.mxu0 0
      %1941 = vmatmul.mubr.bf16.gmra.mrb[0].mxu0 %v755
      %v1942 = vpop.f32.mrb[0].mxu0
      %v1943 = vadd.f32 0.0, %v1942
      %v1944 = vpop.f32.mrb[0].mxu0
      %v1945 = vpop.f32.mrb[0].mxu0
      %v1946 = vadd.f32 0.0, %v1945
      %v1947 = vpop.f32.mrb[0].mxu0
      %1948 = vmatprep.mubr.bf16.mxu0 0
      %1949 = vmatmul.mubr.bf16.gmra.mrb[0].mxu0 %v1842
      %v1950 = vpop.f32.mrb[0].mxu0
      %v1951 = vadd.f32 0.0, %v1950
      %v1952 = vpop.f32.mrb[0].mxu0
      %v1953 = vpop.f32.mrb[0].mxu0
      %v1954 = vadd.f32 0.0, %v1953
      %v1955 = vpop.f32.mrb[0].mxu0
      %1956 = vdwg.mxu0
      %v1957 = vadd.f32 %v1802, %v1927
      %v1958 = vadd.f32 %v1803, %v1930
      %v1959 = vadd.f32 %v1804, %v1935
      %v1960 = vadd.f32 %v1805, %v1938
      %v1961 = vadd.f32 %v1806, %v1943
      %v1962 = vadd.f32 %v1807, %v1946
      %v1963 = vadd.f32 %v1808, %v1951
      %v1964 = vadd.f32 %v1809, %v1954
      %v1966 = vrot.slane %v586, 5
      %v1967 = vrot.slane %v1966, 4
      %v1968 = vrot.slane %v587, 5
      %v1969 = vsel %vm1020, %v1967, %v1968
      %s1970 = scalar_lea.vmem %s2, 512
      %v1971 = vld [vmem:[%s1970] sm:$0xf]
      %v1972 = vld [vmem:[%s1970 + $0x4] sm:$0xf]
      %v1973 = vld [vmem:[%s1970 + $0x8] sm:$0xf]
      %v1974 = vld [vmem:[%s1970 + $0xc] sm:$0xf]
      %v1975 = vld [vmem:[%s1970 + $0x10] sm:$0xf]
      %v1976 = vld [vmem:[%s1970 + $0x14] sm:$0xf]
      %v1977 = vld [vmem:[%s1970 + $0x18] sm:$0xf]
      %v1978 = vld [vmem:[%s1970 + $0x1c] sm:$0xf]
      %v1979 = vld [vmem:[%s1970 + $0x20] sm:$0xf]
      %v1980 = vld [vmem:[%s1970 + $0x24] sm:$0xf]
      %v1981 = vld [vmem:[%s1970 + $0x28] sm:$0xf]
      %v1982 = vld [vmem:[%s1970 + $0x2c] sm:$0xf]
      %v1983 = vld [vmem:[%s1970 + $0x30] sm:$0xf]
      %v1984 = vld [vmem:[%s1970 + $0x34] sm:$0xf]
      %v1985 = vld [vmem:[%s1970 + $0x38] sm:$0xf]
      %v1986 = vld [vmem:[%s1970 + $0x3c] sm:$0xf]
      %v1987 = vunpack.c.l.b16 %v1969
      %v1988 = vpack.c.b16 %v1987, %v1538
      %v2006 = vunpack.c.l.b16 %v1971
      %v2007 = vunpack.c.l.b16 %v1972
      %v2008 = vunpack.c.l.b16 %v1973
      %v2009 = vunpack.c.l.b16 %v1974
      %v2010 = vunpack.c.l.b16 %v1975
      %v2011 = vunpack.c.l.b16 %v1976
      %v2012 = vunpack.c.l.b16 %v1977
      %v2013 = vunpack.c.l.b16 %v1978
      %v2014 = vunpack.c.l.b16 %v1979
      %v2015 = vunpack.c.l.b16 %v1980
      %v2016 = vunpack.c.l.b16 %v1981
      %v2017 = vunpack.c.l.b16 %v1982
      %v2018 = vunpack.c.l.b16 %v1983
      %v2019 = vunpack.c.l.b16 %v1984
      %v2020 = vunpack.c.l.b16 %v1985
      %v2021 = vunpack.c.l.b16 %v1986
      %v2022 = vpack.c.b16 %v2007, %v2006
      %v2023 = vpack.c.b16 %v2009, %v2008
      %v2024 = vpack.c.b16 %v2011, %v2010
      %v2025 = vpack.c.b16 %v2013, %v2012
      %v2026 = vpack.c.b16 %v2015, %v2014
      %v2027 = vpack.c.b16 %v2017, %v2016
      %v2028 = vpack.c.b16 %v2019, %v2018
      %v2029 = vpack.c.b16 %v2021, %v2020
      %2038 = vmatprep.subr.bf16.mxu0 0
      %2039 = vmatpush1.bf16.msra.mxu0 %v2022
      %2040 = vmatprep.subr.bf16.mxu0 0
      %2041 = vmatpush1.bf16.msra.mxu0 %v2023
      %2042 = vmatprep.subr.bf16.mxu0 0
      %2043 = vmatpush1.bf16.msra.mxu0 %v2024
      %2044 = vmatprep.subr.bf16.mxu0 0
      %2045 = vmatpush1.bf16.msra.mxu0 %v2025
      %2046 = vmatprep.subr.bf16.mxu0 0
      %2047 = vmatpush1.bf16.msra.mxu0 %v2026
      %2048 = vmatprep.subr.bf16.mxu0 0
      %2049 = vmatpush1.bf16.msra.mxu0 %v2027
      %2050 = vmatprep.subr.bf16.mxu0 0
      %2051 = vmatpush1.bf16.msra.mxu0 %v2028
      %2052 = vmatprep.subr.bf16.mxu0 0
      %2053 = vmatpush1.bf16.msra.mxu0 %v2029
      %2054 = vmatprep.subr.bf16.mxu0 0
      %2055 = vmatpush1.bf16.msra.mxu0 0
      %2056 = vmatprep.subr.bf16.mxu0 0
      %2057 = vmatpush1.bf16.msra.mxu0 0
      %2058 = vmatprep.subr.bf16.mxu0 0
      %2059 = vmatpush1.bf16.msra.mxu0 0
      %2060 = vmatprep.subr.bf16.mxu0 0
      %2061 = vmatpush1.bf16.msra.mxu0 0
      %2062 = vmatprep.subr.bf16.mxu0 0
      %2063 = vmatpush1.bf16.msra.mxu0 0
      %2064 = vmatprep.subr.bf16.mxu0 0
      %2065 = vmatpush1.bf16.msra.mxu0 0
      %2066 = vmatprep.subr.bf16.mxu0 0
      %2067 = vmatpush1.bf16.msra.mxu0 0
      %2068 = vmatprep.subr.bf16.mxu0 0
      %2069 = vmatpush1.bf16.msra.mxu0 0
      %2070 = vmatprep.mubr.bf16.mxu0 0
      %2071 = vmatmul.mubr.bf16.gmra.mrb[0].mxu0 %v1079
      %v2072 = vpop.f32.mrb[0].mxu0
      %v2073 = vadd.f32 0.0, %v2072
      %v2074 = vpop.f32.mrb[0].mxu0
      %v2075 = vpop.f32.mrb[0].mxu0
      %v2076 = vadd.f32 0.0, %v2075
      %v2077 = vpop.f32.mrb[0].mxu0
      %2078 = vmatprep.mubr.bf16.mxu0 0
      %2079 = vmatmul.mubr.bf16.gmra.mrb[0].mxu0 %v1080
      %v2080 = vpop.f32.mrb[0].mxu0
      %v2081 = vadd.f32 0.0, %v2080
      %v2082 = vpop.f32.mrb[0].mxu0
      %v2083 = vpop.f32.mrb[0].mxu0
      %v2084 = vadd.f32 0.0, %v2083
      %v2085 = vpop.f32.mrb[0].mxu0
      %2086 = vmatprep.mubr.bf16.mxu0 0
      %2087 = vmatmul.mubr.bf16.gmra.mrb[0].mxu0 %v1081
      %v2088 = vpop.f32.mrb[0].mxu0
      %v2089 = vadd.f32 0.0, %v2088
      %v2090 = vpop.f32.mrb[0].mxu0
      %v2091 = vpop.f32.mrb[0].mxu0
      %v2092 = vadd.f32 0.0, %v2091
      %v2093 = vpop.f32.mrb[0].mxu0
      %2094 = vmatprep.mubr.bf16.mxu0 0
      %2095 = vmatmul.mubr.bf16.gmra.mrb[0].mxu0 %v1988
      %v2096 = vpop.f32.mrb[0].mxu0
      %v2097 = vadd.f32 0.0, %v2096
      %v2098 = vpop.f32.mrb[0].mxu0
      %v2099 = vpop.f32.mrb[0].mxu0
      %v2100 = vadd.f32 0.0, %v2099
      %v2101 = vpop.f32.mrb[0].mxu0
      %2102 = vdwg.mxu0
      %v2103 = vadd.f32 %v1957, %v2073
      %v2104 = vadd.f32 %v1958, %v2076
      %v2105 = vadd.f32 %v1959, %v2081
      %v2106 = vadd.f32 %v1960, %v2084
      %v2107 = vadd.f32 %v1961, %v2089
      %v2108 = vadd.f32 %v1962, %v2092
      %v2109 = vadd.f32 %v1963, %v2097
      %v2110 = vadd.f32 %v1964, %v2100
      %v2111 = vld [vmem:[%s3] sm:$0x1]
      %v2113 = vlaneseq
      %v2114 = vshrl.u32 %v2113, 7
      %v2115 = vsub.s32 0, %v2114
      %v2116 = vrot.slane %v2111, %v2115
      %v2118 = vmul.f32 %v2103, %v2116
      %v2119 = vmul.f32 %v2104, %v2116
      %v2120 = vmul.f32 %v2105, %v2116
      %v2121 = vmul.f32 %v2106, %v2116
      %v2122 = vmul.f32 %v2107, %v2116
      %v2123 = vmul.f32 %v2108, %v2116
      %v2124 = vmul.f32 %v2109, %v2116
      %v2125 = vmul.f32 %v2110, %v2116
      %v2126 = vld [vmem:[%s4] sm:$0x1]
      %v2128 = vlaneseq
      %v2129 = vshrl.u32 %v2128, 7
      %v2130 = vsub.s32 0, %v2129
      %v2131 = vrot.slane %v2126, %v2130
      %v2133 = vadd.f32 %v2118, %v2131
      %v2134 = vadd.f32 %v2119, %v2131
      %v2135 = vadd.f32 %v2120, %v2131
      %v2136 = vadd.f32 %v2121, %v2131
      %v2137 = vadd.f32 %v2122, %v2131
      %v2138 = vadd.f32 %v2123, %v2131
      %v2139 = vadd.f32 %v2124, %v2131
      %v2140 = vadd.f32 %v2125, %v2131
      %v2141 = vmax.f32 %v2133, 0.0
      %v2142 = vmax.f32 %v2134, 0.0
      %v2143 = vmax.f32 %v2135, 0.0
      %v2144 = vmax.f32 %v2136, 0.0
      %v2145 = vmax.f32 %v2137, 0.0
      %v2146 = vmax.f32 %v2138, 0.0
      %v2147 = vmax.f32 %v2139, 0.0
      %v2148 = vmax.f32 %v2140, 0.0
      %v2149 = vpack.c.bf16 %v2142, %v2141
      %v2150 = vpack.c.bf16 %v2144, %v2143
      %v2151 = vpack.c.bf16 %v2146, %v2145
      %v2152 = vpack.c.bf16 %v2148, %v2147
      %v2153 = vld [vmem:[%s5] sm:$0xf]
      %v2154 = vld [vmem:[%s5 + $0x4] sm:$0xf]
      %v2155 = vld [vmem:[%s5 + $0x8] sm:$0xf]
      %v2156 = vld [vmem:[%s5 + $0xc] sm:$0xf]
      %v2157 = vld [vmem:[%s5 + $0x10] sm:$0xf]
      %v2158 = vld [vmem:[%s5 + $0x14] sm:$0xf]
      %v2159 = vld [vmem:[%s5 + $0x18] sm:$0xf]
      %v2160 = vld [vmem:[%s5 + $0x1c] sm:$0xf]
      %v2161 = vld [vmem:[%s5 + $0x20] sm:$0xf]
      %v2162 = vld [vmem:[%s5 + $0x24] sm:$0xf]
      %v2163 = vld [vmem:[%s5 + $0x28] sm:$0xf]
      %v2164 = vld [vmem:[%s5 + $0x2c] sm:$0xf]
      %v2165 = vld [vmem:[%s5 + $0x30] sm:$0xf]
      %v2166 = vld [vmem:[%s5 + $0x34] sm:$0xf]
      %v2167 = vld [vmem:[%s5 + $0x38] sm:$0xf]
      %v2168 = vld [vmem:[%s5 + $0x3c] sm:$0xf]
      %v2185 = vunpack.c.l.b16 %v2153
      %v2186 = vunpack.c.l.b16 %v2154
      %v2187 = vunpack.c.l.b16 %v2155
      %v2188 = vunpack.c.l.b16 %v2156
      %v2189 = vunpack.c.l.b16 %v2157
      %v2190 = vunpack.c.l.b16 %v2158
      %v2191 = vunpack.c.l.b16 %v2159
      %v2192 = vunpack.c.l.b16 %v2160
      %v2193 = vunpack.c.l.b16 %v2161
      %v2194 = vunpack.c.l.b16 %v2162
      %v2195 = vunpack.c.l.b16 %v2163
      %v2196 = vunpack.c.l.b16 %v2164
      %v2197 = vunpack.c.l.b16 %v2165
      %v2198 = vunpack.c.l.b16 %v2166
      %v2199 = vunpack.c.l.b16 %v2167
      %v2200 = vunpack.c.l.b16 %v2168
      %v2201 = vpack.c.b16 %v2186, %v2185
      %v2202 = vpack.c.b16 %v2188, %v2187
      %v2203 = vpack.c.b16 %v2190, %v2189
      %v2204 = vpack.c.b16 %v2192, %v2191
      %v2205 = vpack.c.b16 %v2194, %v2193
      %v2206 = vpack.c.b16 %v2196, %v2195
      %v2207 = vpack.c.b16 %v2198, %v2197
      %v2208 = vpack.c.b16 %v2200, %v2199
      %2217 = vmatprep.subr.bf16.mxu0 0
      %2218 = vmatpush1.bf16.msra.mxu0 %v2201
      %2219 = vmatprep.subr.bf16.mxu0 0
      %2220 = vmatpush1.bf16.msra.mxu0 %v2202
      %2221 = vmatprep.subr.bf16.mxu0 0
      %2222 = vmatpush1.bf16.msra.mxu0 %v2203
      %2223 = vmatprep.subr.bf16.mxu0 0
      %2224 = vmatpush1.bf16.msra.mxu0 %v2204
      %2225 = vmatprep.subr.bf16.mxu0 0
      %2226 = vmatpush1.bf16.msra.mxu0 %v2205
      %2227 = vmatprep.subr.bf16.mxu0 0
      %2228 = vmatpush1.bf16.msra.mxu0 %v2206
      %2229 = vmatprep.subr.bf16.mxu0 0
      %2230 = vmatpush1.bf16.msra.mxu0 %v2207
      %2231 = vmatprep.subr.bf16.mxu0 0
      %2232 = vmatpush1.bf16.msra.mxu0 %v2208
      %2233 = vmatprep.subr.bf16.mxu0 0
      %2234 = vmatpush1.bf16.msra.mxu0 0
      %2235 = vmatprep.subr.bf16.mxu0 0
      %2236 = vmatpush1.bf16.msra.mxu0 0
      %2237 = vmatprep.subr.bf16.mxu0 0
      %2238 = vmatpush1.bf16.msra.mxu0 0
      %2239 = vmatprep.subr.bf16.mxu0 0
      %2240 = vmatpush1.bf16.msra.mxu0 0
      %2241 = vmatprep.subr.bf16.mxu0 0
      %2242 = vmatpush1.bf16.msra.mxu0 0
      %2243 = vmatprep.subr.bf16.mxu0 0
      %2244 = vmatpush1.bf16.msra.mxu0 0
      %2245 = vmatprep.subr.bf16.mxu0 0
      %2246 = vmatpush1.bf16.msra.mxu0 0
      %2247 = vmatprep.subr.bf16.mxu0 0
      %2248 = vmatpush1.bf16.msra.mxu0 0
      %2249 = vmatprep.mubr.bf16.mxu0 0
      %2250 = vmatmul.mubr.bf16.gmra.mrb[0].mxu0 %v2149
      %v2251 = vpop.f32.mrb[0].mxu0
      %v2252 = vadd.f32 0.0, %v2251
      %v2253 = vpop.f32.mrb[0].mxu0
      %v2254 = vpop.f32.mrb[0].mxu0
      %v2255 = vadd.f32 0.0, %v2254
      %v2256 = vpop.f32.mrb[0].mxu0
      %2257 = vmatprep.mubr.bf16.mxu0 0
      %2258 = vmatmul.mubr.bf16.gmra.mrb[0].mxu0 %v2150
      %v2259 = vpop.f32.mrb[0].mxu0
      %v2260 = vadd.f32 0.0, %v2259
      %v2261 = vpop.f32.mrb[0].mxu0
      %v2262 = vpop.f32.mrb[0].mxu0
      %v2263 = vadd.f32 0.0, %v2262
      %v2264 = vpop.f32.mrb[0].mxu0
      %2265 = vmatprep.mubr.bf16.mxu0 0
      %2266 = vmatmul.mubr.bf16.gmra.mrb[0].mxu0 %v2151
      %v2267 = vpop.f32.mrb[0].mxu0
      %v2268 = vadd.f32 0.0, %v2267
      %v2269 = vpop.f32.mrb[0].mxu0
      %v2270 = vpop.f32.mrb[0].mxu0
      %v2271 = vadd.f32 0.0, %v2270
      %v2272 = vpop.f32.mrb[0].mxu0
      %2273 = vmatprep.mubr.bf16.mxu0 0
      %2274 = vmatmul.mubr.bf16.gmra.mrb[0].mxu0 %v2152
      %v2275 = vpop.f32.mrb[0].mxu0
      %v2276 = vadd.f32 0.0, %v2275
      %v2277 = vpop.f32.mrb[0].mxu0
      %v2278 = vpop.f32.mrb[0].mxu0
      %v2279 = vadd.f32 0.0, %v2278
      %v2280 = vpop.f32.mrb[0].mxu0
      %2281 = vdwg.mxu0
      %v2282 = vld [vmem:[%s6] sm:$0x1]
      %v2284 = vlaneseq
      %v2285 = vshrl.u32 %v2284, 7
      %v2286 = vsub.s32 0, %v2285
      %v2287 = vrot.slane %v2282, %v2286
      %v2289 = vmul.f32 %v2252, %v2287
      %v2290 = vmul.f32 %v2255, %v2287
      %v2291 = vmul.f32 %v2260, %v2287
      %v2292 = vmul.f32 %v2263, %v2287
      %v2293 = vmul.f32 %v2268, %v2287
      %v2294 = vmul.f32 %v2271, %v2287
      %v2295 = vmul.f32 %v2276, %v2287
      %v2296 = vmul.f32 %v2279, %v2287
      %v2297 = vld [vmem:[%s7] sm:$0x1]
      %v2299 = vlaneseq
      %v2300 = vshrl.u32 %v2299, 7
      %v2301 = vsub.s32 0, %v2300
      %v2302 = vrot.slane %v2297, %v2301
      %v2304 = vadd.f32 %v2289, %v2302
      %v2305 = vadd.f32 %v2290, %v2302
      %v2306 = vadd.f32 %v2291, %v2302
      %v2307 = vadd.f32 %v2292, %v2302
      %v2308 = vadd.f32 %v2293, %v2302
      %v2309 = vadd.f32 %v2294, %v2302
      %v2310 = vadd.f32 %v2295, %v2302
      %v2311 = vadd.f32 %v2296, %v2302
      %v2312 = vadd.f32 %v2304, %v2305
      %v2313 = vadd.f32 %v2312, %v2306
      %v2314 = vadd.f32 %v2313, %v2307
      %v2315 = vadd.f32 %v2314, %v2308
      %v2316 = vadd.f32 %v2315, %v2309
      %v2317 = vadd.f32 %v2316, %v2310
      %v2318 = vadd.f32 %v2317, %v2311
      %v2319 = vrot.slane %v2318, 4
      %v2320 = vadd.f32 %v2318, %v2319
      %v2321 = vrot.slane %v2320, 2
      %v2322 = vadd.f32 %v2320, %v2321
      %v2323 = vrot.slane %v2322, 1
      %v2324 = vadd.f32 %v2322, %v2323
      %v2325 = vrcp.pop 64.0
      %v2326 = vmul.f32 %v2324, %v2325
      %v2327 = vpack.c.bf16 %v2326, %v2326
      %v2328 = vld [vmem:[%s8] sm:$0xf]
      %v2329 = vld [vmem:[%s8 + $0x4] sm:$0xf]
      %v2330 = vld [vmem:[%s8 + $0x8] sm:$0xf]
      %v2331 = vld [vmem:[%s8 + $0xc] sm:$0xf]
      %v2332 = vld [vmem:[%s8 + $0x10] sm:$0xf]
      %v2333 = vld [vmem:[%s8 + $0x14] sm:$0xf]
      %v2334 = vld [vmem:[%s8 + $0x18] sm:$0xf]
      %v2335 = vld [vmem:[%s8 + $0x1c] sm:$0xf]
      %v2336 = vld [vmem:[%s8 + $0x20] sm:$0xf]
      %v2337 = vld [vmem:[%s8 + $0x24] sm:$0xf]
      %v2338 = vld [vmem:[%s8 + $0x28] sm:$0xf]
      %v2339 = vld [vmem:[%s8 + $0x2c] sm:$0xf]
      %v2340 = vld [vmem:[%s8 + $0x30] sm:$0xf]
      %v2341 = vld [vmem:[%s8 + $0x34] sm:$0xf]
      %v2342 = vld [vmem:[%s8 + $0x38] sm:$0xf]
      %v2343 = vld [vmem:[%s8 + $0x3c] sm:$0xf]
      %v2344 = vld [vmem:[%s9] sm:$0x1]
      %v2361 = vunpack.c.l.b16 %v2328
      %v2362 = vunpack.c.l.b16 %v2329
      %v2363 = vunpack.c.l.b16 %v2330
      %v2364 = vunpack.c.l.b16 %v2331
      %v2365 = vunpack.c.l.b16 %v2332
      %v2366 = vunpack.c.l.b16 %v2333
      %v2367 = vunpack.c.l.b16 %v2334
      %v2368 = vunpack.c.l.b16 %v2335
      %v2369 = vunpack.c.l.b16 %v2336
      %v2370 = vunpack.c.l.b16 %v2337
      %v2371 = vunpack.c.l.b16 %v2338
      %v2372 = vunpack.c.l.b16 %v2339
      %v2373 = vunpack.c.l.b16 %v2340
      %v2374 = vunpack.c.l.b16 %v2341
      %v2375 = vunpack.c.l.b16 %v2342
      %v2376 = vunpack.c.l.b16 %v2343
      %v2377 = vpack.c.b16 %v2362, %v2361
      %v2378 = vpack.c.b16 %v2364, %v2363
      %v2379 = vpack.c.b16 %v2366, %v2365
      %v2380 = vpack.c.b16 %v2368, %v2367
      %v2381 = vpack.c.b16 %v2370, %v2369
      %v2382 = vpack.c.b16 %v2372, %v2371
      %v2383 = vpack.c.b16 %v2374, %v2373
      %v2384 = vpack.c.b16 %v2376, %v2375
      %2393 = vmatprep.subr.bf16.mxu0 0
      %2394 = vmatpush1.bf16.msra.mxu0 %v2377
      %2395 = vmatprep.subr.bf16.mxu0 0
      %2396 = vmatpush1.bf16.msra.mxu0 %v2378
      %2397 = vmatprep.subr.bf16.mxu0 0
      %2398 = vmatpush1.bf16.msra.mxu0 %v2379
      %2399 = vmatprep.subr.bf16.mxu0 0
      %2400 = vmatpush1.bf16.msra.mxu0 %v2380
      %2401 = vmatprep.subr.bf16.mxu0 0
      %2402 = vmatpush1.bf16.msra.mxu0 %v2381
      %2403 = vmatprep.subr.bf16.mxu0 0
      %2404 = vmatpush1.bf16.msra.mxu0 %v2382
      %2405 = vmatprep.subr.bf16.mxu0 0
      %2406 = vmatpush1.bf16.msra.mxu0 %v2383
      %2407 = vmatprep.subr.bf16.mxu0 0
      %2408 = vmatpush1.bf16.msra.mxu0 %v2384
      %2409 = vmatprep.subr.bf16.mxu0 0
      %2410 = vmatpush1.bf16.msra.mxu0 0
      %2411 = vmatprep.subr.bf16.mxu0 0
      %2412 = vmatpush1.bf16.msra.mxu0 0
      %2413 = vmatprep.subr.bf16.mxu0 0
      %2414 = vmatpush1.bf16.msra.mxu0 0
      %2415 = vmatprep.subr.bf16.mxu0 0
      %2416 = vmatpush1.bf16.msra.mxu0 0
      %2417 = vmatprep.subr.bf16.mxu0 0
      %2418 = vmatpush1.bf16.msra.mxu0 0
      %2419 = vmatprep.subr.bf16.mxu0 0
      %2420 = vmatpush1.bf16.msra.mxu0 0
      %2421 = vmatprep.subr.bf16.mxu0 0
      %2422 = vmatpush1.bf16.msra.mxu0 0
      %2423 = vmatprep.subr.bf16.mxu0 0
      %2424 = vmatpush1.bf16.msra.mxu0 0
      %2425 = vmatprep.mubr.bf16.mxu0 0
      %2426 = vmatmul.mubr.bf16.gmra.mrb[0].mxu0 %v2327
      %v2427 = vpop.f32.mrb[0].mxu0
      %v2428 = vadd.f32 %v2344, %v2427
      %v2429 = vpop.f32.mrb[0].mxu0
      %v2430 = vpop.f32.mrb[0].mxu0
      %v2431 = vpop.f32.mrb[0].mxu0
      %2432 = vdwg.mxu0
      %v2433 = vmax.f32 %v2428, 0.0
      %v2434 = vpack.c.bf16 %v2433, %v2433
      %v2435 = vld [vmem:[%s10] sm:$0xf]
      %v2436 = vld [vmem:[%s10 + $0x4] sm:$0xf]
      %v2437 = vld [vmem:[%s10 + $0x8] sm:$0xf]
      %v2438 = vld [vmem:[%s10 + $0xc] sm:$0xf]
      %v2439 = vld [vmem:[%s10 + $0x10] sm:$0xf]
      %v2440 = vld [vmem:[%s10 + $0x14] sm:$0xf]
      %v2441 = vld [vmem:[%s10 + $0x18] sm:$0xf]
      %v2442 = vld [vmem:[%s10 + $0x1c] sm:$0xf]
      %v2443 = vld [vmem:[%s10 + $0x20] sm:$0xf]
      %v2444 = vld [vmem:[%s10 + $0x24] sm:$0xf]
      %v2445 = vld [vmem:[%s10 + $0x28] sm:$0xf]
      %v2446 = vld [vmem:[%s10 + $0x2c] sm:$0xf]
      %v2447 = vld [vmem:[%s10 + $0x30] sm:$0xf]
      %v2448 = vld [vmem:[%s10 + $0x34] sm:$0xf]
      %v2449 = vld [vmem:[%s10 + $0x38] sm:$0xf]
      %v2450 = vld [vmem:[%s10 + $0x3c] sm:$0xf]
      %v2451 = vld [vmem:[%s11] sm:$0x1]
      %v2468 = vunpack.c.l.b16 %v2435
      %v2469 = vunpack.c.l.b16 %v2436
      %v2470 = vunpack.c.l.b16 %v2437
      %v2471 = vunpack.c.l.b16 %v2438
      %v2472 = vunpack.c.l.b16 %v2439
      %v2473 = vunpack.c.l.b16 %v2440
      %v2474 = vunpack.c.l.b16 %v2441
      %v2475 = vunpack.c.l.b16 %v2442
      %v2476 = vunpack.c.l.b16 %v2443
      %v2477 = vunpack.c.l.b16 %v2444
      %v2478 = vunpack.c.l.b16 %v2445
      %v2479 = vunpack.c.l.b16 %v2446
      %v2480 = vunpack.c.l.b16 %v2447
      %v2481 = vunpack.c.l.b16 %v2448
      %v2482 = vunpack.c.l.b16 %v2449
      %v2483 = vunpack.c.l.b16 %v2450
      %v2484 = vpack.c.b16 %v2469, %v2468
      %v2485 = vpack.c.b16 %v2471, %v2470
      %v2486 = vpack.c.b16 %v2473, %v2472
      %v2487 = vpack.c.b16 %v2475, %v2474
      %v2488 = vpack.c.b16 %v2477, %v2476
      %v2489 = vpack.c.b16 %v2479, %v2478
      %v2490 = vpack.c.b16 %v2481, %v2480
      %v2491 = vpack.c.b16 %v2483, %v2482
      %2500 = vmatprep.subr.bf16.mxu0 0
      %2501 = vmatpush1.bf16.msra.mxu0 %v2484
      %2502 = vmatprep.subr.bf16.mxu0 0
      %2503 = vmatpush1.bf16.msra.mxu0 %v2485
      %2504 = vmatprep.subr.bf16.mxu0 0
      %2505 = vmatpush1.bf16.msra.mxu0 %v2486
      %2506 = vmatprep.subr.bf16.mxu0 0
      %2507 = vmatpush1.bf16.msra.mxu0 %v2487
      %2508 = vmatprep.subr.bf16.mxu0 0
      %2509 = vmatpush1.bf16.msra.mxu0 %v2488
      %2510 = vmatprep.subr.bf16.mxu0 0
      %2511 = vmatpush1.bf16.msra.mxu0 %v2489
      %2512 = vmatprep.subr.bf16.mxu0 0
      %2513 = vmatpush1.bf16.msra.mxu0 %v2490
      %2514 = vmatprep.subr.bf16.mxu0 0
      %2515 = vmatpush1.bf16.msra.mxu0 %v2491
      %2516 = vmatprep.subr.bf16.mxu0 0
      %2517 = vmatpush1.bf16.msra.mxu0 0
      %2518 = vmatprep.subr.bf16.mxu0 0
      %2519 = vmatpush1.bf16.msra.mxu0 0
      %2520 = vmatprep.subr.bf16.mxu0 0
      %2521 = vmatpush1.bf16.msra.mxu0 0
      %2522 = vmatprep.subr.bf16.mxu0 0
      %2523 = vmatpush1.bf16.msra.mxu0 0
      %2524 = vmatprep.subr.bf16.mxu0 0
      %2525 = vmatpush1.bf16.msra.mxu0 0
      %2526 = vmatprep.subr.bf16.mxu0 0
      %2527 = vmatpush1.bf16.msra.mxu0 0
      %2528 = vmatprep.subr.bf16.mxu0 0
      %2529 = vmatpush1.bf16.msra.mxu0 0
      %2530 = vmatprep.subr.bf16.mxu0 0
      %2531 = vmatpush1.bf16.msra.mxu0 0
      %2532 = vmatprep.mubr.bf16.mxu0 0
      %2533 = vmatmul.mubr.bf16.gmra.mrb[0].mxu0 %v2434
      %v2534 = vpop.f32.mrb[0].mxu0
      %v2535 = vadd.f32 %v2451, %v2534
      %v2536 = vpop.f32.mrb[0].mxu0
      %v2537 = vpop.f32.mrb[0].mxu0
      %v2538 = vpop.f32.mrb[0].mxu0
      %2539 = vdwg.mxu0
      %v2540 = vxor.u32 %v2535, 2147483648
      %v2541 = vmul.f32 %v2540, 1.442695
      %v2542 = vpow.pop %v2541
      %v2543 = vadd.f32 %v2542, 1.0
      %v2544 = vrcp.pop %v2543
      %v2545 = vmul.f32 1.0, %v2544
      %v2546 = vlaneseq
      %v2547 = vshrl.u32 %v2546, 7
      %v2548 = vsub.s32 0, %v2547
      %v2549 = vrot.slane %v2545, %v2548
      %v2550 = vmul.f32 %v2304, %v2549
      %v2551 = vmul.f32 %v2305, %v2549
      %v2552 = vmul.f32 %v2306, %v2549
      %v2553 = vmul.f32 %v2307, %v2549
      %v2554 = vmul.f32 %v2308, %v2549
      %v2555 = vmul.f32 %v2309, %v2549
      %v2556 = vmul.f32 %v2310, %v2549
      %v2557 = vmul.f32 %v2311, %v2549
      %v2558 = vld [vmem:[%s12] sm:$0xf]
      %v2559 = vld [vmem:[%s12 + $0x4] sm:$0xf]
      %v2560 = vld [vmem:[%s12 + $0x8] sm:$0xf]
      %v2561 = vld [vmem:[%s12 + $0xc] sm:$0xf]
      %v2562 = vld [vmem:[%s12 + $0x10] sm:$0xf]
      %v2563 = vld [vmem:[%s12 + $0x14] sm:$0xf]
      %v2564 = vld [vmem:[%s12 + $0x18] sm:$0xf]
      %v2565 = vld [vmem:[%s12 + $0x1c] sm:$0xf]
      %v2566 = vld [vmem:[%s12 + $0x20] sm:$0xf]
      %v2567 = vld [vmem:[%s12 + $0x24] sm:$0xf]
      %v2568 = vld [vmem:[%s12 + $0x28] sm:$0xf]
      %v2569 = vld [vmem:[%s12 + $0x2c] sm:$0xf]
      %v2570 = vld [vmem:[%s12 + $0x30] sm:$0xf]
      %v2571 = vld [vmem:[%s12 + $0x34] sm:$0xf]
      %v2572 = vld [vmem:[%s12 + $0x38] sm:$0xf]
      %v2573 = vld [vmem:[%s12 + $0x3c] sm:$0xf]
      %v2582 = vunpack.c.l.b16 %v588
      %v2583 = vunpack.c.l.b16 %v589
      %v2584 = vunpack.c.l.b16 %v590
      %v2585 = vunpack.c.l.b16 %v591
      %v2586 = vunpack.c.l.b16 %v592
      %v2587 = vunpack.c.l.b16 %v593
      %v2588 = vunpack.c.l.b16 %v594
      %v2589 = vunpack.c.l.b16 %v595
      %v2590 = vpack.c.b16 %v2583, %v2582
      %v2591 = vpack.c.b16 %v2585, %v2584
      %v2592 = vpack.c.b16 %v2587, %v2586
      %v2593 = vpack.c.b16 %v2589, %v2588
      %v2614 = vunpack.c.l.b16 %v2558
      %v2615 = vunpack.c.l.b16 %v2559
      %v2616 = vunpack.c.l.b16 %v2560
      %v2617 = vunpack.c.l.b16 %v2561
      %v2618 = vunpack.c.l.b16 %v2562
      %v2619 = vunpack.c.l.b16 %v2563
      %v2620 = vunpack.c.l.b16 %v2564
      %v2621 = vunpack.c.l.b16 %v2565
      %v2622 = vunpack.c.l.b16 %v2566
      %v2623 = vunpack.c.l.b16 %v2567
      %v2624 = vunpack.c.l.b16 %v2568
      %v2625 = vunpack.c.l.b16 %v2569
      %v2626 = vunpack.c.l.b16 %v2570
      %v2627 = vunpack.c.l.b16 %v2571
      %v2628 = vunpack.c.l.b16 %v2572
      %v2629 = vunpack.c.l.b16 %v2573
      %v2630 = vpack.c.b16 %v2615, %v2614
      %v2631 = vpack.c.b16 %v2617, %v2616
      %v2632 = vpack.c.b16 %v2619, %v2618
      %v2633 = vpack.c.b16 %v2621, %v2620
      %v2634 = vpack.c.b16 %v2623, %v2622
      %v2635 = vpack.c.b16 %v2625, %v2624
      %v2636 = vpack.c.b16 %v2627, %v2626
      %v2637 = vpack.c.b16 %v2629, %v2628
      %2646 = vmatprep.subr.bf16.mxu0 0
      %2647 = vmatpush1.bf16.msra.mxu0 %v2630
      %2648 = vmatprep.subr.bf16.mxu0 0
      %2649 = vmatpush1.bf16.msra.mxu0 %v2631
      %2650 = vmatprep.subr.bf16.mxu0 0
      %2651 = vmatpush1.bf16.msra.mxu0 %v2632
      %2652 = vmatprep.subr.bf16.mxu0 0
      %2653 = vmatpush1.bf16.msra.mxu0 %v2633
      %2654 = vmatprep.subr.bf16.mxu0 0
      %2655 = vmatpush1.bf16.msra.mxu0 %v2634
      %2656 = vmatprep.subr.bf16.mxu0 0
      %2657 = vmatpush1.bf16.msra.mxu0 %v2635
      %2658 = vmatprep.subr.bf16.mxu0 0
      %2659 = vmatpush1.bf16.msra.mxu0 %v2636
      %2660 = vmatprep.subr.bf16.mxu0 0
      %2661 = vmatpush1.bf16.msra.mxu0 %v2637
      %2662 = vmatprep.subr.bf16.mxu0 0
      %2663 = vmatpush1.bf16.msra.mxu0 0
      %2664 = vmatprep.subr.bf16.mxu0 0
      %2665 = vmatpush1.bf16.msra.mxu0 0
      %2666 = vmatprep.subr.bf16.mxu0 0
      %2667 = vmatpush1.bf16.msra.mxu0 0
      %2668 = vmatprep.subr.bf16.mxu0 0
      %2669 = vmatpush1.bf16.msra.mxu0 0
      %2670 = vmatprep.subr.bf16.mxu0 0
      %2671 = vmatpush1.bf16.msra.mxu0 0
      %2672 = vmatprep.subr.bf16.mxu0 0
      %2673 = vmatpush1.bf16.msra.mxu0 0
      %2674 = vmatprep.subr.bf16.mxu0 0
      %2675 = vmatpush1.bf16.msra.mxu0 0
      %2676 = vmatprep.subr.bf16.mxu0 0
      %2677 = vmatpush1.bf16.msra.mxu0 0
      %2678 = vmatprep.mubr.bf16.mxu0 0
      %2679 = vmatmul.mubr.bf16.gmra.mrb[0].mxu0 %v2590
      %v2680 = vpop.f32.mrb[0].mxu0
      %v2681 = vadd.f32 0.0, %v2680
      %v2682 = vpop.f32.mrb[0].mxu0
      %v2683 = vpop.f32.mrb[0].mxu0
      %v2684 = vadd.f32 0.0, %v2683
      %v2685 = vpop.f32.mrb[0].mxu0
      %2686 = vmatprep.mubr.bf16.mxu0 0
      %2687 = vmatmul.mubr.bf16.gmra.mrb[0].mxu0 %v2591
      %v2688 = vpop.f32.mrb[0].mxu0
      %v2689 = vadd.f32 0.0, %v2688
      %v2690 = vpop.f32.mrb[0].mxu0
      %v2691 = vpop.f32.mrb[0].mxu0
      %v2692 = vadd.f32 0.0, %v2691
      %v2693 = vpop.f32.mrb[0].mxu0
      %2694 = vmatprep.mubr.bf16.mxu0 0
      %2695 = vmatmul.mubr.bf16.gmra.mrb[0].mxu0 %v2592
      %v2696 = vpop.f32.mrb[0].mxu0
      %v2697 = vadd.f32 0.0, %v2696
      %v2698 = vpop.f32.mrb[0].mxu0
      %v2699 = vpop.f32.mrb[0].mxu0
      %v2700 = vadd.f32 0.0, %v2699
      %v2701 = vpop.f32.mrb[0].mxu0
      %2702 = vmatprep.mubr.bf16.mxu0 0
      %2703 = vmatmul.mubr.bf16.gmra.mrb[0].mxu0 %v2593
      %v2704 = vpop.f32.mrb[0].mxu0
      %v2705 = vadd.f32 0.0, %v2704
      %v2706 = vpop.f32.mrb[0].mxu0
      %v2707 = vpop.f32.mrb[0].mxu0
      %v2708 = vadd.f32 0.0, %v2707
      %v2709 = vpop.f32.mrb[0].mxu0
      %2710 = vdwg.mxu0
      %v2711 = vld [vmem:[%s13] sm:$0x1]
      %v2713 = vlaneseq
      %v2714 = vshrl.u32 %v2713, 7
      %v2715 = vsub.s32 0, %v2714
      %v2716 = vrot.slane %v2711, %v2715
      %v2718 = vmul.f32 %v2681, %v2716
      %v2719 = vmul.f32 %v2684, %v2716
      %v2720 = vmul.f32 %v2689, %v2716
      %v2721 = vmul.f32 %v2692, %v2716
      %v2722 = vmul.f32 %v2697, %v2716
      %v2723 = vmul.f32 %v2700, %v2716
      %v2724 = vmul.f32 %v2705, %v2716
      %v2725 = vmul.f32 %v2708, %v2716
      %v2726 = vld [vmem:[%s14] sm:$0x1]
      %v2728 = vlaneseq
      %v2729 = vshrl.u32 %v2728, 7
      %v2730 = vsub.s32 0, %v2729
      %v2731 = vrot.slane %v2726, %v2730
      %v2733 = vadd.f32 %v2718, %v2731
      %v2734 = vadd.f32 %v2719, %v2731
      %v2735 = vadd.f32 %v2720, %v2731
      %v2736 = vadd.f32 %v2721, %v2731
      %v2737 = vadd.f32 %v2722, %v2731
      %v2738 = vadd.f32 %v2723, %v2731
      %v2739 = vadd.f32 %v2724, %v2731
      %v2740 = vadd.f32 %v2725, %v2731
      %v2741 = vadd.f32 %v2550, %v2733
      %v2742 = vadd.f32 %v2551, %v2734
      %v2743 = vadd.f32 %v2552, %v2735
      %v2744 = vadd.f32 %v2553, %v2736
      %v2745 = vadd.f32 %v2554, %v2737
      %v2746 = vadd.f32 %v2555, %v2738
      %v2747 = vadd.f32 %v2556, %v2739
      %v2748 = vadd.f32 %v2557, %v2740
      %v2749 = vmax.f32 %v2741, 0.0
      %v2750 = vmax.f32 %v2742, 0.0
      %v2751 = vmax.f32 %v2743, 0.0
      %v2752 = vmax.f32 %v2744, 0.0
      %v2753 = vmax.f32 %v2745, 0.0
      %v2754 = vmax.f32 %v2746, 0.0
      %v2755 = vmax.f32 %v2747, 0.0
      %v2756 = vmax.f32 %v2748, 0.0
      %v2757 = vadd.f32 %v2749, %v2750
      %v2758 = vadd.f32 %v2757, %v2751
      %v2759 = vadd.f32 %v2758, %v2752
      %v2760 = vadd.f32 %v2759, %v2753
      %v2761 = vadd.f32 %v2760, %v2754
      %v2762 = vadd.f32 %v2761, %v2755
      %v2763 = vadd.f32 %v2762, %v2756
      %v2764 = vrot.slane %v2763, 4
      %v2765 = vadd.f32 %v2763, %v2764
      %v2766 = vrot.slane %v2765, 2
      %v2767 = vadd.f32 %v2765, %v2766
      %v2768 = vrot.slane %v2767, 1
      %v2769 = vadd.f32 %v2767, %v2768
      %v2770 = vmul.f32 %v2769, %v2325
      %v2771 = vpack.c.bf16 %v2770, %v2770
      %v2772 = vld [vmem:[%s15] sm:$0xf]
      %v2773 = vld [vmem:[%s15 + $0x4] sm:$0xf]
      %v2774 = vld [vmem:[%s15 + $0x8] sm:$0xf]
      %v2775 = vld [vmem:[%s15 + $0xc] sm:$0xf]
      %v2776 = vld [vmem:[%s15 + $0x10] sm:$0xf]
      %v2777 = vld [vmem:[%s15 + $0x14] sm:$0xf]
      %v2778 = vld [vmem:[%s15 + $0x18] sm:$0xf]
      %v2779 = vld [vmem:[%s15 + $0x1c] sm:$0xf]
      %v2780 = vld [vmem:[%s15 + $0x20] sm:$0xf]
      %v2781 = vld [vmem:[%s15 + $0x24] sm:$0xf]
      %v2782 = vld [vmem:[%s15 + $0x28] sm:$0xf]
      %v2783 = vld [vmem:[%s15 + $0x2c] sm:$0xf]
      %v2784 = vld [vmem:[%s15 + $0x30] sm:$0xf]
      %v2785 = vld [vmem:[%s15 + $0x34] sm:$0xf]
      %v2786 = vld [vmem:[%s15 + $0x38] sm:$0xf]
      %v2787 = vld [vmem:[%s15 + $0x3c] sm:$0xf]
      %v2788 = vld [vmem:[%s16] sm:$0x1]
      %v2805 = vunpack.c.l.b16 %v2772
      %v2806 = vunpack.c.l.b16 %v2773
      %v2807 = vunpack.c.l.b16 %v2774
      %v2808 = vunpack.c.l.b16 %v2775
      %v2809 = vunpack.c.l.b16 %v2776
      %v2810 = vunpack.c.l.b16 %v2777
      %v2811 = vunpack.c.l.b16 %v2778
      %v2812 = vunpack.c.l.b16 %v2779
      %v2813 = vunpack.c.l.b16 %v2780
      %v2814 = vunpack.c.l.b16 %v2781
      %v2815 = vunpack.c.l.b16 %v2782
      %v2816 = vunpack.c.l.b16 %v2783
      %v2817 = vunpack.c.l.b16 %v2784
      %v2818 = vunpack.c.l.b16 %v2785
      %v2819 = vunpack.c.l.b16 %v2786
      %v2820 = vunpack.c.l.b16 %v2787
      %v2821 = vpack.c.b16 %v2806, %v2805
      %v2822 = vpack.c.b16 %v2808, %v2807
      %v2823 = vpack.c.b16 %v2810, %v2809
      %v2824 = vpack.c.b16 %v2812, %v2811
      %v2825 = vpack.c.b16 %v2814, %v2813
      %v2826 = vpack.c.b16 %v2816, %v2815
      %v2827 = vpack.c.b16 %v2818, %v2817
      %v2828 = vpack.c.b16 %v2820, %v2819
      %2837 = vmatprep.subr.bf16.mxu0 0
      %2838 = vmatpush1.bf16.msra.mxu0 %v2821
      %2839 = vmatprep.subr.bf16.mxu0 0
      %2840 = vmatpush1.bf16.msra.mxu0 %v2822
      %2841 = vmatprep.subr.bf16.mxu0 0
      %2842 = vmatpush1.bf16.msra.mxu0 %v2823
      %2843 = vmatprep.subr.bf16.mxu0 0
      %2844 = vmatpush1.bf16.msra.mxu0 %v2824
      %2845 = vmatprep.subr.bf16.mxu0 0
      %2846 = vmatpush1.bf16.msra.mxu0 %v2825
      %2847 = vmatprep.subr.bf16.mxu0 0
      %2848 = vmatpush1.bf16.msra.mxu0 %v2826
      %2849 = vmatprep.subr.bf16.mxu0 0
      %2850 = vmatpush1.bf16.msra.mxu0 %v2827
      %2851 = vmatprep.subr.bf16.mxu0 0
      %2852 = vmatpush1.bf16.msra.mxu0 %v2828
      %2853 = vmatprep.subr.bf16.mxu0 0
      %2854 = vmatpush1.bf16.msra.mxu0 0
      %2855 = vmatprep.subr.bf16.mxu0 0
      %2856 = vmatpush1.bf16.msra.mxu0 0
      %2857 = vmatprep.subr.bf16.mxu0 0
      %2858 = vmatpush1.bf16.msra.mxu0 0
      %2859 = vmatprep.subr.bf16.mxu0 0
      %2860 = vmatpush1.bf16.msra.mxu0 0
      %2861 = vmatprep.subr.bf16.mxu0 0
      %2862 = vmatpush1.bf16.msra.mxu0 0
      %2863 = vmatprep.subr.bf16.mxu0 0
      %2864 = vmatpush1.bf16.msra.mxu0 0
      %2865 = vmatprep.subr.bf16.mxu0 0
      %2866 = vmatpush1.bf16.msra.mxu0 0
      %2867 = vmatprep.subr.bf16.mxu0 0
      %2868 = vmatpush1.bf16.msra.mxu0 0
      %2869 = vmatprep.mubr.bf16.mxu0 0
      %2870 = vmatmul.mubr.bf16.gmra.mrb[0].mxu0 %v2771
      %v2871 = vpop.f32.mrb[0].mxu0
      %v2872 = vadd.f32 %v2788, %v2871
      %v2873 = vpop.f32.mrb[0].mxu0
      %v2874 = vpop.f32.mrb[0].mxu0
      %v2875 = vpop.f32.mrb[0].mxu0
      %2876 = vdwg.mxu0
      %v2877 = vlaneseq
      %v2878 = vshrl.u32 %v2877, 7
      %v2879 = vsub.s32 0, %v2878
      %v2880 = vrot.slane %v2872, %v2879
      %2881 = vst [vmem:[%s566] sm:$0xff] %v2880
      %p2882 = scmp.lt.s32.totalorder %s28, 1
      %s2883 = scalar_select %p2882, %s28, 1
      %s2884 = smul.addr %s2883, 8
      %s2885 = scalar_lea.vmem %s17, %s2884
      // Predicated region
      $region89: #{cassava_forward.7} parent=87 // pred_check
        %p2886 = pneg %p413
      $region90: #{cassava_forward.7} parent=87 // pred_check_branch
        %2888 = sbr.rel (%p2886) target = $region92
      $region91: #{cassava_forward.7} parent=87 // pred_region
        _
      $region92: #{cassava_forward.7} parent=87 // pred_fallthru
        _
    $region88: #{cassava_forward.7} parent=5 // pred_fallthru
      _
    %p2889 = scmp.le.s32.totalorder 2, %s23
    // Predicated region
    $region93: #{cassava_forward.7} parent=5 // pred_check
      %p2890 = pneg %p2889
    $region94: #{cassava_forward.7} parent=5 // pred_check_branch
      %2892 = sbr.rel (%p2890) target = $region96
    $region95: #{cassava_forward.7} parent=5 // pred_region
      %s2893 = ssub.s32 %s23, 2
      // Predicated region
      $region97: #{cassava_forward.7} parent=95 // pred_check
        %p2894 = pneg %p419
      $region98: #{cassava_forward.7} parent=95 // pred_check_branch
        %2896 = sbr.rel (%p2894) target = $region100
      $region99: #{cassava_forward.7} parent=95 // pred_region
        %p2897 = scmp.lt.s32.totalorder %s29, 1
        %s2898 = scalar_select %p2897, %s29, 1
        %s2899 = smul.addr %s2898, 8
        %s2900 = scalar_lea.vmem %s17, %s2899
      $region100: #{cassava_forward.7} parent=95 // pred_fallthru
        _
    $region96: #{cassava_forward.7} parent=5 // pred_fallthru
      _
  $region6: #{cassava_forward.7} parent=0 // loop_footer
    %s27 = sadd.s32 1, %s23
  $region7: #{cassava_forward.7} parent=0 // loop_footer_branch
    %22 = sbr.rel target = $region3
  $region8: #{cassava_forward.7} parent=0 // loop_exit
    _

</llo_original>
